<compile_context>
chip_gen: v6e
topology: v6e:2x2x1
jax: 0.10.0
libtpu: 0.0.40
codegen_flags: <defaults>
</compile_context>

<pallas_src>
import functools

import jax
import jax.numpy as jnp
from jax.experimental import pallas as pl
from jax.experimental.pallas import tpu as pltpu

PREDICT_DAYS = 3   # TODO(synk): config['predict_days'] not available in-script; fixed constant.
BN_EPS = 1e-5


# ---------------------------------------------------------------------------
# Kernel 1: Conv3d(3x3x3, pad 1) + bias + BatchNorm(eval) + ReLU
#           (+ fused adaptive time-pool for the second conv).
# ---------------------------------------------------------------------------
def _conv_tap_kernel(x_ref, wb_ref, shift_ref, o_ref, *, T, H, pool_t):
    L = x_ref.shape[-1]           # (W+2) * Cin
    N = wb_ref.shape[-1]          # W * Cout
    acc = jnp.zeros((T * H, N), jnp.float32)
    for dt in range(3):
        for dh in range(3):
            xt = x_ref[0, dt:dt + T, dh:dh + H, :].reshape(T * H, L)
            acc = acc + jnp.dot(xt.astype(jnp.bfloat16), wb_ref[dt * 3 + dh],
                                preferred_element_type=jnp.float32)
    # conv bias + BN(eval) are folded into the weights / shift row; then ReLU.
    acc = jnp.maximum(acc + shift_ref[...], 0.0)
    if pool_t > 1:                # fused AdaptiveAvgPool3d((T // pool_t, None, None))
        T_out = T // pool_t
        a = acc.reshape(T_out, pool_t * H, N)
        pooled = a[:, 0:H, :]
        for p_i in range(1, pool_t):
            pooled = pooled + a[:, p_i * H:(p_i + 1) * H, :]
        acc = (pooled * (1.0 / pool_t)).reshape(T_out * H, N)
    o_ref[0, :, :] = acc.astype(o_ref.dtype)


def _banded_conv_weight(w, scale, W):
    """w: (3,3,3,Cin,Cout) -> (9, (W+2)*Cin, W*Cout), BN scale folded, dw taps banded."""
    kt, kh, kw, Cin, Cout = w.shape
    Wp = W + 2
    wi = jnp.arange(Wp)[None, :, None]
    wo = jnp.arange(W)[None, None, :]
    dw = jnp.arange(kw)[:, None, None]
    band = (wi == wo + dw).astype(w.dtype)              # (3, Wp, W)
    ws = w * scale[None, None, None, None, :]
    wb = jnp.einsum('kio,tdkce->tdicoe', band, ws)      # (3,3,Wp,Cin,W,Cout)
    return wb.reshape(kt * kh, Wp * Cin, W * Cout)


def conv3d_bn_relu_pool(x_cl, w, b, gamma, beta, mean, var, *, pool_t=1):
    """x_cl: (B,T,H,W,Cin) channels-last. Returns (B, (T//pool_t)*H, W*Cout) f32."""
    B, T, H, W, Cin = x_cl.shape
    Cout = w.shape[-1]
    Tp, Hp = T + 2, H + 2
    L = (W + 2) * Cin
    N = W * Cout
    T_out = T // pool_t

    xp = jnp.pad(x_cl, ((0, 0), (1, 1), (1, 1), (1, 1), (0, 0))).reshape(B, Tp, Hp, L)
    scale = gamma / jnp.sqrt(var + BN_EPS)
    wb = _banded_conv_weight(w, scale, W).astype(jnp.bfloat16)
    shift = jnp.tile(b * scale + beta - mean * scale, W).reshape(1, N)

    kernel = functools.partial(_conv_tap_kernel, T=T, H=H, pool_t=pool_t)
    return pl.pallas_call(
        kernel,
        out_shape=jax.ShapeDtypeStruct((B, T_out * H, N), jnp.float32),
        grid_spec=pltpu.PrefetchScalarGridSpec(
            num_scalar_prefetch=0,
            grid=(B,),
            in_specs=[
                pl.BlockSpec((1, Tp, Hp, L), lambda bi: (bi, 0, 0, 0)),
                pl.BlockSpec((9, L, N), lambda bi: (0, 0, 0)),
                pl.BlockSpec((1, N), lambda bi: (0, 0)),
            ],
            out_specs=pl.BlockSpec((1, T_out * H, N), lambda bi: (bi, 0, 0)),
        ),
        compiler_params=pltpu.CompilerParams(dimension_semantics=("parallel",)),
    )(xp, wb, shift)


# ---------------------------------------------------------------------------
# Kernel 2: bidirectional LSTM (last step only) fused with final 1x1 Conv2d.
# Batch lives in the lane dimension; the whole input projection is one GEMM.
# ---------------------------------------------------------------------------
def _bilstm_head_kernel(x_ref, wih_ref, whh_ref, wout_ref, o_ref, *, T, Hs):
    tile_n = x_ref.shape[-1]
    G = 4 * Hs          # packed gate rows per direction (PyTorch order i,f,g,o)
    S = 2 * G           # rows per timestep in xproj (fwd gates | bwd gates)

    # One lane-dense GEMM: all timesteps, both directions, biases folded via the
    # trailing ones-row of x.
    xproj = jnp.dot(wih_ref[...], x_ref[...].astype(wih_ref.dtype),
                    preferred_element_type=jnp.float32)          # (T*8Hs, tile_n)

    def lstm_gates(g, c_prev):
        i = jax.nn.sigmoid(g[0 * Hs:1 * Hs, :])
        f = jax.nn.sigmoid(g[1 * Hs:2 * Hs, :])
        u = jnp.tanh(g[2 * Hs:3 * Hs, :])
        o = jax.nn.sigmoid(g[3 * Hs:4 * Hs, :])
        c = f * c_prev + i * u
        return o * jnp.tanh(c), c

    whh = whh_ref[...]
    h = jnp.zeros((Hs, tile_n), jnp.float32)
    c = jnp.zeros((Hs, tile_n), jnp.float32)
    for t in range(T):                                           # forward direction
        g = xproj[t * S:t * S + G, :] + jnp.dot(whh, h, preferred_element_type=jnp.float32)
        h, c = lstm_gates(g, c)
    h_f = h

    # backward direction: lstm_out[:, -1, Hs:] is the bwd hidden after its first
    # step (input x[T-1], zero initial state) -> single cell, no recurrent term.
    gb = xproj[(T - 1) * S + G:T * S, :]
    h_b, _ = lstm_gates(gb, jnp.zeros((Hs, tile_n), jnp.float32))

    # final 1x1 Conv2d fused: [w_fwd | w_bwd | bias] . [h_f ; h_b ; 1]
    feats = jnp.concatenate([h_f, h_b, jnp.ones((1, tile_n), jnp.float32)], axis=0)
    o_ref[...] = jnp.dot(wout_ref[...], feats,
                         preferred_element_type=jnp.float32).astype(o_ref.dtype)


def bilstm_head(x_lstm2d, p, *, tile_n=256):
    """x_lstm2d: (N, T*D) f32 (PyTorch flat row ordering). Returns (N,) f32."""
    N, TD = x_lstm2d.shape
    Hs = p['whh_f'].shape[-1]
    D = p['wih_f'].shape[1]
    T = TD // D
    assert N % tile_n == 0

    # Pack gate weights lane/sublane dense, fold biases into the input projection.
    wih_f = jnp.transpose(p['wih_f'], (0, 2, 1)).reshape(4 * Hs, D)
    wih_b = jnp.transpose(p['wih_b'], (0, 2, 1)).reshape(4 * Hs, D)
    wih_all = jnp.concatenate([wih_f, wih_b], axis=0)                    # (8Hs, D)
    b_all = jnp.concatenate([p['b_f'].reshape(4 * Hs, 1),
                             p['b_b'].reshape(4 * Hs, 1)], axis=0)       # (8Hs, 1)
    wih_big = jnp.concatenate(
        [jnp.kron(jnp.eye(T, dtype=wih_all.dtype), wih_all),             # block-diag over t
         jnp.tile(b_all, (T, 1))], axis=1).astype(jnp.bfloat16)          # (T*8Hs, T*D+1)

    whh_T = jnp.transpose(p['whh_f'], (0, 2, 1)).reshape(4 * Hs, Hs)     # (4Hs, Hs)
    wout = jnp.concatenate([p['wout'][0, :, 0], p['wout'][1, :, 0],
                            p['bout'].reshape(1)]).reshape(1, 2 * Hs + 1)

    x_aug = jnp.concatenate([x_lstm2d.T, jnp.ones((1, N), x_lstm2d.dtype)], axis=0)

    kernel = functools.partial(_bilstm_head_kernel, T=T, Hs=Hs)
    out = pl.pallas_call(
        kernel,
        out_shape=jax.ShapeDtypeStruct((1, N), jnp.float32),
        grid_spec=pltpu.PrefetchScalarGridSpec(
            num_scalar_prefetch=0,
            grid=(N // tile_n,),
            in_specs=[
                pl.BlockSpec((TD + 1, tile_n), lambda i: (0, i)),
                pl.BlockSpec((T * 8 * Hs, TD + 1), lambda i: (0, 0)),
                pl.BlockSpec((4 * Hs, Hs), lambda i: (0, 0)),
                pl.BlockSpec((1, 2 * Hs + 1), lambda i: (0, 0)),
            ],
            out_specs=pl.BlockSpec((1, tile_n), lambda i: (0, i)),
        ),
        compiler_params=pltpu.CompilerParams(dimension_semantics=("parallel",)),
    )(x_aug, wih_big, whh_T, wout)
    return out.reshape(N)


# ---------------------------------------------------------------------------
# Forward pass
# ---------------------------------------------------------------------------
def cnn3d_lstm_lite_forward(x_seq, params):
    # x_seq: (b, t, c, h, w) as in the PyTorch module
    b, t, c, h, w = x_seq.shape
    x = jnp.transpose(x_seq, (0, 1, 3, 4, 2)).astype(jnp.float32)   # channels-last

    c1 = params['w1'].shape[-1]
    y1 = conv3d_bn_relu_pool(x, params['w1'], params['b1'],
                             params['bn1_gamma'], params['bn1_beta'],
                             params['bn1_mean'], params['bn1_var'], pool_t=1)
    # Dropout3d(0.15): identity at inference time.
    y1 = y1.reshape(b, t, h, w, c1)

    assert t % 4 == 0
    y2 = conv3d_bn_relu_pool(y1, params['w2'], params['b2'],
                             params['bn2_gamma'], params['bn2_beta'],
                             params['bn2_mean'], params['bn2_var'], pool_t=t // 4)
    new_t, F = 4, params['w2'].shape[-1]

    # y2's flat order equals channels-last (b, new_t, h, w, F); PyTorch's
    # .view(b,new_t,h*w,F).view(b*h*w,new_t,F) is a flat reinterpretation,
    # reproduced exactly by this reshape.
    x_lstm2d = y2.reshape(b * h * w, new_t * F)

    head = bilstm_head(x_lstm2d, params, tile_n=256)                # (b*h*w,)
    out2d = head.reshape(b, h, w)                                   # == .view(b,h,w,-1) + 1x1 conv
    out = jnp.broadcast_to(out2d[:, None, None, :, :], (b, PREDICT_DAYS, 1, h, w))
    return out


def init_params(key, input_dim=4, hidden_dim=32, lstm_hidden_dim=16):
    c1 = hidden_dim // 4   # 8
    c2 = hidden_dim // 2   # 16
    ks = jax.random.split(key, 20)

    def nrm(k, shape, s=0.1):
        return jax.random.normal(k, shape, jnp.float32) * s

    p = {}
    # Conv3d weights stored as (kt, kh, kw, Cin, Cout)  (== PyTorch (Cout,Cin,kt,kh,kw) transposed)
    p['w1'] = nrm(ks[0], (3, 3, 3, input_dim, c1))
    p['b1'] = nrm(ks[1], (c1,))
    p['bn1_gamma'] = 1.0 + nrm(ks[2], (c1,))
    p['bn1_beta'] = nrm(ks[3], (c1,))
    p['bn1_mean'] = nrm(ks[4], (c1,))
    p['bn1_var'] = 1.0 + 0.1 * jax.random.uniform(ks[5], (c1,), jnp.float32)

    p['w2'] = nrm(ks[6], (3, 3, 3, c1, c2))
    p['b2'] = nrm(ks[7], (c2,))
    p['bn2_gamma'] = 1.0 + nrm(ks[8], (c2,))
    p['bn2_beta'] = nrm(ks[9], (c2,))
    p['bn2_mean'] = nrm(ks[10], (c2,))
    p['bn2_var'] = 1.0 + 0.1 * jax.random.uniform(ks[11], (c2,), jnp.float32)

    # LSTM weights (gate order i,f,g,o) stored (4, in, H) / (4, H, H); bias = b_ih + b_hh
    p['wih_f'] = nrm(ks[12], (4, c2, lstm_hidden_dim))
    p['whh_f'] = nrm(ks[13], (4, lstm_hidden_dim, lstm_hidden_dim))
    p['b_f'] = nrm(ks[14], (4, 1, lstm_hidden_dim))
    p['wih_b'] = nrm(ks[15], (4, c2, lstm_hidden_dim))
    p['whh_b'] = nrm(ks[16], (4, lstm_hidden_dim, lstm_hidden_dim))
    p['b_b'] = nrm(ks[17], (4, 1, lstm_hidden_dim))

    # final_out Conv2d(2H, 1, 1): weight split as (2, H, 1) = [fwd part; bwd part]
    p['wout'] = nrm(ks[18], (2, lstm_hidden_dim, 1))
    p['bout'] = nrm(ks[19], (1, 1))
    return p


if __name__ == "__main__":
    key = jax.random.PRNGKey(0)
    pkey, xkey = jax.random.split(key)

    B, T, C, H, W = 2, 8, 4, 16, 16          # input_dim=4, hidden_dim=32, lstm_hidden_dim=16
    params = init_params(pkey, input_dim=C, hidden_dim=32, lstm_hidden_dim=16)
    x_seq = jax.random.normal(xkey, (B, T, C, H, W), jnp.float32)

    out = jax.jit(cnn3d_lstm_lite_forward)(x_seq, params)
    out = jax.block_until_ready(out)
    assert out.shape == (B, PREDICT_DAYS, 1, H, W), out.shape
    assert jnp.all(jnp.isfinite(out))
    print("KERNEL_OK")
</pallas_src>

<mosaic_0001>
module attributes {stable_mosaic.version = 11 : i64} {
  func.func @_conv_tap_kernel(%arg0: i32, %arg1: memref<1x10x18x72xf32, #tpu.memory_space<vmem>>, %arg2: memref<9x72x128xbf16, #tpu.memory_space<vmem>>, %arg3: memref<1x128xf32, #tpu.memory_space<vmem>>, %arg4: memref<1x128x128xf32, #tpu.memory_space<vmem>>) attributes {dimension_semantics = [#tpu.dimension_semantics<parallel>], iteration_bounds = array<i64: 2>, scalar_prefetch = 0 : i64, scratch_operands = 0 : i64, tpu.core_type = #tpu.core_type<tc>, window_params = [{transform_indices = @transform_0, window_bounds = array<i64: 1, 10, 18, 72>}, {pipeline_mode = #tpu.pipeline_mode<synchronous>, transform_indices = @transform_1, window_bounds = array<i64: 9, 72, 128>}, {pipeline_mode = #tpu.pipeline_mode<synchronous>, transform_indices = @transform_2, window_bounds = array<i64: 1, 128>}, {transform_indices = @transform_3, window_bounds = array<i64: 1, 128, 128>}]} {
    %cst = arith.constant 0.000000e+00 : f32
    %0 = vector.broadcast %cst : f32 to vector<128x128xf32>
    %c0 = arith.constant 0 : index
    %c0_0 = arith.constant 0 : index
    %c0_1 = arith.constant 0 : index
    %c0_2 = arith.constant 0 : index
    %1 = vector.load %arg1[%c0, %c0_0, %c0_1, %c0_2] : memref<1x10x18x72xf32, #tpu.memory_space<vmem>>, vector<1x8x16x72xf32>
    %2 = vector.shape_cast %1 : vector<1x8x16x72xf32> to vector<8x16x72xf32>
    %3 = vector.shape_cast %2 : vector<8x16x72xf32> to vector<128x72xf32>
    %4 = arith.truncf %3 : vector<128x72xf32> to vector<128x72xbf16>
    %c0_3 = arith.constant 0 : index
    %c0_4 = arith.constant 0 : index
    %c0_5 = arith.constant 0 : index
    %5 = vector.load %arg2[%c0_3, %c0_4, %c0_5] : memref<9x72x128xbf16, #tpu.memory_space<vmem>>, vector<1x72x128xbf16>
    %6 = vector.shape_cast %5 : vector<1x72x128xbf16> to vector<72x128xbf16>
    %cst_6 = arith.constant dense<0.000000e+00> : vector<128x128xf32>
    %7 = tpu.matmul %4, %6, %cst_6 {dimension_numbers = #tpu.dot_dimension_numbers<[1], [0], [0], [1], [0, 0, 1, 1], [], []>} : vector<128x72xbf16>, vector<72x128xbf16>, vector<128x128xf32> -> vector<128x128xf32>
    %8 = arith.addf %0, %7 : vector<128x128xf32>
    %c0_7 = arith.constant 0 : index
    %c0_8 = arith.constant 0 : index
    %c1 = arith.constant 1 : index
    %c0_9 = arith.constant 0 : index
    %9 = vector.load %arg1[%c0_7, %c0_8, %c1, %c0_9] : memref<1x10x18x72xf32, #tpu.memory_space<vmem>>, vector<1x8x16x72xf32>
    %10 = vector.shape_cast %9 : vector<1x8x16x72xf32> to vector<8x16x72xf32>
    %11 = vector.shape_cast %10 : vector<8x16x72xf32> to vector<128x72xf32>
    %12 = arith.truncf %11 : vector<128x72xf32> to vector<128x72xbf16>
    %c1_10 = arith.constant 1 : index
    %c0_11 = arith.constant 0 : index
    %c0_12 = arith.constant 0 : index
    %13 = vector.load %arg2[%c1_10, %c0_11, %c0_12] : memref<9x72x128xbf16, #tpu.memory_space<vmem>>, vector<1x72x128xbf16>
    %14 = vector.shape_cast %13 : vector<1x72x128xbf16> to vector<72x128xbf16>
    %cst_13 = arith.constant dense<0.000000e+00> : vector<128x128xf32>
    %15 = tpu.matmul %12, %14, %cst_13 {dimension_numbers = #tpu.dot_dimension_numbers<[1], [0], [0], [1], [0, 0, 1, 1], [], []>} : vector<128x72xbf16>, vector<72x128xbf16>, vector<128x128xf32> -> vector<128x128xf32>
    %16 = arith.addf %8, %15 : vector<128x128xf32>
    %c0_14 = arith.constant 0 : index
    %c0_15 = arith.constant 0 : index
    %c2 = arith.constant 2 : index
    %c0_16 = arith.constant 0 : index
    %17 = vector.load %arg1[%c0_14, %c0_15, %c2, %c0_16] : memref<1x10x18x72xf32, #tpu.memory_space<vmem>>, vector<1x8x16x72xf32>
    %18 = vector.shape_cast %17 : vector<1x8x16x72xf32> to vector<8x16x72xf32>
    %19 = vector.shape_cast %18 : vector<8x16x72xf32> to vector<128x72xf32>
    %20 = arith.truncf %19 : vector<128x72xf32> to vector<128x72xbf16>
    %c2_17 = arith.constant 2 : index
    %c0_18 = arith.constant 0 : index
    %c0_19 = arith.constant 0 : index
    %21 = vector.load %arg2[%c2_17, %c0_18, %c0_19] : memref<9x72x128xbf16, #tpu.memory_space<vmem>>, vector<1x72x128xbf16>
    %22 = vector.shape_cast %21 : vector<1x72x128xbf16> to vector<72x128xbf16>
    %cst_20 = arith.constant dense<0.000000e+00> : vector<128x128xf32>
    %23 = tpu.matmul %20, %22, %cst_20 {dimension_numbers = #tpu.dot_dimension_numbers<[1], [0], [0], [1], [0, 0, 1, 1], [], []>} : vector<128x72xbf16>, vector<72x128xbf16>, vector<128x128xf32> -> vector<128x128xf32>
    %24 = arith.addf %16, %23 : vector<128x128xf32>
    %c0_21 = arith.constant 0 : index
    %c1_22 = arith.constant 1 : index
    %c0_23 = arith.constant 0 : index
    %c0_24 = arith.constant 0 : index
    %25 = vector.load %arg1[%c0_21, %c1_22, %c0_23, %c0_24] : memref<1x10x18x72xf32, #tpu.memory_space<vmem>>, vector<1x8x16x72xf32>
    %26 = vector.shape_cast %25 : vector<1x8x16x72xf32> to vector<8x16x72xf32>
    %27 = vector.shape_cast %26 : vector<8x16x72xf32> to vector<128x72xf32>
    %28 = arith.truncf %27 : vector<128x72xf32> to vector<128x72xbf16>
    %c3 = arith.constant 3 : index
    %c0_25 = arith.constant 0 : index
    %c0_26 = arith.constant 0 : index
    %29 = vector.load %arg2[%c3, %c0_25, %c0_26] : memref<9x72x128xbf16, #tpu.memory_space<vmem>>, vector<1x72x128xbf16>
    %30 = vector.shape_cast %29 : vector<1x72x128xbf16> to vector<72x128xbf16>
    %cst_27 = arith.constant dense<0.000000e+00> : vector<128x128xf32>
    %31 = tpu.matmul %28, %30, %cst_27 {dimension_numbers = #tpu.dot_dimension_numbers<[1], [0], [0], [1], [0, 0, 1, 1], [], []>} : vector<128x72xbf16>, vector<72x128xbf16>, vector<128x128xf32> -> vector<128x128xf32>
    %32 = arith.addf %24, %31 : vector<128x128xf32>
    %c0_28 = arith.constant 0 : index
    %c1_29 = arith.constant 1 : index
    %c1_30 = arith.constant 1 : index
    %c0_31 = arith.constant 0 : index
    %33 = vector.load %arg1[%c0_28, %c1_29, %c1_30, %c0_31] : memref<1x10x18x72xf32, #tpu.memory_space<vmem>>, vector<1x8x16x72xf32>
    %34 = vector.shape_cast %33 : vector<1x8x16x72xf32> to vector<8x16x72xf32>
    %35 = vector.shape_cast %34 : vector<8x16x72xf32> to vector<128x72xf32>
    %36 = arith.truncf %35 : vector<128x72xf32> to vector<128x72xbf16>
    %c4 = arith.constant 4 : index
    %c0_32 = arith.constant 0 : index
    %c0_33 = arith.constant 0 : index
    %37 = vector.load %arg2[%c4, %c0_32, %c0_33] : memref<9x72x128xbf16, #tpu.memory_space<vmem>>, vector<1x72x128xbf16>
    %38 = vector.shape_cast %37 : vector<1x72x128xbf16> to vector<72x128xbf16>
    %cst_34 = arith.constant dense<0.000000e+00> : vector<128x128xf32>
    %39 = tpu.matmul %36, %38, %cst_34 {dimension_numbers = #tpu.dot_dimension_numbers<[1], [0], [0], [1], [0, 0, 1, 1], [], []>} : vector<128x72xbf16>, vector<72x128xbf16>, vector<128x128xf32> -> vector<128x128xf32>
    %40 = arith.addf %32, %39 : vector<128x128xf32>
    %c0_35 = arith.constant 0 : index
    %c1_36 = arith.constant 1 : index
    %c2_37 = arith.constant 2 : index
    %c0_38 = arith.constant 0 : index
    %41 = vector.load %arg1[%c0_35, %c1_36, %c2_37, %c0_38] : memref<1x10x18x72xf32, #tpu.memory_space<vmem>>, vector<1x8x16x72xf32>
    %42 = vector.shape_cast %41 : vector<1x8x16x72xf32> to vector<8x16x72xf32>
    %43 = vector.shape_cast %42 : vector<8x16x72xf32> to vector<128x72xf32>
    %44 = arith.truncf %43 : vector<128x72xf32> to vector<128x72xbf16>
    %c5 = arith.constant 5 : index
    %c0_39 = arith.constant 0 : index
    %c0_40 = arith.constant 0 : index
    %45 = vector.load %arg2[%c5, %c0_39, %c0_40] : memref<9x72x128xbf16, #tpu.memory_space<vmem>>, vector<1x72x128xbf16>
    %46 = vector.shape_cast %45 : vector<1x72x128xbf16> to vector<72x128xbf16>
    %cst_41 = arith.constant dense<0.000000e+00> : vector<128x128xf32>
    %47 = tpu.matmul %44, %46, %cst_41 {dimension_numbers = #tpu.dot_dimension_numbers<[1], [0], [0], [1], [0, 0, 1, 1], [], []>} : vector<128x72xbf16>, vector<72x128xbf16>, vector<128x128xf32> -> vector<128x128xf32>
    %48 = arith.addf %40, %47 : vector<128x128xf32>
    %c0_42 = arith.constant 0 : index
    %c2_43 = arith.constant 2 : index
    %c0_44 = arith.constant 0 : index
    %c0_45 = arith.constant 0 : index
    %49 = vector.load %arg1[%c0_42, %c2_43, %c0_44, %c0_45] : memref<1x10x18x72xf32, #tpu.memory_space<vmem>>, vector<1x8x16x72xf32>
    %50 = vector.shape_cast %49 : vector<1x8x16x72xf32> to vector<8x16x72xf32>
    %51 = vector.shape_cast %50 : vector<8x16x72xf32> to vector<128x72xf32>
    %52 = arith.truncf %51 : vector<128x72xf32> to vector<128x72xbf16>
    %c6 = arith.constant 6 : index
    %c0_46 = arith.constant 0 : index
    %c0_47 = arith.constant 0 : index
    %53 = vector.load %arg2[%c6, %c0_46, %c0_47] : memref<9x72x128xbf16, #tpu.memory_space<vmem>>, vector<1x72x128xbf16>
    %54 = vector.shape_cast %53 : vector<1x72x128xbf16> to vector<72x128xbf16>
    %cst_48 = arith.constant dense<0.000000e+00> : vector<128x128xf32>
    %55 = tpu.matmul %52, %54, %cst_48 {dimension_numbers = #tpu.dot_dimension_numbers<[1], [0], [0], [1], [0, 0, 1, 1], [], []>} : vector<128x72xbf16>, vector<72x128xbf16>, vector<128x128xf32> -> vector<128x128xf32>
    %56 = arith.addf %48, %55 : vector<128x128xf32>
    %c0_49 = arith.constant 0 : index
    %c2_50 = arith.constant 2 : index
    %c1_51 = arith.constant 1 : index
    %c0_52 = arith.constant 0 : index
    %57 = vector.load %arg1[%c0_49, %c2_50, %c1_51, %c0_52] : memref<1x10x18x72xf32, #tpu.memory_space<vmem>>, vector<1x8x16x72xf32>
    %58 = vector.shape_cast %57 : vector<1x8x16x72xf32> to vector<8x16x72xf32>
    %59 = vector.shape_cast %58 : vector<8x16x72xf32> to vector<128x72xf32>
    %60 = arith.truncf %59 : vector<128x72xf32> to vector<128x72xbf16>
    %c7 = arith.constant 7 : index
    %c0_53 = arith.constant 0 : index
    %c0_54 = arith.constant 0 : index
    %61 = vector.load %arg2[%c7, %c0_53, %c0_54] : memref<9x72x128xbf16, #tpu.memory_space<vmem>>, vector<1x72x128xbf16>
    %62 = vector.shape_cast %61 : vector<1x72x128xbf16> to vector<72x128xbf16>
    %cst_55 = arith.constant dense<0.000000e+00> : vector<128x128xf32>
    %63 = tpu.matmul %60, %62, %cst_55 {dimension_numbers = #tpu.dot_dimension_numbers<[1], [0], [0], [1], [0, 0, 1, 1], [], []>} : vector<128x72xbf16>, vector<72x128xbf16>, vector<128x128xf32> -> vector<128x128xf32>
    %64 = arith.addf %56, %63 : vector<128x128xf32>
    %c0_56 = arith.constant 0 : index
    %c2_57 = arith.constant 2 : index
    %c2_58 = arith.constant 2 : index
    %c0_59 = arith.constant 0 : index
    %65 = vector.load %arg1[%c0_56, %c2_57, %c2_58, %c0_59] : memref<1x10x18x72xf32, #tpu.memory_space<vmem>>, vector<1x8x16x72xf32>
    %66 = vector.shape_cast %65 : vector<1x8x16x72xf32> to vector<8x16x72xf32>
    %67 = vector.shape_cast %66 : vector<8x16x72xf32> to vector<128x72xf32>
    %68 = arith.truncf %67 : vector<128x72xf32> to vector<128x72xbf16>
    %c8 = arith.constant 8 : index
    %c0_60 = arith.constant 0 : index
    %c0_61 = arith.constant 0 : index
    %69 = vector.load %arg2[%c8, %c0_60, %c0_61] : memref<9x72x128xbf16, #tpu.memory_space<vmem>>, vector<1x72x128xbf16>
    %70 = vector.shape_cast %69 : vector<1x72x128xbf16> to vector<72x128xbf16>
    %cst_62 = arith.constant dense<0.000000e+00> : vector<128x128xf32>
    %71 = tpu.matmul %68, %70, %cst_62 {dimension_numbers = #tpu.dot_dimension_numbers<[1], [0], [0], [1], [0, 0, 1, 1], [], []>} : vector<128x72xbf16>, vector<72x128xbf16>, vector<128x128xf32> -> vector<128x128xf32>
    %72 = arith.addf %64, %71 : vector<128x128xf32>
    %c0_63 = arith.constant 0 : index
    %c0_64 = arith.constant 0 : index
    %73 = vector.load %arg3[%c0_63, %c0_64] : memref<1x128xf32, #tpu.memory_space<vmem>>, vector<1x128xf32>
    %74 = vector.broadcast %73 : vector<1x128xf32> to vector<128x128xf32>
    %75 = arith.addf %72, %74 : vector<128x128xf32>
    %cst_65 = arith.constant 0.000000e+00 : f32
    %76 = vector.broadcast %cst_65 : f32 to vector<128x128xf32>
    %77 = arith.maximumf %75, %76 : vector<128x128xf32>
    %c0_66 = arith.constant 0 : index
    %c0_67 = arith.constant 0 : index
    %c0_68 = arith.constant 0 : index
    %78 = vector.load %arg4[%c0_66, %c0_67, %c0_68] : memref<1x128x128xf32, #tpu.memory_space<vmem>>, vector<1x128x128xf32>
    %79 = vector.shape_cast %78 : vector<1x128x128xf32> to vector<128x128xf32>
    %80 = vector.shape_cast %77 : vector<128x128xf32> to vector<1x128x128xf32>
    tpu.vector_store %arg4[%c0_66, %c0_67, %c0_68], %80 {strides = array<i32>} : memref<1x128x128xf32, #tpu.memory_space<vmem>>, vector<1x128x128xf32>,
    return
  }
  func.func @transform_0(%arg0: i32) -> (i32, i32, i32, i32) {
    %c0_i32 = arith.constant 0 : i32
    %c0_i32_0 = arith.constant 0 : i32
    %c0_i32_1 = arith.constant 0 : i32
    %c0_i32_2 = arith.constant 0 : i32
    return %arg0, %c0_i32, %c0_i32_0, %c0_i32_1 : i32, i32, i32, i32
  }
  func.func @transform_1(%arg0: i32) -> (i32, i32, i32) {
    %c0_i32 = arith.constant 0 : i32
    %c0_i32_0 = arith.constant 0 : i32
    %c0_i32_1 = arith.constant 0 : i32
    %c0_i32_2 = arith.constant 0 : i32
    return %c0_i32, %c0_i32_0, %c0_i32_1 : i32, i32, i32
  }
  func.func @transform_2(%arg0: i32) -> (i32, i32) {
    %c0_i32 = arith.constant 0 : i32
    %c0_i32_0 = arith.constant 0 : i32
    %c0_i32_1 = arith.constant 0 : i32
    return %c0_i32, %c0_i32_0 : i32, i32
  }
  func.func @transform_3(%arg0: i32) -> (i32, i32, i32) {
    %c0_i32 = arith.constant 0 : i32
    %c0_i32_0 = arith.constant 0 : i32
    %c0_i32_1 = arith.constant 0 : i32
    return %arg0, %c0_i32, %c0_i32_0 : i32, i32, i32
  }
}

module attributes {stable_mosaic.version = 11 : i64} {
  func.func @_conv_tap_kernel(%arg0: i32, %arg1: memref<1x10x18x144xf32, #tpu.memory_space<vmem>>, %arg2: memref<9x144x256xbf16, #tpu.memory_space<vmem>>, %arg3: memref<1x256xf32, #tpu.memory_space<vmem>>, %arg4: memref<1x64x256xf32, #tpu.memory_space<vmem>>) attributes {dimension_semantics = [#tpu.dimension_semantics<parallel>], iteration_bounds = array<i64: 2>, scalar_prefetch = 0 : i64, scratch_operands = 0 : i64, tpu.core_type = #tpu.core_type<tc>, window_params = [{transform_indices = @transform_0, window_bounds = array<i64: 1, 10, 18, 144>}, {pipeline_mode = #tpu.pipeline_mode<synchronous>, transform_indices = @transform_1, window_bounds = array<i64: 9, 144, 256>}, {pipeline_mode = #tpu.pipeline_mode<synchronous>, transform_indices = @transform_2, window_bounds = array<i64: 1, 256>}, {transform_indices = @transform_3, window_bounds = array<i64: 1, 64, 256>}]} {
    %cst = arith.constant 0.000000e+00 : f32
    %0 = vector.broadcast %cst : f32 to vector<128x256xf32>
    %c0 = arith.constant 0 : index
    %c0_0 = arith.constant 0 : index
    %c0_1 = arith.constant 0 : index
    %c0_2 = arith.constant 0 : index
    %1 = vector.load %arg1[%c0, %c0_0, %c0_1, %c0_2] : memref<1x10x18x144xf32, #tpu.memory_space<vmem>>, vector<1x8x16x144xf32>
    %2 = vector.shape_cast %1 : vector<1x8x16x144xf32> to vector<8x16x144xf32>
    %3 = vector.shape_cast %2 : vector<8x16x144xf32> to vector<128x144xf32>
    %4 = arith.truncf %3 : vector<128x144xf32> to vector<128x144xbf16>
    %c0_3 = arith.constant 0 : index
    %c0_4 = arith.constant 0 : index
    %c0_5 = arith.constant 0 : index
    %5 = vector.load %arg2[%c0_3, %c0_4, %c0_5] : memref<9x144x256xbf16, #tpu.memory_space<vmem>>, vector<1x144x256xbf16>
    %6 = vector.shape_cast %5 : vector<1x144x256xbf16> to vector<144x256xbf16>
    %cst_6 = arith.constant dense<0.000000e+00> : vector<128x256xf32>
    %7 = tpu.matmul %4, %6, %cst_6 {dimension_numbers = #tpu.dot_dimension_numbers<[1], [0], [0], [1], [0, 0, 1, 1], [], []>} : vector<128x144xbf16>, vector<144x256xbf16>, vector<128x256xf32> -> vector<128x256xf32>
    %8 = arith.addf %0, %7 : vector<128x256xf32>
    %c0_7 = arith.constant 0 : index
    %c0_8 = arith.constant 0 : index
    %c1 = arith.constant 1 : index
    %c0_9 = arith.constant 0 : index
    %9 = vector.load %arg1[%c0_7, %c0_8, %c1, %c0_9] : memref<1x10x18x144xf32, #tpu.memory_space<vmem>>, vector<1x8x16x144xf32>
    %10 = vector.shape_cast %9 : vector<1x8x16x144xf32> to vector<8x16x144xf32>
    %11 = vector.shape_cast %10 : vector<8x16x144xf32> to vector<128x144xf32>
    %12 = arith.truncf %11 : vector<128x144xf32> to vector<128x144xbf16>
    %c1_10 = arith.constant 1 : index
    %c0_11 = arith.constant 0 : index
    %c0_12 = arith.constant 0 : index
    %13 = vector.load %arg2[%c1_10, %c0_11, %c0_12] : memref<9x144x256xbf16, #tpu.memory_space<vmem>>, vector<1x144x256xbf16>
    %14 = vector.shape_cast %13 : vector<1x144x256xbf16> to vector<144x256xbf16>
    %cst_13 = arith.constant dense<0.000000e+00> : vector<128x256xf32>
    %15 = tpu.matmul %12, %14, %cst_13 {dimension_numbers = #tpu.dot_dimension_numbers<[1], [0], [0], [1], [0, 0, 1, 1], [], []>} : vector<128x144xbf16>, vector<144x256xbf16>, vector<128x256xf32> -> vector<128x256xf32>
    %16 = arith.addf %8, %15 : vector<128x256xf32>
    %c0_14 = arith.constant 0 : index
    %c0_15 = arith.constant 0 : index
    %c2 = arith.constant 2 : index
    %c0_16 = arith.constant 0 : index
    %17 = vector.load %arg1[%c0_14, %c0_15, %c2, %c0_16] : memref<1x10x18x144xf32, #tpu.memory_space<vmem>>, vector<1x8x16x144xf32>
    %18 = vector.shape_cast %17 : vector<1x8x16x144xf32> to vector<8x16x144xf32>
    %19 = vector.shape_cast %18 : vector<8x16x144xf32> to vector<128x144xf32>
    %20 = arith.truncf %19 : vector<128x144xf32> to vector<128x144xbf16>
    %c2_17 = arith.constant 2 : index
    %c0_18 = arith.constant 0 : index
    %c0_19 = arith.constant 0 : index
    %21 = vector.load %arg2[%c2_17, %c0_18, %c0_19] : memref<9x144x256xbf16, #tpu.memory_space<vmem>>, vector<1x144x256xbf16>
    %22 = vector.shape_cast %21 : vector<1x144x256xbf16> to vector<144x256xbf16>
    %cst_20 = arith.constant dense<0.000000e+00> : vector<128x256xf32>
    %23 = tpu.matmul %20, %22, %cst_20 {dimension_numbers = #tpu.dot_dimension_numbers<[1], [0], [0], [1], [0, 0, 1, 1], [], []>} : vector<128x144xbf16>, vector<144x256xbf16>, vector<128x256xf32> -> vector<128x256xf32>
    %24 = arith.addf %16, %23 : vector<128x256xf32>
    %c0_21 = arith.constant 0 : index
    %c1_22 = arith.constant 1 : index
    %c0_23 = arith.constant 0 : index
    %c0_24 = arith.constant 0 : index
    %25 = vector.load %arg1[%c0_21, %c1_22, %c0_23, %c0_24] : memref<1x10x18x144xf32, #tpu.memory_space<vmem>>, vector<1x8x16x144xf32>
    %26 = vector.shape_cast %25 : vector<1x8x16x144xf32> to vector<8x16x144xf32>
    %27 = vector.shape_cast %26 : vector<8x16x144xf32> to vector<128x144xf32>
    %28 = arith.truncf %27 : vector<128x144xf32> to vector<128x144xbf16>
    %c3 = arith.constant 3 : index
    %c0_25 = arith.constant 0 : index
    %c0_26 = arith.constant 0 : index
    %29 = vector.load %arg2[%c3, %c0_25, %c0_26] : memref<9x144x256xbf16, #tpu.memory_space<vmem>>, vector<1x144x256xbf16>
    %30 = vector.shape_cast %29 : vector<1x144x256xbf16> to vector<144x256xbf16>
    %cst_27 = arith.constant dense<0.000000e+00> : vector<128x256xf32>
    %31 = tpu.matmul %28, %30, %cst_27 {dimension_numbers = #tpu.dot_dimension_numbers<[1], [0], [0], [1], [0, 0, 1, 1], [], []>} : vector<128x144xbf16>, vector<144x256xbf16>, vector<128x256xf32> -> vector<128x256xf32>
    %32 = arith.addf %24, %31 : vector<128x256xf32>
    %c0_28 = arith.constant 0 : index
    %c1_29 = arith.constant 1 : index
    %c1_30 = arith.constant 1 : index
    %c0_31 = arith.constant 0 : index
    %33 = vector.load %arg1[%c0_28, %c1_29, %c1_30, %c0_31] : memref<1x10x18x144xf32, #tpu.memory_space<vmem>>, vector<1x8x16x144xf32>
    %34 = vector.shape_cast %33 : vector<1x8x16x144xf32> to vector<8x16x144xf32>
    %35 = vector.shape_cast %34 : vector<8x16x144xf32> to vector<128x144xf32>
    %36 = arith.truncf %35 : vector<128x144xf32> to vector<128x144xbf16>
    %c4 = arith.constant 4 : index
    %c0_32 = arith.constant 0 : index
    %c0_33 = arith.constant 0 : index
    %37 = vector.load %arg2[%c4, %c0_32, %c0_33] : memref<9x144x256xbf16, #tpu.memory_space<vmem>>, vector<1x144x256xbf16>
    %38 = vector.shape_cast %37 : vector<1x144x256xbf16> to vector<144x256xbf16>
    %cst_34 = arith.constant dense<0.000000e+00> : vector<128x256xf32>
    %39 = tpu.matmul %36, %38, %cst_34 {dimension_numbers = #tpu.dot_dimension_numbers<[1], [0], [0], [1], [0, 0, 1, 1], [], []>} : vector<128x144xbf16>, vector<144x256xbf16>, vector<128x256xf32> -> vector<128x256xf32>
    %40 = arith.addf %32, %39 : vector<128x256xf32>
    %c0_35 = arith.constant 0 : index
    %c1_36 = arith.constant 1 : index
    %c2_37 = arith.constant 2 : index
    %c0_38 = arith.constant 0 : index
    %41 = vector.load %arg1[%c0_35, %c1_36, %c2_37, %c0_38] : memref<1x10x18x144xf32, #tpu.memory_space<vmem>>, vector<1x8x16x144xf32>
    %42 = vector.shape_cast %41 : vector<1x8x16x144xf32> to vector<8x16x144xf32>
    %43 = vector.shape_cast %42 : vector<8x16x144xf32> to vector<128x144xf32>
    %44 = arith.truncf %43 : vector<128x144xf32> to vector<128x144xbf16>
    %c5 = arith.constant 5 : index
    %c0_39 = arith.constant 0 : index
    %c0_40 = arith.constant 0 : index
    %45 = vector.load %arg2[%c5, %c0_39, %c0_40] : memref<9x144x256xbf16, #tpu.memory_space<vmem>>, vector<1x144x256xbf16>
    %46 = vector.shape_cast %45 : vector<1x144x256xbf16> to vector<144x256xbf16>
    %cst_41 = arith.constant dense<0.000000e+00> : vector<128x256xf32>
    %47 = tpu.matmul %44, %46, %cst_41 {dimension_numbers = #tpu.dot_dimension_numbers<[1], [0], [0], [1], [0, 0, 1, 1], [], []>} : vector<128x144xbf16>, vector<144x256xbf16>, vector<128x256xf32> -> vector<128x256xf32>
    %48 = arith.addf %40, %47 : vector<128x256xf32>
    %c0_42 = arith.constant 0 : index
    %c2_43 = arith.constant 2 : index
    %c0_44 = arith.constant 0 : index
    %c0_45 = arith.constant 0 : index
    %49 = vector.load %arg1[%c0_42, %c2_43, %c0_44, %c0_45] : memref<1x10x18x144xf32, #tpu.memory_space<vmem>>, vector<1x8x16x144xf32>
    %50 = vector.shape_cast %49 : vector<1x8x16x144xf32> to vector<8x16x144xf32>
    %51 = vector.shape_cast %50 : vector<8x16x144xf32> to vector<128x144xf32>
    %52 = arith.truncf %51 : vector<128x144xf32> to vector<128x144xbf16>
    %c6 = arith.constant 6 : index
    %c0_46 = arith.constant 0 : index
    %c0_47 = arith.constant 0 : index
    %53 = vector.load %arg2[%c6, %c0_46, %c0_47] : memref<9x144x256xbf16, #tpu.memory_space<vmem>>, vector<1x144x256xbf16>
    %54 = vector.shape_cast %53 : vector<1x144x256xbf16> to vector<144x256xbf16>
    %cst_48 = arith.constant dense<0.000000e+00> : vector<128x256xf32>
    %55 = tpu.matmul %52, %54, %cst_48 {dimension_numbers = #tpu.dot_dimension_numbers<[1], [0], [0], [1], [0, 0, 1, 1], [], []>} : vector<128x144xbf16>, vector<144x256xbf16>, vector<128x256xf32> -> vector<128x256xf32>
    %56 = arith.addf %48, %55 : vector<128x256xf32>
    %c0_49 = arith.constant 0 : index
    %c2_50 = arith.constant 2 : index
    %c1_51 = arith.constant 1 : index
    %c0_52 = arith.constant 0 : index
    %57 = vector.load %arg1[%c0_49, %c2_50, %c1_51, %c0_52] : memref<1x10x18x144xf32, #tpu.memory_space<vmem>>, vector<1x8x16x144xf32>
    %58 = vector.shape_cast %57 : vector<1x8x16x144xf32> to vector<8x16x144xf32>
    %59 = vector.shape_cast %58 : vector<8x16x144xf32> to vector<128x144xf32>
    %60 = arith.truncf %59 : vector<128x144xf32> to vector<128x144xbf16>
    %c7 = arith.constant 7 : index
    %c0_53 = arith.constant 0 : index
    %c0_54 = arith.constant 0 : index
    %61 = vector.load %arg2[%c7, %c0_53, %c0_54] : memref<9x144x256xbf16, #tpu.memory_space<vmem>>, vector<1x144x256xbf16>
    %62 = vector.shape_cast %61 : vector<1x144x256xbf16> to vector<144x256xbf16>
    %cst_55 = arith.constant dense<0.000000e+00> : vector<128x256xf32>
    %63 = tpu.matmul %60, %62, %cst_55 {dimension_numbers = #tpu.dot_dimension_numbers<[1], [0], [0], [1], [0, 0, 1, 1], [], []>} : vector<128x144xbf16>, vector<144x256xbf16>, vector<128x256xf32> -> vector<128x256xf32>
    %64 = arith.addf %56, %63 : vector<128x256xf32>
    %c0_56 = arith.constant 0 : index
    %c2_57 = arith.constant 2 : index
    %c2_58 = arith.constant 2 : index
    %c0_59 = arith.constant 0 : index
    %65 = vector.load %arg1[%c0_56, %c2_57, %c2_58, %c0_59] : memref<1x10x18x144xf32, #tpu.memory_space<vmem>>, vector<1x8x16x144xf32>
    %66 = vector.shape_cast %65 : vector<1x8x16x144xf32> to vector<8x16x144xf32>
    %67 = vector.shape_cast %66 : vector<8x16x144xf32> to vector<128x144xf32>
    %68 = arith.truncf %67 : vector<128x144xf32> to vector<128x144xbf16>
    %c8 = arith.constant 8 : index
    %c0_60 = arith.constant 0 : index
    %c0_61 = arith.constant 0 : index
    %69 = vector.load %arg2[%c8, %c0_60, %c0_61] : memref<9x144x256xbf16, #tpu.memory_space<vmem>>, vector<1x144x256xbf16>
    %70 = vector.shape_cast %69 : vector<1x144x256xbf16> to vector<144x256xbf16>
    %cst_62 = arith.constant dense<0.000000e+00> : vector<128x256xf32>
    %71 = tpu.matmul %68, %70, %cst_62 {dimension_numbers = #tpu.dot_dimension_numbers<[1], [0], [0], [1], [0, 0, 1, 1], [], []>} : vector<128x144xbf16>, vector<144x256xbf16>, vector<128x256xf32> -> vector<128x256xf32>
    %72 = arith.addf %64, %71 : vector<128x256xf32>
    %c0_63 = arith.constant 0 : index
    %c0_64 = arith.constant 0 : index
    %73 = vector.load %arg3[%c0_63, %c0_64] : memref<1x256xf32, #tpu.memory_space<vmem>>, vector<1x256xf32>
    %74 = vector.broadcast %73 : vector<1x256xf32> to vector<128x256xf32>
    %75 = arith.addf %72, %74 : vector<128x256xf32>
    %cst_65 = arith.constant 0.000000e+00 : f32
    %76 = vector.broadcast %cst_65 : f32 to vector<128x256xf32>
    %77 = arith.maximumf %75, %76 : vector<128x256xf32>
    %78 = vector.shape_cast %77 : vector<128x256xf32> to vector<4x32x256xf32>
    %79 = vector.extract_strided_slice %78 {offsets = [0, 0, 0], sizes = [4, 16, 256], strides = [1, 1, 1]} : vector<4x32x256xf32> to vector<4x16x256xf32>
    %80 = vector.extract_strided_slice %78 {offsets = [0, 16, 0], sizes = [4, 16, 256], strides = [1, 1, 1]} : vector<4x32x256xf32> to vector<4x16x256xf32>
    %81 = arith.addf %79, %80 : vector<4x16x256xf32>
    %cst_66 = arith.constant 5.000000e-01 : f32
    %82 = vector.broadcast %cst_66 : f32 to vector<4x16x256xf32>
    %83 = arith.mulf %81, %82 : vector<4x16x256xf32>
    %84 = vector.shape_cast %83 : vector<4x16x256xf32> to vector<64x256xf32>
    %c0_67 = arith.constant 0 : index
    %c0_68 = arith.constant 0 : index
    %c0_69 = arith.constant 0 : index
    %85 = vector.load %arg4[%c0_67, %c0_68, %c0_69] : memref<1x64x256xf32, #tpu.memory_space<vmem>>, vector<1x64x256xf32>
    %86 = vector.shape_cast %85 : vector<1x64x256xf32> to vector<64x256xf32>
    %87 = vector.shape_cast %84 : vector<64x256xf32> to vector<1x64x256xf32>
    tpu.vector_store %arg4[%c0_67, %c0_68, %c0_69], %87 {strides = array<i32>} : memref<1x64x256xf32, #tpu.memory_space<vmem>>, vector<1x64x256xf32>,
    return
  }
  func.func @transform_0(%arg0: i32) -> (i32, i32, i32, i32) {
    %c0_i32 = arith.constant 0 : i32
    %c0_i32_0 = arith.constant 0 : i32
    %c0_i32_1 = arith.constant 0 : i32
    %c0_i32_2 = arith.constant 0 : i32
    return %arg0, %c0_i32, %c0_i32_0, %c0_i32_1 : i32, i32, i32, i32
  }
  func.func @transform_1(%arg0: i32) -> (i32, i32, i32) {
    %c0_i32 = arith.constant 0 : i32
    %c0_i32_0 = arith.constant 0 : i32
    %c0_i32_1 = arith.constant 0 : i32
    %c0_i32_2 = arith.constant 0 : i32
    return %c0_i32, %c0_i32_0, %c0_i32_1 : i32, i32, i32
  }
  func.func @transform_2(%arg0: i32) -> (i32, i32) {
    %c0_i32 = arith.constant 0 : i32
    %c0_i32_0 = arith.constant 0 : i32
    %c0_i32_1 = arith.constant 0 : i32
    return %c0_i32, %c0_i32_0 : i32, i32
  }
  func.func @transform_3(%arg0: i32) -> (i32, i32, i32) {
    %c0_i32 = arith.constant 0 : i32
    %c0_i32_0 = arith.constant 0 : i32
    %c0_i32_1 = arith.constant 0 : i32
    return %arg0, %c0_i32, %c0_i32_0 : i32, i32, i32
  }
}

module attributes {stable_mosaic.version = 11 : i64} {
  func.func @_bilstm_head_kernel(%arg0: i32, %arg1: memref<65x256xf32, #tpu.memory_space<vmem>>, %arg2: memref<512x65xbf16, #tpu.memory_space<vmem>>, %arg3: memref<64x16xf32, #tpu.memory_space<vmem>>, %arg4: memref<1x33xf32, #tpu.memory_space<vmem>>, %arg5: memref<1x256xf32, #tpu.memory_space<vmem>>) attributes {dimension_semantics = [#tpu.dimension_semantics<parallel>], iteration_bounds = array<i64: 2>, scalar_prefetch = 0 : i64, scratch_operands = 0 : i64, tpu.core_type = #tpu.core_type<tc>, window_params = [{transform_indices = @transform_0, window_bounds = array<i64: 65, 256>}, {pipeline_mode = #tpu.pipeline_mode<synchronous>, transform_indices = @transform_1, window_bounds = array<i64: 512, 65>}, {pipeline_mode = #tpu.pipeline_mode<synchronous>, transform_indices = @transform_2, window_bounds = array<i64: 64, 16>}, {pipeline_mode = #tpu.pipeline_mode<synchronous>, transform_indices = @transform_3, window_bounds = array<i64: 1, 33>}, {transform_indices = @transform_4, window_bounds = array<i64: 1, 256>}]} {
    %c0 = arith.constant 0 : index
    %c0_0 = arith.constant 0 : index
    %0 = vector.load %arg2[%c0, %c0_0] : memref<512x65xbf16, #tpu.memory_space<vmem>>, vector<512x65xbf16>
    %c0_1 = arith.constant 0 : index
    %c0_2 = arith.constant 0 : index
    %1 = vector.load %arg1[%c0_1, %c0_2] : memref<65x256xf32, #tpu.memory_space<vmem>>, vector<65x256xf32>
    %2 = arith.truncf %1 : vector<65x256xf32> to vector<65x256xbf16>
    %cst = arith.constant dense<0.000000e+00> : vector<512x256xf32>
    %3 = tpu.matmul %0, %2, %cst {dimension_numbers = #tpu.dot_dimension_numbers<[1], [0], [0], [1], [0, 0, 1, 1], [], []>} : vector<512x65xbf16>, vector<65x256xbf16>, vector<512x256xf32> -> vector<512x256xf32>
    %c0_3 = arith.constant 0 : index
    %c0_4 = arith.constant 0 : index
    %4 = vector.load %arg3[%c0_3, %c0_4] : memref<64x16xf32, #tpu.memory_space<vmem>>, vector<64x16xf32>
    %cst_5 = arith.constant 0.000000e+00 : f32
    %5 = vector.broadcast %cst_5 : f32 to vector<16x256xf32>
    %cst_6 = arith.constant 0.000000e+00 : f32
    %6 = vector.broadcast %cst_6 : f32 to vector<16x256xf32>
    %7 = vector.extract_strided_slice %3 {offsets = [0, 0], sizes = [64, 256], strides = [1, 1]} : vector<512x256xf32> to vector<64x256xf32>
    %cst_7 = arith.constant dense<0.000000e+00> : vector<64x256xf32>
    %8 = tpu.matmul %4, %5, %cst_7 {dimension_numbers = #tpu.dot_dimension_numbers<[1], [0], [0], [1], [0, 0, 1, 1], [], []>} : vector<64x16xf32>, vector<16x256xf32>, vector<64x256xf32> -> vector<64x256xf32>
    %9 = arith.addf %7, %8 : vector<64x256xf32>
    %10 = vector.extract_strided_slice %9 {offsets = [0, 0], sizes = [16, 256], strides = [1, 1]} : vector<64x256xf32> to vector<16x256xf32>
    %11 = arith.negf %10 : vector<16x256xf32>
    %12 = math.exp %11 : vector<16x256xf32>
    %cst_8 = arith.constant 1.000000e+00 : f32
    %13 = vector.broadcast %cst_8 : f32 to vector<16x256xf32>
    %14 = arith.addf %13, %12 : vector<16x256xf32>
    %15 = arith.divf %13, %14 : vector<16x256xf32>
    %16 = vector.extract_strided_slice %9 {offsets = [16, 0], sizes = [16, 256], strides = [1, 1]} : vector<64x256xf32> to vector<16x256xf32>
    %17 = arith.negf %16 : vector<16x256xf32>
    %18 = math.exp %17 : vector<16x256xf32>
    %cst_9 = arith.constant 1.000000e+00 : f32
    %19 = vector.broadcast %cst_9 : f32 to vector<16x256xf32>
    %20 = arith.addf %19, %18 : vector<16x256xf32>
    %21 = arith.divf %19, %20 : vector<16x256xf32>
    %22 = vector.extract_strided_slice %9 {offsets = [32, 0], sizes = [16, 256], strides = [1, 1]} : vector<64x256xf32> to vector<16x256xf32>
    %23 = math.tanh %22 : vector<16x256xf32>
    %24 = vector.extract_strided_slice %9 {offsets = [48, 0], sizes = [16, 256], strides = [1, 1]} : vector<64x256xf32> to vector<16x256xf32>
    %25 = arith.negf %24 : vector<16x256xf32>
    %26 = math.exp %25 : vector<16x256xf32>
    %cst_10 = arith.constant 1.000000e+00 : f32
    %27 = vector.broadcast %cst_10 : f32 to vector<16x256xf32>
    %28 = arith.addf %27, %26 : vector<16x256xf32>
    %29 = arith.divf %27, %28 : vector<16x256xf32>
    %30 = arith.mulf %21, %6 : vector<16x256xf32>
    %31 = arith.mulf %15, %23 : vector<16x256xf32>
    %32 = arith.addf %30, %31 : vector<16x256xf32>
    %33 = math.tanh %32 : vector<16x256xf32>
    %34 = arith.mulf %29, %33 : vector<16x256xf32>
    %35 = vector.extract_strided_slice %3 {offsets = [128, 0], sizes = [64, 256], strides = [1, 1]} : vector<512x256xf32> to vector<64x256xf32>
    %cst_11 = arith.constant dense<0.000000e+00> : vector<64x256xf32>
    %36 = tpu.matmul %4, %34, %cst_11 {dimension_numbers = #tpu.dot_dimension_numbers<[1], [0], [0], [1], [0, 0, 1, 1], [], []>} : vector<64x16xf32>, vector<16x256xf32>, vector<64x256xf32> -> vector<64x256xf32>
    %37 = arith.addf %35, %36 : vector<64x256xf32>
    %38 = vector.extract_strided_slice %37 {offsets = [0, 0], sizes = [16, 256], strides = [1, 1]} : vector<64x256xf32> to vector<16x256xf32>
    %39 = arith.negf %38 : vector<16x256xf32>
    %40 = math.exp %39 : vector<16x256xf32>
    %cst_12 = arith.constant 1.000000e+00 : f32
    %41 = vector.broadcast %cst_12 : f32 to vector<16x256xf32>
    %42 = arith.addf %41, %40 : vector<16x256xf32>
    %43 = arith.divf %41, %42 : vector<16x256xf32>
    %44 = vector.extract_strided_slice %37 {offsets = [16, 0], sizes = [16, 256], strides = [1, 1]} : vector<64x256xf32> to vector<16x256xf32>
    %45 = arith.negf %44 : vector<16x256xf32>
    %46 = math.exp %45 : vector<16x256xf32>
    %cst_13 = arith.constant 1.000000e+00 : f32
    %47 = vector.broadcast %cst_13 : f32 to vector<16x256xf32>
    %48 = arith.addf %47, %46 : vector<16x256xf32>
    %49 = arith.divf %47, %48 : vector<16x256xf32>
    %50 = vector.extract_strided_slice %37 {offsets = [32, 0], sizes = [16, 256], strides = [1, 1]} : vector<64x256xf32> to vector<16x256xf32>
    %51 = math.tanh %50 : vector<16x256xf32>
    %52 = vector.extract_strided_slice %37 {offsets = [48, 0], sizes = [16, 256], strides = [1, 1]} : vector<64x256xf32> to vector<16x256xf32>
    %53 = arith.negf %52 : vector<16x256xf32>
    %54 = math.exp %53 : vector<16x256xf32>
    %cst_14 = arith.constant 1.000000e+00 : f32
    %55 = vector.broadcast %cst_14 : f32 to vector<16x256xf32>
    %56 = arith.addf %55, %54 : vector<16x256xf32>
    %57 = arith.divf %55, %56 : vector<16x256xf32>
    %58 = arith.mulf %49, %32 : vector<16x256xf32>
    %59 = arith.mulf %43, %51 : vector<16x256xf32>
    %60 = arith.addf %58, %59 : vector<16x256xf32>
    %61 = math.tanh %60 : vector<16x256xf32>
    %62 = arith.mulf %57, %61 : vector<16x256xf32>
    %63 = vector.extract_strided_slice %3 {offsets = [256, 0], sizes = [64, 256], strides = [1, 1]} : vector<512x256xf32> to vector<64x256xf32>
    %cst_15 = arith.constant dense<0.000000e+00> : vector<64x256xf32>
    %64 = tpu.matmul %4, %62, %cst_15 {dimension_numbers = #tpu.dot_dimension_numbers<[1], [0], [0], [1], [0, 0, 1, 1], [], []>} : vector<64x16xf32>, vector<16x256xf32>, vector<64x256xf32> -> vector<64x256xf32>
    %65 = arith.addf %63, %64 : vector<64x256xf32>
    %66 = vector.extract_strided_slice %65 {offsets = [0, 0], sizes = [16, 256], strides = [1, 1]} : vector<64x256xf32> to vector<16x256xf32>
    %67 = arith.negf %66 : vector<16x256xf32>
    %68 = math.exp %67 : vector<16x256xf32>
    %cst_16 = arith.constant 1.000000e+00 : f32
    %69 = vector.broadcast %cst_16 : f32 to vector<16x256xf32>
    %70 = arith.addf %69, %68 : vector<16x256xf32>
    %71 = arith.divf %69, %70 : vector<16x256xf32>
    %72 = vector.extract_strided_slice %65 {offsets = [16, 0], sizes = [16, 256], strides = [1, 1]} : vector<64x256xf32> to vector<16x256xf32>
    %73 = arith.negf %72 : vector<16x256xf32>
    %74 = math.exp %73 : vector<16x256xf32>
    %cst_17 = arith.constant 1.000000e+00 : f32
    %75 = vector.broadcast %cst_17 : f32 to vector<16x256xf32>
    %76 = arith.addf %75, %74 : vector<16x256xf32>
    %77 = arith.divf %75, %76 : vector<16x256xf32>
    %78 = vector.extract_strided_slice %65 {offsets = [32, 0], sizes = [16, 256], strides = [1, 1]} : vector<64x256xf32> to vector<16x256xf32>
    %79 = math.tanh %78 : vector<16x256xf32>
    %80 = vector.extract_strided_slice %65 {offsets = [48, 0], sizes = [16, 256], strides = [1, 1]} : vector<64x256xf32> to vector<16x256xf32>
    %81 = arith.negf %80 : vector<16x256xf32>
    %82 = math.exp %81 : vector<16x256xf32>
    %cst_18 = arith.constant 1.000000e+00 : f32
    %83 = vector.broadcast %cst_18 : f32 to vector<16x256xf32>
    %84 = arith.addf %83, %82 : vector<16x256xf32>
    %85 = arith.divf %83, %84 : vector<16x256xf32>
    %86 = arith.mulf %77, %60 : vector<16x256xf32>
    %87 = arith.mulf %71, %79 : vector<16x256xf32>
    %88 = arith.addf %86, %87 : vector<16x256xf32>
    %89 = math.tanh %88 : vector<16x256xf32>
    %90 = arith.mulf %85, %89 : vector<16x256xf32>
    %91 = vector.extract_strided_slice %3 {offsets = [384, 0], sizes = [64, 256], strides = [1, 1]} : vector<512x256xf32> to vector<64x256xf32>
    %cst_19 = arith.constant dense<0.000000e+00> : vector<64x256xf32>
    %92 = tpu.matmul %4, %90, %cst_19 {dimension_numbers = #tpu.dot_dimension_numbers<[1], [0], [0], [1], [0, 0, 1, 1], [], []>} : vector<64x16xf32>, vector<16x256xf32>, vector<64x256xf32> -> vector<64x256xf32>
    %93 = arith.addf %91, %92 : vector<64x256xf32>
    %94 = vector.extract_strided_slice %93 {offsets = [0, 0], sizes = [16, 256], strides = [1, 1]} : vector<64x256xf32> to vector<16x256xf32>
    %95 = arith.negf %94 : vector<16x256xf32>
    %96 = math.exp %95 : vector<16x256xf32>
    %cst_20 = arith.constant 1.000000e+00 : f32
    %97 = vector.broadcast %cst_20 : f32 to vector<16x256xf32>
    %98 = arith.addf %97, %96 : vector<16x256xf32>
    %99 = arith.divf %97, %98 : vector<16x256xf32>
    %100 = vector.extract_strided_slice %93 {offsets = [16, 0], sizes = [16, 256], strides = [1, 1]} : vector<64x256xf32> to vector<16x256xf32>
    %101 = arith.negf %100 : vector<16x256xf32>
    %102 = math.exp %101 : vector<16x256xf32>
    %cst_21 = arith.constant 1.000000e+00 : f32
    %103 = vector.broadcast %cst_21 : f32 to vector<16x256xf32>
    %104 = arith.addf %103, %102 : vector<16x256xf32>
    %105 = arith.divf %103, %104 : vector<16x256xf32>
    %106 = vector.extract_strided_slice %93 {offsets = [32, 0], sizes = [16, 256], strides = [1, 1]} : vector<64x256xf32> to vector<16x256xf32>
    %107 = math.tanh %106 : vector<16x256xf32>
    %108 = vector.extract_strided_slice %93 {offsets = [48, 0], sizes = [16, 256], strides = [1, 1]} : vector<64x256xf32> to vector<16x256xf32>
    %109 = arith.negf %108 : vector<16x256xf32>
    %110 = math.exp %109 : vector<16x256xf32>
    %cst_22 = arith.constant 1.000000e+00 : f32
    %111 = vector.broadcast %cst_22 : f32 to vector<16x256xf32>
    %112 = arith.addf %111, %110 : vector<16x256xf32>
    %113 = arith.divf %111, %112 : vector<16x256xf32>
    %114 = arith.mulf %105, %88 : vector<16x256xf32>
    %115 = arith.mulf %99, %107 : vector<16x256xf32>
    %116 = arith.addf %114, %115 : vector<16x256xf32>
    %117 = math.tanh %116 : vector<16x256xf32>
    %118 = arith.mulf %113, %117 : vector<16x256xf32>
    %119 = vector.extract_strided_slice %3 {offsets = [448, 0], sizes = [64, 256], strides = [1, 1]} : vector<512x256xf32> to vector<64x256xf32>
    %cst_23 = arith.constant 0.000000e+00 : f32
    %120 = vector.broadcast %cst_23 : f32 to vector<16x256xf32>
    %121 = vector.extract_strided_slice %119 {offsets = [0, 0], sizes = [16, 256], strides = [1, 1]} : vector<64x256xf32> to vector<16x256xf32>
    %122 = arith.negf %121 : vector<16x256xf32>
    %123 = math.exp %122 : vector<16x256xf32>
    %cst_24 = arith.constant 1.000000e+00 : f32
    %124 = vector.broadcast %cst_24 : f32 to vector<16x256xf32>
    %125 = arith.addf %124, %123 : vector<16x256xf32>
    %126 = arith.divf %124, %125 : vector<16x256xf32>
    %127 = vector.extract_strided_slice %119 {offsets = [16, 0], sizes = [16, 256], strides = [1, 1]} : vector<64x256xf32> to vector<16x256xf32>
    %128 = arith.negf %127 : vector<16x256xf32>
    %129 = math.exp %128 : vector<16x256xf32>
    %cst_25 = arith.constant 1.000000e+00 : f32
    %130 = vector.broadcast %cst_25 : f32 to vector<16x256xf32>
    %131 = arith.addf %130, %129 : vector<16x256xf32>
    %132 = arith.divf %130, %131 : vector<16x256xf32>
    %133 = vector.extract_strided_slice %119 {offsets = [32, 0], sizes = [16, 256], strides = [1, 1]} : vector<64x256xf32> to vector<16x256xf32>
    %134 = math.tanh %133 : vector<16x256xf32>
    %135 = vector.extract_strided_slice %119 {offsets = [48, 0], sizes = [16, 256], strides = [1, 1]} : vector<64x256xf32> to vector<16x256xf32>
    %136 = arith.negf %135 : vector<16x256xf32>
    %137 = math.exp %136 : vector<16x256xf32>
    %cst_26 = arith.constant 1.000000e+00 : f32
    %138 = vector.broadcast %cst_26 : f32 to vector<16x256xf32>
    %139 = arith.addf %138, %137 : vector<16x256xf32>
    %140 = arith.divf %138, %139 : vector<16x256xf32>
    %141 = arith.mulf %132, %120 : vector<16x256xf32>
    %142 = arith.mulf %126, %134 : vector<16x256xf32>
    %143 = arith.addf %141, %142 : vector<16x256xf32>
    %144 = math.tanh %143 : vector<16x256xf32>
    %145 = arith.mulf %140, %144 : vector<16x256xf32>
    %cst_27 = arith.constant 1.000000e+00 : f32
    %146 = vector.broadcast %cst_27 : f32 to vector<1x256xf32>
    %147 = tpu.concatenate %118, %145, %146 in 0 : vector<16x256xf32>, vector<16x256xf32>, vector<1x256xf32> -> vector<33x256xf32>
    %c0_28 = arith.constant 0 : index
    %c0_29 = arith.constant 0 : index
    %148 = vector.load %arg4[%c0_28, %c0_29] : memref<1x33xf32, #tpu.memory_space<vmem>>, vector<1x33xf32>
    %cst_30 = arith.constant dense<0.000000e+00> : vector<1x256xf32>
    %149 = tpu.matmul %148, %147, %cst_30 {dimension_numbers = #tpu.dot_dimension_numbers<[1], [0], [0], [1], [0, 0, 1, 1], [], []>} : vector<1x33xf32>, vector<33x256xf32>, vector<1x256xf32> -> vector<1x256xf32>
    %c0_31 = arith.constant 0 : index
    %c0_32 = arith.constant 0 : index
    %150 = vector.load %arg5[%c0_31, %c0_32] : memref<1x256xf32, #tpu.memory_space<vmem>>, vector<1x256xf32>
    tpu.vector_store %arg5[%c0_31, %c0_32], %149 {strides = array<i32>} : memref<1x256xf32, #tpu.memory_space<vmem>>, vector<1x256xf32>,
    return
  }
  func.func @transform_0(%arg0: i32) -> (i32, i32) {
    %c0_i32 = arith.constant 0 : i32
    %c0_i32_0 = arith.constant 0 : i32
    return %c0_i32, %arg0 : i32, i32
  }
  func.func @transform_1(%arg0: i32) -> (i32, i32) {
    %c0_i32 = arith.constant 0 : i32
    %c0_i32_0 = arith.constant 0 : i32
    %c0_i32_1 = arith.constant 0 : i32
    return %c0_i32, %c0_i32_0 : i32, i32
  }
  func.func @transform_2(%arg0: i32) -> (i32, i32) {
    %c0_i32 = arith.constant 0 : i32
    %c0_i32_0 = arith.constant 0 : i32
    %c0_i32_1 = arith.constant 0 : i32
    return %c0_i32, %c0_i32_0 : i32, i32
  }
  func.func @transform_3(%arg0: i32) -> (i32, i32) {
    %c0_i32 = arith.constant 0 : i32
    %c0_i32_0 = arith.constant 0 : i32
    %c0_i32_1 = arith.constant 0 : i32
    return %c0_i32, %c0_i32_0 : i32, i32
  }
  func.func @transform_4(%arg0: i32) -> (i32, i32) {
    %c0_i32 = arith.constant 0 : i32
    %c0_i32_0 = arith.constant 0 : i32
    return %c0_i32, %arg0 : i32, i32
  }
}

</mosaic_0001>

<llo_original>
// kernel: tile.18
$region0: #{tile.18}
  #allocation0 [shape = 's32[1]{0}', space=sflag, size = 0x4, scoped, tag = 'scoped memory for tile.18']
  %s0 = inlined_call_operand.vmem [shape: f32[8], index: 0, kind: input, shape index: {}]
  %s1 = inlined_call_operand.vmem [shape: f32[16,8], index: 1, kind: output, shape index: {}]
  // Predicated region
  $region2: #{tile.18} parent=0 // pred_check
    _
  $region3: #{tile.18} parent=0 // pred_check_branch
    %3 = sbr.rel (0) target = $region5
  $region4: #{tile.18} parent=0 // pred_region
    _
  $region5: #{tile.18} parent=0 // pred_fallthru
    _
  %v4 = vld [vmem:[%s0] ss:$0 sm:$0xff]
  %5 = vst [vmem:[%s1] sm:$0xff] %v4
  %s6 = scalar_lea.vmem %s1, 8
  %7 = vst [vmem:[%s6] sm:$0xff] %v4

// kernel: tile.19
$region0: #{tile.19}
  %s0 = inlined_call_operand.vmem [shape: f32[16,8], index: 0, kind: input, shape index: {}]
  %s1 = inlined_call_operand.vmem [shape: f32[1,128], index: 1, kind: output, shape index: {}]
  $region1: #{tile.19} parent=0
    #allocation0 [shape = 'u8[4096]{0}', space=vmem, size = 0x1000, scoped, tag = 'scoped mem for output reshape']
    %v2 = vld [vmem:[%s0] sm:$0x1]
    %vm3 = vcmask 64512
    %4 = vst.msk [vmem:[#allocation0] sm:$0x1] %vm3, %v2
    %s5 = scalar_lea.vmem %s0, 15
    %v6 = vld [vmem:[%s5] sm:$0x1]
    %7 = vrot.lane.b32.xlu0 %v6, 120
    %v8 = vpop.permute.xlu0 %7
    %vm9 = vcmask 1048512
    %10 = vst.msk [vmem:[#allocation0] sm:$0x1] %vm9, %v8
    %s11 = scalar_lea.vmem %s0, 14
    %v12 = vld [vmem:[%s11] sm:$0x1]
    %13 = vrot.lane.b32.xlu0 %v12, 112
    %v14 = vpop.permute.xlu0 %13
    %vm15 = vcmask 982912
    %16 = vst.msk [vmem:[#allocation0] sm:$0x1] %vm15, %v14
    %s17 = scalar_lea.vmem %s0, 13
    %v18 = vld [vmem:[%s17] sm:$0x1]
    %19 = vrot.lane.b32.xlu0 %v18, 104
    %v20 = vpop.permute.xlu0 %19
    %vm21 = vcmask 917312
    %22 = vst.msk [vmem:[#allocation0] sm:$0x1] %vm21, %v20
    %s23 = scalar_lea.vmem %s0, 12
    %v24 = vld [vmem:[%s23] sm:$0x1]
    %25 = vrot.lane.b32.xlu0 %v24, 96
    %v26 = vpop.permute.xlu0 %25
    %vm27 = vcmask 851712
    %28 = vst.msk [vmem:[#allocation0] sm:$0x1] %vm27, %v26
    %s29 = scalar_lea.vmem %s0, 11
    %v30 = vld [vmem:[%s29] sm:$0x1]
    %31 = vrot.lane.b32.xlu0 %v30, 88
    %v32 = vpop.permute.xlu0 %31
    %vm33 = vcmask 786112
    %34 = vst.msk [vmem:[#allocation0] sm:$0x1] %vm33, %v32
    %s35 = scalar_lea.vmem %s0, 10
    %v36 = vld [vmem:[%s35] sm:$0x1]
    %37 = vrot.lane.b32.xlu0 %v36, 80
    %v38 = vpop.permute.xlu0 %37
    %vm39 = vcmask 720512
    %40 = vst.msk [vmem:[#allocation0] sm:$0x1] %vm39, %v38
    %s41 = scalar_lea.vmem %s0, 9
    %v42 = vld [vmem:[%s41] sm:$0x1]
    %43 = vrot.lane.b32.xlu0 %v42, 72
    %v44 = vpop.permute.xlu0 %43
    %vm45 = vcmask 654912
    %46 = vst.msk [vmem:[#allocation0] sm:$0x1] %vm45, %v44
    %s47 = scalar_lea.vmem %s0, 8
    %v48 = vld [vmem:[%s47] sm:$0x1]
    %49 = vrot.lane.b32.xlu0 %v48, 64
    %v50 = vpop.permute.xlu0 %49
    %vm51 = vcmask 589312
    %52 = vst.msk [vmem:[#allocation0] sm:$0x1] %vm51, %v50
    %s53 = scalar_lea.vmem %s0, 7
    %v54 = vld [vmem:[%s53] sm:$0x1]
    %55 = vrot.lane.b32.xlu0 %v54, 56
    %v56 = vpop.permute.xlu0 %55
    %vm57 = vcmask 523712
    %58 = vst.msk [vmem:[#allocation0] sm:$0x1] %vm57, %v56
    %s59 = scalar_lea.vmem %s0, 6
    %v60 = vld [vmem:[%s59] sm:$0x1]
    %61 = vrot.lane.b32.xlu0 %v60, 48
    %v62 = vpop.permute.xlu0 %61
    %vm63 = vcmask 458112
    %64 = vst.msk [vmem:[#allocation0] sm:$0x1] %vm63, %v62
    %s65 = scalar_lea.vmem %s0, 5
    %v66 = vld [vmem:[%s65] sm:$0x1]
    %67 = vrot.lane.b32.xlu0 %v66, 40
    %v68 = vpop.permute.xlu0 %67
    %vm69 = vcmask 392512
    %70 = vst.msk [vmem:[#allocation0] sm:$0x1] %vm69, %v68
    %s71 = scalar_lea.vmem %s0, 4
    %v72 = vld [vmem:[%s71] sm:$0x1]
    %73 = vrot.lane.b32.xlu0 %v72, 32
    %v74 = vpop.permute.xlu0 %73
    %vm75 = vcmask 326912
    %76 = vst.msk [vmem:[#allocation0] sm:$0x1] %vm75, %v74
    %s77 = scalar_lea.vmem %s0, 3
    %v78 = vld [vmem:[%s77] sm:$0x1]
    %79 = vrot.lane.b32.xlu0 %v78, 24
    %v80 = vpop.permute.xlu0 %79
    %vm81 = vcmask 261312
    %82 = vst.msk [vmem:[#allocation0] sm:$0x1] %vm81, %v80
    %s83 = scalar_lea.vmem %s0, 2
    %v84 = vld [vmem:[%s83] sm:$0x1]
    %85 = vrot.lane.b32.xlu0 %v84, 16
    %v86 = vpop.permute.xlu0 %85
    %vm87 = vcmask 195712
    %88 = vst.msk [vmem:[#allocation0] sm:$0x1] %vm87, %v86
    %s89 = scalar_lea.vmem %s0, 1
    %v90 = vld [vmem:[%s89] sm:$0x1]
    %91 = vrot.lane.b32.xlu0 %v90, 8
    %v92 = vpop.permute.xlu0 %91
    %vm93 = vcmask 130112
    %94 = vst.msk [vmem:[#allocation0] sm:$0x1] %vm93, %v92
    %s96 = sshll.u32 1, 1
    %s97 = ssub.s32 %s96, 1
    %v99 = vld [vmem:[#allocation0] sm:%s97]
    %s100 = sshll.u32 1, 1
    %s101 = ssub.s32 %s100, 1
    %102 = vst [vmem:[%s1] sm:%s101] %v99

// kernel: cnn3d_lstm_lite_forward.3
$region0: #{cnn3d_lstm_lite_forward.3}
  #allocation0 [shape = 'u32[]', space=smem, size = 0x4, offset = 0x4, fixed_abs, tag = 'smem constant byte address 0x4 - core index']
  #allocation1 [shape = 'u32[144,128]{1,0:T(1,128)}', space=vmem, size = 0x12000, scoped, tag = 'internal scratch']
  %s0 = inlined_call_operand.vmem [shape: f32[2,10,18,72], index: 0, kind: input, shape index: {}]
  %s1 = inlined_call_operand.vmem [shape: bf16[9,72,128], index: 1, kind: input, shape index: {}]
  %s2 = inlined_call_operand.vmem [shape: f32[1,128], index: 2, kind: input, shape index: {}]
  %s3 = inlined_call_operand.vmem [shape: f32[2,128,128], index: 3, kind: output, shape index: {}]
  %s4 = sld [smem:[#allocation0]]
  $region45: #{cnn3d_lstm_lite_forward.3} parent=0
    _
  %s6 = ssub.s32 1, %s4
  %s7 = scalar_select 0, %s6, %s4
  loop: start=0, step=1, limit=4
  $region2: #{cnn3d_lstm_lite_forward.3} parent=0 // loop_pre_header
    _
  $region3: #{cnn3d_lstm_lite_forward.3} parent=0 // loop_header
    %s9 = sphi 0, %s13
    %p10 = scmp.ge.s32.totalorder %s9, 4
    %s19 = sphi 0, %s21
    %s22 = sphi 0, %s19
    %s23 = sphi 0, %s22
    %s39 = sphi 0, %s23
    %s43 = sphi 0, %s43
    %s45 = sphi 0, %s43
    %s46 = sphi 0, %s45
    %s60 = sphi 0, %s46
    %s64 = sphi 0, %s64
    %s66 = sphi 0, %s64
    %s67 = sphi 0, %s66
    %s81 = sphi 0, %s67
    %s87 = sphi 0, %s89
    %s90 = sphi 0, %s87
    %s91 = sphi 0, %s90
    %s107 = sphi 0, %s91
  $region4: #{cnn3d_lstm_lite_forward.3} parent=0 // loop_header_branch
    %12 = sbr.rel (%p10) target = $region8
  $region5: #{cnn3d_lstm_lite_forward.3} parent=0 // loop_body
    %s14 = ssub.s32 %s9, 1
    %s15 = ssub.s32 %s9, 2
    %s16 = sadd.s32 %s9, 1
    %s17 = ssub.s32 %s9, %s16
    %p18 = scmp.eq.s32.totalorder %s17, 0
    %s20 = sadd.s32 %s19, 1
    %s21 = scalar_select %p18, %s19, %s20
    %p24 = pneg %p18
    %p25 = scmp.eq.s32.totalorder %s9, 1
    %p26 = por %p24, %p25
    %p27 = scmp.ne.s32.totalorder %s19, %s22
    %p28 = scmp.eq.s32.totalorder %s9, 0
    %p29 = por %p27, %p28
    %p30 = scmp.ne.s32.totalorder %s19, %s22
    %p31 = scmp.eq.s32.totalorder %s14, 1
    %p32 = por %p30, %p31
    %p33 = scmp.ne.s32.totalorder %s22, %s23
    %p34 = scmp.eq.s32.totalorder %s14, 0
    %p35 = por %p33, %p34
    %p36 = scmp.ne.s32.totalorder %s22, %s23
    %p37 = scmp.eq.s32.totalorder %s15, 1
    %p38 = por %p36, %p37
    %p40 = scmp.ne.s32.totalorder %s23, %s39
    %p41 = scmp.eq.s32.totalorder %s15, 0
    %p42 = por %p40, %p41
    %s44 = sadd.s32 %s43, 1
    %p47 = scmp.eq.s32.totalorder %s9, 1
    %p48 = scmp.ne.s32.totalorder %s43, %s45
    %p49 = scmp.eq.s32.totalorder %s9, 0
    %p50 = por %p48, %p49
    %p51 = scmp.ne.s32.totalorder %s43, %s45
    %p52 = scmp.eq.s32.totalorder %s14, 1
    %p53 = por %p51, %p52
    %p54 = scmp.ne.s32.totalorder %s45, %s46
    %p55 = scmp.eq.s32.totalorder %s14, 0
    %p56 = por %p54, %p55
    %p57 = scmp.ne.s32.totalorder %s45, %s46
    %p58 = scmp.eq.s32.totalorder %s15, 1
    %p59 = por %p57, %p58
    %p61 = scmp.ne.s32.totalorder %s46, %s60
    %p62 = scmp.eq.s32.totalorder %s15, 0
    %p63 = por %p61, %p62
    %s65 = sadd.s32 %s64, 1
    %p68 = scmp.eq.s32.totalorder %s9, 1
    %p69 = scmp.ne.s32.totalorder %s64, %s66
    %p70 = scmp.eq.s32.totalorder %s9, 0
    %p71 = por %p69, %p70
    %p72 = scmp.ne.s32.totalorder %s64, %s66
    %p73 = scmp.eq.s32.totalorder %s14, 1
    %p74 = por %p72, %p73
    %p75 = scmp.ne.s32.totalorder %s66, %s67
    %p76 = scmp.eq.s32.totalorder %s14, 0
    %p77 = por %p75, %p76
    %p78 = scmp.ne.s32.totalorder %s66, %s67
    %p79 = scmp.eq.s32.totalorder %s15, 1
    %p80 = por %p78, %p79
    %p82 = scmp.ne.s32.totalorder %s67, %s81
    %p83 = scmp.eq.s32.totalorder %s15, 0
    %p84 = por %p82, %p83
    %s85 = ssub.s32 %s9, %s16
    %p86 = scmp.eq.s32.totalorder %s85, 0
    %s88 = sadd.s32 %s87, 1
    %s89 = scalar_select %p86, %s87, %s88
    %p92 = pneg %p86
    %p93 = scmp.eq.s32.totalorder %s9, 1
    %p94 = por %p92, %p93
    %p95 = scmp.ne.s32.totalorder %s87, %s90
    %p96 = scmp.eq.s32.totalorder %s9, 0
    %p97 = por %p95, %p96
    %p98 = scmp.ne.s32.totalorder %s87, %s90
    %p99 = scmp.eq.s32.totalorder %s14, 1
    %p100 = por %p98, %p99
    %p101 = scmp.ne.s32.totalorder %s90, %s91
    %p102 = scmp.eq.s32.totalorder %s14, 0
    %p103 = por %p101, %p102
    %p104 = scmp.ne.s32.totalorder %s90, %s91
    %p105 = scmp.eq.s32.totalorder %s15, 1
    %p106 = por %p104, %p105
    %p108 = scmp.ne.s32.totalorder %s91, %s107
    %p109 = scmp.eq.s32.totalorder %s15, 0
    %p110 = por %p108, %p109
    %p111 = scmp.le.s32.totalorder 1, %s9
    %p112 = scmp.lt.s32.totalorder %s9, 3
    %p113 = pnand %p111, %p112
    %p114 = pneg %p113
    // Predicated region
    $region9: #{cnn3d_lstm_lite_forward.3} parent=5 // pred_check
      _
    $region10: #{cnn3d_lstm_lite_forward.3} parent=5 // pred_check_branch
      %116 = sbr.rel (%p113) target = $region12
    $region11: #{cnn3d_lstm_lite_forward.3} parent=5 // pred_region
      %s117 = ssub.s32 %s9, 1
      // Predicated region
      $region13: #{cnn3d_lstm_lite_forward.3} parent=11 // pred_check
        %p118 = pneg %p56
      $region14: #{cnn3d_lstm_lite_forward.3} parent=11 // pred_check_branch
        %120 = sbr.rel (%p118) target = $region16
      $region15: #{cnn3d_lstm_lite_forward.3} parent=11 // pred_region
        _
      $region16: #{cnn3d_lstm_lite_forward.3} parent=11 // pred_fallthru
        _
      // Predicated region
      $region17: #{cnn3d_lstm_lite_forward.3} parent=11 // pred_check
        %p121 = pneg %p77
      $region18: #{cnn3d_lstm_lite_forward.3} parent=11 // pred_check_branch
        %123 = sbr.rel (%p121) target = $region20
      $region19: #{cnn3d_lstm_lite_forward.3} parent=11 // pred_region
        _
      $region20: #{cnn3d_lstm_lite_forward.3} parent=11 // pred_fallthru
        _
    $region12: #{cnn3d_lstm_lite_forward.3} parent=5 // pred_fallthru
      _
    %p124 = scmp.lt.s32.totalorder %s9, 2
    // Predicated region
    $region21: #{cnn3d_lstm_lite_forward.3} parent=5 // pred_check
      %p125 = pneg %p124
    $region22: #{cnn3d_lstm_lite_forward.3} parent=5 // pred_check_branch
      %127 = sbr.rel (%p125) target = $region24
    $region23: #{cnn3d_lstm_lite_forward.3} parent=5 // pred_region
      // Predicated region
      $region25: #{cnn3d_lstm_lite_forward.3} parent=23 // pred_check
        %p128 = pneg %p29
      $region26: #{cnn3d_lstm_lite_forward.3} parent=23 // pred_check_branch
        %130 = sbr.rel (%p128) target = $region28
      $region27: #{cnn3d_lstm_lite_forward.3} parent=23 // pred_region
        %p131 = scmp.lt.s32.totalorder %s9, 1
        %s132 = scalar_select %p131, %s9, 1
        %s133 = smul.addr %s132, 30
        %s134 = smul.addr %s133, 8
        %s135 = scalar_lea.vmem %s0, %s134
      $region28: #{cnn3d_lstm_lite_forward.3} parent=23 // pred_fallthru
        _
    $region24: #{cnn3d_lstm_lite_forward.3} parent=5 // pred_fallthru
      _
    %p136 = scmp.le.s32.totalorder 1, %s9
    %p137 = scmp.lt.s32.totalorder %s9, 3
    %p138 = pnand %p136, %p137
    %p139 = pneg %p138
    // Predicated region
    $region29: #{cnn3d_lstm_lite_forward.3} parent=5 // pred_check
      _
    $region30: #{cnn3d_lstm_lite_forward.3} parent=5 // pred_check_branch
      %141 = sbr.rel (%p138) target = $region32
    $region31: #{cnn3d_lstm_lite_forward.3} parent=5 // pred_region
      %s142 = ssub.s32 %s9, 1
      %p143 = scmp.lt.s32.totalorder %s14, 1
      %s144 = scalar_select %p143, %s14, 1
      %s145 = smul.addr %s144, 30
      %s146 = smul.addr %s145, 8
      %s147 = scalar_lea.vmem %s0, %s146
      %p148 = pneg %p35
      %p149 = pneg %p32
      %p150 = pneg %p56
      %p151 = pneg %p53
      %p152 = pneg %p77
      %p153 = pneg %p74
      %p154 = pneg %p103
      %p155 = pneg %p100
      %p156 = scmp.lt.s32.totalorder %s14, 1
      %s157 = scalar_select %p156, %s14, 1
      %s158 = smul.addr %s157, 16
      %s159 = smul.addr %s158, 8
      %s160 = scalar_lea.vmem %s3, %s159
      %p161 = scmp.lt.s32.totalorder %s14, 1
      %s162 = scalar_select %p161, %s14, 1
      %s163 = smul.addr %s162, 30
      %s164 = smul.addr %s163, 8
      %s165 = scalar_lea.vmem %s0, %s164
      %p166 = scmp.lt.s32.totalorder %s14, 1
      %s167 = scalar_select %p166, %s14, 1
      %s168 = smul.addr %s167, 16
      %s169 = smul.addr %s168, 8
      %s170 = scalar_lea.vmem %s3, %s169
      %v172 = vld [vmem:[%s165] sm:$0xff]
      %v173 = vld [vmem:[%s165 + $0x8] sm:$0xff]
      %v174 = vld [vmem:[%s165 + $0x18] sm:$0xff]
      %v175 = vld [vmem:[%s165 + $0x20] sm:$0xff]
      %v176 = vld [vmem:[%s165 + $0x30] sm:$0xff]
      %v177 = vld [vmem:[%s165 + $0x38] sm:$0xff]
      %v178 = vld [vmem:[%s165 + $0x48] sm:$0xff]
      %v179 = vld [vmem:[%s165 + $0x50] sm:$0xff]
      %v180 = vld [vmem:[%s165 + $0x60] sm:$0xff]
      %v181 = vld [vmem:[%s165 + $0x68] sm:$0xff]
      %v182 = vld [vmem:[%s165 + $0x78] sm:$0xff]
      %v183 = vld [vmem:[%s165 + $0x80] sm:$0xff]
      %v184 = vld [vmem:[%s165 + $0x90] sm:$0xff]
      %v185 = vld [vmem:[%s165 + $0x98] sm:$0xff]
      %v186 = vld [vmem:[%s165 + $0xa8] sm:$0xff]
      %v187 = vld [vmem:[%s165 + $0xb0] sm:$0xff]
      %v188 = vpack.c.bf16 %v173, %v172
      %v189 = vpack.c.bf16 %v175, %v174
      %v190 = vpack.c.bf16 %v177, %v176
      %v191 = vpack.c.bf16 %v179, %v178
      %v192 = vpack.c.bf16 %v181, %v180
      %v193 = vpack.c.bf16 %v183, %v182
      %v194 = vpack.c.bf16 %v185, %v184
      %v195 = vpack.c.bf16 %v187, %v186
      %v196 = vld [vmem:[%s1] sm:$0xf]
      %v197 = vld [vmem:[%s1 + $0x4] sm:$0xf]
      %v198 = vld [vmem:[%s1 + $0x8] sm:$0xf]
      %v199 = vld [vmem:[%s1 + $0xc] sm:$0xf]
      %v200 = vld [vmem:[%s1 + $0x10] sm:$0xf]
      %v201 = vld [vmem:[%s1 + $0x14] sm:$0xf]
      %v202 = vld [vmem:[%s1 + $0x18] sm:$0xf]
      %v203 = vld [vmem:[%s1 + $0x1c] sm:$0xf]
      %v204 = vld [vmem:[%s1 + $0x20] sm:$0xf]
      %v205 = vld [vmem:[%s165 + $0x1] sm:$0xff]
      %v206 = vld [vmem:[%s165 + $0x9] sm:$0xff]
      %v207 = vld [vmem:[%s165 + $0x19] sm:$0xff]
      %v208 = vld [vmem:[%s165 + $0x21] sm:$0xff]
      %v209 = vld [vmem:[%s165 + $0x31] sm:$0xff]
      %v210 = vld [vmem:[%s165 + $0x39] sm:$0xff]
      %v211 = vld [vmem:[%s165 + $0x49] sm:$0xff]
      %v212 = vld [vmem:[%s165 + $0x51] sm:$0xff]
      %v213 = vld [vmem:[%s165 + $0x61] sm:$0xff]
      %v214 = vld [vmem:[%s165 + $0x69] sm:$0xff]
      %v215 = vld [vmem:[%s165 + $0x79] sm:$0xff]
      %v216 = vld [vmem:[%s165 + $0x81] sm:$0xff]
      %v217 = vld [vmem:[%s165 + $0x91] sm:$0xff]
      %v218 = vld [vmem:[%s165 + $0x99] sm:$0xff]
      %v219 = vld [vmem:[%s165 + $0xa9] sm:$0xff]
      %v220 = vld [vmem:[%s165 + $0xb1] sm:$0xff]
      %v221 = vpack.c.bf16 %v206, %v205
      %v222 = vpack.c.bf16 %v208, %v207
      %v223 = vpack.c.bf16 %v210, %v209
      %v224 = vpack.c.bf16 %v212, %v211
      %v225 = vpack.c.bf16 %v214, %v213
      %v226 = vpack.c.bf16 %v216, %v215
      %v227 = vpack.c.bf16 %v218, %v217
      %v228 = vpack.c.bf16 %v220, %v219
      %s229 = scalar_lea.vmem %s1, 36
      %v230 = vld [vmem:[%s229] sm:$0xf]
      %v231 = vld [vmem:[%s229 + $0x4] sm:$0xf]
      %v232 = vld [vmem:[%s229 + $0x8] sm:$0xf]
      %v233 = vld [vmem:[%s229 + $0xc] sm:$0xf]
      %v234 = vld [vmem:[%s229 + $0x10] sm:$0xf]
      %v235 = vld [vmem:[%s229 + $0x14] sm:$0xf]
      %v236 = vld [vmem:[%s229 + $0x18] sm:$0xf]
      %v237 = vld [vmem:[%s229 + $0x1c] sm:$0xf]
      %v238 = vld [vmem:[%s229 + $0x20] sm:$0xf]
      %v248 = vunpack.c.l.b16 %v230
      %v249 = vunpack.c.l.b16 %v231
      %v250 = vunpack.c.l.b16 %v232
      %v251 = vunpack.c.l.b16 %v233
      %v252 = vunpack.c.l.b16 %v234
      %v253 = vunpack.c.l.b16 %v235
      %v254 = vunpack.c.l.b16 %v236
      %v255 = vunpack.c.l.b16 %v237
      %v256 = vunpack.c.l.b16 %v238
      %v257 = vpack.c.b16 %v249, %v248
      %v258 = vpack.c.b16 %v251, %v250
      %v259 = vpack.c.b16 %v253, %v252
      %v260 = vpack.c.b16 %v255, %v254
      %v261 = vpack.c.b16 %v256, %v256
      %vm266 = vcmask 588800
      %v268 = vsel %vm266, %v221, 0
      %v271 = vsel %vm266, %v222, 0
      %v274 = vsel %vm266, %v223, 0
      %v277 = vsel %vm266, %v224, 0
      %v280 = vsel %vm266, %v225, 0
      %v283 = vsel %vm266, %v226, 0
      %v286 = vsel %vm266, %v227, 0
      %v289 = vsel %vm266, %v228, 0
      %vm291 = vcmask 1043456
      %v293 = vsel %vm291, %v261, 0
      %295 = vmatprep.subr.bf16.mxu0 0
      %296 = vmatpush1.bf16.msra.mxu0 0
      %297 = vmatprep.subr.bf16.mxu0 0
      %298 = vmatpush1.bf16.msra.mxu0 0
      %299 = vmatprep.subr.bf16.mxu0 0
      %300 = vmatpush1.bf16.msra.mxu0 0
      %301 = vmatprep.subr.bf16.mxu0 0
      %302 = vmatpush1.bf16.msra.mxu0 %v293
      %303 = vmatprep.subr.bf16.mxu0 0
      %304 = vmatpush1.bf16.msra.mxu0 %v260
      %305 = vmatprep.subr.bf16.mxu0 0
      %306 = vmatpush1.bf16.msra.mxu0 %v259
      %307 = vmatprep.subr.bf16.mxu0 0
      %308 = vmatpush1.bf16.msra.mxu0 %v258
      %309 = vmatprep.subr.bf16.mxu0 0
      %310 = vmatpush1.bf16.msra.mxu0 %v257
      %311 = vmatprep.subr.bf16.mxu0 0
      %312 = vmatpush2.bf16.msra.mxu0 0
      %313 = vmatprep.subr.bf16.mxu0 0
      %314 = vmatpush2.bf16.msra.mxu0 0
      %315 = vmatprep.subr.bf16.mxu0 0
      %316 = vmatpush2.bf16.msra.mxu0 0
      %317 = vmatprep.subr.bf16.mxu0 0
      %318 = vmatpush2.bf16.msra.mxu0 0
      %319 = vmatprep.subr.bf16.mxu0 0
      %320 = vmatpush2.bf16.msra.mxu0 0
      %321 = vmatprep.subr.bf16.mxu0 0
      %322 = vmatpush2.bf16.msra.mxu0 0
      %323 = vmatprep.subr.bf16.mxu0 0
      %324 = vmatpush2.bf16.msra.mxu0 0
      %325 = vmatprep.subr.bf16.mxu0 0
      %326 = vmatpush2.bf16.msra.mxu0 0
      %327 = vmatprep.mubr.bf16.mxu0 0
      %328 = vmatmul.mubr.bf16.gmra.mxu0 %v268
      %v329 = vpop.f32.mrf.mxu0
      %v330 = vadd.f32 0.0, %v329
      %v331 = vpop.f32.mrf.mxu0
      %v332 = vpop.f32.mrf.mxu0
      %v333 = vadd.f32 0.0, %v332
      %v334 = vpop.f32.mrf.mxu0
      %335 = vmatprep.mubr.bf16.mxu0 0
      %336 = vmatmul.mubr.bf16.gmra.mxu0 %v271
      %v337 = vpop.f32.mrf.mxu0
      %v338 = vadd.f32 0.0, %v337
      %v339 = vpop.f32.mrf.mxu0
      %v340 = vpop.f32.mrf.mxu0
      %v341 = vadd.f32 0.0, %v340
      %v342 = vpop.f32.mrf.mxu0
      %343 = vmatprep.mubr.bf16.mxu0 0
      %344 = vmatmul.mubr.bf16.gmra.mxu0 %v274
      %v345 = vpop.f32.mrf.mxu0
      %v346 = vadd.f32 0.0, %v345
      %v347 = vpop.f32.mrf.mxu0
      %v348 = vpop.f32.mrf.mxu0
      %v349 = vadd.f32 0.0, %v348
      %v350 = vpop.f32.mrf.mxu0
      %351 = vmatprep.mubr.bf16.mxu0 0
      %352 = vmatmul.mubr.bf16.gmra.mxu0 %v277
      %v353 = vpop.f32.mrf.mxu0
      %v354 = vadd.f32 0.0, %v353
      %v355 = vpop.f32.mrf.mxu0
      %v356 = vpop.f32.mrf.mxu0
      %v357 = vadd.f32 0.0, %v356
      %v358 = vpop.f32.mrf.mxu0
      %359 = vmatprep.mubr.bf16.mxu0 0
      %360 = vmatmul.mubr.bf16.gmra.mxu0 %v280
      %v361 = vpop.f32.mrf.mxu0
      %v362 = vadd.f32 0.0, %v361
      %v363 = vpop.f32.mrf.mxu0
      %v364 = vpop.f32.mrf.mxu0
      %v365 = vadd.f32 0.0, %v364
      %v366 = vpop.f32.mrf.mxu0
      %367 = vmatprep.mubr.bf16.mxu0 0
      %368 = vmatmul.mubr.bf16.gmra.mxu0 %v283
      %v369 = vpop.f32.mrf.mxu0
      %v370 = vadd.f32 0.0, %v369
      %v371 = vpop.f32.mrf.mxu0
      %v372 = vpop.f32.mrf.mxu0
      %v373 = vadd.f32 0.0, %v372
      %v374 = vpop.f32.mrf.mxu0
      %375 = vmatprep.mubr.bf16.mxu0 0
      %376 = vmatmul.mubr.bf16.gmra.mxu0 %v286
      %v377 = vpop.f32.mrf.mxu0
      %v378 = vadd.f32 0.0, %v377
      %v379 = vpop.f32.mrf.mxu0
      %v380 = vpop.f32.mrf.mxu0
      %v381 = vadd.f32 0.0, %v380
      %v382 = vpop.f32.mrf.mxu0
      %383 = vmatprep.mubr.bf16.mxu0 0
      %384 = vmatmul.mubr.bf16.gmra.mxu0 %v289
      %v385 = vpop.f32.mrf.mxu0
      %v386 = vadd.f32 0.0, %v385
      %v387 = vpop.f32.mrf.mxu0
      %v388 = vpop.f32.mrf.mxu0
      %v389 = vadd.f32 0.0, %v388
      %v390 = vpop.f32.mrf.mxu0
      %391 = vdwg.mxu0
      %v401 = vunpack.c.l.b16 %v196
      %v402 = vunpack.c.l.b16 %v197
      %v403 = vunpack.c.l.b16 %v198
      %v404 = vunpack.c.l.b16 %v199
      %v405 = vunpack.c.l.b16 %v200
      %v406 = vunpack.c.l.b16 %v201
      %v407 = vunpack.c.l.b16 %v202
      %v408 = vunpack.c.l.b16 %v203
      %v409 = vunpack.c.l.b16 %v204
      %v410 = vpack.c.b16 %v402, %v401
      %v411 = vpack.c.b16 %v404, %v403
      %v412 = vpack.c.b16 %v406, %v405
      %v413 = vpack.c.b16 %v408, %v407
      %v414 = vpack.c.b16 %v409, %v409
      %v420 = vsel %vm266, %v188, 0
      %v423 = vsel %vm266, %v189, 0
      %v426 = vsel %vm266, %v190, 0
      %v429 = vsel %vm266, %v191, 0
      %v432 = vsel %vm266, %v192, 0
      %v435 = vsel %vm266, %v193, 0
      %v438 = vsel %vm266, %v194, 0
      %v441 = vsel %vm266, %v195, 0
      %v444 = vsel %vm291, %v414, 0
      %446 = vmatprep.subr.bf16.mxu0 0
      %447 = vmatpush1.bf16.msra.mxu0 0
      %448 = vmatprep.subr.bf16.mxu0 0
      %449 = vmatpush1.bf16.msra.mxu0 0
      %450 = vmatprep.subr.bf16.mxu0 0
      %451 = vmatpush1.bf16.msra.mxu0 0
      %452 = vmatprep.subr.bf16.mxu0 0
      %453 = vmatpush1.bf16.msra.mxu0 %v444
      %454 = vmatprep.subr.bf16.mxu0 0
      %455 = vmatpush1.bf16.msra.mxu0 %v413
      %456 = vmatprep.subr.bf16.mxu0 0
      %457 = vmatpush1.bf16.msra.mxu0 %v412
      %458 = vmatprep.subr.bf16.mxu0 0
      %459 = vmatpush1.bf16.msra.mxu0 %v411
      %460 = vmatprep.subr.bf16.mxu0 0
      %461 = vmatpush1.bf16.msra.mxu0 %v410
      %462 = vmatprep.subr.bf16.mxu0 0
      %463 = vmatpush2.bf16.msra.mxu0 0
      %464 = vmatprep.subr.bf16.mxu0 0
      %465 = vmatpush2.bf16.msra.mxu0 0
      %466 = vmatprep.subr.bf16.mxu0 0
      %467 = vmatpush2.bf16.msra.mxu0 0
      %468 = vmatprep.subr.bf16.mxu0 0
      %469 = vmatpush2.bf16.msra.mxu0 0
      %470 = vmatprep.subr.bf16.mxu0 0
      %471 = vmatpush2.bf16.msra.mxu0 0
      %472 = vmatprep.subr.bf16.mxu0 0
      %473 = vmatpush2.bf16.msra.mxu0 0
      %474 = vmatprep.subr.bf16.mxu0 0
      %475 = vmatpush2.bf16.msra.mxu0 0
      %476 = vmatprep.subr.bf16.mxu0 0
      %477 = vmatpush2.bf16.msra.mxu0 0
      %478 = vmatprep.mubr.bf16.mxu0 0
      %479 = vmatmul.mubr.bf16.gmra.mxu0 %v420
      %v480 = vpop.f32.mrf.mxu0
      %v481 = vadd.f32 %v330, %v480
      %v482 = vpop.f32.mrf.mxu0
      %v483 = vpop.f32.mrf.mxu0
      %v484 = vadd.f32 %v333, %v483
      %v485 = vpop.f32.mrf.mxu0
      %486 = vmatprep.mubr.bf16.mxu0 0
      %487 = vmatmul.mubr.bf16.gmra.mxu0 %v423
      %v488 = vpop.f32.mrf.mxu0
      %v489 = vadd.f32 %v338, %v488
      %v490 = vpop.f32.mrf.mxu0
      %v491 = vpop.f32.mrf.mxu0
      %v492 = vadd.f32 %v341, %v491
      %v493 = vpop.f32.mrf.mxu0
      %494 = vmatprep.mubr.bf16.mxu0 0
      %495 = vmatmul.mubr.bf16.gmra.mxu0 %v426
      %v496 = vpop.f32.mrf.mxu0
      %v497 = vadd.f32 %v346, %v496
      %v498 = vpop.f32.mrf.mxu0
      %v499 = vpop.f32.mrf.mxu0
      %v500 = vadd.f32 %v349, %v499
      %v501 = vpop.f32.mrf.mxu0
      %502 = vmatprep.mubr.bf16.mxu0 0
      %503 = vmatmul.mubr.bf16.gmra.mxu0 %v429
      %v504 = vpop.f32.mrf.mxu0
      %v505 = vadd.f32 %v354, %v504
      %v506 = vpop.f32.mrf.mxu0
      %v507 = vpop.f32.mrf.mxu0
      %v508 = vadd.f32 %v357, %v507
      %v509 = vpop.f32.mrf.mxu0
      %510 = vmatprep.mubr.bf16.mxu0 0
      %511 = vmatmul.mubr.bf16.gmra.mxu0 %v432
      %v512 = vpop.f32.mrf.mxu0
      %v513 = vadd.f32 %v362, %v512
      %v514 = vpop.f32.mrf.mxu0
      %v515 = vpop.f32.mrf.mxu0
      %v516 = vadd.f32 %v365, %v515
      %v517 = vpop.f32.mrf.mxu0
      %518 = vmatprep.mubr.bf16.mxu0 0
      %519 = vmatmul.mubr.bf16.gmra.mxu0 %v435
      %v520 = vpop.f32.mrf.mxu0
      %v521 = vadd.f32 %v370, %v520
      %v522 = vpop.f32.mrf.mxu0
      %v523 = vpop.f32.mrf.mxu0
      %v524 = vadd.f32 %v373, %v523
      %v525 = vpop.f32.mrf.mxu0
      %526 = vmatprep.mubr.bf16.mxu0 0
      %527 = vmatmul.mubr.bf16.gmra.mxu0 %v438
      %v528 = vpop.f32.mrf.mxu0
      %v529 = vadd.f32 %v378, %v528
      %v530 = vpop.f32.mrf.mxu0
      %v531 = vpop.f32.mrf.mxu0
      %v532 = vadd.f32 %v381, %v531
      %v533 = vpop.f32.mrf.mxu0
      %534 = vmatprep.mubr.bf16.mxu0 0
      %535 = vmatmul.mubr.bf16.gmra.mxu0 %v441
      %v536 = vpop.f32.mrf.mxu0
      %v537 = vadd.f32 %v386, %v536
      %v538 = vpop.f32.mrf.mxu0
      %v539 = vpop.f32.mrf.mxu0
      %v540 = vadd.f32 %v389, %v539
      %v541 = vpop.f32.mrf.mxu0
      %542 = vdwg.mxu0
      %v543 = vld [vmem:[%s165 + $0x2] sm:$0xff]
      %v544 = vld [vmem:[%s165 + $0xa] sm:$0xff]
      %v545 = vld [vmem:[%s165 + $0x1a] sm:$0xff]
      %v546 = vld [vmem:[%s165 + $0x22] sm:$0xff]
      %v547 = vld [vmem:[%s165 + $0x32] sm:$0xff]
      %v548 = vld [vmem:[%s165 + $0x3a] sm:$0xff]
      %v549 = vld [vmem:[%s165 + $0x4a] sm:$0xff]
      %v550 = vld [vmem:[%s165 + $0x52] sm:$0xff]
      %v551 = vld [vmem:[%s165 + $0x62] sm:$0xff]
      %v552 = vld [vmem:[%s165 + $0x6a] sm:$0xff]
      %v553 = vld [vmem:[%s165 + $0x7a] sm:$0xff]
      %v554 = vld [vmem:[%s165 + $0x82] sm:$0xff]
      %v555 = vld [vmem:[%s165 + $0x92] sm:$0xff]
      %v556 = vld [vmem:[%s165 + $0x9a] sm:$0xff]
      %v557 = vld [vmem:[%s165 + $0xaa] sm:$0xff]
      %v558 = vld [vmem:[%s165 + $0xb2] sm:$0xff]
      %v559 = vpack.c.bf16 %v544, %v543
      %v560 = vpack.c.bf16 %v546, %v545
      %v561 = vpack.c.bf16 %v548, %v547
      %v562 = vpack.c.bf16 %v550, %v549
      %v563 = vpack.c.bf16 %v552, %v551
      %v564 = vpack.c.bf16 %v554, %v553
      %v565 = vpack.c.bf16 %v556, %v555
      %v566 = vpack.c.bf16 %v558, %v557
      %s567 = scalar_lea.vmem %s1, 72
      %v568 = vld [vmem:[%s567] sm:$0xf]
      %v569 = vld [vmem:[%s567 + $0x4] sm:$0xf]
      %v570 = vld [vmem:[%s567 + $0x8] sm:$0xf]
      %v571 = vld [vmem:[%s567 + $0xc] sm:$0xf]
      %v572 = vld [vmem:[%s567 + $0x10] sm:$0xf]
      %v573 = vld [vmem:[%s567 + $0x14] sm:$0xf]
      %v574 = vld [vmem:[%s567 + $0x18] sm:$0xf]
      %v575 = vld [vmem:[%s567 + $0x1c] sm:$0xf]
      %v576 = vld [vmem:[%s567 + $0x20] sm:$0xf]
      %v586 = vunpack.c.l.b16 %v568
      %v587 = vunpack.c.l.b16 %v569
      %v588 = vunpack.c.l.b16 %v570
      %v589 = vunpack.c.l.b16 %v571
      %v590 = vunpack.c.l.b16 %v572
      %v591 = vunpack.c.l.b16 %v573
      %v592 = vunpack.c.l.b16 %v574
      %v593 = vunpack.c.l.b16 %v575
      %v594 = vunpack.c.l.b16 %v576
      %v595 = vpack.c.b16 %v587, %v586
      %v596 = vpack.c.b16 %v589, %v588
      %v597 = vpack.c.b16 %v591, %v590
      %v598 = vpack.c.b16 %v593, %v592
      %v599 = vpack.c.b16 %v594, %v594
      %v605 = vsel %vm266, %v559, 0
      %v608 = vsel %vm266, %v560, 0
      %v611 = vsel %vm266, %v561, 0
      %v614 = vsel %vm266, %v562, 0
      %v617 = vsel %vm266, %v563, 0
      %v620 = vsel %vm266, %v564, 0
      %v623 = vsel %vm266, %v565, 0
      %v626 = vsel %vm266, %v566, 0
      %v629 = vsel %vm291, %v599, 0
      %631 = vmatprep.subr.bf16.mxu0 0
      %632 = vmatpush1.bf16.msra.mxu0 0
      %633 = vmatprep.subr.bf16.mxu0 0
      %634 = vmatpush1.bf16.msra.mxu0 0
      %635 = vmatprep.subr.bf16.mxu0 0
      %636 = vmatpush1.bf16.msra.mxu0 0
      %637 = vmatprep.subr.bf16.mxu0 0
      %638 = vmatpush1.bf16.msra.mxu0 %v629
      %639 = vmatprep.subr.bf16.mxu0 0
      %640 = vmatpush1.bf16.msra.mxu0 %v598
      %641 = vmatprep.subr.bf16.mxu0 0
      %642 = vmatpush1.bf16.msra.mxu0 %v597
      %643 = vmatprep.subr.bf16.mxu0 0
      %644 = vmatpush1.bf16.msra.mxu0 %v596
      %645 = vmatprep.subr.bf16.mxu0 0
      %646 = vmatpush1.bf16.msra.mxu0 %v595
      %647 = vmatprep.subr.bf16.mxu0 0
      %648 = vmatpush2.bf16.msra.mxu0 0
      %649 = vmatprep.subr.bf16.mxu0 0
      %650 = vmatpush2.bf16.msra.mxu0 0
      %651 = vmatprep.subr.bf16.mxu0 0
      %652 = vmatpush2.bf16.msra.mxu0 0
      %653 = vmatprep.subr.bf16.mxu0 0
      %654 = vmatpush2.bf16.msra.mxu0 0
      %655 = vmatprep.subr.bf16.mxu0 0
      %656 = vmatpush2.bf16.msra.mxu0 0
      %657 = vmatprep.subr.bf16.mxu0 0
      %658 = vmatpush2.bf16.msra.mxu0 0
      %659 = vmatprep.subr.bf16.mxu0 0
      %660 = vmatpush2.bf16.msra.mxu0 0
      %661 = vmatprep.subr.bf16.mxu0 0
      %662 = vmatpush2.bf16.msra.mxu0 0
      %663 = vmatprep.mubr.bf16.mxu0 0
      %664 = vmatmul.mubr.bf16.gmra.mxu0 %v605
      %v665 = vpop.f32.mrf.mxu0
      %v666 = vadd.f32 0.0, %v665
      %v667 = vpop.f32.mrf.mxu0
      %v668 = vpop.f32.mrf.mxu0
      %v669 = vadd.f32 0.0, %v668
      %v670 = vpop.f32.mrf.mxu0
      %671 = vmatprep.mubr.bf16.mxu0 0
      %672 = vmatmul.mubr.bf16.gmra.mxu0 %v608
      %v673 = vpop.f32.mrf.mxu0
      %v674 = vadd.f32 0.0, %v673
      %v675 = vpop.f32.mrf.mxu0
      %v676 = vpop.f32.mrf.mxu0
      %v677 = vadd.f32 0.0, %v676
      %v678 = vpop.f32.mrf.mxu0
      %679 = vmatprep.mubr.bf16.mxu0 0
      %680 = vmatmul.mubr.bf16.gmra.mxu0 %v611
      %v681 = vpop.f32.mrf.mxu0
      %v682 = vadd.f32 0.0, %v681
      %v683 = vpop.f32.mrf.mxu0
      %v684 = vpop.f32.mrf.mxu0
      %v685 = vadd.f32 0.0, %v684
      %v686 = vpop.f32.mrf.mxu0
      %687 = vmatprep.mubr.bf16.mxu0 0
      %688 = vmatmul.mubr.bf16.gmra.mxu0 %v614
      %v689 = vpop.f32.mrf.mxu0
      %v690 = vadd.f32 0.0, %v689
      %v691 = vpop.f32.mrf.mxu0
      %v692 = vpop.f32.mrf.mxu0
      %v693 = vadd.f32 0.0, %v692
      %v694 = vpop.f32.mrf.mxu0
      %695 = vmatprep.mubr.bf16.mxu0 0
      %696 = vmatmul.mubr.bf16.gmra.mxu0 %v617
      %v697 = vpop.f32.mrf.mxu0
      %v698 = vadd.f32 0.0, %v697
      %v699 = vpop.f32.mrf.mxu0
      %v700 = vpop.f32.mrf.mxu0
      %v701 = vadd.f32 0.0, %v700
      %v702 = vpop.f32.mrf.mxu0
      %703 = vmatprep.mubr.bf16.mxu0 0
      %704 = vmatmul.mubr.bf16.gmra.mxu0 %v620
      %v705 = vpop.f32.mrf.mxu0
      %v706 = vadd.f32 0.0, %v705
      %v707 = vpop.f32.mrf.mxu0
      %v708 = vpop.f32.mrf.mxu0
      %v709 = vadd.f32 0.0, %v708
      %v710 = vpop.f32.mrf.mxu0
      %711 = vmatprep.mubr.bf16.mxu0 0
      %712 = vmatmul.mubr.bf16.gmra.mxu0 %v623
      %v713 = vpop.f32.mrf.mxu0
      %v714 = vadd.f32 0.0, %v713
      %v715 = vpop.f32.mrf.mxu0
      %v716 = vpop.f32.mrf.mxu0
      %v717 = vadd.f32 0.0, %v716
      %v718 = vpop.f32.mrf.mxu0
      %719 = vmatprep.mubr.bf16.mxu0 0
      %720 = vmatmul.mubr.bf16.gmra.mxu0 %v626
      %v721 = vpop.f32.mrf.mxu0
      %v722 = vadd.f32 0.0, %v721
      %v723 = vpop.f32.mrf.mxu0
      %v724 = vpop.f32.mrf.mxu0
      %v725 = vadd.f32 0.0, %v724
      %v726 = vpop.f32.mrf.mxu0
      %727 = vdwg.mxu0
      %v728 = vadd.f32 %v481, %v666
      %v729 = vadd.f32 %v484, %v669
      %v730 = vadd.f32 %v489, %v674
      %v731 = vadd.f32 %v492, %v677
      %v732 = vadd.f32 %v497, %v682
      %v733 = vadd.f32 %v500, %v685
      %v734 = vadd.f32 %v505, %v690
      %v735 = vadd.f32 %v508, %v693
      %v736 = vadd.f32 %v513, %v698
      %v737 = vadd.f32 %v516, %v701
      %v738 = vadd.f32 %v521, %v706
      %v739 = vadd.f32 %v524, %v709
      %v740 = vadd.f32 %v529, %v714
      %v741 = vadd.f32 %v532, %v717
      %v742 = vadd.f32 %v537, %v722
      %v743 = vadd.f32 %v540, %v725
      %s744 = scalar_lea.vmem %s165, 24
      %v745 = vld [vmem:[%s744] sm:$0xff]
      %v746 = vld [vmem:[%s744 + $0x8] sm:$0xff]
      %v747 = vld [vmem:[%s744 + $0x18] sm:$0xff]
      %v748 = vld [vmem:[%s744 + $0x20] sm:$0xff]
      %v749 = vld [vmem:[%s744 + $0x30] sm:$0xff]
      %v750 = vld [vmem:[%s744 + $0x38] sm:$0xff]
      %v751 = vld [vmem:[%s744 + $0x48] sm:$0xff]
      %v752 = vld [vmem:[%s744 + $0x50] sm:$0xff]
      %v753 = vld [vmem:[%s744 + $0x60] sm:$0xff]
      %v754 = vld [vmem:[%s744 + $0x68] sm:$0xff]
      %v755 = vld [vmem:[%s744 + $0x78] sm:$0xff]
      %v756 = vld [vmem:[%s744 + $0x80] sm:$0xff]
      %v757 = vld [vmem:[%s744 + $0x90] sm:$0xff]
      %v758 = vld [vmem:[%s744 + $0x98] sm:$0xff]
      %v759 = vld [vmem:[%s744 + $0xa8] sm:$0xff]
      %v760 = vld [vmem:[%s744 + $0xb0] sm:$0xff]
      %v761 = vpack.c.bf16 %v746, %v745
      %v762 = vpack.c.bf16 %v748, %v747
      %v763 = vpack.c.bf16 %v750, %v749
      %v764 = vpack.c.bf16 %v752, %v751
      %v765 = vpack.c.bf16 %v754, %v753
      %v766 = vpack.c.bf16 %v756, %v755
      %v767 = vpack.c.bf16 %v758, %v757
      %v768 = vpack.c.bf16 %v760, %v759
      %s769 = scalar_lea.vmem %s1, 108
      %v770 = vld [vmem:[%s769] sm:$0xf]
      %v771 = vld [vmem:[%s769 + $0x4] sm:$0xf]
      %v772 = vld [vmem:[%s769 + $0x8] sm:$0xf]
      %v773 = vld [vmem:[%s769 + $0xc] sm:$0xf]
      %v774 = vld [vmem:[%s769 + $0x10] sm:$0xf]
      %v775 = vld [vmem:[%s769 + $0x14] sm:$0xf]
      %v776 = vld [vmem:[%s769 + $0x18] sm:$0xf]
      %v777 = vld [vmem:[%s769 + $0x1c] sm:$0xf]
      %v778 = vld [vmem:[%s769 + $0x20] sm:$0xf]
      %v788 = vunpack.c.l.b16 %v770
      %v789 = vunpack.c.l.b16 %v771
      %v790 = vunpack.c.l.b16 %v772
      %v791 = vunpack.c.l.b16 %v773
      %v792 = vunpack.c.l.b16 %v774
      %v793 = vunpack.c.l.b16 %v775
      %v794 = vunpack.c.l.b16 %v776
      %v795 = vunpack.c.l.b16 %v777
      %v796 = vunpack.c.l.b16 %v778
      %v797 = vpack.c.b16 %v789, %v788
      %v798 = vpack.c.b16 %v791, %v790
      %v799 = vpack.c.b16 %v793, %v792
      %v800 = vpack.c.b16 %v795, %v794
      %v801 = vpack.c.b16 %v796, %v796
      %v807 = vsel %vm266, %v761, 0
      %v810 = vsel %vm266, %v762, 0
      %v813 = vsel %vm266, %v763, 0
      %v816 = vsel %vm266, %v764, 0
      %v819 = vsel %vm266, %v765, 0
      %v822 = vsel %vm266, %v766, 0
      %v825 = vsel %vm266, %v767, 0
      %v828 = vsel %vm266, %v768, 0
      %v831 = vsel %vm291, %v801, 0
      %833 = vmatprep.subr.bf16.mxu0 0
      %834 = vmatpush1.bf16.msra.mxu0 0
      %835 = vmatprep.subr.bf16.mxu0 0
      %836 = vmatpush1.bf16.msra.mxu0 0
      %837 = vmatprep.subr.bf16.mxu0 0
      %838 = vmatpush1.bf16.msra.mxu0 0
      %839 = vmatprep.subr.bf16.mxu0 0
      %840 = vmatpush1.bf16.msra.mxu0 %v831
      %841 = vmatprep.subr.bf16.mxu0 0
      %842 = vmatpush1.bf16.msra.mxu0 %v800
      %843 = vmatprep.subr.bf16.mxu0 0
      %844 = vmatpush1.bf16.msra.mxu0 %v799
      %845 = vmatprep.subr.bf16.mxu0 0
      %846 = vmatpush1.bf16.msra.mxu0 %v798
      %847 = vmatprep.subr.bf16.mxu0 0
      %848 = vmatpush1.bf16.msra.mxu0 %v797
      %849 = vmatprep.subr.bf16.mxu0 0
      %850 = vmatpush2.bf16.msra.mxu0 0
      %851 = vmatprep.subr.bf16.mxu0 0
      %852 = vmatpush2.bf16.msra.mxu0 0
      %853 = vmatprep.subr.bf16.mxu0 0
      %854 = vmatpush2.bf16.msra.mxu0 0
      %855 = vmatprep.subr.bf16.mxu0 0
      %856 = vmatpush2.bf16.msra.mxu0 0
      %857 = vmatprep.subr.bf16.mxu0 0
      %858 = vmatpush2.bf16.msra.mxu0 0
      %859 = vmatprep.subr.bf16.mxu0 0
      %860 = vmatpush2.bf16.msra.mxu0 0
      %861 = vmatprep.subr.bf16.mxu0 0
      %862 = vmatpush2.bf16.msra.mxu0 0
      %863 = vmatprep.subr.bf16.mxu0 0
      %864 = vmatpush2.bf16.msra.mxu0 0
      %865 = vmatprep.mubr.bf16.mxu0 0
      %866 = vmatmul.mubr.bf16.gmra.mxu0 %v807
      %v867 = vpop.f32.mrf.mxu0
      %v868 = vadd.f32 0.0, %v867
      %v869 = vpop.f32.mrf.mxu0
      %v870 = vpop.f32.mrf.mxu0
      %v871 = vadd.f32 0.0, %v870
      %v872 = vpop.f32.mrf.mxu0
      %873 = vmatprep.mubr.bf16.mxu0 0
      %874 = vmatmul.mubr.bf16.gmra.mxu0 %v810
      %v875 = vpop.f32.mrf.mxu0
      %v876 = vadd.f32 0.0, %v875
      %v877 = vpop.f32.mrf.mxu0
      %v878 = vpop.f32.mrf.mxu0
      %v879 = vadd.f32 0.0, %v878
      %v880 = vpop.f32.mrf.mxu0
      %881 = vmatprep.mubr.bf16.mxu0 0
      %882 = vmatmul.mubr.bf16.gmra.mxu0 %v813
      %v883 = vpop.f32.mrf.mxu0
      %v884 = vadd.f32 0.0, %v883
      %v885 = vpop.f32.mrf.mxu0
      %v886 = vpop.f32.mrf.mxu0
      %v887 = vadd.f32 0.0, %v886
      %v888 = vpop.f32.mrf.mxu0
      %889 = vmatprep.mubr.bf16.mxu0 0
      %890 = vmatmul.mubr.bf16.gmra.mxu0 %v816
      %v891 = vpop.f32.mrf.mxu0
      %v892 = vadd.f32 0.0, %v891
      %v893 = vpop.f32.mrf.mxu0
      %v894 = vpop.f32.mrf.mxu0
      %v895 = vadd.f32 0.0, %v894
      %v896 = vpop.f32.mrf.mxu0
      %897 = vmatprep.mubr.bf16.mxu0 0
      %898 = vmatmul.mubr.bf16.gmra.mxu0 %v819
      %v899 = vpop.f32.mrf.mxu0
      %v900 = vadd.f32 0.0, %v899
      %v901 = vpop.f32.mrf.mxu0
      %v902 = vpop.f32.mrf.mxu0
      %v903 = vadd.f32 0.0, %v902
      %v904 = vpop.f32.mrf.mxu0
      %905 = vmatprep.mubr.bf16.mxu0 0
      %906 = vmatmul.mubr.bf16.gmra.mxu0 %v822
      %v907 = vpop.f32.mrf.mxu0
      %v908 = vadd.f32 0.0, %v907
      %v909 = vpop.f32.mrf.mxu0
      %v910 = vpop.f32.mrf.mxu0
      %v911 = vadd.f32 0.0, %v910
      %v912 = vpop.f32.mrf.mxu0
      %913 = vmatprep.mubr.bf16.mxu0 0
      %914 = vmatmul.mubr.bf16.gmra.mxu0 %v825
      %v915 = vpop.f32.mrf.mxu0
      %v916 = vadd.f32 0.0, %v915
      %v917 = vpop.f32.mrf.mxu0
      %v918 = vpop.f32.mrf.mxu0
      %v919 = vadd.f32 0.0, %v918
      %v920 = vpop.f32.mrf.mxu0
      %921 = vmatprep.mubr.bf16.mxu0 0
      %922 = vmatmul.mubr.bf16.gmra.mxu0 %v828
      %v923 = vpop.f32.mrf.mxu0
      %v924 = vadd.f32 0.0, %v923
      %v925 = vpop.f32.mrf.mxu0
      %v926 = vpop.f32.mrf.mxu0
      %v927 = vadd.f32 0.0, %v926
      %v928 = vpop.f32.mrf.mxu0
      %929 = vdwg.mxu0
      %v930 = vadd.f32 %v728, %v868
      %v931 = vadd.f32 %v729, %v871
      %v932 = vadd.f32 %v730, %v876
      %v933 = vadd.f32 %v731, %v879
      %v934 = vadd.f32 %v732, %v884
      %v935 = vadd.f32 %v733, %v887
      %v936 = vadd.f32 %v734, %v892
      %v937 = vadd.f32 %v735, %v895
      %v938 = vadd.f32 %v736, %v900
      %v939 = vadd.f32 %v737, %v903
      %v940 = vadd.f32 %v738, %v908
      %v941 = vadd.f32 %v739, %v911
      %v942 = vadd.f32 %v740, %v916
      %v943 = vadd.f32 %v741, %v919
      %v944 = vadd.f32 %v742, %v924
      %v945 = vadd.f32 %v743, %v927
      %v946 = vld [vmem:[%s744 + $0x1] sm:$0xff]
      %v947 = vld [vmem:[%s744 + $0x9] sm:$0xff]
      %v948 = vld [vmem:[%s744 + $0x19] sm:$0xff]
      %v949 = vld [vmem:[%s744 + $0x21] sm:$0xff]
      %v950 = vld [vmem:[%s744 + $0x31] sm:$0xff]
      %v951 = vld [vmem:[%s744 + $0x39] sm:$0xff]
      %v952 = vld [vmem:[%s744 + $0x49] sm:$0xff]
      %v953 = vld [vmem:[%s744 + $0x51] sm:$0xff]
      %v954 = vld [vmem:[%s744 + $0x61] sm:$0xff]
      %v955 = vld [vmem:[%s744 + $0x69] sm:$0xff]
      %v956 = vld [vmem:[%s744 + $0x79] sm:$0xff]
      %v957 = vld [vmem:[%s744 + $0x81] sm:$0xff]
      %v958 = vld [vmem:[%s744 + $0x91] sm:$0xff]
      %v959 = vld [vmem:[%s744 + $0x99] sm:$0xff]
      %v960 = vld [vmem:[%s744 + $0xa9] sm:$0xff]
      %v961 = vld [vmem:[%s744 + $0xb1] sm:$0xff]
      %v962 = vpack.c.bf16 %v947, %v946
      %v963 = vpack.c.bf16 %v949, %v948
      %v964 = vpack.c.bf16 %v951, %v950
      %v965 = vpack.c.bf16 %v953, %v952
      %v966 = vpack.c.bf16 %v955, %v954
      %v967 = vpack.c.bf16 %v957, %v956
      %v968 = vpack.c.bf16 %v959, %v958
      %v969 = vpack.c.bf16 %v961, %v960
      %s970 = scalar_lea.vmem %s1, 144
      %v971 = vld [vmem:[%s970] sm:$0xf]
      %v972 = vld [vmem:[%s970 + $0x4] sm:$0xf]
      %v973 = vld [vmem:[%s970 + $0x8] sm:$0xf]
      %v974 = vld [vmem:[%s970 + $0xc] sm:$0xf]
      %v975 = vld [vmem:[%s970 + $0x10] sm:$0xf]
      %v976 = vld [vmem:[%s970 + $0x14] sm:$0xf]
      %v977 = vld [vmem:[%s970 + $0x18] sm:$0xf]
      %v978 = vld [vmem:[%s970 + $0x1c] sm:$0xf]
      %v979 = vld [vmem:[%s970 + $0x20] sm:$0xf]
      %v989 = vunpack.c.l.b16 %v971
      %v990 = vunpack.c.l.b16 %v972
      %v991 = vunpack.c.l.b16 %v973
      %v992 = vunpack.c.l.b16 %v974
      %v993 = vunpack.c.l.b16 %v975
      %v994 = vunpack.c.l.b16 %v976
      %v995 = vunpack.c.l.b16 %v977
      %v996 = vunpack.c.l.b16 %v978
      %v997 = vunpack.c.l.b16 %v979
      %v998 = vpack.c.b16 %v990, %v989
      %v999 = vpack.c.b16 %v992, %v991
      %v1000 = vpack.c.b16 %v994, %v993
      %v1001 = vpack.c.b16 %v996, %v995
      %v1002 = vpack.c.b16 %v997, %v997
      %v1008 = vsel %vm266, %v962, 0
      %v1011 = vsel %vm266, %v963, 0
      %v1014 = vsel %vm266, %v964, 0
      %v1017 = vsel %vm266, %v965, 0
      %v1020 = vsel %vm266, %v966, 0
      %v1023 = vsel %vm266, %v967, 0
      %v1026 = vsel %vm266, %v968, 0
      %v1029 = vsel %vm266, %v969, 0
      %v1032 = vsel %vm291, %v1002, 0
      %1034 = vmatprep.subr.bf16.mxu0 0
      %1035 = vmatpush1.bf16.msra.mxu0 0
      %1036 = vmatprep.subr.bf16.mxu0 0
      %1037 = vmatpush1.bf16.msra.mxu0 0
      %1038 = vmatprep.subr.bf16.mxu0 0
      %1039 = vmatpush1.bf16.msra.mxu0 0
      %1040 = vmatprep.subr.bf16.mxu0 0
      %1041 = vmatpush1.bf16.msra.mxu0 %v1032
      %1042 = vmatprep.subr.bf16.mxu0 0
      %1043 = vmatpush1.bf16.msra.mxu0 %v1001
      %1044 = vmatprep.subr.bf16.mxu0 0
      %1045 = vmatpush1.bf16.msra.mxu0 %v1000
      %1046 = vmatprep.subr.bf16.mxu0 0
      %1047 = vmatpush1.bf16.msra.mxu0 %v999
      %1048 = vmatprep.subr.bf16.mxu0 0
      %1049 = vmatpush1.bf16.msra.mxu0 %v998
      %1050 = vmatprep.subr.bf16.mxu0 0
      %1051 = vmatpush2.bf16.msra.mxu0 0
      %1052 = vmatprep.subr.bf16.mxu0 0
      %1053 = vmatpush2.bf16.msra.mxu0 0
      %1054 = vmatprep.subr.bf16.mxu0 0
      %1055 = vmatpush2.bf16.msra.mxu0 0
      %1056 = vmatprep.subr.bf16.mxu0 0
      %1057 = vmatpush2.bf16.msra.mxu0 0
      %1058 = vmatprep.subr.bf16.mxu0 0
      %1059 = vmatpush2.bf16.msra.mxu0 0
      %1060 = vmatprep.subr.bf16.mxu0 0
      %1061 = vmatpush2.bf16.msra.mxu0 0
      %1062 = vmatprep.subr.bf16.mxu0 0
      %1063 = vmatpush2.bf16.msra.mxu0 0
      %1064 = vmatprep.subr.bf16.mxu0 0
      %1065 = vmatpush2.bf16.msra.mxu0 0
      %1066 = vmatprep.mubr.bf16.mxu0 0
      %1067 = vmatmul.mubr.bf16.gmra.mxu0 %v1008
      %v1068 = vpop.f32.mrf.mxu0
      %v1069 = vadd.f32 0.0, %v1068
      %v1070 = vpop.f32.mrf.mxu0
      %v1071 = vpop.f32.mrf.mxu0
      %v1072 = vadd.f32 0.0, %v1071
      %v1073 = vpop.f32.mrf.mxu0
      %1074 = vmatprep.mubr.bf16.mxu0 0
      %1075 = vmatmul.mubr.bf16.gmra.mxu0 %v1011
      %v1076 = vpop.f32.mrf.mxu0
      %v1077 = vadd.f32 0.0, %v1076
      %v1078 = vpop.f32.mrf.mxu0
      %v1079 = vpop.f32.mrf.mxu0
      %v1080 = vadd.f32 0.0, %v1079
      %v1081 = vpop.f32.mrf.mxu0
      %1082 = vmatprep.mubr.bf16.mxu0 0
      %1083 = vmatmul.mubr.bf16.gmra.mxu0 %v1014
      %v1084 = vpop.f32.mrf.mxu0
      %v1085 = vadd.f32 0.0, %v1084
      %v1086 = vpop.f32.mrf.mxu0
      %v1087 = vpop.f32.mrf.mxu0
      %v1088 = vadd.f32 0.0, %v1087
      %v1089 = vpop.f32.mrf.mxu0
      %1090 = vmatprep.mubr.bf16.mxu0 0
      %1091 = vmatmul.mubr.bf16.gmra.mxu0 %v1017
      %v1092 = vpop.f32.mrf.mxu0
      %v1093 = vadd.f32 0.0, %v1092
      %v1094 = vpop.f32.mrf.mxu0
      %v1095 = vpop.f32.mrf.mxu0
      %v1096 = vadd.f32 0.0, %v1095
      %v1097 = vpop.f32.mrf.mxu0
      %1098 = vmatprep.mubr.bf16.mxu0 0
      %1099 = vmatmul.mubr.bf16.gmra.mxu0 %v1020
      %v1100 = vpop.f32.mrf.mxu0
      %v1101 = vadd.f32 0.0, %v1100
      %v1102 = vpop.f32.mrf.mxu0
      %v1103 = vpop.f32.mrf.mxu0
      %v1104 = vadd.f32 0.0, %v1103
      %v1105 = vpop.f32.mrf.mxu0
      %1106 = vmatprep.mubr.bf16.mxu0 0
      %1107 = vmatmul.mubr.bf16.gmra.mxu0 %v1023
      %v1108 = vpop.f32.mrf.mxu0
      %v1109 = vadd.f32 0.0, %v1108
      %v1110 = vpop.f32.mrf.mxu0
      %v1111 = vpop.f32.mrf.mxu0
      %v1112 = vadd.f32 0.0, %v1111
      %v1113 = vpop.f32.mrf.mxu0
      %1114 = vmatprep.mubr.bf16.mxu0 0
      %1115 = vmatmul.mubr.bf16.gmra.mxu0 %v1026
      %v1116 = vpop.f32.mrf.mxu0
      %v1117 = vadd.f32 0.0, %v1116
      %v1118 = vpop.f32.mrf.mxu0
      %v1119 = vpop.f32.mrf.mxu0
      %v1120 = vadd.f32 0.0, %v1119
      %v1121 = vpop.f32.mrf.mxu0
      %1122 = vmatprep.mubr.bf16.mxu0 0
      %1123 = vmatmul.mubr.bf16.gmra.mxu0 %v1029
      %v1124 = vpop.f32.mrf.mxu0
      %v1125 = vadd.f32 0.0, %v1124
      %v1126 = vpop.f32.mrf.mxu0
      %v1127 = vpop.f32.mrf.mxu0
      %v1128 = vadd.f32 0.0, %v1127
      %v1129 = vpop.f32.mrf.mxu0
      %1130 = vdwg.mxu0
      %v1131 = vadd.f32 %v930, %v1069
      %v1132 = vadd.f32 %v931, %v1072
      %v1133 = vadd.f32 %v932, %v1077
      %v1134 = vadd.f32 %v933, %v1080
      %v1135 = vadd.f32 %v934, %v1085
      %v1136 = vadd.f32 %v935, %v1088
      %v1137 = vadd.f32 %v936, %v1093
      %v1138 = vadd.f32 %v937, %v1096
      %v1139 = vadd.f32 %v938, %v1101
      %v1140 = vadd.f32 %v939, %v1104
      %v1141 = vadd.f32 %v940, %v1109
      %v1142 = vadd.f32 %v941, %v1112
      %v1143 = vadd.f32 %v942, %v1117
      %v1144 = vadd.f32 %v943, %v1120
      %v1145 = vadd.f32 %v944, %v1125
      %v1146 = vadd.f32 %v945, %v1128
      %v1147 = vld [vmem:[%s744 + $0x2] sm:$0xff]
      %v1148 = vld [vmem:[%s744 + $0xa] sm:$0xff]
      %v1149 = vld [vmem:[%s744 + $0x1a] sm:$0xff]
      %v1150 = vld [vmem:[%s744 + $0x22] sm:$0xff]
      %v1151 = vld [vmem:[%s744 + $0x32] sm:$0xff]
      %v1152 = vld [vmem:[%s744 + $0x3a] sm:$0xff]
      %v1153 = vld [vmem:[%s744 + $0x4a] sm:$0xff]
      %v1154 = vld [vmem:[%s744 + $0x52] sm:$0xff]
      %v1155 = vld [vmem:[%s744 + $0x62] sm:$0xff]
      %v1156 = vld [vmem:[%s744 + $0x6a] sm:$0xff]
      %v1157 = vld [vmem:[%s744 + $0x7a] sm:$0xff]
      %v1158 = vld [vmem:[%s744 + $0x82] sm:$0xff]
      %v1159 = vld [vmem:[%s744 + $0x92] sm:$0xff]
      %v1160 = vld [vmem:[%s744 + $0x9a] sm:$0xff]
      %v1161 = vld [vmem:[%s744 + $0xaa] sm:$0xff]
      %v1162 = vld [vmem:[%s744 + $0xb2] sm:$0xff]
      %v1163 = vpack.c.bf16 %v1148, %v1147
      %v1164 = vpack.c.bf16 %v1150, %v1149
      %v1165 = vpack.c.bf16 %v1152, %v1151
      %v1166 = vpack.c.bf16 %v1154, %v1153
      %v1167 = vpack.c.bf16 %v1156, %v1155
      %v1168 = vpack.c.bf16 %v1158, %v1157
      %v1169 = vpack.c.bf16 %v1160, %v1159
      %v1170 = vpack.c.bf16 %v1162, %v1161
      %s1171 = scalar_lea.vmem %s1, 180
      %v1172 = vld [vmem:[%s1171] sm:$0xf]
      %v1173 = vld [vmem:[%s1171 + $0x4] sm:$0xf]
      %v1174 = vld [vmem:[%s1171 + $0x8] sm:$0xf]
      %v1175 = vld [vmem:[%s1171 + $0xc] sm:$0xf]
      %v1176 = vld [vmem:[%s1171 + $0x10] sm:$0xf]
      %v1177 = vld [vmem:[%s1171 + $0x14] sm:$0xf]
      %v1178 = vld [vmem:[%s1171 + $0x18] sm:$0xf]
      %v1179 = vld [vmem:[%s1171 + $0x1c] sm:$0xf]
      %v1180 = vld [vmem:[%s1171 + $0x20] sm:$0xf]
      %v1190 = vunpack.c.l.b16 %v1172
      %v1191 = vunpack.c.l.b16 %v1173
      %v1192 = vunpack.c.l.b16 %v1174
      %v1193 = vunpack.c.l.b16 %v1175
      %v1194 = vunpack.c.l.b16 %v1176
      %v1195 = vunpack.c.l.b16 %v1177
      %v1196 = vunpack.c.l.b16 %v1178
      %v1197 = vunpack.c.l.b16 %v1179
      %v1198 = vunpack.c.l.b16 %v1180
      %v1199 = vpack.c.b16 %v1191, %v1190
      %v1200 = vpack.c.b16 %v1193, %v1192
      %v1201 = vpack.c.b16 %v1195, %v1194
      %v1202 = vpack.c.b16 %v1197, %v1196
      %v1203 = vpack.c.b16 %v1198, %v1198
      %v1209 = vsel %vm266, %v1163, 0
      %v1212 = vsel %vm266, %v1164, 0
      %v1215 = vsel %vm266, %v1165, 0
      %v1218 = vsel %vm266, %v1166, 0
      %v1221 = vsel %vm266, %v1167, 0
      %v1224 = vsel %vm266, %v1168, 0
      %v1227 = vsel %vm266, %v1169, 0
      %v1230 = vsel %vm266, %v1170, 0
      %v1233 = vsel %vm291, %v1203, 0
      %1235 = vmatprep.subr.bf16.mxu0 0
      %1236 = vmatpush1.bf16.msra.mxu0 0
      %1237 = vmatprep.subr.bf16.mxu0 0
      %1238 = vmatpush1.bf16.msra.mxu0 0
      %1239 = vmatprep.subr.bf16.mxu0 0
      %1240 = vmatpush1.bf16.msra.mxu0 0
      %1241 = vmatprep.subr.bf16.mxu0 0
      %1242 = vmatpush1.bf16.msra.mxu0 %v1233
      %1243 = vmatprep.subr.bf16.mxu0 0
      %1244 = vmatpush1.bf16.msra.mxu0 %v1202
      %1245 = vmatprep.subr.bf16.mxu0 0
      %1246 = vmatpush1.bf16.msra.mxu0 %v1201
      %1247 = vmatprep.subr.bf16.mxu0 0
      %1248 = vmatpush1.bf16.msra.mxu0 %v1200
      %1249 = vmatprep.subr.bf16.mxu0 0
      %1250 = vmatpush1.bf16.msra.mxu0 %v1199
      %1251 = vmatprep.subr.bf16.mxu0 0
      %1252 = vmatpush2.bf16.msra.mxu0 0
      %1253 = vmatprep.subr.bf16.mxu0 0
      %1254 = vmatpush2.bf16.msra.mxu0 0
      %1255 = vmatprep.subr.bf16.mxu0 0
      %1256 = vmatpush2.bf16.msra.mxu0 0
      %1257 = vmatprep.subr.bf16.mxu0 0
      %1258 = vmatpush2.bf16.msra.mxu0 0
      %1259 = vmatprep.subr.bf16.mxu0 0
      %1260 = vmatpush2.bf16.msra.mxu0 0
      %1261 = vmatprep.subr.bf16.mxu0 0
      %1262 = vmatpush2.bf16.msra.mxu0 0
      %1263 = vmatprep.subr.bf16.mxu0 0
      %1264 = vmatpush2.bf16.msra.mxu0 0
      %1265 = vmatprep.subr.bf16.mxu0 0
      %1266 = vmatpush2.bf16.msra.mxu0 0
      %1267 = vmatprep.mubr.bf16.mxu0 0
      %1268 = vmatmul.mubr.bf16.gmra.mxu0 %v1209
      %v1269 = vpop.f32.mrf.mxu0
      %v1270 = vadd.f32 0.0, %v1269
      %v1271 = vpop.f32.mrf.mxu0
      %v1272 = vpop.f32.mrf.mxu0
      %v1273 = vadd.f32 0.0, %v1272
      %v1274 = vpop.f32.mrf.mxu0
      %1275 = vmatprep.mubr.bf16.mxu0 0
      %1276 = vmatmul.mubr.bf16.gmra.mxu0 %v1212
      %v1277 = vpop.f32.mrf.mxu0
      %v1278 = vadd.f32 0.0, %v1277
      %v1279 = vpop.f32.mrf.mxu0
      %v1280 = vpop.f32.mrf.mxu0
      %v1281 = vadd.f32 0.0, %v1280
      %v1282 = vpop.f32.mrf.mxu0
      %1283 = vmatprep.mubr.bf16.mxu0 0
      %1284 = vmatmul.mubr.bf16.gmra.mxu0 %v1215
      %v1285 = vpop.f32.mrf.mxu0
      %v1286 = vadd.f32 0.0, %v1285
      %v1287 = vpop.f32.mrf.mxu0
      %v1288 = vpop.f32.mrf.mxu0
      %v1289 = vadd.f32 0.0, %v1288
      %v1290 = vpop.f32.mrf.mxu0
      %1291 = vmatprep.mubr.bf16.mxu0 0
      %1292 = vmatmul.mubr.bf16.gmra.mxu0 %v1218
      %v1293 = vpop.f32.mrf.mxu0
      %v1294 = vadd.f32 0.0, %v1293
      %v1295 = vpop.f32.mrf.mxu0
      %v1296 = vpop.f32.mrf.mxu0
      %v1297 = vadd.f32 0.0, %v1296
      %v1298 = vpop.f32.mrf.mxu0
      %1299 = vmatprep.mubr.bf16.mxu0 0
      %1300 = vmatmul.mubr.bf16.gmra.mxu0 %v1221
      %v1301 = vpop.f32.mrf.mxu0
      %v1302 = vadd.f32 0.0, %v1301
      %v1303 = vpop.f32.mrf.mxu0
      %v1304 = vpop.f32.mrf.mxu0
      %v1305 = vadd.f32 0.0, %v1304
      %v1306 = vpop.f32.mrf.mxu0
      %1307 = vmatprep.mubr.bf16.mxu0 0
      %1308 = vmatmul.mubr.bf16.gmra.mxu0 %v1224
      %v1309 = vpop.f32.mrf.mxu0
      %v1310 = vadd.f32 0.0, %v1309
      %v1311 = vpop.f32.mrf.mxu0
      %v1312 = vpop.f32.mrf.mxu0
      %v1313 = vadd.f32 0.0, %v1312
      %v1314 = vpop.f32.mrf.mxu0
      %1315 = vmatprep.mubr.bf16.mxu0 0
      %1316 = vmatmul.mubr.bf16.gmra.mxu0 %v1227
      %v1317 = vpop.f32.mrf.mxu0
      %v1318 = vadd.f32 0.0, %v1317
      %v1319 = vpop.f32.mrf.mxu0
      %v1320 = vpop.f32.mrf.mxu0
      %v1321 = vadd.f32 0.0, %v1320
      %v1322 = vpop.f32.mrf.mxu0
      %1323 = vmatprep.mubr.bf16.mxu0 0
      %1324 = vmatmul.mubr.bf16.gmra.mxu0 %v1230
      %v1325 = vpop.f32.mrf.mxu0
      %v1326 = vadd.f32 0.0, %v1325
      %v1327 = vpop.f32.mrf.mxu0
      %v1328 = vpop.f32.mrf.mxu0
      %v1329 = vadd.f32 0.0, %v1328
      %v1330 = vpop.f32.mrf.mxu0
      %1331 = vdwg.mxu0
      %v1332 = vadd.f32 %v1131, %v1270
      %v1333 = vadd.f32 %v1132, %v1273
      %v1334 = vadd.f32 %v1133, %v1278
      %v1335 = vadd.f32 %v1134, %v1281
      %v1336 = vadd.f32 %v1135, %v1286
      %v1337 = vadd.f32 %v1136, %v1289
      %v1338 = vadd.f32 %v1137, %v1294
      %v1339 = vadd.f32 %v1138, %v1297
      %v1340 = vadd.f32 %v1139, %v1302
      %v1341 = vadd.f32 %v1140, %v1305
      %v1342 = vadd.f32 %v1141, %v1310
      %v1343 = vadd.f32 %v1142, %v1313
      %v1344 = vadd.f32 %v1143, %v1318
      %v1345 = vadd.f32 %v1144, %v1321
      %v1346 = vadd.f32 %v1145, %v1326
      %v1347 = vadd.f32 %v1146, %v1329
      %s1348 = scalar_lea.vmem %s165, 48
      %v1349 = vld [vmem:[%s1348] sm:$0xff]
      %v1350 = vld [vmem:[%s1348 + $0x8] sm:$0xff]
      %v1351 = vld [vmem:[%s1348 + $0x18] sm:$0xff]
      %v1352 = vld [vmem:[%s1348 + $0x20] sm:$0xff]
      %v1353 = vld [vmem:[%s1348 + $0x30] sm:$0xff]
      %v1354 = vld [vmem:[%s1348 + $0x38] sm:$0xff]
      %v1355 = vld [vmem:[%s1348 + $0x48] sm:$0xff]
      %v1356 = vld [vmem:[%s1348 + $0x50] sm:$0xff]
      %v1357 = vld [vmem:[%s1348 + $0x60] sm:$0xff]
      %v1358 = vld [vmem:[%s1348 + $0x68] sm:$0xff]
      %v1359 = vld [vmem:[%s1348 + $0x78] sm:$0xff]
      %v1360 = vld [vmem:[%s1348 + $0x80] sm:$0xff]
      %v1361 = vld [vmem:[%s1348 + $0x90] sm:$0xff]
      %v1362 = vld [vmem:[%s1348 + $0x98] sm:$0xff]
      %v1363 = vld [vmem:[%s1348 + $0xa8] sm:$0xff]
      %v1364 = vld [vmem:[%s1348 + $0xb0] sm:$0xff]
      %v1365 = vpack.c.bf16 %v1350, %v1349
      %v1366 = vpack.c.bf16 %v1352, %v1351
      %v1367 = vpack.c.bf16 %v1354, %v1353
      %v1368 = vpack.c.bf16 %v1356, %v1355
      %v1369 = vpack.c.bf16 %v1358, %v1357
      %v1370 = vpack.c.bf16 %v1360, %v1359
      %v1371 = vpack.c.bf16 %v1362, %v1361
      %v1372 = vpack.c.bf16 %v1364, %v1363
      %s1373 = scalar_lea.vmem %s1, 216
      %v1374 = vld [vmem:[%s1373] sm:$0xf]
      %v1375 = vld [vmem:[%s1373 + $0x4] sm:$0xf]
      %v1376 = vld [vmem:[%s1373 + $0x8] sm:$0xf]
      %v1377 = vld [vmem:[%s1373 + $0xc] sm:$0xf]
      %v1378 = vld [vmem:[%s1373 + $0x10] sm:$0xf]
      %v1379 = vld [vmem:[%s1373 + $0x14] sm:$0xf]
      %v1380 = vld [vmem:[%s1373 + $0x18] sm:$0xf]
      %v1381 = vld [vmem:[%s1373 + $0x1c] sm:$0xf]
      %v1382 = vld [vmem:[%s1373 + $0x20] sm:$0xf]
      %v1392 = vunpack.c.l.b16 %v1374
      %v1393 = vunpack.c.l.b16 %v1375
      %v1394 = vunpack.c.l.b16 %v1376
      %v1395 = vunpack.c.l.b16 %v1377
      %v1396 = vunpack.c.l.b16 %v1378
      %v1397 = vunpack.c.l.b16 %v1379
      %v1398 = vunpack.c.l.b16 %v1380
      %v1399 = vunpack.c.l.b16 %v1381
      %v1400 = vunpack.c.l.b16 %v1382
      %v1401 = vpack.c.b16 %v1393, %v1392
      %v1402 = vpack.c.b16 %v1395, %v1394
      %v1403 = vpack.c.b16 %v1397, %v1396
      %v1404 = vpack.c.b16 %v1399, %v1398
      %v1405 = vpack.c.b16 %v1400, %v1400
      %v1411 = vsel %vm266, %v1365, 0
      %v1414 = vsel %vm266, %v1366, 0
      %v1417 = vsel %vm266, %v1367, 0
      %v1420 = vsel %vm266, %v1368, 0
      %v1423 = vsel %vm266, %v1369, 0
      %v1426 = vsel %vm266, %v1370, 0
      %v1429 = vsel %vm266, %v1371, 0
      %v1432 = vsel %vm266, %v1372, 0
      %v1435 = vsel %vm291, %v1405, 0
      %1437 = vmatprep.subr.bf16.mxu0 0
      %1438 = vmatpush1.bf16.msra.mxu0 0
      %1439 = vmatprep.subr.bf16.mxu0 0
      %1440 = vmatpush1.bf16.msra.mxu0 0
      %1441 = vmatprep.subr.bf16.mxu0 0
      %1442 = vmatpush1.bf16.msra.mxu0 0
      %1443 = vmatprep.subr.bf16.mxu0 0
      %1444 = vmatpush1.bf16.msra.mxu0 %v1435
      %1445 = vmatprep.subr.bf16.mxu0 0
      %1446 = vmatpush1.bf16.msra.mxu0 %v1404
      %1447 = vmatprep.subr.bf16.mxu0 0
      %1448 = vmatpush1.bf16.msra.mxu0 %v1403
      %1449 = vmatprep.subr.bf16.mxu0 0
      %1450 = vmatpush1.bf16.msra.mxu0 %v1402
      %1451 = vmatprep.subr.bf16.mxu0 0
      %1452 = vmatpush1.bf16.msra.mxu0 %v1401
      %1453 = vmatprep.subr.bf16.mxu0 0
      %1454 = vmatpush2.bf16.msra.mxu0 0
      %1455 = vmatprep.subr.bf16.mxu0 0
      %1456 = vmatpush2.bf16.msra.mxu0 0
      %1457 = vmatprep.subr.bf16.mxu0 0
      %1458 = vmatpush2.bf16.msra.mxu0 0
      %1459 = vmatprep.subr.bf16.mxu0 0
      %1460 = vmatpush2.bf16.msra.mxu0 0
      %1461 = vmatprep.subr.bf16.mxu0 0
      %1462 = vmatpush2.bf16.msra.mxu0 0
      %1463 = vmatprep.subr.bf16.mxu0 0
      %1464 = vmatpush2.bf16.msra.mxu0 0
      %1465 = vmatprep.subr.bf16.mxu0 0
      %1466 = vmatpush2.bf16.msra.mxu0 0
      %1467 = vmatprep.subr.bf16.mxu0 0
      %1468 = vmatpush2.bf16.msra.mxu0 0
      %1469 = vmatprep.mubr.bf16.mxu0 0
      %1470 = vmatmul.mubr.bf16.gmra.mxu0 %v1411
      %v1471 = vpop.f32.mrf.mxu0
      %v1472 = vadd.f32 0.0, %v1471
      %v1473 = vpop.f32.mrf.mxu0
      %v1474 = vpop.f32.mrf.mxu0
      %v1475 = vadd.f32 0.0, %v1474
      %v1476 = vpop.f32.mrf.mxu0
      %1477 = vmatprep.mubr.bf16.mxu0 0
      %1478 = vmatmul.mubr.bf16.gmra.mxu0 %v1414
      %v1479 = vpop.f32.mrf.mxu0
      %v1480 = vadd.f32 0.0, %v1479
      %v1481 = vpop.f32.mrf.mxu0
      %v1482 = vpop.f32.mrf.mxu0
      %v1483 = vadd.f32 0.0, %v1482
      %v1484 = vpop.f32.mrf.mxu0
      %1485 = vmatprep.mubr.bf16.mxu0 0
      %1486 = vmatmul.mubr.bf16.gmra.mxu0 %v1417
      %v1487 = vpop.f32.mrf.mxu0
      %v1488 = vadd.f32 0.0, %v1487
      %v1489 = vpop.f32.mrf.mxu0
      %v1490 = vpop.f32.mrf.mxu0
      %v1491 = vadd.f32 0.0, %v1490
      %v1492 = vpop.f32.mrf.mxu0
      %1493 = vmatprep.mubr.bf16.mxu0 0
      %1494 = vmatmul.mubr.bf16.gmra.mxu0 %v1420
      %v1495 = vpop.f32.mrf.mxu0
      %v1496 = vadd.f32 0.0, %v1495
      %v1497 = vpop.f32.mrf.mxu0
      %v1498 = vpop.f32.mrf.mxu0
      %v1499 = vadd.f32 0.0, %v1498
      %v1500 = vpop.f32.mrf.mxu0
      %1501 = vmatprep.mubr.bf16.mxu0 0
      %1502 = vmatmul.mubr.bf16.gmra.mxu0 %v1423
      %v1503 = vpop.f32.mrf.mxu0
      %v1504 = vadd.f32 0.0, %v1503
      %v1505 = vpop.f32.mrf.mxu0
      %v1506 = vpop.f32.mrf.mxu0
      %v1507 = vadd.f32 0.0, %v1506
      %v1508 = vpop.f32.mrf.mxu0
      %1509 = vmatprep.mubr.bf16.mxu0 0
      %1510 = vmatmul.mubr.bf16.gmra.mxu0 %v1426
      %v1511 = vpop.f32.mrf.mxu0
      %v1512 = vadd.f32 0.0, %v1511
      %v1513 = vpop.f32.mrf.mxu0
      %v1514 = vpop.f32.mrf.mxu0
      %v1515 = vadd.f32 0.0, %v1514
      %v1516 = vpop.f32.mrf.mxu0
      %1517 = vmatprep.mubr.bf16.mxu0 0
      %1518 = vmatmul.mubr.bf16.gmra.mxu0 %v1429
      %v1519 = vpop.f32.mrf.mxu0
      %v1520 = vadd.f32 0.0, %v1519
      %v1521 = vpop.f32.mrf.mxu0
      %v1522 = vpop.f32.mrf.mxu0
      %v1523 = vadd.f32 0.0, %v1522
      %v1524 = vpop.f32.mrf.mxu0
      %1525 = vmatprep.mubr.bf16.mxu0 0
      %1526 = vmatmul.mubr.bf16.gmra.mxu0 %v1432
      %v1527 = vpop.f32.mrf.mxu0
      %v1528 = vadd.f32 0.0, %v1527
      %v1529 = vpop.f32.mrf.mxu0
      %v1530 = vpop.f32.mrf.mxu0
      %v1531 = vadd.f32 0.0, %v1530
      %v1532 = vpop.f32.mrf.mxu0
      %1533 = vdwg.mxu0
      %v1534 = vadd.f32 %v1332, %v1472
      %v1535 = vadd.f32 %v1333, %v1475
      %v1536 = vadd.f32 %v1334, %v1480
      %v1537 = vadd.f32 %v1335, %v1483
      %v1538 = vadd.f32 %v1336, %v1488
      %v1539 = vadd.f32 %v1337, %v1491
      %v1540 = vadd.f32 %v1338, %v1496
      %v1541 = vadd.f32 %v1339, %v1499
      %v1542 = vadd.f32 %v1340, %v1504
      %v1543 = vadd.f32 %v1341, %v1507
      %v1544 = vadd.f32 %v1342, %v1512
      %v1545 = vadd.f32 %v1343, %v1515
      %v1546 = vadd.f32 %v1344, %v1520
      %v1547 = vadd.f32 %v1345, %v1523
      %v1548 = vadd.f32 %v1346, %v1528
      %v1549 = vadd.f32 %v1347, %v1531
      %v1550 = vld [vmem:[%s1348 + $0x1] sm:$0xff]
      %v1551 = vld [vmem:[%s1348 + $0x9] sm:$0xff]
      %v1552 = vld [vmem:[%s1348 + $0x19] sm:$0xff]
      %v1553 = vld [vmem:[%s1348 + $0x21] sm:$0xff]
      %v1554 = vld [vmem:[%s1348 + $0x31] sm:$0xff]
      %v1555 = vld [vmem:[%s1348 + $0x39] sm:$0xff]
      %v1556 = vld [vmem:[%s1348 + $0x49] sm:$0xff]
      %v1557 = vld [vmem:[%s1348 + $0x51] sm:$0xff]
      %v1558 = vld [vmem:[%s1348 + $0x61] sm:$0xff]
      %v1559 = vld [vmem:[%s1348 + $0x69] sm:$0xff]
      %v1560 = vld [vmem:[%s1348 + $0x79] sm:$0xff]
      %v1561 = vld [vmem:[%s1348 + $0x81] sm:$0xff]
      %v1562 = vld [vmem:[%s1348 + $0x91] sm:$0xff]
      %v1563 = vld [vmem:[%s1348 + $0x99] sm:$0xff]
      %v1564 = vld [vmem:[%s1348 + $0xa9] sm:$0xff]
      %v1565 = vld [vmem:[%s1348 + $0xb1] sm:$0xff]
      %v1566 = vpack.c.bf16 %v1551, %v1550
      %v1567 = vpack.c.bf16 %v1553, %v1552
      %v1568 = vpack.c.bf16 %v1555, %v1554
      %v1569 = vpack.c.bf16 %v1557, %v1556
      %v1570 = vpack.c.bf16 %v1559, %v1558
      %v1571 = vpack.c.bf16 %v1561, %v1560
      %v1572 = vpack.c.bf16 %v1563, %v1562
      %v1573 = vpack.c.bf16 %v1565, %v1564
      %s1574 = scalar_lea.vmem %s1, 252
      %v1575 = vld [vmem:[%s1574] sm:$0xf]
      %v1576 = vld [vmem:[%s1574 + $0x4] sm:$0xf]
      %v1577 = vld [vmem:[%s1574 + $0x8] sm:$0xf]
      %v1578 = vld [vmem:[%s1574 + $0xc] sm:$0xf]
      %v1579 = vld [vmem:[%s1574 + $0x10] sm:$0xf]
      %v1580 = vld [vmem:[%s1574 + $0x14] sm:$0xf]
      %v1581 = vld [vmem:[%s1574 + $0x18] sm:$0xf]
      %v1582 = vld [vmem:[%s1574 + $0x1c] sm:$0xf]
      %v1583 = vld [vmem:[%s1574 + $0x20] sm:$0xf]
      %v1593 = vunpack.c.l.b16 %v1575
      %v1594 = vunpack.c.l.b16 %v1576
      %v1595 = vunpack.c.l.b16 %v1577
      %v1596 = vunpack.c.l.b16 %v1578
      %v1597 = vunpack.c.l.b16 %v1579
      %v1598 = vunpack.c.l.b16 %v1580
      %v1599 = vunpack.c.l.b16 %v1581
      %v1600 = vunpack.c.l.b16 %v1582
      %v1601 = vunpack.c.l.b16 %v1583
      %v1602 = vpack.c.b16 %v1594, %v1593
      %v1603 = vpack.c.b16 %v1596, %v1595
      %v1604 = vpack.c.b16 %v1598, %v1597
      %v1605 = vpack.c.b16 %v1600, %v1599
      %v1606 = vpack.c.b16 %v1601, %v1601
      %v1612 = vsel %vm266, %v1566, 0
      %v1615 = vsel %vm266, %v1567, 0
      %v1618 = vsel %vm266, %v1568, 0
      %v1621 = vsel %vm266, %v1569, 0
      %v1624 = vsel %vm266, %v1570, 0
      %v1627 = vsel %vm266, %v1571, 0
      %v1630 = vsel %vm266, %v1572, 0
      %v1633 = vsel %vm266, %v1573, 0
      %v1636 = vsel %vm291, %v1606, 0
      %1638 = vmatprep.subr.bf16.mxu0 0
      %1639 = vmatpush1.bf16.msra.mxu0 0
      %1640 = vmatprep.subr.bf16.mxu0 0
      %1641 = vmatpush1.bf16.msra.mxu0 0
      %1642 = vmatprep.subr.bf16.mxu0 0
      %1643 = vmatpush1.bf16.msra.mxu0 0
      %1644 = vmatprep.subr.bf16.mxu0 0
      %1645 = vmatpush1.bf16.msra.mxu0 %v1636
      %1646 = vmatprep.subr.bf16.mxu0 0
      %1647 = vmatpush1.bf16.msra.mxu0 %v1605
      %1648 = vmatprep.subr.bf16.mxu0 0
      %1649 = vmatpush1.bf16.msra.mxu0 %v1604
      %1650 = vmatprep.subr.bf16.mxu0 0
      %1651 = vmatpush1.bf16.msra.mxu0 %v1603
      %1652 = vmatprep.subr.bf16.mxu0 0
      %1653 = vmatpush1.bf16.msra.mxu0 %v1602
      %1654 = vmatprep.subr.bf16.mxu0 0
      %1655 = vmatpush2.bf16.msra.mxu0 0
      %1656 = vmatprep.subr.bf16.mxu0 0
      %1657 = vmatpush2.bf16.msra.mxu0 0
      %1658 = vmatprep.subr.bf16.mxu0 0
      %1659 = vmatpush2.bf16.msra.mxu0 0
      %1660 = vmatprep.subr.bf16.mxu0 0
      %1661 = vmatpush2.bf16.msra.mxu0 0
      %1662 = vmatprep.subr.bf16.mxu0 0
      %1663 = vmatpush2.bf16.msra.mxu0 0
      %1664 = vmatprep.subr.bf16.mxu0 0
      %1665 = vmatpush2.bf16.msra.mxu0 0
      %1666 = vmatprep.subr.bf16.mxu0 0
      %1667 = vmatpush2.bf16.msra.mxu0 0
      %1668 = vmatprep.subr.bf16.mxu0 0
      %1669 = vmatpush2.bf16.msra.mxu0 0
      %1670 = vmatprep.mubr.bf16.mxu0 0
      %1671 = vmatmul.mubr.bf16.gmra.mxu0 %v1612
      %v1672 = vpop.f32.mrf.mxu0
      %v1673 = vadd.f32 0.0, %v1672
      %v1674 = vpop.f32.mrf.mxu0
      %v1675 = vpop.f32.mrf.mxu0
      %v1676 = vadd.f32 0.0, %v1675
      %v1677 = vpop.f32.mrf.mxu0
      %1678 = vmatprep.mubr.bf16.mxu0 0
      %1679 = vmatmul.mubr.bf16.gmra.mxu0 %v1615
      %v1680 = vpop.f32.mrf.mxu0
      %v1681 = vadd.f32 0.0, %v1680
      %v1682 = vpop.f32.mrf.mxu0
      %v1683 = vpop.f32.mrf.mxu0
      %v1684 = vadd.f32 0.0, %v1683
      %v1685 = vpop.f32.mrf.mxu0
      %1686 = vmatprep.mubr.bf16.mxu0 0
      %1687 = vmatmul.mubr.bf16.gmra.mxu0 %v1618
      %v1688 = vpop.f32.mrf.mxu0
      %v1689 = vadd.f32 0.0, %v1688
      %v1690 = vpop.f32.mrf.mxu0
      %v1691 = vpop.f32.mrf.mxu0
      %v1692 = vadd.f32 0.0, %v1691
      %v1693 = vpop.f32.mrf.mxu0
      %1694 = vmatprep.mubr.bf16.mxu0 0
      %1695 = vmatmul.mubr.bf16.gmra.mxu0 %v1621
      %v1696 = vpop.f32.mrf.mxu0
      %v1697 = vadd.f32 0.0, %v1696
      %v1698 = vpop.f32.mrf.mxu0
      %v1699 = vpop.f32.mrf.mxu0
      %v1700 = vadd.f32 0.0, %v1699
      %v1701 = vpop.f32.mrf.mxu0
      %1702 = vmatprep.mubr.bf16.mxu0 0
      %1703 = vmatmul.mubr.bf16.gmra.mxu0 %v1624
      %v1704 = vpop.f32.mrf.mxu0
      %v1705 = vadd.f32 0.0, %v1704
      %v1706 = vpop.f32.mrf.mxu0
      %v1707 = vpop.f32.mrf.mxu0
      %v1708 = vadd.f32 0.0, %v1707
      %v1709 = vpop.f32.mrf.mxu0
      %1710 = vmatprep.mubr.bf16.mxu0 0
      %1711 = vmatmul.mubr.bf16.gmra.mxu0 %v1627
      %v1712 = vpop.f32.mrf.mxu0
      %v1713 = vadd.f32 0.0, %v1712
      %v1714 = vpop.f32.mrf.mxu0
      %v1715 = vpop.f32.mrf.mxu0
      %v1716 = vadd.f32 0.0, %v1715
      %v1717 = vpop.f32.mrf.mxu0
      %1718 = vmatprep.mubr.bf16.mxu0 0
      %1719 = vmatmul.mubr.bf16.gmra.mxu0 %v1630
      %v1720 = vpop.f32.mrf.mxu0
      %v1721 = vadd.f32 0.0, %v1720
      %v1722 = vpop.f32.mrf.mxu0
      %v1723 = vpop.f32.mrf.mxu0
      %v1724 = vadd.f32 0.0, %v1723
      %v1725 = vpop.f32.mrf.mxu0
      %1726 = vmatprep.mubr.bf16.mxu0 0
      %1727 = vmatmul.mubr.bf16.gmra.mxu0 %v1633
      %v1728 = vpop.f32.mrf.mxu0
      %v1729 = vadd.f32 0.0, %v1728
      %v1730 = vpop.f32.mrf.mxu0
      %v1731 = vpop.f32.mrf.mxu0
      %v1732 = vadd.f32 0.0, %v1731
      %v1733 = vpop.f32.mrf.mxu0
      %1734 = vdwg.mxu0
      %v1735 = vadd.f32 %v1534, %v1673
      %v1736 = vadd.f32 %v1535, %v1676
      %v1737 = vadd.f32 %v1536, %v1681
      %v1738 = vadd.f32 %v1537, %v1684
      %v1739 = vadd.f32 %v1538, %v1689
      %v1740 = vadd.f32 %v1539, %v1692
      %v1741 = vadd.f32 %v1540, %v1697
      %v1742 = vadd.f32 %v1541, %v1700
      %v1743 = vadd.f32 %v1542, %v1705
      %v1744 = vadd.f32 %v1543, %v1708
      %v1745 = vadd.f32 %v1544, %v1713
      %v1746 = vadd.f32 %v1545, %v1716
      %v1747 = vadd.f32 %v1546, %v1721
      %v1748 = vadd.f32 %v1547, %v1724
      %v1749 = vadd.f32 %v1548, %v1729
      %v1750 = vadd.f32 %v1549, %v1732
      %v1751 = vld [vmem:[%s1348 + $0x2] sm:$0xff]
      %v1752 = vld [vmem:[%s1348 + $0xa] sm:$0xff]
      %v1753 = vld [vmem:[%s1348 + $0x1a] sm:$0xff]
      %v1754 = vld [vmem:[%s1348 + $0x22] sm:$0xff]
      %v1755 = vld [vmem:[%s1348 + $0x32] sm:$0xff]
      %v1756 = vld [vmem:[%s1348 + $0x3a] sm:$0xff]
      %v1757 = vld [vmem:[%s1348 + $0x4a] sm:$0xff]
      %v1758 = vld [vmem:[%s1348 + $0x52] sm:$0xff]
      %v1759 = vld [vmem:[%s1348 + $0x62] sm:$0xff]
      %v1760 = vld [vmem:[%s1348 + $0x6a] sm:$0xff]
      %v1761 = vld [vmem:[%s1348 + $0x7a] sm:$0xff]
      %v1762 = vld [vmem:[%s1348 + $0x82] sm:$0xff]
      %v1763 = vld [vmem:[%s1348 + $0x92] sm:$0xff]
      %v1764 = vld [vmem:[%s1348 + $0x9a] sm:$0xff]
      %v1765 = vld [vmem:[%s1348 + $0xaa] sm:$0xff]
      %v1766 = vld [vmem:[%s1348 + $0xb2] sm:$0xff]
      %v1767 = vpack.c.bf16 %v1752, %v1751
      %v1768 = vpack.c.bf16 %v1754, %v1753
      %v1769 = vpack.c.bf16 %v1756, %v1755
      %v1770 = vpack.c.bf16 %v1758, %v1757
      %v1771 = vpack.c.bf16 %v1760, %v1759
      %v1772 = vpack.c.bf16 %v1762, %v1761
      %v1773 = vpack.c.bf16 %v1764, %v1763
      %v1774 = vpack.c.bf16 %v1766, %v1765
      %s1775 = scalar_lea.vmem %s1, 288
      %v1776 = vld [vmem:[%s1775] sm:$0xf]
      %v1777 = vld [vmem:[%s1775 + $0x4] sm:$0xf]
      %v1778 = vld [vmem:[%s1775 + $0x8] sm:$0xf]
      %v1779 = vld [vmem:[%s1775 + $0xc] sm:$0xf]
      %v1780 = vld [vmem:[%s1775 + $0x10] sm:$0xf]
      %v1781 = vld [vmem:[%s1775 + $0x14] sm:$0xf]
      %v1782 = vld [vmem:[%s1775 + $0x18] sm:$0xf]
      %v1783 = vld [vmem:[%s1775 + $0x1c] sm:$0xf]
      %v1784 = vld [vmem:[%s1775 + $0x20] sm:$0xf]
      %v1794 = vunpack.c.l.b16 %v1776
      %v1795 = vunpack.c.l.b16 %v1777
      %v1796 = vunpack.c.l.b16 %v1778
      %v1797 = vunpack.c.l.b16 %v1779
      %v1798 = vunpack.c.l.b16 %v1780
      %v1799 = vunpack.c.l.b16 %v1781
      %v1800 = vunpack.c.l.b16 %v1782
      %v1801 = vunpack.c.l.b16 %v1783
      %v1802 = vunpack.c.l.b16 %v1784
      %v1803 = vpack.c.b16 %v1795, %v1794
      %v1804 = vpack.c.b16 %v1797, %v1796
      %v1805 = vpack.c.b16 %v1799, %v1798
      %v1806 = vpack.c.b16 %v1801, %v1800
      %v1807 = vpack.c.b16 %v1802, %v1802
      %v1813 = vsel %vm266, %v1767, 0
      %v1816 = vsel %vm266, %v1768, 0
      %v1819 = vsel %vm266, %v1769, 0
      %v1822 = vsel %vm266, %v1770, 0
      %v1825 = vsel %vm266, %v1771, 0
      %v1828 = vsel %vm266, %v1772, 0
      %v1831 = vsel %vm266, %v1773, 0
      %v1834 = vsel %vm266, %v1774, 0
      %v1837 = vsel %vm291, %v1807, 0
      %1839 = vmatprep.subr.bf16.mxu0 0
      %1840 = vmatpush1.bf16.msra.mxu0 0
      %1841 = vmatprep.subr.bf16.mxu0 0
      %1842 = vmatpush1.bf16.msra.mxu0 0
      %1843 = vmatprep.subr.bf16.mxu0 0
      %1844 = vmatpush1.bf16.msra.mxu0 0
      %1845 = vmatprep.subr.bf16.mxu0 0
      %1846 = vmatpush1.bf16.msra.mxu0 %v1837
      %1847 = vmatprep.subr.bf16.mxu0 0
      %1848 = vmatpush1.bf16.msra.mxu0 %v1806
      %1849 = vmatprep.subr.bf16.mxu0 0
      %1850 = vmatpush1.bf16.msra.mxu0 %v1805
      %1851 = vmatprep.subr.bf16.mxu0 0
      %1852 = vmatpush1.bf16.msra.mxu0 %v1804
      %1853 = vmatprep.subr.bf16.mxu0 0
      %1854 = vmatpush1.bf16.msra.mxu0 %v1803
      %1855 = vmatprep.subr.bf16.mxu0 0
      %1856 = vmatpush2.bf16.msra.mxu0 0
      %1857 = vmatprep.subr.bf16.mxu0 0
      %1858 = vmatpush2.bf16.msra.mxu0 0
      %1859 = vmatprep.subr.bf16.mxu0 0
      %1860 = vmatpush2.bf16.msra.mxu0 0
      %1861 = vmatprep.subr.bf16.mxu0 0
      %1862 = vmatpush2.bf16.msra.mxu0 0
      %1863 = vmatprep.subr.bf16.mxu0 0
      %1864 = vmatpush2.bf16.msra.mxu0 0
      %1865 = vmatprep.subr.bf16.mxu0 0
      %1866 = vmatpush2.bf16.msra.mxu0 0
      %1867 = vmatprep.subr.bf16.mxu0 0
      %1868 = vmatpush2.bf16.msra.mxu0 0
      %1869 = vmatprep.subr.bf16.mxu0 0
      %1870 = vmatpush2.bf16.msra.mxu0 0
      %1871 = vmatprep.mubr.bf16.mxu0 0
      %1872 = vmatmul.mubr.bf16.gmra.mxu0 %v1813
      %v1873 = vpop.f32.mrf.mxu0
      %v1874 = vadd.f32 0.0, %v1873
      %v1875 = vpop.f32.mrf.mxu0
      %v1876 = vpop.f32.mrf.mxu0
      %v1877 = vadd.f32 0.0, %v1876
      %v1878 = vpop.f32.mrf.mxu0
      %1879 = vmatprep.mubr.bf16.mxu0 0
      %1880 = vmatmul.mubr.bf16.gmra.mxu0 %v1816
      %v1881 = vpop.f32.mrf.mxu0
      %v1882 = vadd.f32 0.0, %v1881
      %v1883 = vpop.f32.mrf.mxu0
      %v1884 = vpop.f32.mrf.mxu0
      %v1885 = vadd.f32 0.0, %v1884
      %v1886 = vpop.f32.mrf.mxu0
      %1887 = vmatprep.mubr.bf16.mxu0 0
      %1888 = vmatmul.mubr.bf16.gmra.mxu0 %v1819
      %v1889 = vpop.f32.mrf.mxu0
      %v1890 = vadd.f32 0.0, %v1889
      %v1891 = vpop.f32.mrf.mxu0
      %v1892 = vpop.f32.mrf.mxu0
      %v1893 = vadd.f32 0.0, %v1892
      %v1894 = vpop.f32.mrf.mxu0
      %1895 = vmatprep.mubr.bf16.mxu0 0
      %1896 = vmatmul.mubr.bf16.gmra.mxu0 %v1822
      %v1897 = vpop.f32.mrf.mxu0
      %v1898 = vadd.f32 0.0, %v1897
      %v1899 = vpop.f32.mrf.mxu0
      %v1900 = vpop.f32.mrf.mxu0
      %v1901 = vadd.f32 0.0, %v1900
      %v1902 = vpop.f32.mrf.mxu0
      %1903 = vmatprep.mubr.bf16.mxu0 0
      %1904 = vmatmul.mubr.bf16.gmra.mxu0 %v1825
      %v1905 = vpop.f32.mrf.mxu0
      %v1906 = vadd.f32 0.0, %v1905
      %v1907 = vpop.f32.mrf.mxu0
      %v1908 = vpop.f32.mrf.mxu0
      %v1909 = vadd.f32 0.0, %v1908
      %v1910 = vpop.f32.mrf.mxu0
      %1911 = vmatprep.mubr.bf16.mxu0 0
      %1912 = vmatmul.mubr.bf16.gmra.mxu0 %v1828
      %v1913 = vpop.f32.mrf.mxu0
      %v1914 = vadd.f32 0.0, %v1913
      %v1915 = vpop.f32.mrf.mxu0
      %v1916 = vpop.f32.mrf.mxu0
      %v1917 = vadd.f32 0.0, %v1916
      %v1918 = vpop.f32.mrf.mxu0
      %1919 = vmatprep.mubr.bf16.mxu0 0
      %1920 = vmatmul.mubr.bf16.gmra.mxu0 %v1831
      %v1921 = vpop.f32.mrf.mxu0
      %v1922 = vadd.f32 0.0, %v1921
      %v1923 = vpop.f32.mrf.mxu0
      %v1924 = vpop.f32.mrf.mxu0
      %v1925 = vadd.f32 0.0, %v1924
      %v1926 = vpop.f32.mrf.mxu0
      %1927 = vmatprep.mubr.bf16.mxu0 0
      %1928 = vmatmul.mubr.bf16.gmra.mxu0 %v1834
      %v1929 = vpop.f32.mrf.mxu0
      %v1930 = vadd.f32 0.0, %v1929
      %v1931 = vpop.f32.mrf.mxu0
      %v1932 = vpop.f32.mrf.mxu0
      %v1933 = vadd.f32 0.0, %v1932
      %v1934 = vpop.f32.mrf.mxu0
      %1935 = vdwg.mxu0
      %v1936 = vadd.f32 %v1735, %v1874
      %v1937 = vadd.f32 %v1736, %v1877
      %v1938 = vadd.f32 %v1737, %v1882
      %v1939 = vadd.f32 %v1738, %v1885
      %v1940 = vadd.f32 %v1739, %v1890
      %v1941 = vadd.f32 %v1740, %v1893
      %v1942 = vadd.f32 %v1741, %v1898
      %v1943 = vadd.f32 %v1742, %v1901
      %v1944 = vadd.f32 %v1743, %v1906
      %v1945 = vadd.f32 %v1744, %v1909
      %v1946 = vadd.f32 %v1745, %v1914
      %v1947 = vadd.f32 %v1746, %v1917
      %v1948 = vadd.f32 %v1747, %v1922
      %v1949 = vadd.f32 %v1748, %v1925
      %v1950 = vadd.f32 %v1749, %v1930
      %v1951 = vadd.f32 %v1750, %v1933
      %v1952 = vld [vmem:[%s2] sm:$0x1]
      %v1954 = vlaneseq
      %v1955 = vshrl.u32 %v1954, 7
      %v1956 = vsub.s32 0, %v1955
      %v1957 = vrot.slane %v1952, %v1956
      %v1959 = vadd.f32 %v1936, %v1957
      %v1960 = vadd.f32 %v1937, %v1957
      %v1961 = vadd.f32 %v1938, %v1957
      %v1962 = vadd.f32 %v1939, %v1957
      %v1963 = vadd.f32 %v1940, %v1957
      %v1964 = vadd.f32 %v1941, %v1957
      %v1965 = vadd.f32 %v1942, %v1957
      %v1966 = vadd.f32 %v1943, %v1957
      %v1967 = vadd.f32 %v1944, %v1957
      %v1968 = vadd.f32 %v1945, %v1957
      %v1969 = vadd.f32 %v1946, %v1957
      %v1970 = vadd.f32 %v1947, %v1957
      %v1971 = vadd.f32 %v1948, %v1957
      %v1972 = vadd.f32 %v1949, %v1957
      %v1973 = vadd.f32 %v1950, %v1957
      %v1974 = vadd.f32 %v1951, %v1957
      %v1975 = vmax.f32 %v1959, 0.0
      %v1976 = vmax.f32 %v1960, 0.0
      %v1977 = vmax.f32 %v1961, 0.0
      %v1978 = vmax.f32 %v1962, 0.0
      %v1979 = vmax.f32 %v1963, 0.0
      %v1980 = vmax.f32 %v1964, 0.0
      %v1981 = vmax.f32 %v1965, 0.0
      %v1982 = vmax.f32 %v1966, 0.0
      %v1983 = vmax.f32 %v1967, 0.0
      %v1984 = vmax.f32 %v1968, 0.0
      %v1985 = vmax.f32 %v1969, 0.0
      %v1986 = vmax.f32 %v1970, 0.0
      %v1987 = vmax.f32 %v1971, 0.0
      %v1988 = vmax.f32 %v1972, 0.0
      %v1989 = vmax.f32 %v1973, 0.0
      %v1990 = vmax.f32 %v1974, 0.0
      %1991 = vst [vmem:[%s170] sm:$0xff] %v1975
      %1992 = vst [vmem:[%s170 + $0x8] sm:$0xff] %v1976
      %1993 = vst [vmem:[%s170 + $0x10] sm:$0xff] %v1977
      %1994 = vst [vmem:[%s170 + $0x18] sm:$0xff] %v1978
      %1995 = vst [vmem:[%s170 + $0x20] sm:$0xff] %v1979
      %1996 = vst [vmem:[%s170 + $0x28] sm:$0xff] %v1980
      %1997 = vst [vmem:[%s170 + $0x30] sm:$0xff] %v1981
      %1998 = vst [vmem:[%s170 + $0x38] sm:$0xff] %v1982
      %1999 = vst [vmem:[%s170 + $0x40] sm:$0xff] %v1983
      %2000 = vst [vmem:[%s170 + $0x48] sm:$0xff] %v1984
      %2001 = vst [vmem:[%s170 + $0x50] sm:$0xff] %v1985
      %2002 = vst [vmem:[%s170 + $0x58] sm:$0xff] %v1986
      %2003 = vst [vmem:[%s170 + $0x60] sm:$0xff] %v1987
      %2004 = vst [vmem:[%s170 + $0x68] sm:$0xff] %v1988
      %2005 = vst [vmem:[%s170 + $0x70] sm:$0xff] %v1989
      %2006 = vst [vmem:[%s170 + $0x78] sm:$0xff] %v1990
      %p2007 = scmp.lt.s32.totalorder %s14, 1
      %s2008 = scalar_select %p2007, %s14, 1
      %s2009 = smul.addr %s2008, 16
      %s2010 = smul.addr %s2009, 8
      %s2011 = scalar_lea.vmem %s3, %s2010
      // Predicated region
      $region33: #{cnn3d_lstm_lite_forward.3} parent=31 // pred_check
        %p2012 = pneg %p100
      $region34: #{cnn3d_lstm_lite_forward.3} parent=31 // pred_check_branch
        %2014 = sbr.rel (%p2012) target = $region36
      $region35: #{cnn3d_lstm_lite_forward.3} parent=31 // pred_region
        _
      $region36: #{cnn3d_lstm_lite_forward.3} parent=31 // pred_fallthru
        _
    $region32: #{cnn3d_lstm_lite_forward.3} parent=5 // pred_fallthru
      _
    %p2015 = scmp.le.s32.totalorder 2, %s9
    // Predicated region
    $region37: #{cnn3d_lstm_lite_forward.3} parent=5 // pred_check
      %p2016 = pneg %p2015
    $region38: #{cnn3d_lstm_lite_forward.3} parent=5 // pred_check_branch
      %2018 = sbr.rel (%p2016) target = $region40
    $region39: #{cnn3d_lstm_lite_forward.3} parent=5 // pred_region
      %s2019 = ssub.s32 %s9, 2
      // Predicated region
      $region41: #{cnn3d_lstm_lite_forward.3} parent=39 // pred_check
        %p2020 = pneg %p106
      $region42: #{cnn3d_lstm_lite_forward.3} parent=39 // pred_check_branch
        %2022 = sbr.rel (%p2020) target = $region44
      $region43: #{cnn3d_lstm_lite_forward.3} parent=39 // pred_region
        %p2023 = scmp.lt.s32.totalorder %s15, 1
        %s2024 = scalar_select %p2023, %s15, 1
        %s2025 = smul.addr %s2024, 16
        %s2026 = smul.addr %s2025, 8
        %s2027 = scalar_lea.vmem %s3, %s2026
      $region44: #{cnn3d_lstm_lite_forward.3} parent=39 // pred_fallthru
        _
    $region40: #{cnn3d_lstm_lite_forward.3} parent=5 // pred_fallthru
      _
  $region6: #{cnn3d_lstm_lite_forward.3} parent=0 // loop_footer
    %s13 = sadd.s32 1, %s9
  $region7: #{cnn3d_lstm_lite_forward.3} parent=0 // loop_footer_branch
    %8 = sbr.rel target = $region3
  $region8: #{cnn3d_lstm_lite_forward.3} parent=0 // loop_exit
    _

// kernel: tile.23
$region0: #{tile.23}
  #allocation0 [shape = 's32[1]{0}', space=sflag, size = 0x4, scoped, tag = 'scoped memory for tile.23']
  %s0 = inlined_call_operand.vmem [shape: f32[16], index: 0, kind: input, shape index: {}]
  %s1 = inlined_call_operand.vmem [shape: f32[16,16], index: 1, kind: output, shape index: {}]
  // Predicated region
  $region2: #{tile.23} parent=0 // pred_check
    _
  $region3: #{tile.23} parent=0 // pred_check_branch
    %3 = sbr.rel (0) target = $region5
  $region4: #{tile.23} parent=0 // pred_region
    _
  $region5: #{tile.23} parent=0 // pred_fallthru
    _
  %v4 = vld [vmem:[%s0] ss:$0 sm:$0xff]
  %5 = vst [vmem:[%s1] sm:$0xff] %v4
  %s6 = scalar_lea.vmem %s1, 8
  %7 = vst [vmem:[%s6] sm:$0xff] %v4

// kernel: tile.24
$region0: #{tile.24}
  %s0 = inlined_call_operand.vmem [shape: f32[16,16], index: 0, kind: input, shape index: {}]
  %s1 = inlined_call_operand.vmem [shape: f32[1,256], index: 1, kind: output, shape index: {}]
  $region1: #{tile.24} parent=0
    #allocation0 [shape = 'u8[8192]{0}', space=vmem, size = 0x2000, scoped, tag = 'scoped mem for output reshape']
    %s2 = smov 3
    %v3 = vld [vmem:[%s0] ss:$8 sm:%s2]
    %vm4 = vcmask 130048
    %5 = vst.msk [vmem:[#allocation0] ss:$8 sm:$0x3] %vm4, %v3
    %s6 = scalar_lea.vmem %s0, 7
    %s7 = smov 3
    %v8 = vld [vmem:[%s6] ss:$8 sm:%s7]
    %9 = vrot.lane.b32.xlu0 %v8, 112
    %v10 = vpop.permute.xlu0 %9
    %vm11 = vcmask 1048448
    %12 = vst.msk [vmem:[#allocation0] ss:$8 sm:$0x3] %vm11, %v10
    %s13 = scalar_lea.vmem %s0, 6
    %s14 = smov 3
    %v15 = vld [vmem:[%s13] ss:$8 sm:%s14]
    %16 = vrot.lane.b32.xlu0 %v15, 96
    %v17 = vpop.permute.xlu0 %16
    %vm18 = vcmask 917248
    %19 = vst.msk [vmem:[#allocation0] ss:$8 sm:$0x3] %vm18, %v17
    %s20 = scalar_lea.vmem %s0, 5
    %s21 = smov 3
    %v22 = vld [vmem:[%s20] ss:$8 sm:%s21]
    %23 = vrot.lane.b32.xlu0 %v22, 80
    %v24 = vpop.permute.xlu0 %23
    %vm25 = vcmask 786048
    %26 = vst.msk [vmem:[#allocation0] ss:$8 sm:$0x3] %vm25, %v24
    %s27 = scalar_lea.vmem %s0, 4
    %s28 = smov 3
    %v29 = vld [vmem:[%s27] ss:$8 sm:%s28]
    %30 = vrot.lane.b32.xlu0 %v29, 64
    %v31 = vpop.permute.xlu0 %30
    %vm32 = vcmask 654848
    %33 = vst.msk [vmem:[#allocation0] ss:$8 sm:$0x3] %vm32, %v31
    %s34 = scalar_lea.vmem %s0, 3
    %s35 = smov 3
    %v36 = vld [vmem:[%s34] ss:$8 sm:%s35]
    %37 = vrot.lane.b32.xlu0 %v36, 48
    %v38 = vpop.permute.xlu0 %37
    %vm39 = vcmask 523648
    %40 = vst.msk [vmem:[#allocation0] ss:$8 sm:$0x3] %vm39, %v38
    %s41 = scalar_lea.vmem %s0, 2
    %s42 = smov 3
    %v43 = vld [vmem:[%s41] ss:$8 sm:%s42]
    %44 = vrot.lane.b32.xlu0 %v43, 32
    %v45 = vpop.permute.xlu0 %44
    %vm46 = vcmask 392448
    %47 = vst.msk [vmem:[#allocation0] ss:$8 sm:$0x3] %vm46, %v45
    %s48 = scalar_lea.vmem %s0, 1
    %s49 = smov 3
    %v50 = vld [vmem:[%s48] ss:$8 sm:%s49]
    %51 = vrot.lane.b32.xlu0 %v50, 16
    %v52 = vpop.permute.xlu0 %51
    %vm53 = vcmask 261248
    %54 = vst.msk [vmem:[#allocation0] ss:$8 sm:$0x3] %vm53, %v52
    %s56 = sshll.u32 1, 1
    %s57 = ssub.s32 %s56, 1
    %v59 = vld [vmem:[#allocation0] sm:%s57]
    %s60 = sshll.u32 1, 1
    %s61 = ssub.s32 %s60, 1
    %62 = vst [vmem:[%s1] sm:%s61] %v59
    %s63 = scalar_lea.vmem [#allocation0], 8
    %v64 = vld [vmem:[%s63] sm:%s57]
    %s65 = sshll.u32 1, 1
    %s66 = ssub.s32 %s65, 1
    %s67 = scalar_lea.vmem %s1, 1
    %68 = vst [vmem:[%s67] sm:%s66] %v64

// kernel: cnn3d_lstm_lite_forward.4
$region0: #{cnn3d_lstm_lite_forward.4}
  #allocation0 [shape = 'u32[]', space=smem, size = 0x4, offset = 0x4, fixed_abs, tag = 'smem constant byte address 0x4 - core index']
  #allocation1 [shape = 'u32[144,128]{1,0:T(1,128)}', space=vmem, size = 0x12000, scoped, tag = 'internal scratch']
  %s0 = inlined_call_operand.vmem [shape: f32[2,10,18,144], index: 0, kind: input, shape index: {}]
  %s1 = inlined_call_operand.vmem [shape: bf16[9,144,256], index: 1, kind: input, shape index: {}]
  %s2 = inlined_call_operand.vmem [shape: f32[1,256], index: 2, kind: input, shape index: {}]
  %s3 = inlined_call_operand.vmem [shape: f32[2,64,256], index: 3, kind: output, shape index: {}]
  %s4 = sld [smem:[#allocation0]]
  $region45: #{cnn3d_lstm_lite_forward.4} parent=0
    _
  %s6 = ssub.s32 1, %s4
  %s7 = scalar_select 0, %s6, %s4
  loop: start=0, step=1, limit=4
  $region2: #{cnn3d_lstm_lite_forward.4} parent=0 // loop_pre_header
    _
  $region3: #{cnn3d_lstm_lite_forward.4} parent=0 // loop_header
    %s9 = sphi 0, %s13
    %p10 = scmp.ge.s32.totalorder %s9, 4
    %s19 = sphi 0, %s21
    %s22 = sphi 0, %s19
    %s23 = sphi 0, %s22
    %s39 = sphi 0, %s23
    %s43 = sphi 0, %s43
    %s45 = sphi 0, %s43
    %s46 = sphi 0, %s45
    %s60 = sphi 0, %s46
    %s64 = sphi 0, %s64
    %s66 = sphi 0, %s64
    %s67 = sphi 0, %s66
    %s81 = sphi 0, %s67
    %s87 = sphi 0, %s89
    %s90 = sphi 0, %s87
    %s91 = sphi 0, %s90
    %s107 = sphi 0, %s91
  $region4: #{cnn3d_lstm_lite_forward.4} parent=0 // loop_header_branch
    %12 = sbr.rel (%p10) target = $region8
  $region5: #{cnn3d_lstm_lite_forward.4} parent=0 // loop_body
    %s14 = ssub.s32 %s9, 1
    %s15 = ssub.s32 %s9, 2
    %s16 = sadd.s32 %s9, 1
    %s17 = ssub.s32 %s9, %s16
    %p18 = scmp.eq.s32.totalorder %s17, 0
    %s20 = sadd.s32 %s19, 1
    %s21 = scalar_select %p18, %s19, %s20
    %p24 = pneg %p18
    %p25 = scmp.eq.s32.totalorder %s9, 1
    %p26 = por %p24, %p25
    %p27 = scmp.ne.s32.totalorder %s19, %s22
    %p28 = scmp.eq.s32.totalorder %s9, 0
    %p29 = por %p27, %p28
    %p30 = scmp.ne.s32.totalorder %s19, %s22
    %p31 = scmp.eq.s32.totalorder %s14, 1
    %p32 = por %p30, %p31
    %p33 = scmp.ne.s32.totalorder %s22, %s23
    %p34 = scmp.eq.s32.totalorder %s14, 0
    %p35 = por %p33, %p34
    %p36 = scmp.ne.s32.totalorder %s22, %s23
    %p37 = scmp.eq.s32.totalorder %s15, 1
    %p38 = por %p36, %p37
    %p40 = scmp.ne.s32.totalorder %s23, %s39
    %p41 = scmp.eq.s32.totalorder %s15, 0
    %p42 = por %p40, %p41
    %s44 = sadd.s32 %s43, 1
    %p47 = scmp.eq.s32.totalorder %s9, 1
    %p48 = scmp.ne.s32.totalorder %s43, %s45
    %p49 = scmp.eq.s32.totalorder %s9, 0
    %p50 = por %p48, %p49
    %p51 = scmp.ne.s32.totalorder %s43, %s45
    %p52 = scmp.eq.s32.totalorder %s14, 1
    %p53 = por %p51, %p52
    %p54 = scmp.ne.s32.totalorder %s45, %s46
    %p55 = scmp.eq.s32.totalorder %s14, 0
    %p56 = por %p54, %p55
    %p57 = scmp.ne.s32.totalorder %s45, %s46
    %p58 = scmp.eq.s32.totalorder %s15, 1
    %p59 = por %p57, %p58
    %p61 = scmp.ne.s32.totalorder %s46, %s60
    %p62 = scmp.eq.s32.totalorder %s15, 0
    %p63 = por %p61, %p62
    %s65 = sadd.s32 %s64, 1
    %p68 = scmp.eq.s32.totalorder %s9, 1
    %p69 = scmp.ne.s32.totalorder %s64, %s66
    %p70 = scmp.eq.s32.totalorder %s9, 0
    %p71 = por %p69, %p70
    %p72 = scmp.ne.s32.totalorder %s64, %s66
    %p73 = scmp.eq.s32.totalorder %s14, 1
    %p74 = por %p72, %p73
    %p75 = scmp.ne.s32.totalorder %s66, %s67
    %p76 = scmp.eq.s32.totalorder %s14, 0
    %p77 = por %p75, %p76
    %p78 = scmp.ne.s32.totalorder %s66, %s67
    %p79 = scmp.eq.s32.totalorder %s15, 1
    %p80 = por %p78, %p79
    %p82 = scmp.ne.s32.totalorder %s67, %s81
    %p83 = scmp.eq.s32.totalorder %s15, 0
    %p84 = por %p82, %p83
    %s85 = ssub.s32 %s9, %s16
    %p86 = scmp.eq.s32.totalorder %s85, 0
    %s88 = sadd.s32 %s87, 1
    %s89 = scalar_select %p86, %s87, %s88
    %p92 = pneg %p86
    %p93 = scmp.eq.s32.totalorder %s9, 1
    %p94 = por %p92, %p93
    %p95 = scmp.ne.s32.totalorder %s87, %s90
    %p96 = scmp.eq.s32.totalorder %s9, 0
    %p97 = por %p95, %p96
    %p98 = scmp.ne.s32.totalorder %s87, %s90
    %p99 = scmp.eq.s32.totalorder %s14, 1
    %p100 = por %p98, %p99
    %p101 = scmp.ne.s32.totalorder %s90, %s91
    %p102 = scmp.eq.s32.totalorder %s14, 0
    %p103 = por %p101, %p102
    %p104 = scmp.ne.s32.totalorder %s90, %s91
    %p105 = scmp.eq.s32.totalorder %s15, 1
    %p106 = por %p104, %p105
    %p108 = scmp.ne.s32.totalorder %s91, %s107
    %p109 = scmp.eq.s32.totalorder %s15, 0
    %p110 = por %p108, %p109
    %p111 = scmp.le.s32.totalorder 1, %s9
    %p112 = scmp.lt.s32.totalorder %s9, 3
    %p113 = pnand %p111, %p112
    %p114 = pneg %p113
    // Predicated region
    $region9: #{cnn3d_lstm_lite_forward.4} parent=5 // pred_check
      _
    $region10: #{cnn3d_lstm_lite_forward.4} parent=5 // pred_check_branch
      %116 = sbr.rel (%p113) target = $region12
    $region11: #{cnn3d_lstm_lite_forward.4} parent=5 // pred_region
      %s117 = ssub.s32 %s9, 1
      // Predicated region
      $region13: #{cnn3d_lstm_lite_forward.4} parent=11 // pred_check
        %p118 = pneg %p56
      $region14: #{cnn3d_lstm_lite_forward.4} parent=11 // pred_check_branch
        %120 = sbr.rel (%p118) target = $region16
      $region15: #{cnn3d_lstm_lite_forward.4} parent=11 // pred_region
        _
      $region16: #{cnn3d_lstm_lite_forward.4} parent=11 // pred_fallthru
        _
      // Predicated region
      $region17: #{cnn3d_lstm_lite_forward.4} parent=11 // pred_check
        %p121 = pneg %p77
      $region18: #{cnn3d_lstm_lite_forward.4} parent=11 // pred_check_branch
        %123 = sbr.rel (%p121) target = $region20
      $region19: #{cnn3d_lstm_lite_forward.4} parent=11 // pred_region
        _
      $region20: #{cnn3d_lstm_lite_forward.4} parent=11 // pred_fallthru
        _
    $region12: #{cnn3d_lstm_lite_forward.4} parent=5 // pred_fallthru
      _
    %p124 = scmp.lt.s32.totalorder %s9, 2
    // Predicated region
    $region21: #{cnn3d_lstm_lite_forward.4} parent=5 // pred_check
      %p125 = pneg %p124
    $region22: #{cnn3d_lstm_lite_forward.4} parent=5 // pred_check_branch
      %127 = sbr.rel (%p125) target = $region24
    $region23: #{cnn3d_lstm_lite_forward.4} parent=5 // pred_region
      // Predicated region
      $region25: #{cnn3d_lstm_lite_forward.4} parent=23 // pred_check
        %p128 = pneg %p29
      $region26: #{cnn3d_lstm_lite_forward.4} parent=23 // pred_check_branch
        %130 = sbr.rel (%p128) target = $region28
      $region27: #{cnn3d_lstm_lite_forward.4} parent=23 // pred_region
        %p131 = scmp.lt.s32.totalorder %s9, 1
        %s132 = scalar_select %p131, %s9, 1
        %s133 = smul.addr %s132, 60
        %s134 = smul.addr %s133, 8
        %s135 = scalar_lea.vmem %s0, %s134
      $region28: #{cnn3d_lstm_lite_forward.4} parent=23 // pred_fallthru
        _
    $region24: #{cnn3d_lstm_lite_forward.4} parent=5 // pred_fallthru
      _
    %p136 = scmp.le.s32.totalorder 1, %s9
    %p137 = scmp.lt.s32.totalorder %s9, 3
    %p138 = pnand %p136, %p137
    %p139 = pneg %p138
    // Predicated region
    $region29: #{cnn3d_lstm_lite_forward.4} parent=5 // pred_check
      _
    $region30: #{cnn3d_lstm_lite_forward.4} parent=5 // pred_check_branch
      %141 = sbr.rel (%p138) target = $region32
    $region31: #{cnn3d_lstm_lite_forward.4} parent=5 // pred_region
      %s142 = ssub.s32 %s9, 1
      %p143 = scmp.lt.s32.totalorder %s14, 1
      %s144 = scalar_select %p143, %s14, 1
      %s145 = smul.addr %s144, 60
      %s146 = smul.addr %s145, 8
      %s147 = scalar_lea.vmem %s0, %s146
      %p148 = pneg %p35
      %p149 = pneg %p32
      %p150 = pneg %p56
      %p151 = pneg %p53
      %p152 = pneg %p77
      %p153 = pneg %p74
      %p154 = pneg %p103
      %p155 = pneg %p100
      %p156 = scmp.lt.s32.totalorder %s14, 1
      %s157 = scalar_select %p156, %s14, 1
      %s158 = smul.addr %s157, 16
      %s159 = smul.addr %s158, 8
      %s160 = scalar_lea.vmem %s3, %s159
      %p161 = scmp.lt.s32.totalorder %s14, 1
      %s162 = scalar_select %p161, %s14, 1
      %s163 = smul.addr %s162, 60
      %s164 = smul.addr %s163, 8
      %s165 = scalar_lea.vmem %s0, %s164
      %p166 = scmp.lt.s32.totalorder %s14, 1
      %s167 = scalar_select %p166, %s14, 1
      %s168 = smul.addr %s167, 16
      %s169 = smul.addr %s168, 8
      %s170 = scalar_lea.vmem %s3, %s169
      %v172 = vld [vmem:[%s165] sm:$0xff]
      %v173 = vld [vmem:[%s165 + $0x8] sm:$0xff]
      %v174 = vld [vmem:[%s165 + $0x10] sm:$0xff]
      %v175 = vld [vmem:[%s165 + $0x18] sm:$0xff]
      %v176 = vld [vmem:[%s165 + $0x30] sm:$0xff]
      %v177 = vld [vmem:[%s165 + $0x38] sm:$0xff]
      %v178 = vld [vmem:[%s165 + $0x40] sm:$0xff]
      %v179 = vld [vmem:[%s165 + $0x48] sm:$0xff]
      %v180 = vld [vmem:[%s165 + $0x60] sm:$0xff]
      %v181 = vld [vmem:[%s165 + $0x68] sm:$0xff]
      %v182 = vld [vmem:[%s165 + $0x70] sm:$0xff]
      %v183 = vld [vmem:[%s165 + $0x78] sm:$0xff]
      %v184 = vld [vmem:[%s165 + $0x90] sm:$0xff]
      %v185 = vld [vmem:[%s165 + $0x98] sm:$0xff]
      %v186 = vld [vmem:[%s165 + $0xa0] sm:$0xff]
      %v187 = vld [vmem:[%s165 + $0xa8] sm:$0xff]
      %v188 = vld [vmem:[%s165 + $0xc0] sm:$0xff]
      %v189 = vld [vmem:[%s165 + $0xc8] sm:$0xff]
      %v190 = vld [vmem:[%s165 + $0xd0] sm:$0xff]
      %v191 = vld [vmem:[%s165 + $0xd8] sm:$0xff]
      %v192 = vld [vmem:[%s165 + $0xf0] sm:$0xff]
      %v193 = vld [vmem:[%s165 + $0xf8] sm:$0xff]
      %v194 = vld [vmem:[%s165 + $0x100] sm:$0xff]
      %v195 = vld [vmem:[%s165 + $0x108] sm:$0xff]
      %v196 = vld [vmem:[%s165 + $0x120] sm:$0xff]
      %v197 = vld [vmem:[%s165 + $0x128] sm:$0xff]
      %v198 = vld [vmem:[%s165 + $0x130] sm:$0xff]
      %v199 = vld [vmem:[%s165 + $0x138] sm:$0xff]
      %v200 = vld [vmem:[%s165 + $0x150] sm:$0xff]
      %v201 = vld [vmem:[%s165 + $0x158] sm:$0xff]
      %v202 = vld [vmem:[%s165 + $0x160] sm:$0xff]
      %v203 = vld [vmem:[%s165 + $0x168] sm:$0xff]
      %v204 = vpack.c.bf16 %v174, %v172
      %v205 = vpack.c.bf16 %v175, %v173
      %v206 = vpack.c.bf16 %v178, %v176
      %v207 = vpack.c.bf16 %v179, %v177
      %v208 = vpack.c.bf16 %v182, %v180
      %v209 = vpack.c.bf16 %v183, %v181
      %v210 = vpack.c.bf16 %v186, %v184
      %v211 = vpack.c.bf16 %v187, %v185
      %v212 = vpack.c.bf16 %v190, %v188
      %v213 = vpack.c.bf16 %v191, %v189
      %v214 = vpack.c.bf16 %v194, %v192
      %v215 = vpack.c.bf16 %v195, %v193
      %v216 = vpack.c.bf16 %v198, %v196
      %v217 = vpack.c.bf16 %v199, %v197
      %v218 = vpack.c.bf16 %v202, %v200
      %v219 = vpack.c.bf16 %v203, %v201
      %v220 = vld [vmem:[%s1] sm:$0xff]
      %v221 = vld [vmem:[%s1 + $0x8] sm:$0xff]
      %v222 = vld [vmem:[%s1 + $0x10] sm:$0xff]
      %v223 = vld [vmem:[%s1 + $0x18] sm:$0xff]
      %v224 = vld [vmem:[%s1 + $0x20] sm:$0xff]
      %v225 = vld [vmem:[%s1 + $0x28] sm:$0xff]
      %v226 = vld [vmem:[%s1 + $0x30] sm:$0xff]
      %v227 = vld [vmem:[%s1 + $0x38] sm:$0xff]
      %v228 = vld [vmem:[%s1 + $0x40] sm:$0xff]
      %v229 = vld [vmem:[%s1 + $0x48] sm:$0xff]
      %v230 = vld [vmem:[%s1 + $0x50] sm:$0xff]
      %v231 = vld [vmem:[%s1 + $0x58] sm:$0xff]
      %v232 = vld [vmem:[%s1 + $0x60] sm:$0xff]
      %v233 = vld [vmem:[%s1 + $0x68] sm:$0xff]
      %v234 = vld [vmem:[%s1 + $0x70] sm:$0xff]
      %v235 = vld [vmem:[%s1 + $0x78] sm:$0xff]
      %v236 = vld [vmem:[%s1 + $0x80] sm:$0xff]
      %v237 = vld [vmem:[%s1 + $0x88] sm:$0xff]
      %v238 = vld [vmem:[%s165] sm:$0xfe]
      %v239 = vld [vmem:[%s165 + $0x8] sm:$0xfe]
      %v240 = vld [vmem:[%s165 + $0x20] sm:$0x1]
      %v241 = vld [vmem:[%s165 + $0x28] sm:$0x1]
      %v242 = vld [vmem:[%s165 + $0x30] sm:$0xfe]
      %v243 = vld [vmem:[%s165 + $0x38] sm:$0xfe]
      %v244 = vld [vmem:[%s165 + $0x50] sm:$0x1]
      %v245 = vld [vmem:[%s165 + $0x58] sm:$0x1]
      %v246 = vld [vmem:[%s165 + $0x60] sm:$0xfe]
      %v247 = vld [vmem:[%s165 + $0x68] sm:$0xfe]
      %v248 = vld [vmem:[%s165 + $0x80] sm:$0x1]
      %v249 = vld [vmem:[%s165 + $0x88] sm:$0x1]
      %v250 = vld [vmem:[%s165 + $0x90] sm:$0xfe]
      %v251 = vld [vmem:[%s165 + $0x98] sm:$0xfe]
      %v252 = vld [vmem:[%s165 + $0xb0] sm:$0x1]
      %v253 = vld [vmem:[%s165 + $0xb8] sm:$0x1]
      %v254 = vld [vmem:[%s165 + $0xc0] sm:$0xfe]
      %v255 = vld [vmem:[%s165 + $0xc8] sm:$0xfe]
      %v256 = vld [vmem:[%s165 + $0xe0] sm:$0x1]
      %v257 = vld [vmem:[%s165 + $0xe8] sm:$0x1]
      %v258 = vld [vmem:[%s165 + $0xf0] sm:$0xfe]
      %v259 = vld [vmem:[%s165 + $0xf8] sm:$0xfe]
      %v260 = vld [vmem:[%s165 + $0x110] sm:$0x1]
      %v261 = vld [vmem:[%s165 + $0x118] sm:$0x1]
      %v262 = vld [vmem:[%s165 + $0x120] sm:$0xfe]
      %v263 = vld [vmem:[%s165 + $0x128] sm:$0xfe]
      %v264 = vld [vmem:[%s165 + $0x140] sm:$0x1]
      %v265 = vld [vmem:[%s165 + $0x148] sm:$0x1]
      %v266 = vld [vmem:[%s165 + $0x150] sm:$0xfe]
      %v267 = vld [vmem:[%s165 + $0x158] sm:$0xfe]
      %v268 = vld [vmem:[%s165 + $0x170] sm:$0x1]
      %v269 = vld [vmem:[%s165 + $0x178] sm:$0x1]
      %vm318 = vcmask 1046528
      %v319 = vrot.slane %v238, 1
      %v320 = vrot.slane %v174, 1
      %v321 = vsel %vm318, %v319, %v320
      %v322 = vrot.slane %v239, 1
      %v323 = vrot.slane %v175, 1
      %v324 = vsel %vm318, %v322, %v323
      %v325 = vrot.slane %v240, 1
      %v326 = vsel %vm318, %v320, %v325
      %v327 = vrot.slane %v241, 1
      %v328 = vsel %vm318, %v323, %v327
      %v329 = vrot.slane %v242, 1
      %v330 = vrot.slane %v178, 1
      %v331 = vsel %vm318, %v329, %v330
      %v332 = vrot.slane %v243, 1
      %v333 = vrot.slane %v179, 1
      %v334 = vsel %vm318, %v332, %v333
      %v335 = vrot.slane %v244, 1
      %v336 = vsel %vm318, %v330, %v335
      %v337 = vrot.slane %v245, 1
      %v338 = vsel %vm318, %v333, %v337
      %v339 = vrot.slane %v246, 1
      %v340 = vrot.slane %v182, 1
      %v341 = vsel %vm318, %v339, %v340
      %v342 = vrot.slane %v247, 1
      %v343 = vrot.slane %v183, 1
      %v344 = vsel %vm318, %v342, %v343
      %v345 = vrot.slane %v248, 1
      %v346 = vsel %vm318, %v340, %v345
      %v347 = vrot.slane %v249, 1
      %v348 = vsel %vm318, %v343, %v347
      %v349 = vrot.slane %v250, 1
      %v350 = vrot.slane %v186, 1
      %v351 = vsel %vm318, %v349, %v350
      %v352 = vrot.slane %v251, 1
      %v353 = vrot.slane %v187, 1
      %v354 = vsel %vm318, %v352, %v353
      %v355 = vrot.slane %v252, 1
      %v356 = vsel %vm318, %v350, %v355
      %v357 = vrot.slane %v253, 1
      %v358 = vsel %vm318, %v353, %v357
      %v359 = vrot.slane %v254, 1
      %v360 = vrot.slane %v190, 1
      %v361 = vsel %vm318, %v359, %v360
      %v362 = vrot.slane %v255, 1
      %v363 = vrot.slane %v191, 1
      %v364 = vsel %vm318, %v362, %v363
      %v365 = vrot.slane %v256, 1
      %v366 = vsel %vm318, %v360, %v365
      %v367 = vrot.slane %v257, 1
      %v368 = vsel %vm318, %v363, %v367
      %v369 = vrot.slane %v258, 1
      %v370 = vrot.slane %v194, 1
      %v371 = vsel %vm318, %v369, %v370
      %v372 = vrot.slane %v259, 1
      %v373 = vrot.slane %v195, 1
      %v374 = vsel %vm318, %v372, %v373
      %v375 = vrot.slane %v260, 1
      %v376 = vsel %vm318, %v370, %v375
      %v377 = vrot.slane %v261, 1
      %v378 = vsel %vm318, %v373, %v377
      %v379 = vrot.slane %v262, 1
      %v380 = vrot.slane %v198, 1
      %v381 = vsel %vm318, %v379, %v380
      %v382 = vrot.slane %v263, 1
      %v383 = vrot.slane %v199, 1
      %v384 = vsel %vm318, %v382, %v383
      %v385 = vrot.slane %v264, 1
      %v386 = vsel %vm318, %v380, %v385
      %v387 = vrot.slane %v265, 1
      %v388 = vsel %vm318, %v383, %v387
      %v389 = vrot.slane %v266, 1
      %v390 = vrot.slane %v202, 1
      %v391 = vsel %vm318, %v389, %v390
      %v392 = vrot.slane %v267, 1
      %v393 = vrot.slane %v203, 1
      %v394 = vsel %vm318, %v392, %v393
      %v395 = vrot.slane %v268, 1
      %v396 = vsel %vm318, %v390, %v395
      %v397 = vrot.slane %v269, 1
      %v398 = vsel %vm318, %v393, %v397
      %v431 = vpack.c.bf16 %v326, %v321
      %v432 = vpack.c.bf16 %v328, %v324
      %v433 = vpack.c.bf16 %v336, %v331
      %v434 = vpack.c.bf16 %v338, %v334
      %v435 = vpack.c.bf16 %v346, %v341
      %v436 = vpack.c.bf16 %v348, %v344
      %v437 = vpack.c.bf16 %v356, %v351
      %v438 = vpack.c.bf16 %v358, %v354
      %v439 = vpack.c.bf16 %v366, %v361
      %v440 = vpack.c.bf16 %v368, %v364
      %v441 = vpack.c.bf16 %v376, %v371
      %v442 = vpack.c.bf16 %v378, %v374
      %v443 = vpack.c.bf16 %v386, %v381
      %v444 = vpack.c.bf16 %v388, %v384
      %v445 = vpack.c.bf16 %v396, %v391
      %v446 = vpack.c.bf16 %v398, %v394
      %s447 = scalar_lea.vmem %s1, 144
      %v448 = vld [vmem:[%s447] sm:$0xff]
      %v449 = vld [vmem:[%s447 + $0x8] sm:$0xff]
      %v450 = vld [vmem:[%s447 + $0x10] sm:$0xff]
      %v451 = vld [vmem:[%s447 + $0x18] sm:$0xff]
      %v452 = vld [vmem:[%s447 + $0x20] sm:$0xff]
      %v453 = vld [vmem:[%s447 + $0x28] sm:$0xff]
      %v454 = vld [vmem:[%s447 + $0x30] sm:$0xff]
      %v455 = vld [vmem:[%s447 + $0x38] sm:$0xff]
      %v456 = vld [vmem:[%s447 + $0x40] sm:$0xff]
      %v457 = vld [vmem:[%s447 + $0x48] sm:$0xff]
      %v458 = vld [vmem:[%s447 + $0x50] sm:$0xff]
      %v459 = vld [vmem:[%s447 + $0x58] sm:$0xff]
      %v460 = vld [vmem:[%s447 + $0x60] sm:$0xff]
      %v461 = vld [vmem:[%s447 + $0x68] sm:$0xff]
      %v462 = vld [vmem:[%s447 + $0x70] sm:$0xff]
      %v463 = vld [vmem:[%s447 + $0x78] sm:$0xff]
      %v464 = vld [vmem:[%s447 + $0x80] sm:$0xff]
      %v465 = vld [vmem:[%s447 + $0x88] sm:$0xff]
      %v484 = vunpack.c.l.b16 %v448
      %v485 = vunpack.c.h.b16 %v448
      %v486 = vunpack.c.l.b16 %v449
      %v487 = vunpack.c.h.b16 %v449
      %v488 = vunpack.c.l.b16 %v450
      %v489 = vunpack.c.h.b16 %v450
      %v490 = vunpack.c.l.b16 %v451
      %v491 = vunpack.c.h.b16 %v451
      %v492 = vunpack.c.l.b16 %v452
      %v493 = vunpack.c.h.b16 %v452
      %v494 = vunpack.c.l.b16 %v453
      %v495 = vunpack.c.h.b16 %v453
      %v496 = vunpack.c.l.b16 %v454
      %v497 = vunpack.c.h.b16 %v454
      %v498 = vunpack.c.l.b16 %v455
      %v499 = vunpack.c.h.b16 %v455
      %v500 = vunpack.c.l.b16 %v456
      %v501 = vunpack.c.h.b16 %v456
      %v502 = vunpack.c.l.b16 %v457
      %v503 = vunpack.c.h.b16 %v457
      %v504 = vunpack.c.l.b16 %v458
      %v505 = vunpack.c.h.b16 %v458
      %v506 = vunpack.c.l.b16 %v459
      %v507 = vunpack.c.h.b16 %v459
      %v508 = vunpack.c.l.b16 %v460
      %v509 = vunpack.c.h.b16 %v460
      %v510 = vunpack.c.l.b16 %v461
      %v511 = vunpack.c.h.b16 %v461
      %v512 = vunpack.c.l.b16 %v462
      %v513 = vunpack.c.h.b16 %v462
      %v514 = vunpack.c.l.b16 %v463
      %v515 = vunpack.c.h.b16 %v463
      %v516 = vunpack.c.l.b16 %v464
      %v517 = vunpack.c.h.b16 %v464
      %v518 = vunpack.c.l.b16 %v465
      %v519 = vunpack.c.h.b16 %v465
      %v520 = vpack.c.b16 %v486, %v484
      %v521 = vpack.c.b16 %v487, %v485
      %v522 = vpack.c.b16 %v490, %v488
      %v523 = vpack.c.b16 %v491, %v489
      %v524 = vpack.c.b16 %v494, %v492
      %v525 = vpack.c.b16 %v495, %v493
      %v526 = vpack.c.b16 %v498, %v496
      %v527 = vpack.c.b16 %v499, %v497
      %v528 = vpack.c.b16 %v502, %v500
      %v529 = vpack.c.b16 %v503, %v501
      %v530 = vpack.c.b16 %v506, %v504
      %v531 = vpack.c.b16 %v507, %v505
      %v532 = vpack.c.b16 %v510, %v508
      %v533 = vpack.c.b16 %v511, %v509
      %v534 = vpack.c.b16 %v514, %v512
      %v535 = vpack.c.b16 %v515, %v513
      %v536 = vpack.c.b16 %v518, %v516
      %v537 = vpack.c.b16 %v519, %v517
      %vm556 = vcmask 130048
      %v558 = vsel %vm556, %v432, 0
      %v561 = vsel %vm556, %v434, 0
      %v564 = vsel %vm556, %v436, 0
      %v567 = vsel %vm556, %v438, 0
      %v570 = vsel %vm556, %v440, 0
      %v573 = vsel %vm556, %v442, 0
      %v576 = vsel %vm556, %v444, 0
      %v579 = vsel %vm556, %v446, 0
      %581 = vmatprep.subr.bf16.mxu0 %v535
      %582 = vmatpush1.bf16.msra.mxu0 %v534
      %583 = vmatprep.subr.bf16.mxu0 %v533
      %584 = vmatpush1.bf16.msra.mxu0 %v532
      %585 = vmatprep.subr.bf16.mxu0 %v531
      %586 = vmatpush1.bf16.msra.mxu0 %v530
      %587 = vmatprep.subr.bf16.mxu0 %v529
      %588 = vmatpush1.bf16.msra.mxu0 %v528
      %589 = vmatprep.subr.bf16.mxu0 %v527
      %590 = vmatpush1.bf16.msra.mxu0 %v526
      %591 = vmatprep.subr.bf16.mxu0 %v525
      %592 = vmatpush1.bf16.msra.mxu0 %v524
      %593 = vmatprep.subr.bf16.mxu0 %v523
      %594 = vmatpush1.bf16.msra.mxu0 %v522
      %595 = vmatprep.subr.bf16.mxu0 %v521
      %596 = vmatpush1.bf16.msra.mxu0 %v520
      %597 = vmatprep.subr.bf16.mxu0 0
      %598 = vmatpush2.bf16.msra.mxu0 0
      %599 = vmatprep.subr.bf16.mxu0 0
      %600 = vmatpush2.bf16.msra.mxu0 0
      %601 = vmatprep.subr.bf16.mxu0 0
      %602 = vmatpush2.bf16.msra.mxu0 0
      %603 = vmatprep.subr.bf16.mxu0 0
      %604 = vmatpush2.bf16.msra.mxu0 0
      %605 = vmatprep.subr.bf16.mxu0 0
      %606 = vmatpush2.bf16.msra.mxu0 0
      %607 = vmatprep.subr.bf16.mxu0 0
      %608 = vmatpush2.bf16.msra.mxu0 0
      %609 = vmatprep.subr.bf16.mxu0 0
      %610 = vmatpush2.bf16.msra.mxu0 0
      %611 = vmatprep.subr.bf16.mxu0 %v537
      %612 = vmatpush2.bf16.msra.mxu0 %v536
      %613 = vmatprep.mubr.bf16.mxu0 %v558
      %614 = vmatmul.mubr.bf16.gmra.mxu0 %v431
      %v615 = vpop.f32.mrf.mxu0
      %v616 = vadd.f32 0.0, %v615
      %v617 = vpop.f32.mrf.mxu0
      %v618 = vadd.f32 0.0, %v617
      %v619 = vpop.f32.mrf.mxu0
      %v620 = vadd.f32 0.0, %v619
      %v621 = vpop.f32.mrf.mxu0
      %v622 = vadd.f32 0.0, %v621
      %623 = vmatprep.mubr.bf16.mxu0 %v561
      %624 = vmatmul.mubr.bf16.gmra.mxu0 %v433
      %v625 = vpop.f32.mrf.mxu0
      %v626 = vadd.f32 0.0, %v625
      %v627 = vpop.f32.mrf.mxu0
      %v628 = vadd.f32 0.0, %v627
      %v629 = vpop.f32.mrf.mxu0
      %v630 = vadd.f32 0.0, %v629
      %v631 = vpop.f32.mrf.mxu0
      %v632 = vadd.f32 0.0, %v631
      %633 = vmatprep.mubr.bf16.mxu0 %v564
      %634 = vmatmul.mubr.bf16.gmra.mxu0 %v435
      %v635 = vpop.f32.mrf.mxu0
      %v636 = vadd.f32 0.0, %v635
      %v637 = vpop.f32.mrf.mxu0
      %v638 = vadd.f32 0.0, %v637
      %v639 = vpop.f32.mrf.mxu0
      %v640 = vadd.f32 0.0, %v639
      %v641 = vpop.f32.mrf.mxu0
      %v642 = vadd.f32 0.0, %v641
      %643 = vmatprep.mubr.bf16.mxu0 %v567
      %644 = vmatmul.mubr.bf16.gmra.mxu0 %v437
      %v645 = vpop.f32.mrf.mxu0
      %v646 = vadd.f32 0.0, %v645
      %v647 = vpop.f32.mrf.mxu0
      %v648 = vadd.f32 0.0, %v647
      %v649 = vpop.f32.mrf.mxu0
      %v650 = vadd.f32 0.0, %v649
      %v651 = vpop.f32.mrf.mxu0
      %v652 = vadd.f32 0.0, %v651
      %653 = vmatprep.mubr.bf16.mxu0 %v570
      %654 = vmatmul.mubr.bf16.gmra.mxu0 %v439
      %v655 = vpop.f32.mrf.mxu0
      %v656 = vadd.f32 0.0, %v655
      %v657 = vpop.f32.mrf.mxu0
      %v658 = vadd.f32 0.0, %v657
      %v659 = vpop.f32.mrf.mxu0
      %v660 = vadd.f32 0.0, %v659
      %v661 = vpop.f32.mrf.mxu0
      %v662 = vadd.f32 0.0, %v661
      %663 = vmatprep.mubr.bf16.mxu0 %v573
      %664 = vmatmul.mubr.bf16.gmra.mxu0 %v441
      %v665 = vpop.f32.mrf.mxu0
      %v666 = vadd.f32 0.0, %v665
      %v667 = vpop.f32.mrf.mxu0
      %v668 = vadd.f32 0.0, %v667
      %v669 = vpop.f32.mrf.mxu0
      %v670 = vadd.f32 0.0, %v669
      %v671 = vpop.f32.mrf.mxu0
      %v672 = vadd.f32 0.0, %v671
      %673 = vmatprep.mubr.bf16.mxu0 %v576
      %674 = vmatmul.mubr.bf16.gmra.mxu0 %v443
      %v675 = vpop.f32.mrf.mxu0
      %v676 = vadd.f32 0.0, %v675
      %v677 = vpop.f32.mrf.mxu0
      %v678 = vadd.f32 0.0, %v677
      %v679 = vpop.f32.mrf.mxu0
      %v680 = vadd.f32 0.0, %v679
      %v681 = vpop.f32.mrf.mxu0
      %v682 = vadd.f32 0.0, %v681
      %683 = vmatprep.mubr.bf16.mxu0 %v579
      %684 = vmatmul.mubr.bf16.gmra.mxu0 %v445
      %v685 = vpop.f32.mrf.mxu0
      %v686 = vadd.f32 0.0, %v685
      %v687 = vpop.f32.mrf.mxu0
      %v688 = vadd.f32 0.0, %v687
      %v689 = vpop.f32.mrf.mxu0
      %v690 = vadd.f32 0.0, %v689
      %v691 = vpop.f32.mrf.mxu0
      %v692 = vadd.f32 0.0, %v691
      %693 = vdwg.mxu0
      %v712 = vunpack.c.l.b16 %v220
      %v713 = vunpack.c.h.b16 %v220
      %v714 = vunpack.c.l.b16 %v221
      %v715 = vunpack.c.h.b16 %v221
      %v716 = vunpack.c.l.b16 %v222
      %v717 = vunpack.c.h.b16 %v222
      %v718 = vunpack.c.l.b16 %v223
      %v719 = vunpack.c.h.b16 %v223
      %v720 = vunpack.c.l.b16 %v224
      %v721 = vunpack.c.h.b16 %v224
      %v722 = vunpack.c.l.b16 %v225
      %v723 = vunpack.c.h.b16 %v225
      %v724 = vunpack.c.l.b16 %v226
      %v725 = vunpack.c.h.b16 %v226
      %v726 = vunpack.c.l.b16 %v227
      %v727 = vunpack.c.h.b16 %v227
      %v728 = vunpack.c.l.b16 %v228
      %v729 = vunpack.c.h.b16 %v228
      %v730 = vunpack.c.l.b16 %v229
      %v731 = vunpack.c.h.b16 %v229
      %v732 = vunpack.c.l.b16 %v230
      %v733 = vunpack.c.h.b16 %v230
      %v734 = vunpack.c.l.b16 %v231
      %v735 = vunpack.c.h.b16 %v231
      %v736 = vunpack.c.l.b16 %v232
      %v737 = vunpack.c.h.b16 %v232
      %v738 = vunpack.c.l.b16 %v233
      %v739 = vunpack.c.h.b16 %v233
      %v740 = vunpack.c.l.b16 %v234
      %v741 = vunpack.c.h.b16 %v234
      %v742 = vunpack.c.l.b16 %v235
      %v743 = vunpack.c.h.b16 %v235
      %v744 = vunpack.c.l.b16 %v236
      %v745 = vunpack.c.h.b16 %v236
      %v746 = vunpack.c.l.b16 %v237
      %v747 = vunpack.c.h.b16 %v237
      %v748 = vpack.c.b16 %v714, %v712
      %v749 = vpack.c.b16 %v715, %v713
      %v750 = vpack.c.b16 %v718, %v716
      %v751 = vpack.c.b16 %v719, %v717
      %v752 = vpack.c.b16 %v722, %v720
      %v753 = vpack.c.b16 %v723, %v721
      %v754 = vpack.c.b16 %v726, %v724
      %v755 = vpack.c.b16 %v727, %v725
      %v756 = vpack.c.b16 %v730, %v728
      %v757 = vpack.c.b16 %v731, %v729
      %v758 = vpack.c.b16 %v734, %v732
      %v759 = vpack.c.b16 %v735, %v733
      %v760 = vpack.c.b16 %v738, %v736
      %v761 = vpack.c.b16 %v739, %v737
      %v762 = vpack.c.b16 %v742, %v740
      %v763 = vpack.c.b16 %v743, %v741
      %v764 = vpack.c.b16 %v746, %v744
      %v765 = vpack.c.b16 %v747, %v745
      %v785 = vsel %vm556, %v205, 0
      %v788 = vsel %vm556, %v207, 0
      %v791 = vsel %vm556, %v209, 0
      %v794 = vsel %vm556, %v211, 0
      %v797 = vsel %vm556, %v213, 0
      %v800 = vsel %vm556, %v215, 0
      %v803 = vsel %vm556, %v217, 0
      %v806 = vsel %vm556, %v219, 0
      %808 = vmatprep.subr.bf16.mxu0 %v763
      %809 = vmatpush1.bf16.msra.mxu0 %v762
      %810 = vmatprep.subr.bf16.mxu0 %v761
      %811 = vmatpush1.bf16.msra.mxu0 %v760
      %812 = vmatprep.subr.bf16.mxu0 %v759
      %813 = vmatpush1.bf16.msra.mxu0 %v758
      %814 = vmatprep.subr.bf16.mxu0 %v757
      %815 = vmatpush1.bf16.msra.mxu0 %v756
      %816 = vmatprep.subr.bf16.mxu0 %v755
      %817 = vmatpush1.bf16.msra.mxu0 %v754
      %818 = vmatprep.subr.bf16.mxu0 %v753
      %819 = vmatpush1.bf16.msra.mxu0 %v752
      %820 = vmatprep.subr.bf16.mxu0 %v751
      %821 = vmatpush1.bf16.msra.mxu0 %v750
      %822 = vmatprep.subr.bf16.mxu0 %v749
      %823 = vmatpush1.bf16.msra.mxu0 %v748
      %824 = vmatprep.subr.bf16.mxu0 0
      %825 = vmatpush2.bf16.msra.mxu0 0
      %826 = vmatprep.subr.bf16.mxu0 0
      %827 = vmatpush2.bf16.msra.mxu0 0
      %828 = vmatprep.subr.bf16.mxu0 0
      %829 = vmatpush2.bf16.msra.mxu0 0
      %830 = vmatprep.subr.bf16.mxu0 0
      %831 = vmatpush2.bf16.msra.mxu0 0
      %832 = vmatprep.subr.bf16.mxu0 0
      %833 = vmatpush2.bf16.msra.mxu0 0
      %834 = vmatprep.subr.bf16.mxu0 0
      %835 = vmatpush2.bf16.msra.mxu0 0
      %836 = vmatprep.subr.bf16.mxu0 0
      %837 = vmatpush2.bf16.msra.mxu0 0
      %838 = vmatprep.subr.bf16.mxu0 %v765
      %839 = vmatpush2.bf16.msra.mxu0 %v764
      %840 = vmatprep.mubr.bf16.mxu0 %v785
      %841 = vmatmul.mubr.bf16.gmra.mxu0 %v204
      %v842 = vpop.f32.mrf.mxu0
      %v843 = vadd.f32 %v616, %v842
      %v844 = vpop.f32.mrf.mxu0
      %v845 = vadd.f32 %v618, %v844
      %v846 = vpop.f32.mrf.mxu0
      %v847 = vadd.f32 %v620, %v846
      %v848 = vpop.f32.mrf.mxu0
      %v849 = vadd.f32 %v622, %v848
      %850 = vmatprep.mubr.bf16.mxu0 %v788
      %851 = vmatmul.mubr.bf16.gmra.mxu0 %v206
      %v852 = vpop.f32.mrf.mxu0
      %v853 = vadd.f32 %v626, %v852
      %v854 = vpop.f32.mrf.mxu0
      %v855 = vadd.f32 %v628, %v854
      %v856 = vpop.f32.mrf.mxu0
      %v857 = vadd.f32 %v630, %v856
      %v858 = vpop.f32.mrf.mxu0
      %v859 = vadd.f32 %v632, %v858
      %860 = vmatprep.mubr.bf16.mxu0 %v791
      %861 = vmatmul.mubr.bf16.gmra.mxu0 %v208
      %v862 = vpop.f32.mrf.mxu0
      %v863 = vadd.f32 %v636, %v862
      %v864 = vpop.f32.mrf.mxu0
      %v865 = vadd.f32 %v638, %v864
      %v866 = vpop.f32.mrf.mxu0
      %v867 = vadd.f32 %v640, %v866
      %v868 = vpop.f32.mrf.mxu0
      %v869 = vadd.f32 %v642, %v868
      %870 = vmatprep.mubr.bf16.mxu0 %v794
      %871 = vmatmul.mubr.bf16.gmra.mxu0 %v210
      %v872 = vpop.f32.mrf.mxu0
      %v873 = vadd.f32 %v646, %v872
      %v874 = vpop.f32.mrf.mxu0
      %v875 = vadd.f32 %v648, %v874
      %v876 = vpop.f32.mrf.mxu0
      %v877 = vadd.f32 %v650, %v876
      %v878 = vpop.f32.mrf.mxu0
      %v879 = vadd.f32 %v652, %v878
      %880 = vmatprep.mubr.bf16.mxu0 %v797
      %881 = vmatmul.mubr.bf16.gmra.mxu0 %v212
      %v882 = vpop.f32.mrf.mxu0
      %v883 = vadd.f32 %v656, %v882
      %v884 = vpop.f32.mrf.mxu0
      %v885 = vadd.f32 %v658, %v884
      %v886 = vpop.f32.mrf.mxu0
      %v887 = vadd.f32 %v660, %v886
      %v888 = vpop.f32.mrf.mxu0
      %v889 = vadd.f32 %v662, %v888
      %890 = vmatprep.mubr.bf16.mxu0 %v800
      %891 = vmatmul.mubr.bf16.gmra.mxu0 %v214
      %v892 = vpop.f32.mrf.mxu0
      %v893 = vadd.f32 %v666, %v892
      %v894 = vpop.f32.mrf.mxu0
      %v895 = vadd.f32 %v668, %v894
      %v896 = vpop.f32.mrf.mxu0
      %v897 = vadd.f32 %v670, %v896
      %v898 = vpop.f32.mrf.mxu0
      %v899 = vadd.f32 %v672, %v898
      %900 = vmatprep.mubr.bf16.mxu0 %v803
      %901 = vmatmul.mubr.bf16.gmra.mxu0 %v216
      %v902 = vpop.f32.mrf.mxu0
      %v903 = vadd.f32 %v676, %v902
      %v904 = vpop.f32.mrf.mxu0
      %v905 = vadd.f32 %v678, %v904
      %v906 = vpop.f32.mrf.mxu0
      %v907 = vadd.f32 %v680, %v906
      %v908 = vpop.f32.mrf.mxu0
      %v909 = vadd.f32 %v682, %v908
      %910 = vmatprep.mubr.bf16.mxu0 %v806
      %911 = vmatmul.mubr.bf16.gmra.mxu0 %v218
      %v912 = vpop.f32.mrf.mxu0
      %v913 = vadd.f32 %v686, %v912
      %v914 = vpop.f32.mrf.mxu0
      %v915 = vadd.f32 %v688, %v914
      %v916 = vpop.f32.mrf.mxu0
      %v917 = vadd.f32 %v690, %v916
      %v918 = vpop.f32.mrf.mxu0
      %v919 = vadd.f32 %v692, %v918
      %920 = vdwg.mxu0
      %v921 = vld [vmem:[%s165] sm:$0xfc]
      %v922 = vld [vmem:[%s165 + $0x8] sm:$0xfc]
      %v923 = vld [vmem:[%s165 + $0x20] sm:$0x3]
      %v924 = vld [vmem:[%s165 + $0x28] sm:$0x3]
      %v925 = vld [vmem:[%s165 + $0x30] sm:$0xfc]
      %v926 = vld [vmem:[%s165 + $0x38] sm:$0xfc]
      %v927 = vld [vmem:[%s165 + $0x50] sm:$0x3]
      %v928 = vld [vmem:[%s165 + $0x58] sm:$0x3]
      %v929 = vld [vmem:[%s165 + $0x60] sm:$0xfc]
      %v930 = vld [vmem:[%s165 + $0x68] sm:$0xfc]
      %v931 = vld [vmem:[%s165 + $0x80] sm:$0x3]
      %v932 = vld [vmem:[%s165 + $0x88] sm:$0x3]
      %v933 = vld [vmem:[%s165 + $0x90] sm:$0xfc]
      %v934 = vld [vmem:[%s165 + $0x98] sm:$0xfc]
      %v935 = vld [vmem:[%s165 + $0xb0] sm:$0x3]
      %v936 = vld [vmem:[%s165 + $0xb8] sm:$0x3]
      %v937 = vld [vmem:[%s165 + $0xc0] sm:$0xfc]
      %v938 = vld [vmem:[%s165 + $0xc8] sm:$0xfc]
      %v939 = vld [vmem:[%s165 + $0xe0] sm:$0x3]
      %v940 = vld [vmem:[%s165 + $0xe8] sm:$0x3]
      %v941 = vld [vmem:[%s165 + $0xf0] sm:$0xfc]
      %v942 = vld [vmem:[%s165 + $0xf8] sm:$0xfc]
      %v943 = vld [vmem:[%s165 + $0x110] sm:$0x3]
      %v944 = vld [vmem:[%s165 + $0x118] sm:$0x3]
      %v945 = vld [vmem:[%s165 + $0x120] sm:$0xfc]
      %v946 = vld [vmem:[%s165 + $0x128] sm:$0xfc]
      %v947 = vld [vmem:[%s165 + $0x140] sm:$0x3]
      %v948 = vld [vmem:[%s165 + $0x148] sm:$0x3]
      %v949 = vld [vmem:[%s165 + $0x150] sm:$0xfc]
      %v950 = vld [vmem:[%s165 + $0x158] sm:$0xfc]
      %v951 = vld [vmem:[%s165 + $0x170] sm:$0x3]
      %v952 = vld [vmem:[%s165 + $0x178] sm:$0x3]
      %vm985 = vcmask 1045504
      %v986 = vrot.slane %v921, 2
      %v987 = vrot.slane %v174, 2
      %v988 = vsel %vm985, %v986, %v987
      %v989 = vrot.slane %v922, 2
      %v990 = vrot.slane %v175, 2
      %v991 = vsel %vm985, %v989, %v990
      %v992 = vrot.slane %v923, 2
      %v993 = vsel %vm985, %v987, %v992
      %v994 = vrot.slane %v924, 2
      %v995 = vsel %vm985, %v990, %v994
      %v996 = vrot.slane %v925, 2
      %v997 = vrot.slane %v178, 2
      %v998 = vsel %vm985, %v996, %v997
      %v999 = vrot.slane %v926, 2
      %v1000 = vrot.slane %v179, 2
      %v1001 = vsel %vm985, %v999, %v1000
      %v1002 = vrot.slane %v927, 2
      %v1003 = vsel %vm985, %v997, %v1002
      %v1004 = vrot.slane %v928, 2
      %v1005 = vsel %vm985, %v1000, %v1004
      %v1006 = vrot.slane %v929, 2
      %v1007 = vrot.slane %v182, 2
      %v1008 = vsel %vm985, %v1006, %v1007
      %v1009 = vrot.slane %v930, 2
      %v1010 = vrot.slane %v183, 2
      %v1011 = vsel %vm985, %v1009, %v1010
      %v1012 = vrot.slane %v931, 2
      %v1013 = vsel %vm985, %v1007, %v1012
      %v1014 = vrot.slane %v932, 2
      %v1015 = vsel %vm985, %v1010, %v1014
      %v1016 = vrot.slane %v933, 2
      %v1017 = vrot.slane %v186, 2
      %v1018 = vsel %vm985, %v1016, %v1017
      %v1019 = vrot.slane %v934, 2
      %v1020 = vrot.slane %v187, 2
      %v1021 = vsel %vm985, %v1019, %v1020
      %v1022 = vrot.slane %v935, 2
      %v1023 = vsel %vm985, %v1017, %v1022
      %v1024 = vrot.slane %v936, 2
      %v1025 = vsel %vm985, %v1020, %v1024
      %v1026 = vrot.slane %v937, 2
      %v1027 = vrot.slane %v190, 2
      %v1028 = vsel %vm985, %v1026, %v1027
      %v1029 = vrot.slane %v938, 2
      %v1030 = vrot.slane %v191, 2
      %v1031 = vsel %vm985, %v1029, %v1030
      %v1032 = vrot.slane %v939, 2
      %v1033 = vsel %vm985, %v1027, %v1032
      %v1034 = vrot.slane %v940, 2
      %v1035 = vsel %vm985, %v1030, %v1034
      %v1036 = vrot.slane %v941, 2
      %v1037 = vrot.slane %v194, 2
      %v1038 = vsel %vm985, %v1036, %v1037
      %v1039 = vrot.slane %v942, 2
      %v1040 = vrot.slane %v195, 2
      %v1041 = vsel %vm985, %v1039, %v1040
      %v1042 = vrot.slane %v943, 2
      %v1043 = vsel %vm985, %v1037, %v1042
      %v1044 = vrot.slane %v944, 2
      %v1045 = vsel %vm985, %v1040, %v1044
      %v1046 = vrot.slane %v945, 2
      %v1047 = vrot.slane %v198, 2
      %v1048 = vsel %vm985, %v1046, %v1047
      %v1049 = vrot.slane %v946, 2
      %v1050 = vrot.slane %v199, 2
      %v1051 = vsel %vm985, %v1049, %v1050
      %v1052 = vrot.slane %v947, 2
      %v1053 = vsel %vm985, %v1047, %v1052
      %v1054 = vrot.slane %v948, 2
      %v1055 = vsel %vm985, %v1050, %v1054
      %v1056 = vrot.slane %v949, 2
      %v1057 = vrot.slane %v202, 2
      %v1058 = vsel %vm985, %v1056, %v1057
      %v1059 = vrot.slane %v950, 2
      %v1060 = vrot.slane %v203, 2
      %v1061 = vsel %vm985, %v1059, %v1060
      %v1062 = vrot.slane %v951, 2
      %v1063 = vsel %vm985, %v1057, %v1062
      %v1064 = vrot.slane %v952, 2
      %v1065 = vsel %vm985, %v1060, %v1064
      %v1098 = vpack.c.bf16 %v993, %v988
      %v1099 = vpack.c.bf16 %v995, %v991
      %v1100 = vpack.c.bf16 %v1003, %v998
      %v1101 = vpack.c.bf16 %v1005, %v1001
      %v1102 = vpack.c.bf16 %v1013, %v1008
      %v1103 = vpack.c.bf16 %v1015, %v1011
      %v1104 = vpack.c.bf16 %v1023, %v1018
      %v1105 = vpack.c.bf16 %v1025, %v1021
      %v1106 = vpack.c.bf16 %v1033, %v1028
      %v1107 = vpack.c.bf16 %v1035, %v1031
      %v1108 = vpack.c.bf16 %v1043, %v1038
      %v1109 = vpack.c.bf16 %v1045, %v1041
      %v1110 = vpack.c.bf16 %v1053, %v1048
      %v1111 = vpack.c.bf16 %v1055, %v1051
      %v1112 = vpack.c.bf16 %v1063, %v1058
      %v1113 = vpack.c.bf16 %v1065, %v1061
      %s1114 = scalar_lea.vmem %s1, 288
      %v1115 = vld [vmem:[%s1114] sm:$0xff]
      %v1116 = vld [vmem:[%s1114 + $0x8] sm:$0xff]
      %v1117 = vld [vmem:[%s1114 + $0x10] sm:$0xff]
      %v1118 = vld [vmem:[%s1114 + $0x18] sm:$0xff]
      %v1119 = vld [vmem:[%s1114 + $0x20] sm:$0xff]
      %v1120 = vld [vmem:[%s1114 + $0x28] sm:$0xff]
      %v1121 = vld [vmem:[%s1114 + $0x30] sm:$0xff]
      %v1122 = vld [vmem:[%s1114 + $0x38] sm:$0xff]
      %v1123 = vld [vmem:[%s1114 + $0x40] sm:$0xff]
      %v1124 = vld [vmem:[%s1114 + $0x48] sm:$0xff]
      %v1125 = vld [vmem:[%s1114 + $0x50] sm:$0xff]
      %v1126 = vld [vmem:[%s1114 + $0x58] sm:$0xff]
      %v1127 = vld [vmem:[%s1114 + $0x60] sm:$0xff]
      %v1128 = vld [vmem:[%s1114 + $0x68] sm:$0xff]
      %v1129 = vld [vmem:[%s1114 + $0x70] sm:$0xff]
      %v1130 = vld [vmem:[%s1114 + $0x78] sm:$0xff]
      %v1131 = vld [vmem:[%s1114 + $0x80] sm:$0xff]
      %v1132 = vld [vmem:[%s1114 + $0x88] sm:$0xff]
      %v1151 = vunpack.c.l.b16 %v1115
      %v1152 = vunpack.c.h.b16 %v1115
      %v1153 = vunpack.c.l.b16 %v1116
      %v1154 = vunpack.c.h.b16 %v1116
      %v1155 = vunpack.c.l.b16 %v1117
      %v1156 = vunpack.c.h.b16 %v1117
      %v1157 = vunpack.c.l.b16 %v1118
      %v1158 = vunpack.c.h.b16 %v1118
      %v1159 = vunpack.c.l.b16 %v1119
      %v1160 = vunpack.c.h.b16 %v1119
      %v1161 = vunpack.c.l.b16 %v1120
      %v1162 = vunpack.c.h.b16 %v1120
      %v1163 = vunpack.c.l.b16 %v1121
      %v1164 = vunpack.c.h.b16 %v1121
      %v1165 = vunpack.c.l.b16 %v1122
      %v1166 = vunpack.c.h.b16 %v1122
      %v1167 = vunpack.c.l.b16 %v1123
      %v1168 = vunpack.c.h.b16 %v1123
      %v1169 = vunpack.c.l.b16 %v1124
      %v1170 = vunpack.c.h.b16 %v1124
      %v1171 = vunpack.c.l.b16 %v1125
      %v1172 = vunpack.c.h.b16 %v1125
      %v1173 = vunpack.c.l.b16 %v1126
      %v1174 = vunpack.c.h.b16 %v1126
      %v1175 = vunpack.c.l.b16 %v1127
      %v1176 = vunpack.c.h.b16 %v1127
      %v1177 = vunpack.c.l.b16 %v1128
      %v1178 = vunpack.c.h.b16 %v1128
      %v1179 = vunpack.c.l.b16 %v1129
      %v1180 = vunpack.c.h.b16 %v1129
      %v1181 = vunpack.c.l.b16 %v1130
      %v1182 = vunpack.c.h.b16 %v1130
      %v1183 = vunpack.c.l.b16 %v1131
      %v1184 = vunpack.c.h.b16 %v1131
      %v1185 = vunpack.c.l.b16 %v1132
      %v1186 = vunpack.c.h.b16 %v1132
      %v1187 = vpack.c.b16 %v1153, %v1151
      %v1188 = vpack.c.b16 %v1154, %v1152
      %v1189 = vpack.c.b16 %v1157, %v1155
      %v1190 = vpack.c.b16 %v1158, %v1156
      %v1191 = vpack.c.b16 %v1161, %v1159
      %v1192 = vpack.c.b16 %v1162, %v1160
      %v1193 = vpack.c.b16 %v1165, %v1163
      %v1194 = vpack.c.b16 %v1166, %v1164
      %v1195 = vpack.c.b16 %v1169, %v1167
      %v1196 = vpack.c.b16 %v1170, %v1168
      %v1197 = vpack.c.b16 %v1173, %v1171
      %v1198 = vpack.c.b16 %v1174, %v1172
      %v1199 = vpack.c.b16 %v1177, %v1175
      %v1200 = vpack.c.b16 %v1178, %v1176
      %v1201 = vpack.c.b16 %v1181, %v1179
      %v1202 = vpack.c.b16 %v1182, %v1180
      %v1203 = vpack.c.b16 %v1185, %v1183
      %v1204 = vpack.c.b16 %v1186, %v1184
      %v1224 = vsel %vm556, %v1099, 0
      %v1227 = vsel %vm556, %v1101, 0
      %v1230 = vsel %vm556, %v1103, 0
      %v1233 = vsel %vm556, %v1105, 0
      %v1236 = vsel %vm556, %v1107, 0
      %v1239 = vsel %vm556, %v1109, 0
      %v1242 = vsel %vm556, %v1111, 0
      %v1245 = vsel %vm556, %v1113, 0
      %1247 = vmatprep.subr.bf16.mxu0 %v1202
      %1248 = vmatpush1.bf16.msra.mxu0 %v1201
      %1249 = vmatprep.subr.bf16.mxu0 %v1200
      %1250 = vmatpush1.bf16.msra.mxu0 %v1199
      %1251 = vmatprep.subr.bf16.mxu0 %v1198
      %1252 = vmatpush1.bf16.msra.mxu0 %v1197
      %1253 = vmatprep.subr.bf16.mxu0 %v1196
      %1254 = vmatpush1.bf16.msra.mxu0 %v1195
      %1255 = vmatprep.subr.bf16.mxu0 %v1194
      %1256 = vmatpush1.bf16.msra.mxu0 %v1193
      %1257 = vmatprep.subr.bf16.mxu0 %v1192
      %1258 = vmatpush1.bf16.msra.mxu0 %v1191
      %1259 = vmatprep.subr.bf16.mxu0 %v1190
      %1260 = vmatpush1.bf16.msra.mxu0 %v1189
      %1261 = vmatprep.subr.bf16.mxu0 %v1188
      %1262 = vmatpush1.bf16.msra.mxu0 %v1187
      %1263 = vmatprep.subr.bf16.mxu0 0
      %1264 = vmatpush2.bf16.msra.mxu0 0
      %1265 = vmatprep.subr.bf16.mxu0 0
      %1266 = vmatpush2.bf16.msra.mxu0 0
      %1267 = vmatprep.subr.bf16.mxu0 0
      %1268 = vmatpush2.bf16.msra.mxu0 0
      %1269 = vmatprep.subr.bf16.mxu0 0
      %1270 = vmatpush2.bf16.msra.mxu0 0
      %1271 = vmatprep.subr.bf16.mxu0 0
      %1272 = vmatpush2.bf16.msra.mxu0 0
      %1273 = vmatprep.subr.bf16.mxu0 0
      %1274 = vmatpush2.bf16.msra.mxu0 0
      %1275 = vmatprep.subr.bf16.mxu0 0
      %1276 = vmatpush2.bf16.msra.mxu0 0
      %1277 = vmatprep.subr.bf16.mxu0 %v1204
      %1278 = vmatpush2.bf16.msra.mxu0 %v1203
      %1279 = vmatprep.mubr.bf16.mxu0 %v1224
      %1280 = vmatmul.mubr.bf16.gmra.mxu0 %v1098
      %v1281 = vpop.f32.mrf.mxu0
      %v1282 = vadd.f32 0.0, %v1281
      %v1283 = vpop.f32.mrf.mxu0
      %v1284 = vadd.f32 0.0, %v1283
      %v1285 = vpop.f32.mrf.mxu0
      %v1286 = vadd.f32 0.0, %v1285
      %v1287 = vpop.f32.mrf.mxu0
      %v1288 = vadd.f32 0.0, %v1287
      %1289 = vmatprep.mubr.bf16.mxu0 %v1227
      %1290 = vmatmul.mubr.bf16.gmra.mxu0 %v1100
      %v1291 = vpop.f32.mrf.mxu0
      %v1292 = vadd.f32 0.0, %v1291
      %v1293 = vpop.f32.mrf.mxu0
      %v1294 = vadd.f32 0.0, %v1293
      %v1295 = vpop.f32.mrf.mxu0
      %v1296 = vadd.f32 0.0, %v1295
      %v1297 = vpop.f32.mrf.mxu0
      %v1298 = vadd.f32 0.0, %v1297
      %1299 = vmatprep.mubr.bf16.mxu0 %v1230
      %1300 = vmatmul.mubr.bf16.gmra.mxu0 %v1102
      %v1301 = vpop.f32.mrf.mxu0
      %v1302 = vadd.f32 0.0, %v1301
      %v1303 = vpop.f32.mrf.mxu0
      %v1304 = vadd.f32 0.0, %v1303
      %v1305 = vpop.f32.mrf.mxu0
      %v1306 = vadd.f32 0.0, %v1305
      %v1307 = vpop.f32.mrf.mxu0
      %v1308 = vadd.f32 0.0, %v1307
      %1309 = vmatprep.mubr.bf16.mxu0 %v1233
      %1310 = vmatmul.mubr.bf16.gmra.mxu0 %v1104
      %v1311 = vpop.f32.mrf.mxu0
      %v1312 = vadd.f32 0.0, %v1311
      %v1313 = vpop.f32.mrf.mxu0
      %v1314 = vadd.f32 0.0, %v1313
      %v1315 = vpop.f32.mrf.mxu0
      %v1316 = vadd.f32 0.0, %v1315
      %v1317 = vpop.f32.mrf.mxu0
      %v1318 = vadd.f32 0.0, %v1317
      %1319 = vmatprep.mubr.bf16.mxu0 %v1236
      %1320 = vmatmul.mubr.bf16.gmra.mxu0 %v1106
      %v1321 = vpop.f32.mrf.mxu0
      %v1322 = vadd.f32 0.0, %v1321
      %v1323 = vpop.f32.mrf.mxu0
      %v1324 = vadd.f32 0.0, %v1323
      %v1325 = vpop.f32.mrf.mxu0
      %v1326 = vadd.f32 0.0, %v1325
      %v1327 = vpop.f32.mrf.mxu0
      %v1328 = vadd.f32 0.0, %v1327
      %1329 = vmatprep.mubr.bf16.mxu0 %v1239
      %1330 = vmatmul.mubr.bf16.gmra.mxu0 %v1108
      %v1331 = vpop.f32.mrf.mxu0
      %v1332 = vadd.f32 0.0, %v1331
      %v1333 = vpop.f32.mrf.mxu0
      %v1334 = vadd.f32 0.0, %v1333
      %v1335 = vpop.f32.mrf.mxu0
      %v1336 = vadd.f32 0.0, %v1335
      %v1337 = vpop.f32.mrf.mxu0
      %v1338 = vadd.f32 0.0, %v1337
      %1339 = vmatprep.mubr.bf16.mxu0 %v1242
      %1340 = vmatmul.mubr.bf16.gmra.mxu0 %v1110
      %v1341 = vpop.f32.mrf.mxu0
      %v1342 = vadd.f32 0.0, %v1341
      %v1343 = vpop.f32.mrf.mxu0
      %v1344 = vadd.f32 0.0, %v1343
      %v1345 = vpop.f32.mrf.mxu0
      %v1346 = vadd.f32 0.0, %v1345
      %v1347 = vpop.f32.mrf.mxu0
      %v1348 = vadd.f32 0.0, %v1347
      %1349 = vmatprep.mubr.bf16.mxu0 %v1245
      %1350 = vmatmul.mubr.bf16.gmra.mxu0 %v1112
      %v1351 = vpop.f32.mrf.mxu0
      %v1352 = vadd.f32 0.0, %v1351
      %v1353 = vpop.f32.mrf.mxu0
      %v1354 = vadd.f32 0.0, %v1353
      %v1355 = vpop.f32.mrf.mxu0
      %v1356 = vadd.f32 0.0, %v1355
      %v1357 = vpop.f32.mrf.mxu0
      %v1358 = vadd.f32 0.0, %v1357
      %1359 = vdwg.mxu0
      %v1360 = vadd.f32 %v843, %v1282
      %v1361 = vadd.f32 %v845, %v1284
      %v1362 = vadd.f32 %v847, %v1286
      %v1363 = vadd.f32 %v849, %v1288
      %v1364 = vadd.f32 %v853, %v1292
      %v1365 = vadd.f32 %v855, %v1294
      %v1366 = vadd.f32 %v857, %v1296
      %v1367 = vadd.f32 %v859, %v1298
      %v1368 = vadd.f32 %v863, %v1302
      %v1369 = vadd.f32 %v865, %v1304
      %v1370 = vadd.f32 %v867, %v1306
      %v1371 = vadd.f32 %v869, %v1308
      %v1372 = vadd.f32 %v873, %v1312
      %v1373 = vadd.f32 %v875, %v1314
      %v1374 = vadd.f32 %v877, %v1316
      %v1375 = vadd.f32 %v879, %v1318
      %v1376 = vadd.f32 %v883, %v1322
      %v1377 = vadd.f32 %v885, %v1324
      %v1378 = vadd.f32 %v887, %v1326
      %v1379 = vadd.f32 %v889, %v1328
      %v1380 = vadd.f32 %v893, %v1332
      %v1381 = vadd.f32 %v895, %v1334
      %v1382 = vadd.f32 %v897, %v1336
      %v1383 = vadd.f32 %v899, %v1338
      %v1384 = vadd.f32 %v903, %v1342
      %v1385 = vadd.f32 %v905, %v1344
      %v1386 = vadd.f32 %v907, %v1346
      %v1387 = vadd.f32 %v909, %v1348
      %v1388 = vadd.f32 %v913, %v1352
      %v1389 = vadd.f32 %v915, %v1354
      %v1390 = vadd.f32 %v917, %v1356
      %v1391 = vadd.f32 %v919, %v1358
      %s1392 = scalar_lea.vmem %s165, 48
      %v1393 = vld [vmem:[%s1392] sm:$0xff]
      %v1394 = vld [vmem:[%s1392 + $0x8] sm:$0xff]
      %v1395 = vld [vmem:[%s1392 + $0x10] sm:$0xff]
      %v1396 = vld [vmem:[%s1392 + $0x18] sm:$0xff]
      %v1397 = vld [vmem:[%s1392 + $0x30] sm:$0xff]
      %v1398 = vld [vmem:[%s1392 + $0x38] sm:$0xff]
      %v1399 = vld [vmem:[%s1392 + $0x40] sm:$0xff]
      %v1400 = vld [vmem:[%s1392 + $0x48] sm:$0xff]
      %v1401 = vld [vmem:[%s1392 + $0x60] sm:$0xff]
      %v1402 = vld [vmem:[%s1392 + $0x68] sm:$0xff]
      %v1403 = vld [vmem:[%s1392 + $0x70] sm:$0xff]
      %v1404 = vld [vmem:[%s1392 + $0x78] sm:$0xff]
      %v1405 = vld [vmem:[%s1392 + $0x90] sm:$0xff]
      %v1406 = vld [vmem:[%s1392 + $0x98] sm:$0xff]
      %v1407 = vld [vmem:[%s1392 + $0xa0] sm:$0xff]
      %v1408 = vld [vmem:[%s1392 + $0xa8] sm:$0xff]
      %v1409 = vld [vmem:[%s1392 + $0xc0] sm:$0xff]
      %v1410 = vld [vmem:[%s1392 + $0xc8] sm:$0xff]
      %v1411 = vld [vmem:[%s1392 + $0xd0] sm:$0xff]
      %v1412 = vld [vmem:[%s1392 + $0xd8] sm:$0xff]
      %v1413 = vld [vmem:[%s1392 + $0xf0] sm:$0xff]
      %v1414 = vld [vmem:[%s1392 + $0xf8] sm:$0xff]
      %v1415 = vld [vmem:[%s1392 + $0x100] sm:$0xff]
      %v1416 = vld [vmem:[%s1392 + $0x108] sm:$0xff]
      %v1417 = vld [vmem:[%s1392 + $0x120] sm:$0xff]
      %v1418 = vld [vmem:[%s1392 + $0x128] sm:$0xff]
      %v1419 = vld [vmem:[%s1392 + $0x130] sm:$0xff]
      %v1420 = vld [vmem:[%s1392 + $0x138] sm:$0xff]
      %v1421 = vld [vmem:[%s1392 + $0x150] sm:$0xff]
      %v1422 = vld [vmem:[%s1392 + $0x158] sm:$0xff]
      %v1423 = vld [vmem:[%s1392 + $0x160] sm:$0xff]
      %v1424 = vld [vmem:[%s1392 + $0x168] sm:$0xff]
      %v1425 = vpack.c.bf16 %v1395, %v1393
      %v1426 = vpack.c.bf16 %v1396, %v1394
      %v1427 = vpack.c.bf16 %v1399, %v1397
      %v1428 = vpack.c.bf16 %v1400, %v1398
      %v1429 = vpack.c.bf16 %v1403, %v1401
      %v1430 = vpack.c.bf16 %v1404, %v1402
      %v1431 = vpack.c.bf16 %v1407, %v1405
      %v1432 = vpack.c.bf16 %v1408, %v1406
      %v1433 = vpack.c.bf16 %v1411, %v1409
      %v1434 = vpack.c.bf16 %v1412, %v1410
      %v1435 = vpack.c.bf16 %v1415, %v1413
      %v1436 = vpack.c.bf16 %v1416, %v1414
      %v1437 = vpack.c.bf16 %v1419, %v1417
      %v1438 = vpack.c.bf16 %v1420, %v1418
      %v1439 = vpack.c.bf16 %v1423, %v1421
      %v1440 = vpack.c.bf16 %v1424, %v1422
      %s1441 = scalar_lea.vmem %s1, 432
      %v1442 = vld [vmem:[%s1441] sm:$0xff]
      %v1443 = vld [vmem:[%s1441 + $0x8] sm:$0xff]
      %v1444 = vld [vmem:[%s1441 + $0x10] sm:$0xff]
      %v1445 = vld [vmem:[%s1441 + $0x18] sm:$0xff]
      %v1446 = vld [vmem:[%s1441 + $0x20] sm:$0xff]
      %v1447 = vld [vmem:[%s1441 + $0x28] sm:$0xff]
      %v1448 = vld [vmem:[%s1441 + $0x30] sm:$0xff]
      %v1449 = vld [vmem:[%s1441 + $0x38] sm:$0xff]
      %v1450 = vld [vmem:[%s1441 + $0x40] sm:$0xff]
      %v1451 = vld [vmem:[%s1441 + $0x48] sm:$0xff]
      %v1452 = vld [vmem:[%s1441 + $0x50] sm:$0xff]
      %v1453 = vld [vmem:[%s1441 + $0x58] sm:$0xff]
      %v1454 = vld [vmem:[%s1441 + $0x60] sm:$0xff]
      %v1455 = vld [vmem:[%s1441 + $0x68] sm:$0xff]
      %v1456 = vld [vmem:[%s1441 + $0x70] sm:$0xff]
      %v1457 = vld [vmem:[%s1441 + $0x78] sm:$0xff]
      %v1458 = vld [vmem:[%s1441 + $0x80] sm:$0xff]
      %v1459 = vld [vmem:[%s1441 + $0x88] sm:$0xff]
      %v1478 = vunpack.c.l.b16 %v1442
      %v1479 = vunpack.c.h.b16 %v1442
      %v1480 = vunpack.c.l.b16 %v1443
      %v1481 = vunpack.c.h.b16 %v1443
      %v1482 = vunpack.c.l.b16 %v1444
      %v1483 = vunpack.c.h.b16 %v1444
      %v1484 = vunpack.c.l.b16 %v1445
      %v1485 = vunpack.c.h.b16 %v1445
      %v1486 = vunpack.c.l.b16 %v1446
      %v1487 = vunpack.c.h.b16 %v1446
      %v1488 = vunpack.c.l.b16 %v1447
      %v1489 = vunpack.c.h.b16 %v1447
      %v1490 = vunpack.c.l.b16 %v1448
      %v1491 = vunpack.c.h.b16 %v1448
      %v1492 = vunpack.c.l.b16 %v1449
      %v1493 = vunpack.c.h.b16 %v1449
      %v1494 = vunpack.c.l.b16 %v1450
      %v1495 = vunpack.c.h.b16 %v1450
      %v1496 = vunpack.c.l.b16 %v1451
      %v1497 = vunpack.c.h.b16 %v1451
      %v1498 = vunpack.c.l.b16 %v1452
      %v1499 = vunpack.c.h.b16 %v1452
      %v1500 = vunpack.c.l.b16 %v1453
      %v1501 = vunpack.c.h.b16 %v1453
      %v1502 = vunpack.c.l.b16 %v1454
      %v1503 = vunpack.c.h.b16 %v1454
      %v1504 = vunpack.c.l.b16 %v1455
      %v1505 = vunpack.c.h.b16 %v1455
      %v1506 = vunpack.c.l.b16 %v1456
      %v1507 = vunpack.c.h.b16 %v1456
      %v1508 = vunpack.c.l.b16 %v1457
      %v1509 = vunpack.c.h.b16 %v1457
      %v1510 = vunpack.c.l.b16 %v1458
      %v1511 = vunpack.c.h.b16 %v1458
      %v1512 = vunpack.c.l.b16 %v1459
      %v1513 = vunpack.c.h.b16 %v1459
      %v1514 = vpack.c.b16 %v1480, %v1478
      %v1515 = vpack.c.b16 %v1481, %v1479
      %v1516 = vpack.c.b16 %v1484, %v1482
      %v1517 = vpack.c.b16 %v1485, %v1483
      %v1518 = vpack.c.b16 %v1488, %v1486
      %v1519 = vpack.c.b16 %v1489, %v1487
      %v1520 = vpack.c.b16 %v1492, %v1490
      %v1521 = vpack.c.b16 %v1493, %v1491
      %v1522 = vpack.c.b16 %v1496, %v1494
      %v1523 = vpack.c.b16 %v1497, %v1495
      %v1524 = vpack.c.b16 %v1500, %v1498
      %v1525 = vpack.c.b16 %v1501, %v1499
      %v1526 = vpack.c.b16 %v1504, %v1502
      %v1527 = vpack.c.b16 %v1505, %v1503
      %v1528 = vpack.c.b16 %v1508, %v1506
      %v1529 = vpack.c.b16 %v1509, %v1507
      %v1530 = vpack.c.b16 %v1512, %v1510
      %v1531 = vpack.c.b16 %v1513, %v1511
      %v1551 = vsel %vm556, %v1426, 0
      %v1554 = vsel %vm556, %v1428, 0
      %v1557 = vsel %vm556, %v1430, 0
      %v1560 = vsel %vm556, %v1432, 0
      %v1563 = vsel %vm556, %v1434, 0
      %v1566 = vsel %vm556, %v1436, 0
      %v1569 = vsel %vm556, %v1438, 0
      %v1572 = vsel %vm556, %v1440, 0
      %1574 = vmatprep.subr.bf16.mxu0 %v1529
      %1575 = vmatpush1.bf16.msra.mxu0 %v1528
      %1576 = vmatprep.subr.bf16.mxu0 %v1527
      %1577 = vmatpush1.bf16.msra.mxu0 %v1526
      %1578 = vmatprep.subr.bf16.mxu0 %v1525
      %1579 = vmatpush1.bf16.msra.mxu0 %v1524
      %1580 = vmatprep.subr.bf16.mxu0 %v1523
      %1581 = vmatpush1.bf16.msra.mxu0 %v1522
      %1582 = vmatprep.subr.bf16.mxu0 %v1521
      %1583 = vmatpush1.bf16.msra.mxu0 %v1520
      %1584 = vmatprep.subr.bf16.mxu0 %v1519
      %1585 = vmatpush1.bf16.msra.mxu0 %v1518
      %1586 = vmatprep.subr.bf16.mxu0 %v1517
      %1587 = vmatpush1.bf16.msra.mxu0 %v1516
      %1588 = vmatprep.subr.bf16.mxu0 %v1515
      %1589 = vmatpush1.bf16.msra.mxu0 %v1514
      %1590 = vmatprep.subr.bf16.mxu0 0
      %1591 = vmatpush2.bf16.msra.mxu0 0
      %1592 = vmatprep.subr.bf16.mxu0 0
      %1593 = vmatpush2.bf16.msra.mxu0 0
      %1594 = vmatprep.subr.bf16.mxu0 0
      %1595 = vmatpush2.bf16.msra.mxu0 0
      %1596 = vmatprep.subr.bf16.mxu0 0
      %1597 = vmatpush2.bf16.msra.mxu0 0
      %1598 = vmatprep.subr.bf16.mxu0 0
      %1599 = vmatpush2.bf16.msra.mxu0 0
      %1600 = vmatprep.subr.bf16.mxu0 0
      %1601 = vmatpush2.bf16.msra.mxu0 0
      %1602 = vmatprep.subr.bf16.mxu0 0
      %1603 = vmatpush2.bf16.msra.mxu0 0
      %1604 = vmatprep.subr.bf16.mxu0 %v1531
      %1605 = vmatpush2.bf16.msra.mxu0 %v1530
      %1606 = vmatprep.mubr.bf16.mxu0 %v1551
      %1607 = vmatmul.mubr.bf16.gmra.mxu0 %v1425
      %v1608 = vpop.f32.mrf.mxu0
      %v1609 = vadd.f32 0.0, %v1608
      %v1610 = vpop.f32.mrf.mxu0
      %v1611 = vadd.f32 0.0, %v1610
      %v1612 = vpop.f32.mrf.mxu0
      %v1613 = vadd.f32 0.0, %v1612
      %v1614 = vpop.f32.mrf.mxu0
      %v1615 = vadd.f32 0.0, %v1614
      %1616 = vmatprep.mubr.bf16.mxu0 %v1554
      %1617 = vmatmul.mubr.bf16.gmra.mxu0 %v1427
      %v1618 = vpop.f32.mrf.mxu0
      %v1619 = vadd.f32 0.0, %v1618
      %v1620 = vpop.f32.mrf.mxu0
      %v1621 = vadd.f32 0.0, %v1620
      %v1622 = vpop.f32.mrf.mxu0
      %v1623 = vadd.f32 0.0, %v1622
      %v1624 = vpop.f32.mrf.mxu0
      %v1625 = vadd.f32 0.0, %v1624
      %1626 = vmatprep.mubr.bf16.mxu0 %v1557
      %1627 = vmatmul.mubr.bf16.gmra.mxu0 %v1429
      %v1628 = vpop.f32.mrf.mxu0
      %v1629 = vadd.f32 0.0, %v1628
      %v1630 = vpop.f32.mrf.mxu0
      %v1631 = vadd.f32 0.0, %v1630
      %v1632 = vpop.f32.mrf.mxu0
      %v1633 = vadd.f32 0.0, %v1632
      %v1634 = vpop.f32.mrf.mxu0
      %v1635 = vadd.f32 0.0, %v1634
      %1636 = vmatprep.mubr.bf16.mxu0 %v1560
      %1637 = vmatmul.mubr.bf16.gmra.mxu0 %v1431
      %v1638 = vpop.f32.mrf.mxu0
      %v1639 = vadd.f32 0.0, %v1638
      %v1640 = vpop.f32.mrf.mxu0
      %v1641 = vadd.f32 0.0, %v1640
      %v1642 = vpop.f32.mrf.mxu0
      %v1643 = vadd.f32 0.0, %v1642
      %v1644 = vpop.f32.mrf.mxu0
      %v1645 = vadd.f32 0.0, %v1644
      %1646 = vmatprep.mubr.bf16.mxu0 %v1563
      %1647 = vmatmul.mubr.bf16.gmra.mxu0 %v1433
      %v1648 = vpop.f32.mrf.mxu0
      %v1649 = vadd.f32 0.0, %v1648
      %v1650 = vpop.f32.mrf.mxu0
      %v1651 = vadd.f32 0.0, %v1650
      %v1652 = vpop.f32.mrf.mxu0
      %v1653 = vadd.f32 0.0, %v1652
      %v1654 = vpop.f32.mrf.mxu0
      %v1655 = vadd.f32 0.0, %v1654
      %1656 = vmatprep.mubr.bf16.mxu0 %v1566
      %1657 = vmatmul.mubr.bf16.gmra.mxu0 %v1435
      %v1658 = vpop.f32.mrf.mxu0
      %v1659 = vadd.f32 0.0, %v1658
      %v1660 = vpop.f32.mrf.mxu0
      %v1661 = vadd.f32 0.0, %v1660
      %v1662 = vpop.f32.mrf.mxu0
      %v1663 = vadd.f32 0.0, %v1662
      %v1664 = vpop.f32.mrf.mxu0
      %v1665 = vadd.f32 0.0, %v1664
      %1666 = vmatprep.mubr.bf16.mxu0 %v1569
      %1667 = vmatmul.mubr.bf16.gmra.mxu0 %v1437
      %v1668 = vpop.f32.mrf.mxu0
      %v1669 = vadd.f32 0.0, %v1668
      %v1670 = vpop.f32.mrf.mxu0
      %v1671 = vadd.f32 0.0, %v1670
      %v1672 = vpop.f32.mrf.mxu0
      %v1673 = vadd.f32 0.0, %v1672
      %v1674 = vpop.f32.mrf.mxu0
      %v1675 = vadd.f32 0.0, %v1674
      %1676 = vmatprep.mubr.bf16.mxu0 %v1572
      %1677 = vmatmul.mubr.bf16.gmra.mxu0 %v1439
      %v1678 = vpop.f32.mrf.mxu0
      %v1679 = vadd.f32 0.0, %v1678
      %v1680 = vpop.f32.mrf.mxu0
      %v1681 = vadd.f32 0.0, %v1680
      %v1682 = vpop.f32.mrf.mxu0
      %v1683 = vadd.f32 0.0, %v1682
      %v1684 = vpop.f32.mrf.mxu0
      %v1685 = vadd.f32 0.0, %v1684
      %1686 = vdwg.mxu0
      %v1687 = vadd.f32 %v1360, %v1609
      %v1688 = vadd.f32 %v1361, %v1611
      %v1689 = vadd.f32 %v1362, %v1613
      %v1690 = vadd.f32 %v1363, %v1615
      %v1691 = vadd.f32 %v1364, %v1619
      %v1692 = vadd.f32 %v1365, %v1621
      %v1693 = vadd.f32 %v1366, %v1623
      %v1694 = vadd.f32 %v1367, %v1625
      %v1695 = vadd.f32 %v1368, %v1629
      %v1696 = vadd.f32 %v1369, %v1631
      %v1697 = vadd.f32 %v1370, %v1633
      %v1698 = vadd.f32 %v1371, %v1635
      %v1699 = vadd.f32 %v1372, %v1639
      %v1700 = vadd.f32 %v1373, %v1641
      %v1701 = vadd.f32 %v1374, %v1643
      %v1702 = vadd.f32 %v1375, %v1645
      %v1703 = vadd.f32 %v1376, %v1649
      %v1704 = vadd.f32 %v1377, %v1651
      %v1705 = vadd.f32 %v1378, %v1653
      %v1706 = vadd.f32 %v1379, %v1655
      %v1707 = vadd.f32 %v1380, %v1659
      %v1708 = vadd.f32 %v1381, %v1661
      %v1709 = vadd.f32 %v1382, %v1663
      %v1710 = vadd.f32 %v1383, %v1665
      %v1711 = vadd.f32 %v1384, %v1669
      %v1712 = vadd.f32 %v1385, %v1671
      %v1713 = vadd.f32 %v1386, %v1673
      %v1714 = vadd.f32 %v1387, %v1675
      %v1715 = vadd.f32 %v1388, %v1679
      %v1716 = vadd.f32 %v1389, %v1681
      %v1717 = vadd.f32 %v1390, %v1683
      %v1718 = vadd.f32 %v1391, %v1685
      %v1719 = vld [vmem:[%s1392] sm:$0xfe]
      %v1720 = vld [vmem:[%s1392 + $0x8] sm:$0xfe]
      %v1721 = vld [vmem:[%s1392 + $0x10] sm:$0xff]
      %v1722 = vld [vmem:[%s1392 + $0x18] sm:$0xff]
      %v1723 = vld [vmem:[%s1392 + $0x20] sm:$0x1]
      %v1724 = vld [vmem:[%s1392 + $0x28] sm:$0x1]
      %v1725 = vld [vmem:[%s1392 + $0x30] sm:$0xfe]
      %v1726 = vld [vmem:[%s1392 + $0x38] sm:$0xfe]
      %v1727 = vld [vmem:[%s1392 + $0x40] sm:$0xff]
      %v1728 = vld [vmem:[%s1392 + $0x48] sm:$0xff]
      %v1729 = vld [vmem:[%s1392 + $0x50] sm:$0x1]
      %v1730 = vld [vmem:[%s1392 + $0x58] sm:$0x1]
      %v1731 = vld [vmem:[%s1392 + $0x60] sm:$0xfe]
      %v1732 = vld [vmem:[%s1392 + $0x68] sm:$0xfe]
      %v1733 = vld [vmem:[%s1392 + $0x70] sm:$0xff]
      %v1734 = vld [vmem:[%s1392 + $0x78] sm:$0xff]
      %v1735 = vld [vmem:[%s1392 + $0x80] sm:$0x1]
      %v1736 = vld [vmem:[%s1392 + $0x88] sm:$0x1]
      %v1737 = vld [vmem:[%s1392 + $0x90] sm:$0xfe]
      %v1738 = vld [vmem:[%s1392 + $0x98] sm:$0xfe]
      %v1739 = vld [vmem:[%s1392 + $0xa0] sm:$0xff]
      %v1740 = vld [vmem:[%s1392 + $0xa8] sm:$0xff]
      %v1741 = vld [vmem:[%s1392 + $0xb0] sm:$0x1]
      %v1742 = vld [vmem:[%s1392 + $0xb8] sm:$0x1]
      %v1743 = vld [vmem:[%s1392 + $0xc0] sm:$0xfe]
      %v1744 = vld [vmem:[%s1392 + $0xc8] sm:$0xfe]
      %v1745 = vld [vmem:[%s1392 + $0xd0] sm:$0xff]
      %v1746 = vld [vmem:[%s1392 + $0xd8] sm:$0xff]
      %v1747 = vld [vmem:[%s1392 + $0xe0] sm:$0x1]
      %v1748 = vld [vmem:[%s1392 + $0xe8] sm:$0x1]
      %v1749 = vld [vmem:[%s1392 + $0xf0] sm:$0xfe]
      %v1750 = vld [vmem:[%s1392 + $0xf8] sm:$0xfe]
      %v1751 = vld [vmem:[%s1392 + $0x100] sm:$0xff]
      %v1752 = vld [vmem:[%s1392 + $0x108] sm:$0xff]
      %v1753 = vld [vmem:[%s1392 + $0x110] sm:$0x1]
      %v1754 = vld [vmem:[%s1392 + $0x118] sm:$0x1]
      %v1755 = vld [vmem:[%s1392 + $0x120] sm:$0xfe]
      %v1756 = vld [vmem:[%s1392 + $0x128] sm:$0xfe]
      %v1757 = vld [vmem:[%s1392 + $0x130] sm:$0xff]
      %v1758 = vld [vmem:[%s1392 + $0x138] sm:$0xff]
      %v1759 = vld [vmem:[%s1392 + $0x140] sm:$0x1]
      %v1760 = vld [vmem:[%s1392 + $0x148] sm:$0x1]
      %v1761 = vld [vmem:[%s1392 + $0x150] sm:$0xfe]
      %v1762 = vld [vmem:[%s1392 + $0x158] sm:$0xfe]
      %v1763 = vld [vmem:[%s1392 + $0x160] sm:$0xff]
      %v1764 = vld [vmem:[%s1392 + $0x168] sm:$0xff]
      %v1765 = vld [vmem:[%s1392 + $0x170] sm:$0x1]
      %v1766 = vld [vmem:[%s1392 + $0x178] sm:$0x1]
      %v1815 = vrot.slane %v1719, 1
      %v1816 = vrot.slane %v1721, 1
      %v1817 = vsel %vm318, %v1815, %v1816
      %v1818 = vrot.slane %v1720, 1
      %v1819 = vrot.slane %v1722, 1
      %v1820 = vsel %vm318, %v1818, %v1819
      %v1821 = vrot.slane %v1723, 1
      %v1822 = vsel %vm318, %v1816, %v1821
      %v1823 = vrot.slane %v1724, 1
      %v1824 = vsel %vm318, %v1819, %v1823
      %v1825 = vrot.slane %v1725, 1
      %v1826 = vrot.slane %v1727, 1
      %v1827 = vsel %vm318, %v1825, %v1826
      %v1828 = vrot.slane %v1726, 1
      %v1829 = vrot.slane %v1728, 1
      %v1830 = vsel %vm318, %v1828, %v1829
      %v1831 = vrot.slane %v1729, 1
      %v1832 = vsel %vm318, %v1826, %v1831
      %v1833 = vrot.slane %v1730, 1
      %v1834 = vsel %vm318, %v1829, %v1833
      %v1835 = vrot.slane %v1731, 1
      %v1836 = vrot.slane %v1733, 1
      %v1837 = vsel %vm318, %v1835, %v1836
      %v1838 = vrot.slane %v1732, 1
      %v1839 = vrot.slane %v1734, 1
      %v1840 = vsel %vm318, %v1838, %v1839
      %v1841 = vrot.slane %v1735, 1
      %v1842 = vsel %vm318, %v1836, %v1841
      %v1843 = vrot.slane %v1736, 1
      %v1844 = vsel %vm318, %v1839, %v1843
      %v1845 = vrot.slane %v1737, 1
      %v1846 = vrot.slane %v1739, 1
      %v1847 = vsel %vm318, %v1845, %v1846
      %v1848 = vrot.slane %v1738, 1
      %v1849 = vrot.slane %v1740, 1
      %v1850 = vsel %vm318, %v1848, %v1849
      %v1851 = vrot.slane %v1741, 1
      %v1852 = vsel %vm318, %v1846, %v1851
      %v1853 = vrot.slane %v1742, 1
      %v1854 = vsel %vm318, %v1849, %v1853
      %v1855 = vrot.slane %v1743, 1
      %v1856 = vrot.slane %v1745, 1
      %v1857 = vsel %vm318, %v1855, %v1856
      %v1858 = vrot.slane %v1744, 1
      %v1859 = vrot.slane %v1746, 1
      %v1860 = vsel %vm318, %v1858, %v1859
      %v1861 = vrot.slane %v1747, 1
      %v1862 = vsel %vm318, %v1856, %v1861
      %v1863 = vrot.slane %v1748, 1
      %v1864 = vsel %vm318, %v1859, %v1863
      %v1865 = vrot.slane %v1749, 1
      %v1866 = vrot.slane %v1751, 1
      %v1867 = vsel %vm318, %v1865, %v1866
      %v1868 = vrot.slane %v1750, 1
      %v1869 = vrot.slane %v1752, 1
      %v1870 = vsel %vm318, %v1868, %v1869
      %v1871 = vrot.slane %v1753, 1
      %v1872 = vsel %vm318, %v1866, %v1871
      %v1873 = vrot.slane %v1754, 1
      %v1874 = vsel %vm318, %v1869, %v1873
      %v1875 = vrot.slane %v1755, 1
      %v1876 = vrot.slane %v1757, 1
      %v1877 = vsel %vm318, %v1875, %v1876
      %v1878 = vrot.slane %v1756, 1
      %v1879 = vrot.slane %v1758, 1
      %v1880 = vsel %vm318, %v1878, %v1879
      %v1881 = vrot.slane %v1759, 1
      %v1882 = vsel %vm318, %v1876, %v1881
      %v1883 = vrot.slane %v1760, 1
      %v1884 = vsel %vm318, %v1879, %v1883
      %v1885 = vrot.slane %v1761, 1
      %v1886 = vrot.slane %v1763, 1
      %v1887 = vsel %vm318, %v1885, %v1886
      %v1888 = vrot.slane %v1762, 1
      %v1889 = vrot.slane %v1764, 1
      %v1890 = vsel %vm318, %v1888, %v1889
      %v1891 = vrot.slane %v1765, 1
      %v1892 = vsel %vm318, %v1886, %v1891
      %v1893 = vrot.slane %v1766, 1
      %v1894 = vsel %vm318, %v1889, %v1893
      %v1927 = vpack.c.bf16 %v1822, %v1817
      %v1928 = vpack.c.bf16 %v1824, %v1820
      %v1929 = vpack.c.bf16 %v1832, %v1827
      %v1930 = vpack.c.bf16 %v1834, %v1830
      %v1931 = vpack.c.bf16 %v1842, %v1837
      %v1932 = vpack.c.bf16 %v1844, %v1840
      %v1933 = vpack.c.bf16 %v1852, %v1847
      %v1934 = vpack.c.bf16 %v1854, %v1850
      %v1935 = vpack.c.bf16 %v1862, %v1857
      %v1936 = vpack.c.bf16 %v1864, %v1860
      %v1937 = vpack.c.bf16 %v1872, %v1867
      %v1938 = vpack.c.bf16 %v1874, %v1870
      %v1939 = vpack.c.bf16 %v1882, %v1877
      %v1940 = vpack.c.bf16 %v1884, %v1880
      %v1941 = vpack.c.bf16 %v1892, %v1887
      %v1942 = vpack.c.bf16 %v1894, %v1890
      %s1943 = scalar_lea.vmem %s1, 576
      %v1944 = vld [vmem:[%s1943] sm:$0xff]
      %v1945 = vld [vmem:[%s1943 + $0x8] sm:$0xff]
      %v1946 = vld [vmem:[%s1943 + $0x10] sm:$0xff]
      %v1947 = vld [vmem:[%s1943 + $0x18] sm:$0xff]
      %v1948 = vld [vmem:[%s1943 + $0x20] sm:$0xff]
      %v1949 = vld [vmem:[%s1943 + $0x28] sm:$0xff]
      %v1950 = vld [vmem:[%s1943 + $0x30] sm:$0xff]
      %v1951 = vld [vmem:[%s1943 + $0x38] sm:$0xff]
      %v1952 = vld [vmem:[%s1943 + $0x40] sm:$0xff]
      %v1953 = vld [vmem:[%s1943 + $0x48] sm:$0xff]
      %v1954 = vld [vmem:[%s1943 + $0x50] sm:$0xff]
      %v1955 = vld [vmem:[%s1943 + $0x58] sm:$0xff]
      %v1956 = vld [vmem:[%s1943 + $0x60] sm:$0xff]
      %v1957 = vld [vmem:[%s1943 + $0x68] sm:$0xff]
      %v1958 = vld [vmem:[%s1943 + $0x70] sm:$0xff]
      %v1959 = vld [vmem:[%s1943 + $0x78] sm:$0xff]
      %v1960 = vld [vmem:[%s1943 + $0x80] sm:$0xff]
      %v1961 = vld [vmem:[%s1943 + $0x88] sm:$0xff]
      %v1980 = vunpack.c.l.b16 %v1944
      %v1981 = vunpack.c.h.b16 %v1944
      %v1982 = vunpack.c.l.b16 %v1945
      %v1983 = vunpack.c.h.b16 %v1945
      %v1984 = vunpack.c.l.b16 %v1946
      %v1985 = vunpack.c.h.b16 %v1946
      %v1986 = vunpack.c.l.b16 %v1947
      %v1987 = vunpack.c.h.b16 %v1947
      %v1988 = vunpack.c.l.b16 %v1948
      %v1989 = vunpack.c.h.b16 %v1948
      %v1990 = vunpack.c.l.b16 %v1949
      %v1991 = vunpack.c.h.b16 %v1949
      %v1992 = vunpack.c.l.b16 %v1950
      %v1993 = vunpack.c.h.b16 %v1950
      %v1994 = vunpack.c.l.b16 %v1951
      %v1995 = vunpack.c.h.b16 %v1951
      %v1996 = vunpack.c.l.b16 %v1952
      %v1997 = vunpack.c.h.b16 %v1952
      %v1998 = vunpack.c.l.b16 %v1953
      %v1999 = vunpack.c.h.b16 %v1953
      %v2000 = vunpack.c.l.b16 %v1954
      %v2001 = vunpack.c.h.b16 %v1954
      %v2002 = vunpack.c.l.b16 %v1955
      %v2003 = vunpack.c.h.b16 %v1955
      %v2004 = vunpack.c.l.b16 %v1956
      %v2005 = vunpack.c.h.b16 %v1956
      %v2006 = vunpack.c.l.b16 %v1957
      %v2007 = vunpack.c.h.b16 %v1957
      %v2008 = vunpack.c.l.b16 %v1958
      %v2009 = vunpack.c.h.b16 %v1958
      %v2010 = vunpack.c.l.b16 %v1959
      %v2011 = vunpack.c.h.b16 %v1959
      %v2012 = vunpack.c.l.b16 %v1960
      %v2013 = vunpack.c.h.b16 %v1960
      %v2014 = vunpack.c.l.b16 %v1961
      %v2015 = vunpack.c.h.b16 %v1961
      %v2016 = vpack.c.b16 %v1982, %v1980
      %v2017 = vpack.c.b16 %v1983, %v1981
      %v2018 = vpack.c.b16 %v1986, %v1984
      %v2019 = vpack.c.b16 %v1987, %v1985
      %v2020 = vpack.c.b16 %v1990, %v1988
      %v2021 = vpack.c.b16 %v1991, %v1989
      %v2022 = vpack.c.b16 %v1994, %v1992
      %v2023 = vpack.c.b16 %v1995, %v1993
      %v2024 = vpack.c.b16 %v1998, %v1996
      %v2025 = vpack.c.b16 %v1999, %v1997
      %v2026 = vpack.c.b16 %v2002, %v2000
      %v2027 = vpack.c.b16 %v2003, %v2001
      %v2028 = vpack.c.b16 %v2006, %v2004
      %v2029 = vpack.c.b16 %v2007, %v2005
      %v2030 = vpack.c.b16 %v2010, %v2008
      %v2031 = vpack.c.b16 %v2011, %v2009
      %v2032 = vpack.c.b16 %v2014, %v2012
      %v2033 = vpack.c.b16 %v2015, %v2013
      %v2053 = vsel %vm556, %v1928, 0
      %v2056 = vsel %vm556, %v1930, 0
      %v2059 = vsel %vm556, %v1932, 0
      %v2062 = vsel %vm556, %v1934, 0
      %v2065 = vsel %vm556, %v1936, 0
      %v2068 = vsel %vm556, %v1938, 0
      %v2071 = vsel %vm556, %v1940, 0
      %v2074 = vsel %vm556, %v1942, 0
      %2076 = vmatprep.subr.bf16.mxu0 %v2031
      %2077 = vmatpush1.bf16.msra.mxu0 %v2030
      %2078 = vmatprep.subr.bf16.mxu0 %v2029
      %2079 = vmatpush1.bf16.msra.mxu0 %v2028
      %2080 = vmatprep.subr.bf16.mxu0 %v2027
      %2081 = vmatpush1.bf16.msra.mxu0 %v2026
      %2082 = vmatprep.subr.bf16.mxu0 %v2025
      %2083 = vmatpush1.bf16.msra.mxu0 %v2024
      %2084 = vmatprep.subr.bf16.mxu0 %v2023
      %2085 = vmatpush1.bf16.msra.mxu0 %v2022
      %2086 = vmatprep.subr.bf16.mxu0 %v2021
      %2087 = vmatpush1.bf16.msra.mxu0 %v2020
      %2088 = vmatprep.subr.bf16.mxu0 %v2019
      %2089 = vmatpush1.bf16.msra.mxu0 %v2018
      %2090 = vmatprep.subr.bf16.mxu0 %v2017
      %2091 = vmatpush1.bf16.msra.mxu0 %v2016
      %2092 = vmatprep.subr.bf16.mxu0 0
      %2093 = vmatpush2.bf16.msra.mxu0 0
      %2094 = vmatprep.subr.bf16.mxu0 0
      %2095 = vmatpush2.bf16.msra.mxu0 0
      %2096 = vmatprep.subr.bf16.mxu0 0
      %2097 = vmatpush2.bf16.msra.mxu0 0
      %2098 = vmatprep.subr.bf16.mxu0 0
      %2099 = vmatpush2.bf16.msra.mxu0 0
      %2100 = vmatprep.subr.bf16.mxu0 0
      %2101 = vmatpush2.bf16.msra.mxu0 0
      %2102 = vmatprep.subr.bf16.mxu0 0
      %2103 = vmatpush2.bf16.msra.mxu0 0
      %2104 = vmatprep.subr.bf16.mxu0 0
      %2105 = vmatpush2.bf16.msra.mxu0 0
      %2106 = vmatprep.subr.bf16.mxu0 %v2033
      %2107 = vmatpush2.bf16.msra.mxu0 %v2032
      %2108 = vmatprep.mubr.bf16.mxu0 %v2053
      %2109 = vmatmul.mubr.bf16.gmra.mxu0 %v1927
      %v2110 = vpop.f32.mrf.mxu0
      %v2111 = vadd.f32 0.0, %v2110
      %v2112 = vpop.f32.mrf.mxu0
      %v2113 = vadd.f32 0.0, %v2112
      %v2114 = vpop.f32.mrf.mxu0
      %v2115 = vadd.f32 0.0, %v2114
      %v2116 = vpop.f32.mrf.mxu0
      %v2117 = vadd.f32 0.0, %v2116
      %2118 = vmatprep.mubr.bf16.mxu0 %v2056
      %2119 = vmatmul.mubr.bf16.gmra.mxu0 %v1929
      %v2120 = vpop.f32.mrf.mxu0
      %v2121 = vadd.f32 0.0, %v2120
      %v2122 = vpop.f32.mrf.mxu0
      %v2123 = vadd.f32 0.0, %v2122
      %v2124 = vpop.f32.mrf.mxu0
      %v2125 = vadd.f32 0.0, %v2124
      %v2126 = vpop.f32.mrf.mxu0
      %v2127 = vadd.f32 0.0, %v2126
      %2128 = vmatprep.mubr.bf16.mxu0 %v2059
      %2129 = vmatmul.mubr.bf16.gmra.mxu0 %v1931
      %v2130 = vpop.f32.mrf.mxu0
      %v2131 = vadd.f32 0.0, %v2130
      %v2132 = vpop.f32.mrf.mxu0
      %v2133 = vadd.f32 0.0, %v2132
      %v2134 = vpop.f32.mrf.mxu0
      %v2135 = vadd.f32 0.0, %v2134
      %v2136 = vpop.f32.mrf.mxu0
      %v2137 = vadd.f32 0.0, %v2136
      %2138 = vmatprep.mubr.bf16.mxu0 %v2062
      %2139 = vmatmul.mubr.bf16.gmra.mxu0 %v1933
      %v2140 = vpop.f32.mrf.mxu0
      %v2141 = vadd.f32 0.0, %v2140
      %v2142 = vpop.f32.mrf.mxu0
      %v2143 = vadd.f32 0.0, %v2142
      %v2144 = vpop.f32.mrf.mxu0
      %v2145 = vadd.f32 0.0, %v2144
      %v2146 = vpop.f32.mrf.mxu0
      %v2147 = vadd.f32 0.0, %v2146
      %2148 = vmatprep.mubr.bf16.mxu0 %v2065
      %2149 = vmatmul.mubr.bf16.gmra.mxu0 %v1935
      %v2150 = vpop.f32.mrf.mxu0
      %v2151 = vadd.f32 0.0, %v2150
      %v2152 = vpop.f32.mrf.mxu0
      %v2153 = vadd.f32 0.0, %v2152
      %v2154 = vpop.f32.mrf.mxu0
      %v2155 = vadd.f32 0.0, %v2154
      %v2156 = vpop.f32.mrf.mxu0
      %v2157 = vadd.f32 0.0, %v2156
      %2158 = vmatprep.mubr.bf16.mxu0 %v2068
      %2159 = vmatmul.mubr.bf16.gmra.mxu0 %v1937
      %v2160 = vpop.f32.mrf.mxu0
      %v2161 = vadd.f32 0.0, %v2160
      %v2162 = vpop.f32.mrf.mxu0
      %v2163 = vadd.f32 0.0, %v2162
      %v2164 = vpop.f32.mrf.mxu0
      %v2165 = vadd.f32 0.0, %v2164
      %v2166 = vpop.f32.mrf.mxu0
      %v2167 = vadd.f32 0.0, %v2166
      %2168 = vmatprep.mubr.bf16.mxu0 %v2071
      %2169 = vmatmul.mubr.bf16.gmra.mxu0 %v1939
      %v2170 = vpop.f32.mrf.mxu0
      %v2171 = vadd.f32 0.0, %v2170
      %v2172 = vpop.f32.mrf.mxu0
      %v2173 = vadd.f32 0.0, %v2172
      %v2174 = vpop.f32.mrf.mxu0
      %v2175 = vadd.f32 0.0, %v2174
      %v2176 = vpop.f32.mrf.mxu0
      %v2177 = vadd.f32 0.0, %v2176
      %2178 = vmatprep.mubr.bf16.mxu0 %v2074
      %2179 = vmatmul.mubr.bf16.gmra.mxu0 %v1941
      %v2180 = vpop.f32.mrf.mxu0
      %v2181 = vadd.f32 0.0, %v2180
      %v2182 = vpop.f32.mrf.mxu0
      %v2183 = vadd.f32 0.0, %v2182
      %v2184 = vpop.f32.mrf.mxu0
      %v2185 = vadd.f32 0.0, %v2184
      %v2186 = vpop.f32.mrf.mxu0
      %v2187 = vadd.f32 0.0, %v2186
      %2188 = vdwg.mxu0
      %v2189 = vadd.f32 %v1687, %v2111
      %v2190 = vadd.f32 %v1688, %v2113
      %v2191 = vadd.f32 %v1689, %v2115
      %v2192 = vadd.f32 %v1690, %v2117
      %v2193 = vadd.f32 %v1691, %v2121
      %v2194 = vadd.f32 %v1692, %v2123
      %v2195 = vadd.f32 %v1693, %v2125
      %v2196 = vadd.f32 %v1694, %v2127
      %v2197 = vadd.f32 %v1695, %v2131
      %v2198 = vadd.f32 %v1696, %v2133
      %v2199 = vadd.f32 %v1697, %v2135
      %v2200 = vadd.f32 %v1698, %v2137
      %v2201 = vadd.f32 %v1699, %v2141
      %v2202 = vadd.f32 %v1700, %v2143
      %v2203 = vadd.f32 %v1701, %v2145
      %v2204 = vadd.f32 %v1702, %v2147
      %v2205 = vadd.f32 %v1703, %v2151
      %v2206 = vadd.f32 %v1704, %v2153
      %v2207 = vadd.f32 %v1705, %v2155
      %v2208 = vadd.f32 %v1706, %v2157
      %v2209 = vadd.f32 %v1707, %v2161
      %v2210 = vadd.f32 %v1708, %v2163
      %v2211 = vadd.f32 %v1709, %v2165
      %v2212 = vadd.f32 %v1710, %v2167
      %v2213 = vadd.f32 %v1711, %v2171
      %v2214 = vadd.f32 %v1712, %v2173
      %v2215 = vadd.f32 %v1713, %v2175
      %v2216 = vadd.f32 %v1714, %v2177
      %v2217 = vadd.f32 %v1715, %v2181
      %v2218 = vadd.f32 %v1716, %v2183
      %v2219 = vadd.f32 %v1717, %v2185
      %v2220 = vadd.f32 %v1718, %v2187
      %v2221 = vld [vmem:[%s1392] sm:$0xfc]
      %v2222 = vld [vmem:[%s1392 + $0x8] sm:$0xfc]
      %v2223 = vld [vmem:[%s1392 + $0x20] sm:$0x3]
      %v2224 = vld [vmem:[%s1392 + $0x28] sm:$0x3]
      %v2225 = vld [vmem:[%s1392 + $0x30] sm:$0xfc]
      %v2226 = vld [vmem:[%s1392 + $0x38] sm:$0xfc]
      %v2227 = vld [vmem:[%s1392 + $0x50] sm:$0x3]
      %v2228 = vld [vmem:[%s1392 + $0x58] sm:$0x3]
      %v2229 = vld [vmem:[%s1392 + $0x60] sm:$0xfc]
      %v2230 = vld [vmem:[%s1392 + $0x68] sm:$0xfc]
      %v2231 = vld [vmem:[%s1392 + $0x80] sm:$0x3]
      %v2232 = vld [vmem:[%s1392 + $0x88] sm:$0x3]
      %v2233 = vld [vmem:[%s1392 + $0x90] sm:$0xfc]
      %v2234 = vld [vmem:[%s1392 + $0x98] sm:$0xfc]
      %v2235 = vld [vmem:[%s1392 + $0xb0] sm:$0x3]
      %v2236 = vld [vmem:[%s1392 + $0xb8] sm:$0x3]
      %v2237 = vld [vmem:[%s1392 + $0xc0] sm:$0xfc]
      %v2238 = vld [vmem:[%s1392 + $0xc8] sm:$0xfc]
      %v2239 = vld [vmem:[%s1392 + $0xe0] sm:$0x3]
      %v2240 = vld [vmem:[%s1392 + $0xe8] sm:$0x3]
      %v2241 = vld [vmem:[%s1392 + $0xf0] sm:$0xfc]
      %v2242 = vld [vmem:[%s1392 + $0xf8] sm:$0xfc]
      %v2243 = vld [vmem:[%s1392 + $0x110] sm:$0x3]
      %v2244 = vld [vmem:[%s1392 + $0x118] sm:$0x3]
      %v2245 = vld [vmem:[%s1392 + $0x120] sm:$0xfc]
      %v2246 = vld [vmem:[%s1392 + $0x128] sm:$0xfc]
      %v2247 = vld [vmem:[%s1392 + $0x140] sm:$0x3]
      %v2248 = vld [vmem:[%s1392 + $0x148] sm:$0x3]
      %v2249 = vld [vmem:[%s1392 + $0x150] sm:$0xfc]
      %v2250 = vld [vmem:[%s1392 + $0x158] sm:$0xfc]
      %v2251 = vld [vmem:[%s1392 + $0x170] sm:$0x3]
      %v2252 = vld [vmem:[%s1392 + $0x178] sm:$0x3]
      %v2285 = vrot.slane %v2221, 2
      %v2286 = vrot.slane %v1721, 2
      %v2287 = vsel %vm985, %v2285, %v2286
      %v2288 = vrot.slane %v2222, 2
      %v2289 = vrot.slane %v1722, 2
      %v2290 = vsel %vm985, %v2288, %v2289
      %v2291 = vrot.slane %v2223, 2
      %v2292 = vsel %vm985, %v2286, %v2291
      %v2293 = vrot.slane %v2224, 2
      %v2294 = vsel %vm985, %v2289, %v2293
      %v2295 = vrot.slane %v2225, 2
      %v2296 = vrot.slane %v1727, 2
      %v2297 = vsel %vm985, %v2295, %v2296
      %v2298 = vrot.slane %v2226, 2
      %v2299 = vrot.slane %v1728, 2
      %v2300 = vsel %vm985, %v2298, %v2299
      %v2301 = vrot.slane %v2227, 2
      %v2302 = vsel %vm985, %v2296, %v2301
      %v2303 = vrot.slane %v2228, 2
      %v2304 = vsel %vm985, %v2299, %v2303
      %v2305 = vrot.slane %v2229, 2
      %v2306 = vrot.slane %v1733, 2
      %v2307 = vsel %vm985, %v2305, %v2306
      %v2308 = vrot.slane %v2230, 2
      %v2309 = vrot.slane %v1734, 2
      %v2310 = vsel %vm985, %v2308, %v2309
      %v2311 = vrot.slane %v2231, 2
      %v2312 = vsel %vm985, %v2306, %v2311
      %v2313 = vrot.slane %v2232, 2
      %v2314 = vsel %vm985, %v2309, %v2313
      %v2315 = vrot.slane %v2233, 2
      %v2316 = vrot.slane %v1739, 2
      %v2317 = vsel %vm985, %v2315, %v2316
      %v2318 = vrot.slane %v2234, 2
      %v2319 = vrot.slane %v1740, 2
      %v2320 = vsel %vm985, %v2318, %v2319
      %v2321 = vrot.slane %v2235, 2
      %v2322 = vsel %vm985, %v2316, %v2321
      %v2323 = vrot.slane %v2236, 2
      %v2324 = vsel %vm985, %v2319, %v2323
      %v2325 = vrot.slane %v2237, 2
      %v2326 = vrot.slane %v1745, 2
      %v2327 = vsel %vm985, %v2325, %v2326
      %v2328 = vrot.slane %v2238, 2
      %v2329 = vrot.slane %v1746, 2
      %v2330 = vsel %vm985, %v2328, %v2329
      %v2331 = vrot.slane %v2239, 2
      %v2332 = vsel %vm985, %v2326, %v2331
      %v2333 = vrot.slane %v2240, 2
      %v2334 = vsel %vm985, %v2329, %v2333
      %v2335 = vrot.slane %v2241, 2
      %v2336 = vrot.slane %v1751, 2
      %v2337 = vsel %vm985, %v2335, %v2336
      %v2338 = vrot.slane %v2242, 2
      %v2339 = vrot.slane %v1752, 2
      %v2340 = vsel %vm985, %v2338, %v2339
      %v2341 = vrot.slane %v2243, 2
      %v2342 = vsel %vm985, %v2336, %v2341
      %v2343 = vrot.slane %v2244, 2
      %v2344 = vsel %vm985, %v2339, %v2343
      %v2345 = vrot.slane %v2245, 2
      %v2346 = vrot.slane %v1757, 2
      %v2347 = vsel %vm985, %v2345, %v2346
      %v2348 = vrot.slane %v2246, 2
      %v2349 = vrot.slane %v1758, 2
      %v2350 = vsel %vm985, %v2348, %v2349
      %v2351 = vrot.slane %v2247, 2
      %v2352 = vsel %vm985, %v2346, %v2351
      %v2353 = vrot.slane %v2248, 2
      %v2354 = vsel %vm985, %v2349, %v2353
      %v2355 = vrot.slane %v2249, 2
      %v2356 = vrot.slane %v1763, 2
      %v2357 = vsel %vm985, %v2355, %v2356
      %v2358 = vrot.slane %v2250, 2
      %v2359 = vrot.slane %v1764, 2
      %v2360 = vsel %vm985, %v2358, %v2359
      %v2361 = vrot.slane %v2251, 2
      %v2362 = vsel %vm985, %v2356, %v2361
      %v2363 = vrot.slane %v2252, 2
      %v2364 = vsel %vm985, %v2359, %v2363
      %v2397 = vpack.c.bf16 %v2292, %v2287
      %v2398 = vpack.c.bf16 %v2294, %v2290
      %v2399 = vpack.c.bf16 %v2302, %v2297
      %v2400 = vpack.c.bf16 %v2304, %v2300
      %v2401 = vpack.c.bf16 %v2312, %v2307
      %v2402 = vpack.c.bf16 %v2314, %v2310
      %v2403 = vpack.c.bf16 %v2322, %v2317
      %v2404 = vpack.c.bf16 %v2324, %v2320
      %v2405 = vpack.c.bf16 %v2332, %v2327
      %v2406 = vpack.c.bf16 %v2334, %v2330
      %v2407 = vpack.c.bf16 %v2342, %v2337
      %v2408 = vpack.c.bf16 %v2344, %v2340
      %v2409 = vpack.c.bf16 %v2352, %v2347
      %v2410 = vpack.c.bf16 %v2354, %v2350
      %v2411 = vpack.c.bf16 %v2362, %v2357
      %v2412 = vpack.c.bf16 %v2364, %v2360
      %s2413 = scalar_lea.vmem %s1, 720
      %v2414 = vld [vmem:[%s2413] sm:$0xff]
      %v2415 = vld [vmem:[%s2413 + $0x8] sm:$0xff]
      %v2416 = vld [vmem:[%s2413 + $0x10] sm:$0xff]
      %v2417 = vld [vmem:[%s2413 + $0x18] sm:$0xff]
      %v2418 = vld [vmem:[%s2413 + $0x20] sm:$0xff]
      %v2419 = vld [vmem:[%s2413 + $0x28] sm:$0xff]
      %v2420 = vld [vmem:[%s2413 + $0x30] sm:$0xff]
      %v2421 = vld [vmem:[%s2413 + $0x38] sm:$0xff]
      %v2422 = vld [vmem:[%s2413 + $0x40] sm:$0xff]
      %v2423 = vld [vmem:[%s2413 + $0x48] sm:$0xff]
      %v2424 = vld [vmem:[%s2413 + $0x50] sm:$0xff]
      %v2425 = vld [vmem:[%s2413 + $0x58] sm:$0xff]
      %v2426 = vld [vmem:[%s2413 + $0x60] sm:$0xff]
      %v2427 = vld [vmem:[%s2413 + $0x68] sm:$0xff]
      %v2428 = vld [vmem:[%s2413 + $0x70] sm:$0xff]
      %v2429 = vld [vmem:[%s2413 + $0x78] sm:$0xff]
      %v2430 = vld [vmem:[%s2413 + $0x80] sm:$0xff]
      %v2431 = vld [vmem:[%s2413 + $0x88] sm:$0xff]
      %v2450 = vunpack.c.l.b16 %v2414
      %v2451 = vunpack.c.h.b16 %v2414
      %v2452 = vunpack.c.l.b16 %v2415
      %v2453 = vunpack.c.h.b16 %v2415
      %v2454 = vunpack.c.l.b16 %v2416
      %v2455 = vunpack.c.h.b16 %v2416
      %v2456 = vunpack.c.l.b16 %v2417
      %v2457 = vunpack.c.h.b16 %v2417
      %v2458 = vunpack.c.l.b16 %v2418
      %v2459 = vunpack.c.h.b16 %v2418
      %v2460 = vunpack.c.l.b16 %v2419
      %v2461 = vunpack.c.h.b16 %v2419
      %v2462 = vunpack.c.l.b16 %v2420
      %v2463 = vunpack.c.h.b16 %v2420
      %v2464 = vunpack.c.l.b16 %v2421
      %v2465 = vunpack.c.h.b16 %v2421
      %v2466 = vunpack.c.l.b16 %v2422
      %v2467 = vunpack.c.h.b16 %v2422
      %v2468 = vunpack.c.l.b16 %v2423
      %v2469 = vunpack.c.h.b16 %v2423
      %v2470 = vunpack.c.l.b16 %v2424
      %v2471 = vunpack.c.h.b16 %v2424
      %v2472 = vunpack.c.l.b16 %v2425
      %v2473 = vunpack.c.h.b16 %v2425
      %v2474 = vunpack.c.l.b16 %v2426
      %v2475 = vunpack.c.h.b16 %v2426
      %v2476 = vunpack.c.l.b16 %v2427
      %v2477 = vunpack.c.h.b16 %v2427
      %v2478 = vunpack.c.l.b16 %v2428
      %v2479 = vunpack.c.h.b16 %v2428
      %v2480 = vunpack.c.l.b16 %v2429
      %v2481 = vunpack.c.h.b16 %v2429
      %v2482 = vunpack.c.l.b16 %v2430
      %v2483 = vunpack.c.h.b16 %v2430
      %v2484 = vunpack.c.l.b16 %v2431
      %v2485 = vunpack.c.h.b16 %v2431
      %v2486 = vpack.c.b16 %v2452, %v2450
      %v2487 = vpack.c.b16 %v2453, %v2451
      %v2488 = vpack.c.b16 %v2456, %v2454
      %v2489 = vpack.c.b16 %v2457, %v2455
      %v2490 = vpack.c.b16 %v2460, %v2458
      %v2491 = vpack.c.b16 %v2461, %v2459
      %v2492 = vpack.c.b16 %v2464, %v2462
      %v2493 = vpack.c.b16 %v2465, %v2463
      %v2494 = vpack.c.b16 %v2468, %v2466
      %v2495 = vpack.c.b16 %v2469, %v2467
      %v2496 = vpack.c.b16 %v2472, %v2470
      %v2497 = vpack.c.b16 %v2473, %v2471
      %v2498 = vpack.c.b16 %v2476, %v2474
      %v2499 = vpack.c.b16 %v2477, %v2475
      %v2500 = vpack.c.b16 %v2480, %v2478
      %v2501 = vpack.c.b16 %v2481, %v2479
      %v2502 = vpack.c.b16 %v2484, %v2482
      %v2503 = vpack.c.b16 %v2485, %v2483
      %v2523 = vsel %vm556, %v2398, 0
      %v2526 = vsel %vm556, %v2400, 0
      %v2529 = vsel %vm556, %v2402, 0
      %v2532 = vsel %vm556, %v2404, 0
      %v2535 = vsel %vm556, %v2406, 0
      %v2538 = vsel %vm556, %v2408, 0
      %v2541 = vsel %vm556, %v2410, 0
      %v2544 = vsel %vm556, %v2412, 0
      %2546 = vmatprep.subr.bf16.mxu0 %v2501
      %2547 = vmatpush1.bf16.msra.mxu0 %v2500
      %2548 = vmatprep.subr.bf16.mxu0 %v2499
      %2549 = vmatpush1.bf16.msra.mxu0 %v2498
      %2550 = vmatprep.subr.bf16.mxu0 %v2497
      %2551 = vmatpush1.bf16.msra.mxu0 %v2496
      %2552 = vmatprep.subr.bf16.mxu0 %v2495
      %2553 = vmatpush1.bf16.msra.mxu0 %v2494
      %2554 = vmatprep.subr.bf16.mxu0 %v2493
      %2555 = vmatpush1.bf16.msra.mxu0 %v2492
      %2556 = vmatprep.subr.bf16.mxu0 %v2491
      %2557 = vmatpush1.bf16.msra.mxu0 %v2490
      %2558 = vmatprep.subr.bf16.mxu0 %v2489
      %2559 = vmatpush1.bf16.msra.mxu0 %v2488
      %2560 = vmatprep.subr.bf16.mxu0 %v2487
      %2561 = vmatpush1.bf16.msra.mxu0 %v2486
      %2562 = vmatprep.subr.bf16.mxu0 0
      %2563 = vmatpush2.bf16.msra.mxu0 0
      %2564 = vmatprep.subr.bf16.mxu0 0
      %2565 = vmatpush2.bf16.msra.mxu0 0
      %2566 = vmatprep.subr.bf16.mxu0 0
      %2567 = vmatpush2.bf16.msra.mxu0 0
      %2568 = vmatprep.subr.bf16.mxu0 0
      %2569 = vmatpush2.bf16.msra.mxu0 0
      %2570 = vmatprep.subr.bf16.mxu0 0
      %2571 = vmatpush2.bf16.msra.mxu0 0
      %2572 = vmatprep.subr.bf16.mxu0 0
      %2573 = vmatpush2.bf16.msra.mxu0 0
      %2574 = vmatprep.subr.bf16.mxu0 0
      %2575 = vmatpush2.bf16.msra.mxu0 0
      %2576 = vmatprep.subr.bf16.mxu0 %v2503
      %2577 = vmatpush2.bf16.msra.mxu0 %v2502
      %2578 = vmatprep.mubr.bf16.mxu0 %v2523
      %2579 = vmatmul.mubr.bf16.gmra.mxu0 %v2397
      %v2580 = vpop.f32.mrf.mxu0
      %v2581 = vadd.f32 0.0, %v2580
      %v2582 = vpop.f32.mrf.mxu0
      %v2583 = vadd.f32 0.0, %v2582
      %v2584 = vpop.f32.mrf.mxu0
      %v2585 = vadd.f32 0.0, %v2584
      %v2586 = vpop.f32.mrf.mxu0
      %v2587 = vadd.f32 0.0, %v2586
      %2588 = vmatprep.mubr.bf16.mxu0 %v2526
      %2589 = vmatmul.mubr.bf16.gmra.mxu0 %v2399
      %v2590 = vpop.f32.mrf.mxu0
      %v2591 = vadd.f32 0.0, %v2590
      %v2592 = vpop.f32.mrf.mxu0
      %v2593 = vadd.f32 0.0, %v2592
      %v2594 = vpop.f32.mrf.mxu0
      %v2595 = vadd.f32 0.0, %v2594
      %v2596 = vpop.f32.mrf.mxu0
      %v2597 = vadd.f32 0.0, %v2596
      %2598 = vmatprep.mubr.bf16.mxu0 %v2529
      %2599 = vmatmul.mubr.bf16.gmra.mxu0 %v2401
      %v2600 = vpop.f32.mrf.mxu0
      %v2601 = vadd.f32 0.0, %v2600
      %v2602 = vpop.f32.mrf.mxu0
      %v2603 = vadd.f32 0.0, %v2602
      %v2604 = vpop.f32.mrf.mxu0
      %v2605 = vadd.f32 0.0, %v2604
      %v2606 = vpop.f32.mrf.mxu0
      %v2607 = vadd.f32 0.0, %v2606
      %2608 = vmatprep.mubr.bf16.mxu0 %v2532
      %2609 = vmatmul.mubr.bf16.gmra.mxu0 %v2403
      %v2610 = vpop.f32.mrf.mxu0
      %v2611 = vadd.f32 0.0, %v2610
      %v2612 = vpop.f32.mrf.mxu0
      %v2613 = vadd.f32 0.0, %v2612
      %v2614 = vpop.f32.mrf.mxu0
      %v2615 = vadd.f32 0.0, %v2614
      %v2616 = vpop.f32.mrf.mxu0
      %v2617 = vadd.f32 0.0, %v2616
      %2618 = vmatprep.mubr.bf16.mxu0 %v2535
      %2619 = vmatmul.mubr.bf16.gmra.mxu0 %v2405
      %v2620 = vpop.f32.mrf.mxu0
      %v2621 = vadd.f32 0.0, %v2620
      %v2622 = vpop.f32.mrf.mxu0
      %v2623 = vadd.f32 0.0, %v2622
      %v2624 = vpop.f32.mrf.mxu0
      %v2625 = vadd.f32 0.0, %v2624
      %v2626 = vpop.f32.mrf.mxu0
      %v2627 = vadd.f32 0.0, %v2626
      %2628 = vmatprep.mubr.bf16.mxu0 %v2538
      %2629 = vmatmul.mubr.bf16.gmra.mxu0 %v2407
      %v2630 = vpop.f32.mrf.mxu0
      %v2631 = vadd.f32 0.0, %v2630
      %v2632 = vpop.f32.mrf.mxu0
      %v2633 = vadd.f32 0.0, %v2632
      %v2634 = vpop.f32.mrf.mxu0
      %v2635 = vadd.f32 0.0, %v2634
      %v2636 = vpop.f32.mrf.mxu0
      %v2637 = vadd.f32 0.0, %v2636
      %2638 = vmatprep.mubr.bf16.mxu0 %v2541
      %2639 = vmatmul.mubr.bf16.gmra.mxu0 %v2409
      %v2640 = vpop.f32.mrf.mxu0
      %v2641 = vadd.f32 0.0, %v2640
      %v2642 = vpop.f32.mrf.mxu0
      %v2643 = vadd.f32 0.0, %v2642
      %v2644 = vpop.f32.mrf.mxu0
      %v2645 = vadd.f32 0.0, %v2644
      %v2646 = vpop.f32.mrf.mxu0
      %v2647 = vadd.f32 0.0, %v2646
      %2648 = vmatprep.mubr.bf16.mxu0 %v2544
      %2649 = vmatmul.mubr.bf16.gmra.mxu0 %v2411
      %v2650 = vpop.f32.mrf.mxu0
      %v2651 = vadd.f32 0.0, %v2650
      %v2652 = vpop.f32.mrf.mxu0
      %v2653 = vadd.f32 0.0, %v2652
      %v2654 = vpop.f32.mrf.mxu0
      %v2655 = vadd.f32 0.0, %v2654
      %v2656 = vpop.f32.mrf.mxu0
      %v2657 = vadd.f32 0.0, %v2656
      %2658 = vdwg.mxu0
      %v2659 = vadd.f32 %v2189, %v2581
      %v2660 = vadd.f32 %v2190, %v2583
      %v2661 = vadd.f32 %v2191, %v2585
      %v2662 = vadd.f32 %v2192, %v2587
      %v2663 = vadd.f32 %v2193, %v2591
      %v2664 = vadd.f32 %v2194, %v2593
      %v2665 = vadd.f32 %v2195, %v2595
      %v2666 = vadd.f32 %v2196, %v2597
      %v2667 = vadd.f32 %v2197, %v2601
      %v2668 = vadd.f32 %v2198, %v2603
      %v2669 = vadd.f32 %v2199, %v2605
      %v2670 = vadd.f32 %v2200, %v2607
      %v2671 = vadd.f32 %v2201, %v2611
      %v2672 = vadd.f32 %v2202, %v2613
      %v2673 = vadd.f32 %v2203, %v2615
      %v2674 = vadd.f32 %v2204, %v2617
      %v2675 = vadd.f32 %v2205, %v2621
      %v2676 = vadd.f32 %v2206, %v2623
      %v2677 = vadd.f32 %v2207, %v2625
      %v2678 = vadd.f32 %v2208, %v2627
      %v2679 = vadd.f32 %v2209, %v2631
      %v2680 = vadd.f32 %v2210, %v2633
      %v2681 = vadd.f32 %v2211, %v2635
      %v2682 = vadd.f32 %v2212, %v2637
      %v2683 = vadd.f32 %v2213, %v2641
      %v2684 = vadd.f32 %v2214, %v2643
      %v2685 = vadd.f32 %v2215, %v2645
      %v2686 = vadd.f32 %v2216, %v2647
      %v2687 = vadd.f32 %v2217, %v2651
      %v2688 = vadd.f32 %v2218, %v2653
      %v2689 = vadd.f32 %v2219, %v2655
      %v2690 = vadd.f32 %v2220, %v2657
      %s2691 = scalar_lea.vmem %s165, 96
      %v2692 = vld [vmem:[%s2691] sm:$0xff]
      %v2693 = vld [vmem:[%s2691 + $0x8] sm:$0xff]
      %v2694 = vld [vmem:[%s2691 + $0x10] sm:$0xff]
      %v2695 = vld [vmem:[%s2691 + $0x18] sm:$0xff]
      %v2696 = vld [vmem:[%s2691 + $0x30] sm:$0xff]
      %v2697 = vld [vmem:[%s2691 + $0x38] sm:$0xff]
      %v2698 = vld [vmem:[%s2691 + $0x40] sm:$0xff]
      %v2699 = vld [vmem:[%s2691 + $0x48] sm:$0xff]
      %v2700 = vld [vmem:[%s2691 + $0x60] sm:$0xff]
      %v2701 = vld [vmem:[%s2691 + $0x68] sm:$0xff]
      %v2702 = vld [vmem:[%s2691 + $0x70] sm:$0xff]
      %v2703 = vld [vmem:[%s2691 + $0x78] sm:$0xff]
      %v2704 = vld [vmem:[%s2691 + $0x90] sm:$0xff]
      %v2705 = vld [vmem:[%s2691 + $0x98] sm:$0xff]
      %v2706 = vld [vmem:[%s2691 + $0xa0] sm:$0xff]
      %v2707 = vld [vmem:[%s2691 + $0xa8] sm:$0xff]
      %v2708 = vld [vmem:[%s2691 + $0xc0] sm:$0xff]
      %v2709 = vld [vmem:[%s2691 + $0xc8] sm:$0xff]
      %v2710 = vld [vmem:[%s2691 + $0xd0] sm:$0xff]
      %v2711 = vld [vmem:[%s2691 + $0xd8] sm:$0xff]
      %v2712 = vld [vmem:[%s2691 + $0xf0] sm:$0xff]
      %v2713 = vld [vmem:[%s2691 + $0xf8] sm:$0xff]
      %v2714 = vld [vmem:[%s2691 + $0x100] sm:$0xff]
      %v2715 = vld [vmem:[%s2691 + $0x108] sm:$0xff]
      %v2716 = vld [vmem:[%s2691 + $0x120] sm:$0xff]
      %v2717 = vld [vmem:[%s2691 + $0x128] sm:$0xff]
      %v2718 = vld [vmem:[%s2691 + $0x130] sm:$0xff]
      %v2719 = vld [vmem:[%s2691 + $0x138] sm:$0xff]
      %v2720 = vld [vmem:[%s2691 + $0x150] sm:$0xff]
      %v2721 = vld [vmem:[%s2691 + $0x158] sm:$0xff]
      %v2722 = vld [vmem:[%s2691 + $0x160] sm:$0xff]
      %v2723 = vld [vmem:[%s2691 + $0x168] sm:$0xff]
      %v2724 = vpack.c.bf16 %v2694, %v2692
      %v2725 = vpack.c.bf16 %v2695, %v2693
      %v2726 = vpack.c.bf16 %v2698, %v2696
      %v2727 = vpack.c.bf16 %v2699, %v2697
      %v2728 = vpack.c.bf16 %v2702, %v2700
      %v2729 = vpack.c.bf16 %v2703, %v2701
      %v2730 = vpack.c.bf16 %v2706, %v2704
      %v2731 = vpack.c.bf16 %v2707, %v2705
      %v2732 = vpack.c.bf16 %v2710, %v2708
      %v2733 = vpack.c.bf16 %v2711, %v2709
      %v2734 = vpack.c.bf16 %v2714, %v2712
      %v2735 = vpack.c.bf16 %v2715, %v2713
      %v2736 = vpack.c.bf16 %v2718, %v2716
      %v2737 = vpack.c.bf16 %v2719, %v2717
      %v2738 = vpack.c.bf16 %v2722, %v2720
      %v2739 = vpack.c.bf16 %v2723, %v2721
      %s2740 = scalar_lea.vmem %s1, 864
      %v2741 = vld [vmem:[%s2740] sm:$0xff]
      %v2742 = vld [vmem:[%s2740 + $0x8] sm:$0xff]
      %v2743 = vld [vmem:[%s2740 + $0x10] sm:$0xff]
      %v2744 = vld [vmem:[%s2740 + $0x18] sm:$0xff]
      %v2745 = vld [vmem:[%s2740 + $0x20] sm:$0xff]
      %v2746 = vld [vmem:[%s2740 + $0x28] sm:$0xff]
      %v2747 = vld [vmem:[%s2740 + $0x30] sm:$0xff]
      %v2748 = vld [vmem:[%s2740 + $0x38] sm:$0xff]
      %v2749 = vld [vmem:[%s2740 + $0x40] sm:$0xff]
      %v2750 = vld [vmem:[%s2740 + $0x48] sm:$0xff]
      %v2751 = vld [vmem:[%s2740 + $0x50] sm:$0xff]
      %v2752 = vld [vmem:[%s2740 + $0x58] sm:$0xff]
      %v2753 = vld [vmem:[%s2740 + $0x60] sm:$0xff]
      %v2754 = vld [vmem:[%s2740 + $0x68] sm:$0xff]
      %v2755 = vld [vmem:[%s2740 + $0x70] sm:$0xff]
      %v2756 = vld [vmem:[%s2740 + $0x78] sm:$0xff]
      %v2757 = vld [vmem:[%s2740 + $0x80] sm:$0xff]
      %v2758 = vld [vmem:[%s2740 + $0x88] sm:$0xff]
      %v2777 = vunpack.c.l.b16 %v2741
      %v2778 = vunpack.c.h.b16 %v2741
      %v2779 = vunpack.c.l.b16 %v2742
      %v2780 = vunpack.c.h.b16 %v2742
      %v2781 = vunpack.c.l.b16 %v2743
      %v2782 = vunpack.c.h.b16 %v2743
      %v2783 = vunpack.c.l.b16 %v2744
      %v2784 = vunpack.c.h.b16 %v2744
      %v2785 = vunpack.c.l.b16 %v2745
      %v2786 = vunpack.c.h.b16 %v2745
      %v2787 = vunpack.c.l.b16 %v2746
      %v2788 = vunpack.c.h.b16 %v2746
      %v2789 = vunpack.c.l.b16 %v2747
      %v2790 = vunpack.c.h.b16 %v2747
      %v2791 = vunpack.c.l.b16 %v2748
      %v2792 = vunpack.c.h.b16 %v2748
      %v2793 = vunpack.c.l.b16 %v2749
      %v2794 = vunpack.c.h.b16 %v2749
      %v2795 = vunpack.c.l.b16 %v2750
      %v2796 = vunpack.c.h.b16 %v2750
      %v2797 = vunpack.c.l.b16 %v2751
      %v2798 = vunpack.c.h.b16 %v2751
      %v2799 = vunpack.c.l.b16 %v2752
      %v2800 = vunpack.c.h.b16 %v2752
      %v2801 = vunpack.c.l.b16 %v2753
      %v2802 = vunpack.c.h.b16 %v2753
      %v2803 = vunpack.c.l.b16 %v2754
      %v2804 = vunpack.c.h.b16 %v2754
      %v2805 = vunpack.c.l.b16 %v2755
      %v2806 = vunpack.c.h.b16 %v2755
      %v2807 = vunpack.c.l.b16 %v2756
      %v2808 = vunpack.c.h.b16 %v2756
      %v2809 = vunpack.c.l.b16 %v2757
      %v2810 = vunpack.c.h.b16 %v2757
      %v2811 = vunpack.c.l.b16 %v2758
      %v2812 = vunpack.c.h.b16 %v2758
      %v2813 = vpack.c.b16 %v2779, %v2777
      %v2814 = vpack.c.b16 %v2780, %v2778
      %v2815 = vpack.c.b16 %v2783, %v2781
      %v2816 = vpack.c.b16 %v2784, %v2782
      %v2817 = vpack.c.b16 %v2787, %v2785
      %v2818 = vpack.c.b16 %v2788, %v2786
      %v2819 = vpack.c.b16 %v2791, %v2789
      %v2820 = vpack.c.b16 %v2792, %v2790
      %v2821 = vpack.c.b16 %v2795, %v2793
      %v2822 = vpack.c.b16 %v2796, %v2794
      %v2823 = vpack.c.b16 %v2799, %v2797
      %v2824 = vpack.c.b16 %v2800, %v2798
      %v2825 = vpack.c.b16 %v2803, %v2801
      %v2826 = vpack.c.b16 %v2804, %v2802
      %v2827 = vpack.c.b16 %v2807, %v2805
      %v2828 = vpack.c.b16 %v2808, %v2806
      %v2829 = vpack.c.b16 %v2811, %v2809
      %v2830 = vpack.c.b16 %v2812, %v2810
      %v2850 = vsel %vm556, %v2725, 0
      %v2853 = vsel %vm556, %v2727, 0
      %v2856 = vsel %vm556, %v2729, 0
      %v2859 = vsel %vm556, %v2731, 0
      %v2862 = vsel %vm556, %v2733, 0
      %v2865 = vsel %vm556, %v2735, 0
      %v2868 = vsel %vm556, %v2737, 0
      %v2871 = vsel %vm556, %v2739, 0
      %2873 = vmatprep.subr.bf16.mxu0 %v2828
      %2874 = vmatpush1.bf16.msra.mxu0 %v2827
      %2875 = vmatprep.subr.bf16.mxu0 %v2826
      %2876 = vmatpush1.bf16.msra.mxu0 %v2825
      %2877 = vmatprep.subr.bf16.mxu0 %v2824
      %2878 = vmatpush1.bf16.msra.mxu0 %v2823
      %2879 = vmatprep.subr.bf16.mxu0 %v2822
      %2880 = vmatpush1.bf16.msra.mxu0 %v2821
      %2881 = vmatprep.subr.bf16.mxu0 %v2820
      %2882 = vmatpush1.bf16.msra.mxu0 %v2819
      %2883 = vmatprep.subr.bf16.mxu0 %v2818
      %2884 = vmatpush1.bf16.msra.mxu0 %v2817
      %2885 = vmatprep.subr.bf16.mxu0 %v2816
      %2886 = vmatpush1.bf16.msra.mxu0 %v2815
      %2887 = vmatprep.subr.bf16.mxu0 %v2814
      %2888 = vmatpush1.bf16.msra.mxu0 %v2813
      %2889 = vmatprep.subr.bf16.mxu0 0
      %2890 = vmatpush2.bf16.msra.mxu0 0
      %2891 = vmatprep.subr.bf16.mxu0 0
      %2892 = vmatpush2.bf16.msra.mxu0 0
      %2893 = vmatprep.subr.bf16.mxu0 0
      %2894 = vmatpush2.bf16.msra.mxu0 0
      %2895 = vmatprep.subr.bf16.mxu0 0
      %2896 = vmatpush2.bf16.msra.mxu0 0
      %2897 = vmatprep.subr.bf16.mxu0 0
      %2898 = vmatpush2.bf16.msra.mxu0 0
      %2899 = vmatprep.subr.bf16.mxu0 0
      %2900 = vmatpush2.bf16.msra.mxu0 0
      %2901 = vmatprep.subr.bf16.mxu0 0
      %2902 = vmatpush2.bf16.msra.mxu0 0
      %2903 = vmatprep.subr.bf16.mxu0 %v2830
      %2904 = vmatpush2.bf16.msra.mxu0 %v2829
      %2905 = vmatprep.mubr.bf16.mxu0 %v2850
      %2906 = vmatmul.mubr.bf16.gmra.mxu0 %v2724
      %v2907 = vpop.f32.mrf.mxu0
      %v2908 = vadd.f32 0.0, %v2907
      %v2909 = vpop.f32.mrf.mxu0
      %v2910 = vadd.f32 0.0, %v2909
      %v2911 = vpop.f32.mrf.mxu0
      %v2912 = vadd.f32 0.0, %v2911
      %v2913 = vpop.f32.mrf.mxu0
      %v2914 = vadd.f32 0.0, %v2913
      %2915 = vmatprep.mubr.bf16.mxu0 %v2853
      %2916 = vmatmul.mubr.bf16.gmra.mxu0 %v2726
      %v2917 = vpop.f32.mrf.mxu0
      %v2918 = vadd.f32 0.0, %v2917
      %v2919 = vpop.f32.mrf.mxu0
      %v2920 = vadd.f32 0.0, %v2919
      %v2921 = vpop.f32.mrf.mxu0
      %v2922 = vadd.f32 0.0, %v2921
      %v2923 = vpop.f32.mrf.mxu0
      %v2924 = vadd.f32 0.0, %v2923
      %2925 = vmatprep.mubr.bf16.mxu0 %v2856
      %2926 = vmatmul.mubr.bf16.gmra.mxu0 %v2728
      %v2927 = vpop.f32.mrf.mxu0
      %v2928 = vadd.f32 0.0, %v2927
      %v2929 = vpop.f32.mrf.mxu0
      %v2930 = vadd.f32 0.0, %v2929
      %v2931 = vpop.f32.mrf.mxu0
      %v2932 = vadd.f32 0.0, %v2931
      %v2933 = vpop.f32.mrf.mxu0
      %v2934 = vadd.f32 0.0, %v2933
      %2935 = vmatprep.mubr.bf16.mxu0 %v2859
      %2936 = vmatmul.mubr.bf16.gmra.mxu0 %v2730
      %v2937 = vpop.f32.mrf.mxu0
      %v2938 = vadd.f32 0.0, %v2937
      %v2939 = vpop.f32.mrf.mxu0
      %v2940 = vadd.f32 0.0, %v2939
      %v2941 = vpop.f32.mrf.mxu0
      %v2942 = vadd.f32 0.0, %v2941
      %v2943 = vpop.f32.mrf.mxu0
      %v2944 = vadd.f32 0.0, %v2943
      %2945 = vmatprep.mubr.bf16.mxu0 %v2862
      %2946 = vmatmul.mubr.bf16.gmra.mxu0 %v2732
      %v2947 = vpop.f32.mrf.mxu0
      %v2948 = vadd.f32 0.0, %v2947
      %v2949 = vpop.f32.mrf.mxu0
      %v2950 = vadd.f32 0.0, %v2949
      %v2951 = vpop.f32.mrf.mxu0
      %v2952 = vadd.f32 0.0, %v2951
      %v2953 = vpop.f32.mrf.mxu0
      %v2954 = vadd.f32 0.0, %v2953
      %2955 = vmatprep.mubr.bf16.mxu0 %v2865
      %2956 = vmatmul.mubr.bf16.gmra.mxu0 %v2734
      %v2957 = vpop.f32.mrf.mxu0
      %v2958 = vadd.f32 0.0, %v2957
      %v2959 = vpop.f32.mrf.mxu0
      %v2960 = vadd.f32 0.0, %v2959
      %v2961 = vpop.f32.mrf.mxu0
      %v2962 = vadd.f32 0.0, %v2961
      %v2963 = vpop.f32.mrf.mxu0
      %v2964 = vadd.f32 0.0, %v2963
      %2965 = vmatprep.mubr.bf16.mxu0 %v2868
      %2966 = vmatmul.mubr.bf16.gmra.mxu0 %v2736
      %v2967 = vpop.f32.mrf.mxu0
      %v2968 = vadd.f32 0.0, %v2967
      %v2969 = vpop.f32.mrf.mxu0
      %v2970 = vadd.f32 0.0, %v2969
      %v2971 = vpop.f32.mrf.mxu0
      %v2972 = vadd.f32 0.0, %v2971
      %v2973 = vpop.f32.mrf.mxu0
      %v2974 = vadd.f32 0.0, %v2973
      %2975 = vmatprep.mubr.bf16.mxu0 %v2871
      %2976 = vmatmul.mubr.bf16.gmra.mxu0 %v2738
      %v2977 = vpop.f32.mrf.mxu0
      %v2978 = vadd.f32 0.0, %v2977
      %v2979 = vpop.f32.mrf.mxu0
      %v2980 = vadd.f32 0.0, %v2979
      %v2981 = vpop.f32.mrf.mxu0
      %v2982 = vadd.f32 0.0, %v2981
      %v2983 = vpop.f32.mrf.mxu0
      %v2984 = vadd.f32 0.0, %v2983
      %2985 = vdwg.mxu0
      %v2986 = vadd.f32 %v2659, %v2908
      %v2987 = vadd.f32 %v2660, %v2910
      %v2988 = vadd.f32 %v2661, %v2912
      %v2989 = vadd.f32 %v2662, %v2914
      %v2990 = vadd.f32 %v2663, %v2918
      %v2991 = vadd.f32 %v2664, %v2920
      %v2992 = vadd.f32 %v2665, %v2922
      %v2993 = vadd.f32 %v2666, %v2924
      %v2994 = vadd.f32 %v2667, %v2928
      %v2995 = vadd.f32 %v2668, %v2930
      %v2996 = vadd.f32 %v2669, %v2932
      %v2997 = vadd.f32 %v2670, %v2934
      %v2998 = vadd.f32 %v2671, %v2938
      %v2999 = vadd.f32 %v2672, %v2940
      %v3000 = vadd.f32 %v2673, %v2942
      %v3001 = vadd.f32 %v2674, %v2944
      %v3002 = vadd.f32 %v2675, %v2948
      %v3003 = vadd.f32 %v2676, %v2950
      %v3004 = vadd.f32 %v2677, %v2952
      %v3005 = vadd.f32 %v2678, %v2954
      %v3006 = vadd.f32 %v2679, %v2958
      %v3007 = vadd.f32 %v2680, %v2960
      %v3008 = vadd.f32 %v2681, %v2962
      %v3009 = vadd.f32 %v2682, %v2964
      %v3010 = vadd.f32 %v2683, %v2968
      %v3011 = vadd.f32 %v2684, %v2970
      %v3012 = vadd.f32 %v2685, %v2972
      %v3013 = vadd.f32 %v2686, %v2974
      %v3014 = vadd.f32 %v2687, %v2978
      %v3015 = vadd.f32 %v2688, %v2980
      %v3016 = vadd.f32 %v2689, %v2982
      %v3017 = vadd.f32 %v2690, %v2984
      %v3018 = vld [vmem:[%s2691] sm:$0xfe]
      %v3019 = vld [vmem:[%s2691 + $0x8] sm:$0xfe]
      %v3020 = vld [vmem:[%s2691 + $0x10] sm:$0xff]
      %v3021 = vld [vmem:[%s2691 + $0x18] sm:$0xff]
      %v3022 = vld [vmem:[%s2691 + $0x20] sm:$0x1]
      %v3023 = vld [vmem:[%s2691 + $0x28] sm:$0x1]
      %v3024 = vld [vmem:[%s2691 + $0x30] sm:$0xfe]
      %v3025 = vld [vmem:[%s2691 + $0x38] sm:$0xfe]
      %v3026 = vld [vmem:[%s2691 + $0x40] sm:$0xff]
      %v3027 = vld [vmem:[%s2691 + $0x48] sm:$0xff]
      %v3028 = vld [vmem:[%s2691 + $0x50] sm:$0x1]
      %v3029 = vld [vmem:[%s2691 + $0x58] sm:$0x1]
      %v3030 = vld [vmem:[%s2691 + $0x60] sm:$0xfe]
      %v3031 = vld [vmem:[%s2691 + $0x68] sm:$0xfe]
      %v3032 = vld [vmem:[%s2691 + $0x70] sm:$0xff]
      %v3033 = vld [vmem:[%s2691 + $0x78] sm:$0xff]
      %v3034 = vld [vmem:[%s2691 + $0x80] sm:$0x1]
      %v3035 = vld [vmem:[%s2691 + $0x88] sm:$0x1]
      %v3036 = vld [vmem:[%s2691 + $0x90] sm:$0xfe]
      %v3037 = vld [vmem:[%s2691 + $0x98] sm:$0xfe]
      %v3038 = vld [vmem:[%s2691 + $0xa0] sm:$0xff]
      %v3039 = vld [vmem:[%s2691 + $0xa8] sm:$0xff]
      %v3040 = vld [vmem:[%s2691 + $0xb0] sm:$0x1]
      %v3041 = vld [vmem:[%s2691 + $0xb8] sm:$0x1]
      %v3042 = vld [vmem:[%s2691 + $0xc0] sm:$0xfe]
      %v3043 = vld [vmem:[%s2691 + $0xc8] sm:$0xfe]
      %v3044 = vld [vmem:[%s2691 + $0xd0] sm:$0xff]
      %v3045 = vld [vmem:[%s2691 + $0xd8] sm:$0xff]
      %v3046 = vld [vmem:[%s2691 + $0xe0] sm:$0x1]
      %v3047 = vld [vmem:[%s2691 + $0xe8] sm:$0x1]
      %v3048 = vld [vmem:[%s2691 + $0xf0] sm:$0xfe]
      %v3049 = vld [vmem:[%s2691 + $0xf8] sm:$0xfe]
      %v3050 = vld [vmem:[%s2691 + $0x100] sm:$0xff]
      %v3051 = vld [vmem:[%s2691 + $0x108] sm:$0xff]
      %v3052 = vld [vmem:[%s2691 + $0x110] sm:$0x1]
      %v3053 = vld [vmem:[%s2691 + $0x118] sm:$0x1]
      %v3054 = vld [vmem:[%s2691 + $0x120] sm:$0xfe]
      %v3055 = vld [vmem:[%s2691 + $0x128] sm:$0xfe]
      %v3056 = vld [vmem:[%s2691 + $0x130] sm:$0xff]
      %v3057 = vld [vmem:[%s2691 + $0x138] sm:$0xff]
      %v3058 = vld [vmem:[%s2691 + $0x140] sm:$0x1]
      %v3059 = vld [vmem:[%s2691 + $0x148] sm:$0x1]
      %v3060 = vld [vmem:[%s2691 + $0x150] sm:$0xfe]
      %v3061 = vld [vmem:[%s2691 + $0x158] sm:$0xfe]
      %v3062 = vld [vmem:[%s2691 + $0x160] sm:$0xff]
      %v3063 = vld [vmem:[%s2691 + $0x168] sm:$0xff]
      %v3064 = vld [vmem:[%s2691 + $0x170] sm:$0x1]
      %v3065 = vld [vmem:[%s2691 + $0x178] sm:$0x1]
      %v3114 = vrot.slane %v3018, 1
      %v3115 = vrot.slane %v3020, 1
      %v3116 = vsel %vm318, %v3114, %v3115
      %v3117 = vrot.slane %v3019, 1
      %v3118 = vrot.slane %v3021, 1
      %v3119 = vsel %vm318, %v3117, %v3118
      %v3120 = vrot.slane %v3022, 1
      %v3121 = vsel %vm318, %v3115, %v3120
      %v3122 = vrot.slane %v3023, 1
      %v3123 = vsel %vm318, %v3118, %v3122
      %v3124 = vrot.slane %v3024, 1
      %v3125 = vrot.slane %v3026, 1
      %v3126 = vsel %vm318, %v3124, %v3125
      %v3127 = vrot.slane %v3025, 1
      %v3128 = vrot.slane %v3027, 1
      %v3129 = vsel %vm318, %v3127, %v3128
      %v3130 = vrot.slane %v3028, 1
      %v3131 = vsel %vm318, %v3125, %v3130
      %v3132 = vrot.slane %v3029, 1
      %v3133 = vsel %vm318, %v3128, %v3132
      %v3134 = vrot.slane %v3030, 1
      %v3135 = vrot.slane %v3032, 1
      %v3136 = vsel %vm318, %v3134, %v3135
      %v3137 = vrot.slane %v3031, 1
      %v3138 = vrot.slane %v3033, 1
      %v3139 = vsel %vm318, %v3137, %v3138
      %v3140 = vrot.slane %v3034, 1
      %v3141 = vsel %vm318, %v3135, %v3140
      %v3142 = vrot.slane %v3035, 1
      %v3143 = vsel %vm318, %v3138, %v3142
      %v3144 = vrot.slane %v3036, 1
      %v3145 = vrot.slane %v3038, 1
      %v3146 = vsel %vm318, %v3144, %v3145
      %v3147 = vrot.slane %v3037, 1
      %v3148 = vrot.slane %v3039, 1
      %v3149 = vsel %vm318, %v3147, %v3148
      %v3150 = vrot.slane %v3040, 1
      %v3151 = vsel %vm318, %v3145, %v3150
      %v3152 = vrot.slane %v3041, 1
      %v3153 = vsel %vm318, %v3148, %v3152
      %v3154 = vrot.slane %v3042, 1
      %v3155 = vrot.slane %v3044, 1
      %v3156 = vsel %vm318, %v3154, %v3155
      %v3157 = vrot.slane %v3043, 1
      %v3158 = vrot.slane %v3045, 1
      %v3159 = vsel %vm318, %v3157, %v3158
      %v3160 = vrot.slane %v3046, 1
      %v3161 = vsel %vm318, %v3155, %v3160
      %v3162 = vrot.slane %v3047, 1
      %v3163 = vsel %vm318, %v3158, %v3162
      %v3164 = vrot.slane %v3048, 1
      %v3165 = vrot.slane %v3050, 1
      %v3166 = vsel %vm318, %v3164, %v3165
      %v3167 = vrot.slane %v3049, 1
      %v3168 = vrot.slane %v3051, 1
      %v3169 = vsel %vm318, %v3167, %v3168
      %v3170 = vrot.slane %v3052, 1
      %v3171 = vsel %vm318, %v3165, %v3170
      %v3172 = vrot.slane %v3053, 1
      %v3173 = vsel %vm318, %v3168, %v3172
      %v3174 = vrot.slane %v3054, 1
      %v3175 = vrot.slane %v3056, 1
      %v3176 = vsel %vm318, %v3174, %v3175
      %v3177 = vrot.slane %v3055, 1
      %v3178 = vrot.slane %v3057, 1
      %v3179 = vsel %vm318, %v3177, %v3178
      %v3180 = vrot.slane %v3058, 1
      %v3181 = vsel %vm318, %v3175, %v3180
      %v3182 = vrot.slane %v3059, 1
      %v3183 = vsel %vm318, %v3178, %v3182
      %v3184 = vrot.slane %v3060, 1
      %v3185 = vrot.slane %v3062, 1
      %v3186 = vsel %vm318, %v3184, %v3185
      %v3187 = vrot.slane %v3061, 1
      %v3188 = vrot.slane %v3063, 1
      %v3189 = vsel %vm318, %v3187, %v3188
      %v3190 = vrot.slane %v3064, 1
      %v3191 = vsel %vm318, %v3185, %v3190
      %v3192 = vrot.slane %v3065, 1
      %v3193 = vsel %vm318, %v3188, %v3192
      %v3226 = vpack.c.bf16 %v3121, %v3116
      %v3227 = vpack.c.bf16 %v3123, %v3119
      %v3228 = vpack.c.bf16 %v3131, %v3126
      %v3229 = vpack.c.bf16 %v3133, %v3129
      %v3230 = vpack.c.bf16 %v3141, %v3136
      %v3231 = vpack.c.bf16 %v3143, %v3139
      %v3232 = vpack.c.bf16 %v3151, %v3146
      %v3233 = vpack.c.bf16 %v3153, %v3149
      %v3234 = vpack.c.bf16 %v3161, %v3156
      %v3235 = vpack.c.bf16 %v3163, %v3159
      %v3236 = vpack.c.bf16 %v3171, %v3166
      %v3237 = vpack.c.bf16 %v3173, %v3169
      %v3238 = vpack.c.bf16 %v3181, %v3176
      %v3239 = vpack.c.bf16 %v3183, %v3179
      %v3240 = vpack.c.bf16 %v3191, %v3186
      %v3241 = vpack.c.bf16 %v3193, %v3189
      %s3242 = scalar_lea.vmem %s1, 1008
      %v3243 = vld [vmem:[%s3242] sm:$0xff]
      %v3244 = vld [vmem:[%s3242 + $0x8] sm:$0xff]
      %v3245 = vld [vmem:[%s3242 + $0x10] sm:$0xff]
      %v3246 = vld [vmem:[%s3242 + $0x18] sm:$0xff]
      %v3247 = vld [vmem:[%s3242 + $0x20] sm:$0xff]
      %v3248 = vld [vmem:[%s3242 + $0x28] sm:$0xff]
      %v3249 = vld [vmem:[%s3242 + $0x30] sm:$0xff]
      %v3250 = vld [vmem:[%s3242 + $0x38] sm:$0xff]
      %v3251 = vld [vmem:[%s3242 + $0x40] sm:$0xff]
      %v3252 = vld [vmem:[%s3242 + $0x48] sm:$0xff]
      %v3253 = vld [vmem:[%s3242 + $0x50] sm:$0xff]
      %v3254 = vld [vmem:[%s3242 + $0x58] sm:$0xff]
      %v3255 = vld [vmem:[%s3242 + $0x60] sm:$0xff]
      %v3256 = vld [vmem:[%s3242 + $0x68] sm:$0xff]
      %v3257 = vld [vmem:[%s3242 + $0x70] sm:$0xff]
      %v3258 = vld [vmem:[%s3242 + $0x78] sm:$0xff]
      %v3259 = vld [vmem:[%s3242 + $0x80] sm:$0xff]
      %v3260 = vld [vmem:[%s3242 + $0x88] sm:$0xff]
      %v3279 = vunpack.c.l.b16 %v3243
      %v3280 = vunpack.c.h.b16 %v3243
      %v3281 = vunpack.c.l.b16 %v3244
      %v3282 = vunpack.c.h.b16 %v3244
      %v3283 = vunpack.c.l.b16 %v3245
      %v3284 = vunpack.c.h.b16 %v3245
      %v3285 = vunpack.c.l.b16 %v3246
      %v3286 = vunpack.c.h.b16 %v3246
      %v3287 = vunpack.c.l.b16 %v3247
      %v3288 = vunpack.c.h.b16 %v3247
      %v3289 = vunpack.c.l.b16 %v3248
      %v3290 = vunpack.c.h.b16 %v3248
      %v3291 = vunpack.c.l.b16 %v3249
      %v3292 = vunpack.c.h.b16 %v3249
      %v3293 = vunpack.c.l.b16 %v3250
      %v3294 = vunpack.c.h.b16 %v3250
      %v3295 = vunpack.c.l.b16 %v3251
      %v3296 = vunpack.c.h.b16 %v3251
      %v3297 = vunpack.c.l.b16 %v3252
      %v3298 = vunpack.c.h.b16 %v3252
      %v3299 = vunpack.c.l.b16 %v3253
      %v3300 = vunpack.c.h.b16 %v3253
      %v3301 = vunpack.c.l.b16 %v3254
      %v3302 = vunpack.c.h.b16 %v3254
      %v3303 = vunpack.c.l.b16 %v3255
      %v3304 = vunpack.c.h.b16 %v3255
      %v3305 = vunpack.c.l.b16 %v3256
      %v3306 = vunpack.c.h.b16 %v3256
      %v3307 = vunpack.c.l.b16 %v3257
      %v3308 = vunpack.c.h.b16 %v3257
      %v3309 = vunpack.c.l.b16 %v3258
      %v3310 = vunpack.c.h.b16 %v3258
      %v3311 = vunpack.c.l.b16 %v3259
      %v3312 = vunpack.c.h.b16 %v3259
      %v3313 = vunpack.c.l.b16 %v3260
      %v3314 = vunpack.c.h.b16 %v3260
      %v3315 = vpack.c.b16 %v3281, %v3279
      %v3316 = vpack.c.b16 %v3282, %v3280
      %v3317 = vpack.c.b16 %v3285, %v3283
      %v3318 = vpack.c.b16 %v3286, %v3284
      %v3319 = vpack.c.b16 %v3289, %v3287
      %v3320 = vpack.c.b16 %v3290, %v3288
      %v3321 = vpack.c.b16 %v3293, %v3291
      %v3322 = vpack.c.b16 %v3294, %v3292
      %v3323 = vpack.c.b16 %v3297, %v3295
      %v3324 = vpack.c.b16 %v3298, %v3296
      %v3325 = vpack.c.b16 %v3301, %v3299
      %v3326 = vpack.c.b16 %v3302, %v3300
      %v3327 = vpack.c.b16 %v3305, %v3303
      %v3328 = vpack.c.b16 %v3306, %v3304
      %v3329 = vpack.c.b16 %v3309, %v3307
      %v3330 = vpack.c.b16 %v3310, %v3308
      %v3331 = vpack.c.b16 %v3313, %v3311
      %v3332 = vpack.c.b16 %v3314, %v3312
      %v3352 = vsel %vm556, %v3227, 0
      %v3355 = vsel %vm556, %v3229, 0
      %v3358 = vsel %vm556, %v3231, 0
      %v3361 = vsel %vm556, %v3233, 0
      %v3364 = vsel %vm556, %v3235, 0
      %v3367 = vsel %vm556, %v3237, 0
      %v3370 = vsel %vm556, %v3239, 0
      %v3373 = vsel %vm556, %v3241, 0
      %3375 = vmatprep.subr.bf16.mxu0 %v3330
      %3376 = vmatpush1.bf16.msra.mxu0 %v3329
      %3377 = vmatprep.subr.bf16.mxu0 %v3328
      %3378 = vmatpush1.bf16.msra.mxu0 %v3327
      %3379 = vmatprep.subr.bf16.mxu0 %v3326
      %3380 = vmatpush1.bf16.msra.mxu0 %v3325
      %3381 = vmatprep.subr.bf16.mxu0 %v3324
      %3382 = vmatpush1.bf16.msra.mxu0 %v3323
      %3383 = vmatprep.subr.bf16.mxu0 %v3322
      %3384 = vmatpush1.bf16.msra.mxu0 %v3321
      %3385 = vmatprep.subr.bf16.mxu0 %v3320
      %3386 = vmatpush1.bf16.msra.mxu0 %v3319
      %3387 = vmatprep.subr.bf16.mxu0 %v3318
      %3388 = vmatpush1.bf16.msra.mxu0 %v3317
      %3389 = vmatprep.subr.bf16.mxu0 %v3316
      %3390 = vmatpush1.bf16.msra.mxu0 %v3315
      %3391 = vmatprep.subr.bf16.mxu0 0
      %3392 = vmatpush2.bf16.msra.mxu0 0
      %3393 = vmatprep.subr.bf16.mxu0 0
      %3394 = vmatpush2.bf16.msra.mxu0 0
      %3395 = vmatprep.subr.bf16.mxu0 0
      %3396 = vmatpush2.bf16.msra.mxu0 0
      %3397 = vmatprep.subr.bf16.mxu0 0
      %3398 = vmatpush2.bf16.msra.mxu0 0
      %3399 = vmatprep.subr.bf16.mxu0 0
      %3400 = vmatpush2.bf16.msra.mxu0 0
      %3401 = vmatprep.subr.bf16.mxu0 0
      %3402 = vmatpush2.bf16.msra.mxu0 0
      %3403 = vmatprep.subr.bf16.mxu0 0
      %3404 = vmatpush2.bf16.msra.mxu0 0
      %3405 = vmatprep.subr.bf16.mxu0 %v3332
      %3406 = vmatpush2.bf16.msra.mxu0 %v3331
      %3407 = vmatprep.mubr.bf16.mxu0 %v3352
      %3408 = vmatmul.mubr.bf16.gmra.mxu0 %v3226
      %v3409 = vpop.f32.mrf.mxu0
      %v3410 = vadd.f32 0.0, %v3409
      %v3411 = vpop.f32.mrf.mxu0
      %v3412 = vadd.f32 0.0, %v3411
      %v3413 = vpop.f32.mrf.mxu0
      %v3414 = vadd.f32 0.0, %v3413
      %v3415 = vpop.f32.mrf.mxu0
      %v3416 = vadd.f32 0.0, %v3415
      %3417 = vmatprep.mubr.bf16.mxu0 %v3355
      %3418 = vmatmul.mubr.bf16.gmra.mxu0 %v3228
      %v3419 = vpop.f32.mrf.mxu0
      %v3420 = vadd.f32 0.0, %v3419
      %v3421 = vpop.f32.mrf.mxu0
      %v3422 = vadd.f32 0.0, %v3421
      %v3423 = vpop.f32.mrf.mxu0
      %v3424 = vadd.f32 0.0, %v3423
      %v3425 = vpop.f32.mrf.mxu0
      %v3426 = vadd.f32 0.0, %v3425
      %3427 = vmatprep.mubr.bf16.mxu0 %v3358
      %3428 = vmatmul.mubr.bf16.gmra.mxu0 %v3230
      %v3429 = vpop.f32.mrf.mxu0
      %v3430 = vadd.f32 0.0, %v3429
      %v3431 = vpop.f32.mrf.mxu0
      %v3432 = vadd.f32 0.0, %v3431
      %v3433 = vpop.f32.mrf.mxu0
      %v3434 = vadd.f32 0.0, %v3433
      %v3435 = vpop.f32.mrf.mxu0
      %v3436 = vadd.f32 0.0, %v3435
      %3437 = vmatprep.mubr.bf16.mxu0 %v3361
      %3438 = vmatmul.mubr.bf16.gmra.mxu0 %v3232
      %v3439 = vpop.f32.mrf.mxu0
      %v3440 = vadd.f32 0.0, %v3439
      %v3441 = vpop.f32.mrf.mxu0
      %v3442 = vadd.f32 0.0, %v3441
      %v3443 = vpop.f32.mrf.mxu0
      %v3444 = vadd.f32 0.0, %v3443
      %v3445 = vpop.f32.mrf.mxu0
      %v3446 = vadd.f32 0.0, %v3445
      %3447 = vmatprep.mubr.bf16.mxu0 %v3364
      %3448 = vmatmul.mubr.bf16.gmra.mxu0 %v3234
      %v3449 = vpop.f32.mrf.mxu0
      %v3450 = vadd.f32 0.0, %v3449
      %v3451 = vpop.f32.mrf.mxu0
      %v3452 = vadd.f32 0.0, %v3451
      %v3453 = vpop.f32.mrf.mxu0
      %v3454 = vadd.f32 0.0, %v3453
      %v3455 = vpop.f32.mrf.mxu0
      %v3456 = vadd.f32 0.0, %v3455
      %3457 = vmatprep.mubr.bf16.mxu0 %v3367
      %3458 = vmatmul.mubr.bf16.gmra.mxu0 %v3236
      %v3459 = vpop.f32.mrf.mxu0
      %v3460 = vadd.f32 0.0, %v3459
      %v3461 = vpop.f32.mrf.mxu0
      %v3462 = vadd.f32 0.0, %v3461
      %v3463 = vpop.f32.mrf.mxu0
      %v3464 = vadd.f32 0.0, %v3463
      %v3465 = vpop.f32.mrf.mxu0
      %v3466 = vadd.f32 0.0, %v3465
      %3467 = vmatprep.mubr.bf16.mxu0 %v3370
      %3468 = vmatmul.mubr.bf16.gmra.mxu0 %v3238
      %v3469 = vpop.f32.mrf.mxu0
      %v3470 = vadd.f32 0.0, %v3469
      %v3471 = vpop.f32.mrf.mxu0
      %v3472 = vadd.f32 0.0, %v3471
      %v3473 = vpop.f32.mrf.mxu0
      %v3474 = vadd.f32 0.0, %v3473
      %v3475 = vpop.f32.mrf.mxu0
      %v3476 = vadd.f32 0.0, %v3475
      %3477 = vmatprep.mubr.bf16.mxu0 %v3373
      %3478 = vmatmul.mubr.bf16.gmra.mxu0 %v3240
      %v3479 = vpop.f32.mrf.mxu0
      %v3480 = vadd.f32 0.0, %v3479
      %v3481 = vpop.f32.mrf.mxu0
      %v3482 = vadd.f32 0.0, %v3481
      %v3483 = vpop.f32.mrf.mxu0
      %v3484 = vadd.f32 0.0, %v3483
      %v3485 = vpop.f32.mrf.mxu0
      %v3486 = vadd.f32 0.0, %v3485
      %3487 = vdwg.mxu0
      %v3488 = vadd.f32 %v2986, %v3410
      %v3489 = vadd.f32 %v2987, %v3412
      %v3490 = vadd.f32 %v2988, %v3414
      %v3491 = vadd.f32 %v2989, %v3416
      %v3492 = vadd.f32 %v2990, %v3420
      %v3493 = vadd.f32 %v2991, %v3422
      %v3494 = vadd.f32 %v2992, %v3424
      %v3495 = vadd.f32 %v2993, %v3426
      %v3496 = vadd.f32 %v2994, %v3430
      %v3497 = vadd.f32 %v2995, %v3432
      %v3498 = vadd.f32 %v2996, %v3434
      %v3499 = vadd.f32 %v2997, %v3436
      %v3500 = vadd.f32 %v2998, %v3440
      %v3501 = vadd.f32 %v2999, %v3442
      %v3502 = vadd.f32 %v3000, %v3444
      %v3503 = vadd.f32 %v3001, %v3446
      %v3504 = vadd.f32 %v3002, %v3450
      %v3505 = vadd.f32 %v3003, %v3452
      %v3506 = vadd.f32 %v3004, %v3454
      %v3507 = vadd.f32 %v3005, %v3456
      %v3508 = vadd.f32 %v3006, %v3460
      %v3509 = vadd.f32 %v3007, %v3462
      %v3510 = vadd.f32 %v3008, %v3464
      %v3511 = vadd.f32 %v3009, %v3466
      %v3512 = vadd.f32 %v3010, %v3470
      %v3513 = vadd.f32 %v3011, %v3472
      %v3514 = vadd.f32 %v3012, %v3474
      %v3515 = vadd.f32 %v3013, %v3476
      %v3516 = vadd.f32 %v3014, %v3480
      %v3517 = vadd.f32 %v3015, %v3482
      %v3518 = vadd.f32 %v3016, %v3484
      %v3519 = vadd.f32 %v3017, %v3486
      %v3520 = vld [vmem:[%s2691] sm:$0xfc]
      %v3521 = vld [vmem:[%s2691 + $0x8] sm:$0xfc]
      %v3522 = vld [vmem:[%s2691 + $0x20] sm:$0x3]
      %v3523 = vld [vmem:[%s2691 + $0x28] sm:$0x3]
      %v3524 = vld [vmem:[%s2691 + $0x30] sm:$0xfc]
      %v3525 = vld [vmem:[%s2691 + $0x38] sm:$0xfc]
      %v3526 = vld [vmem:[%s2691 + $0x50] sm:$0x3]
      %v3527 = vld [vmem:[%s2691 + $0x58] sm:$0x3]
      %v3528 = vld [vmem:[%s2691 + $0x60] sm:$0xfc]
      %v3529 = vld [vmem:[%s2691 + $0x68] sm:$0xfc]
      %v3530 = vld [vmem:[%s2691 + $0x80] sm:$0x3]
      %v3531 = vld [vmem:[%s2691 + $0x88] sm:$0x3]
      %v3532 = vld [vmem:[%s2691 + $0x90] sm:$0xfc]
      %v3533 = vld [vmem:[%s2691 + $0x98] sm:$0xfc]
      %v3534 = vld [vmem:[%s2691 + $0xb0] sm:$0x3]
      %v3535 = vld [vmem:[%s2691 + $0xb8] sm:$0x3]
      %v3536 = vld [vmem:[%s2691 + $0xc0] sm:$0xfc]
      %v3537 = vld [vmem:[%s2691 + $0xc8] sm:$0xfc]
      %v3538 = vld [vmem:[%s2691 + $0xe0] sm:$0x3]
      %v3539 = vld [vmem:[%s2691 + $0xe8] sm:$0x3]
      %v3540 = vld [vmem:[%s2691 + $0xf0] sm:$0xfc]
      %v3541 = vld [vmem:[%s2691 + $0xf8] sm:$0xfc]
      %v3542 = vld [vmem:[%s2691 + $0x110] sm:$0x3]
      %v3543 = vld [vmem:[%s2691 + $0x118] sm:$0x3]
      %v3544 = vld [vmem:[%s2691 + $0x120] sm:$0xfc]
      %v3545 = vld [vmem:[%s2691 + $0x128] sm:$0xfc]
      %v3546 = vld [vmem:[%s2691 + $0x140] sm:$0x3]
      %v3547 = vld [vmem:[%s2691 + $0x148] sm:$0x3]
      %v3548 = vld [vmem:[%s2691 + $0x150] sm:$0xfc]
      %v3549 = vld [vmem:[%s2691 + $0x158] sm:$0xfc]
      %v3550 = vld [vmem:[%s2691 + $0x170] sm:$0x3]
      %v3551 = vld [vmem:[%s2691 + $0x178] sm:$0x3]
      %v3584 = vrot.slane %v3520, 2
      %v3585 = vrot.slane %v3020, 2
      %v3586 = vsel %vm985, %v3584, %v3585
      %v3587 = vrot.slane %v3521, 2
      %v3588 = vrot.slane %v3021, 2
      %v3589 = vsel %vm985, %v3587, %v3588
      %v3590 = vrot.slane %v3522, 2
      %v3591 = vsel %vm985, %v3585, %v3590
      %v3592 = vrot.slane %v3523, 2
      %v3593 = vsel %vm985, %v3588, %v3592
      %v3594 = vrot.slane %v3524, 2
      %v3595 = vrot.slane %v3026, 2
      %v3596 = vsel %vm985, %v3594, %v3595
      %v3597 = vrot.slane %v3525, 2
      %v3598 = vrot.slane %v3027, 2
      %v3599 = vsel %vm985, %v3597, %v3598
      %v3600 = vrot.slane %v3526, 2
      %v3601 = vsel %vm985, %v3595, %v3600
      %v3602 = vrot.slane %v3527, 2
      %v3603 = vsel %vm985, %v3598, %v3602
      %v3604 = vrot.slane %v3528, 2
      %v3605 = vrot.slane %v3032, 2
      %v3606 = vsel %vm985, %v3604, %v3605
      %v3607 = vrot.slane %v3529, 2
      %v3608 = vrot.slane %v3033, 2
      %v3609 = vsel %vm985, %v3607, %v3608
      %v3610 = vrot.slane %v3530, 2
      %v3611 = vsel %vm985, %v3605, %v3610
      %v3612 = vrot.slane %v3531, 2
      %v3613 = vsel %vm985, %v3608, %v3612
      %v3614 = vrot.slane %v3532, 2
      %v3615 = vrot.slane %v3038, 2
      %v3616 = vsel %vm985, %v3614, %v3615
      %v3617 = vrot.slane %v3533, 2
      %v3618 = vrot.slane %v3039, 2
      %v3619 = vsel %vm985, %v3617, %v3618
      %v3620 = vrot.slane %v3534, 2
      %v3621 = vsel %vm985, %v3615, %v3620
      %v3622 = vrot.slane %v3535, 2
      %v3623 = vsel %vm985, %v3618, %v3622
      %v3624 = vrot.slane %v3536, 2
      %v3625 = vrot.slane %v3044, 2
      %v3626 = vsel %vm985, %v3624, %v3625
      %v3627 = vrot.slane %v3537, 2
      %v3628 = vrot.slane %v3045, 2
      %v3629 = vsel %vm985, %v3627, %v3628
      %v3630 = vrot.slane %v3538, 2
      %v3631 = vsel %vm985, %v3625, %v3630
      %v3632 = vrot.slane %v3539, 2
      %v3633 = vsel %vm985, %v3628, %v3632
      %v3634 = vrot.slane %v3540, 2
      %v3635 = vrot.slane %v3050, 2
      %v3636 = vsel %vm985, %v3634, %v3635
      %v3637 = vrot.slane %v3541, 2
      %v3638 = vrot.slane %v3051, 2
      %v3639 = vsel %vm985, %v3637, %v3638
      %v3640 = vrot.slane %v3542, 2
      %v3641 = vsel %vm985, %v3635, %v3640
      %v3642 = vrot.slane %v3543, 2
      %v3643 = vsel %vm985, %v3638, %v3642
      %v3644 = vrot.slane %v3544, 2
      %v3645 = vrot.slane %v3056, 2
      %v3646 = vsel %vm985, %v3644, %v3645
      %v3647 = vrot.slane %v3545, 2
      %v3648 = vrot.slane %v3057, 2
      %v3649 = vsel %vm985, %v3647, %v3648
      %v3650 = vrot.slane %v3546, 2
      %v3651 = vsel %vm985, %v3645, %v3650
      %v3652 = vrot.slane %v3547, 2
      %v3653 = vsel %vm985, %v3648, %v3652
      %v3654 = vrot.slane %v3548, 2
      %v3655 = vrot.slane %v3062, 2
      %v3656 = vsel %vm985, %v3654, %v3655
      %v3657 = vrot.slane %v3549, 2
      %v3658 = vrot.slane %v3063, 2
      %v3659 = vsel %vm985, %v3657, %v3658
      %v3660 = vrot.slane %v3550, 2
      %v3661 = vsel %vm985, %v3655, %v3660
      %v3662 = vrot.slane %v3551, 2
      %v3663 = vsel %vm985, %v3658, %v3662
      %v3696 = vpack.c.bf16 %v3591, %v3586
      %v3697 = vpack.c.bf16 %v3593, %v3589
      %v3698 = vpack.c.bf16 %v3601, %v3596
      %v3699 = vpack.c.bf16 %v3603, %v3599
      %v3700 = vpack.c.bf16 %v3611, %v3606
      %v3701 = vpack.c.bf16 %v3613, %v3609
      %v3702 = vpack.c.bf16 %v3621, %v3616
      %v3703 = vpack.c.bf16 %v3623, %v3619
      %v3704 = vpack.c.bf16 %v3631, %v3626
      %v3705 = vpack.c.bf16 %v3633, %v3629
      %v3706 = vpack.c.bf16 %v3641, %v3636
      %v3707 = vpack.c.bf16 %v3643, %v3639
      %v3708 = vpack.c.bf16 %v3651, %v3646
      %v3709 = vpack.c.bf16 %v3653, %v3649
      %v3710 = vpack.c.bf16 %v3661, %v3656
      %v3711 = vpack.c.bf16 %v3663, %v3659
      %s3712 = scalar_lea.vmem %s1, 1152
      %v3713 = vld [vmem:[%s3712] sm:$0xff]
      %v3714 = vld [vmem:[%s3712 + $0x8] sm:$0xff]
      %v3715 = vld [vmem:[%s3712 + $0x10] sm:$0xff]
      %v3716 = vld [vmem:[%s3712 + $0x18] sm:$0xff]
      %v3717 = vld [vmem:[%s3712 + $0x20] sm:$0xff]
      %v3718 = vld [vmem:[%s3712 + $0x28] sm:$0xff]
      %v3719 = vld [vmem:[%s3712 + $0x30] sm:$0xff]
      %v3720 = vld [vmem:[%s3712 + $0x38] sm:$0xff]
      %v3721 = vld [vmem:[%s3712 + $0x40] sm:$0xff]
      %v3722 = vld [vmem:[%s3712 + $0x48] sm:$0xff]
      %v3723 = vld [vmem:[%s3712 + $0x50] sm:$0xff]
      %v3724 = vld [vmem:[%s3712 + $0x58] sm:$0xff]
      %v3725 = vld [vmem:[%s3712 + $0x60] sm:$0xff]
      %v3726 = vld [vmem:[%s3712 + $0x68] sm:$0xff]
      %v3727 = vld [vmem:[%s3712 + $0x70] sm:$0xff]
      %v3728 = vld [vmem:[%s3712 + $0x78] sm:$0xff]
      %v3729 = vld [vmem:[%s3712 + $0x80] sm:$0xff]
      %v3730 = vld [vmem:[%s3712 + $0x88] sm:$0xff]
      %v3749 = vunpack.c.l.b16 %v3713
      %v3750 = vunpack.c.h.b16 %v3713
      %v3751 = vunpack.c.l.b16 %v3714
      %v3752 = vunpack.c.h.b16 %v3714
      %v3753 = vunpack.c.l.b16 %v3715
      %v3754 = vunpack.c.h.b16 %v3715
      %v3755 = vunpack.c.l.b16 %v3716
      %v3756 = vunpack.c.h.b16 %v3716
      %v3757 = vunpack.c.l.b16 %v3717
      %v3758 = vunpack.c.h.b16 %v3717
      %v3759 = vunpack.c.l.b16 %v3718
      %v3760 = vunpack.c.h.b16 %v3718
      %v3761 = vunpack.c.l.b16 %v3719
      %v3762 = vunpack.c.h.b16 %v3719
      %v3763 = vunpack.c.l.b16 %v3720
      %v3764 = vunpack.c.h.b16 %v3720
      %v3765 = vunpack.c.l.b16 %v3721
      %v3766 = vunpack.c.h.b16 %v3721
      %v3767 = vunpack.c.l.b16 %v3722
      %v3768 = vunpack.c.h.b16 %v3722
      %v3769 = vunpack.c.l.b16 %v3723
      %v3770 = vunpack.c.h.b16 %v3723
      %v3771 = vunpack.c.l.b16 %v3724
      %v3772 = vunpack.c.h.b16 %v3724
      %v3773 = vunpack.c.l.b16 %v3725
      %v3774 = vunpack.c.h.b16 %v3725
      %v3775 = vunpack.c.l.b16 %v3726
      %v3776 = vunpack.c.h.b16 %v3726
      %v3777 = vunpack.c.l.b16 %v3727
      %v3778 = vunpack.c.h.b16 %v3727
      %v3779 = vunpack.c.l.b16 %v3728
      %v3780 = vunpack.c.h.b16 %v3728
      %v3781 = vunpack.c.l.b16 %v3729
      %v3782 = vunpack.c.h.b16 %v3729
      %v3783 = vunpack.c.l.b16 %v3730
      %v3784 = vunpack.c.h.b16 %v3730
      %v3785 = vpack.c.b16 %v3751, %v3749
      %v3786 = vpack.c.b16 %v3752, %v3750
      %v3787 = vpack.c.b16 %v3755, %v3753
      %v3788 = vpack.c.b16 %v3756, %v3754
      %v3789 = vpack.c.b16 %v3759, %v3757
      %v3790 = vpack.c.b16 %v3760, %v3758
      %v3791 = vpack.c.b16 %v3763, %v3761
      %v3792 = vpack.c.b16 %v3764, %v3762
      %v3793 = vpack.c.b16 %v3767, %v3765
      %v3794 = vpack.c.b16 %v3768, %v3766
      %v3795 = vpack.c.b16 %v3771, %v3769
      %v3796 = vpack.c.b16 %v3772, %v3770
      %v3797 = vpack.c.b16 %v3775, %v3773
      %v3798 = vpack.c.b16 %v3776, %v3774
      %v3799 = vpack.c.b16 %v3779, %v3777
      %v3800 = vpack.c.b16 %v3780, %v3778
      %v3801 = vpack.c.b16 %v3783, %v3781
      %v3802 = vpack.c.b16 %v3784, %v3782
      %v3822 = vsel %vm556, %v3697, 0
      %v3825 = vsel %vm556, %v3699, 0
      %v3828 = vsel %vm556, %v3701, 0
      %v3831 = vsel %vm556, %v3703, 0
      %v3834 = vsel %vm556, %v3705, 0
      %v3837 = vsel %vm556, %v3707, 0
      %v3840 = vsel %vm556, %v3709, 0
      %v3843 = vsel %vm556, %v3711, 0
      %3845 = vmatprep.subr.bf16.mxu0 %v3800
      %3846 = vmatpush1.bf16.msra.mxu0 %v3799
      %3847 = vmatprep.subr.bf16.mxu0 %v3798
      %3848 = vmatpush1.bf16.msra.mxu0 %v3797
      %3849 = vmatprep.subr.bf16.mxu0 %v3796
      %3850 = vmatpush1.bf16.msra.mxu0 %v3795
      %3851 = vmatprep.subr.bf16.mxu0 %v3794
      %3852 = vmatpush1.bf16.msra.mxu0 %v3793
      %3853 = vmatprep.subr.bf16.mxu0 %v3792
      %3854 = vmatpush1.bf16.msra.mxu0 %v3791
      %3855 = vmatprep.subr.bf16.mxu0 %v3790
      %3856 = vmatpush1.bf16.msra.mxu0 %v3789
      %3857 = vmatprep.subr.bf16.mxu0 %v3788
      %3858 = vmatpush1.bf16.msra.mxu0 %v3787
      %3859 = vmatprep.subr.bf16.mxu0 %v3786
      %3860 = vmatpush1.bf16.msra.mxu0 %v3785
      %3861 = vmatprep.subr.bf16.mxu0 0
      %3862 = vmatpush2.bf16.msra.mxu0 0
      %3863 = vmatprep.subr.bf16.mxu0 0
      %3864 = vmatpush2.bf16.msra.mxu0 0
      %3865 = vmatprep.subr.bf16.mxu0 0
      %3866 = vmatpush2.bf16.msra.mxu0 0
      %3867 = vmatprep.subr.bf16.mxu0 0
      %3868 = vmatpush2.bf16.msra.mxu0 0
      %3869 = vmatprep.subr.bf16.mxu0 0
      %3870 = vmatpush2.bf16.msra.mxu0 0
      %3871 = vmatprep.subr.bf16.mxu0 0
      %3872 = vmatpush2.bf16.msra.mxu0 0
      %3873 = vmatprep.subr.bf16.mxu0 0
      %3874 = vmatpush2.bf16.msra.mxu0 0
      %3875 = vmatprep.subr.bf16.mxu0 %v3802
      %3876 = vmatpush2.bf16.msra.mxu0 %v3801
      %3877 = vmatprep.mubr.bf16.mxu0 %v3822
      %3878 = vmatmul.mubr.bf16.gmra.mxu0 %v3696
      %v3879 = vpop.f32.mrf.mxu0
      %v3880 = vadd.f32 0.0, %v3879
      %v3881 = vpop.f32.mrf.mxu0
      %v3882 = vadd.f32 0.0, %v3881
      %v3883 = vpop.f32.mrf.mxu0
      %v3884 = vadd.f32 0.0, %v3883
      %v3885 = vpop.f32.mrf.mxu0
      %v3886 = vadd.f32 0.0, %v3885
      %3887 = vmatprep.mubr.bf16.mxu0 %v3825
      %3888 = vmatmul.mubr.bf16.gmra.mxu0 %v3698
      %v3889 = vpop.f32.mrf.mxu0
      %v3890 = vadd.f32 0.0, %v3889
      %v3891 = vpop.f32.mrf.mxu0
      %v3892 = vadd.f32 0.0, %v3891
      %v3893 = vpop.f32.mrf.mxu0
      %v3894 = vadd.f32 0.0, %v3893
      %v3895 = vpop.f32.mrf.mxu0
      %v3896 = vadd.f32 0.0, %v3895
      %3897 = vmatprep.mubr.bf16.mxu0 %v3828
      %3898 = vmatmul.mubr.bf16.gmra.mxu0 %v3700
      %v3899 = vpop.f32.mrf.mxu0
      %v3900 = vadd.f32 0.0, %v3899
      %v3901 = vpop.f32.mrf.mxu0
      %v3902 = vadd.f32 0.0, %v3901
      %v3903 = vpop.f32.mrf.mxu0
      %v3904 = vadd.f32 0.0, %v3903
      %v3905 = vpop.f32.mrf.mxu0
      %v3906 = vadd.f32 0.0, %v3905
      %3907 = vmatprep.mubr.bf16.mxu0 %v3831
      %3908 = vmatmul.mubr.bf16.gmra.mxu0 %v3702
      %v3909 = vpop.f32.mrf.mxu0
      %v3910 = vadd.f32 0.0, %v3909
      %v3911 = vpop.f32.mrf.mxu0
      %v3912 = vadd.f32 0.0, %v3911
      %v3913 = vpop.f32.mrf.mxu0
      %v3914 = vadd.f32 0.0, %v3913
      %v3915 = vpop.f32.mrf.mxu0
      %v3916 = vadd.f32 0.0, %v3915
      %3917 = vmatprep.mubr.bf16.mxu0 %v3834
      %3918 = vmatmul.mubr.bf16.gmra.mxu0 %v3704
      %v3919 = vpop.f32.mrf.mxu0
      %v3920 = vadd.f32 0.0, %v3919
      %v3921 = vpop.f32.mrf.mxu0
      %v3922 = vadd.f32 0.0, %v3921
      %v3923 = vpop.f32.mrf.mxu0
      %v3924 = vadd.f32 0.0, %v3923
      %v3925 = vpop.f32.mrf.mxu0
      %v3926 = vadd.f32 0.0, %v3925
      %3927 = vmatprep.mubr.bf16.mxu0 %v3837
      %3928 = vmatmul.mubr.bf16.gmra.mxu0 %v3706
      %v3929 = vpop.f32.mrf.mxu0
      %v3930 = vadd.f32 0.0, %v3929
      %v3931 = vpop.f32.mrf.mxu0
      %v3932 = vadd.f32 0.0, %v3931
      %v3933 = vpop.f32.mrf.mxu0
      %v3934 = vadd.f32 0.0, %v3933
      %v3935 = vpop.f32.mrf.mxu0
      %v3936 = vadd.f32 0.0, %v3935
      %3937 = vmatprep.mubr.bf16.mxu0 %v3840
      %3938 = vmatmul.mubr.bf16.gmra.mxu0 %v3708
      %v3939 = vpop.f32.mrf.mxu0
      %v3940 = vadd.f32 0.0, %v3939
      %v3941 = vpop.f32.mrf.mxu0
      %v3942 = vadd.f32 0.0, %v3941
      %v3943 = vpop.f32.mrf.mxu0
      %v3944 = vadd.f32 0.0, %v3943
      %v3945 = vpop.f32.mrf.mxu0
      %v3946 = vadd.f32 0.0, %v3945
      %3947 = vmatprep.mubr.bf16.mxu0 %v3843
      %3948 = vmatmul.mubr.bf16.gmra.mxu0 %v3710
      %v3949 = vpop.f32.mrf.mxu0
      %v3950 = vadd.f32 0.0, %v3949
      %v3951 = vpop.f32.mrf.mxu0
      %v3952 = vadd.f32 0.0, %v3951
      %v3953 = vpop.f32.mrf.mxu0
      %v3954 = vadd.f32 0.0, %v3953
      %v3955 = vpop.f32.mrf.mxu0
      %v3956 = vadd.f32 0.0, %v3955
      %3957 = vdwg.mxu0
      %v3958 = vadd.f32 %v3488, %v3880
      %v3959 = vadd.f32 %v3489, %v3882
      %v3960 = vadd.f32 %v3490, %v3884
      %v3961 = vadd.f32 %v3491, %v3886
      %v3962 = vadd.f32 %v3492, %v3890
      %v3963 = vadd.f32 %v3493, %v3892
      %v3964 = vadd.f32 %v3494, %v3894
      %v3965 = vadd.f32 %v3495, %v3896
      %v3966 = vadd.f32 %v3496, %v3900
      %v3967 = vadd.f32 %v3497, %v3902
      %v3968 = vadd.f32 %v3498, %v3904
      %v3969 = vadd.f32 %v3499, %v3906
      %v3970 = vadd.f32 %v3500, %v3910
      %v3971 = vadd.f32 %v3501, %v3912
      %v3972 = vadd.f32 %v3502, %v3914
      %v3973 = vadd.f32 %v3503, %v3916
      %v3974 = vadd.f32 %v3504, %v3920
      %v3975 = vadd.f32 %v3505, %v3922
      %v3976 = vadd.f32 %v3506, %v3924
      %v3977 = vadd.f32 %v3507, %v3926
      %v3978 = vadd.f32 %v3508, %v3930
      %v3979 = vadd.f32 %v3509, %v3932
      %v3980 = vadd.f32 %v3510, %v3934
      %v3981 = vadd.f32 %v3511, %v3936
      %v3982 = vadd.f32 %v3512, %v3940
      %v3983 = vadd.f32 %v3513, %v3942
      %v3984 = vadd.f32 %v3514, %v3944
      %v3985 = vadd.f32 %v3515, %v3946
      %v3986 = vadd.f32 %v3516, %v3950
      %v3987 = vadd.f32 %v3517, %v3952
      %v3988 = vadd.f32 %v3518, %v3954
      %v3989 = vadd.f32 %v3519, %v3956
      %v3990 = vld [vmem:[%s2] sm:$0x3]
      %v3992 = vlaneseq
      %v3993 = vshrl.u32 %v3992, 7
      %v3994 = vsub.s32 0, %v3993
      %v3995 = vrot.slane %v3990, %v3994
      %v3996 = vlaneseq
      %v3997 = vshrl.u32 %v3996, 7
      %v3998 = vsub.s32 1, %v3997
      %v3999 = vrot.slane %v3990, %v3998
      %v4002 = vadd.f32 %v3958, %v3995
      %v4003 = vadd.f32 %v3959, %v3999
      %v4004 = vadd.f32 %v3960, %v3995
      %v4005 = vadd.f32 %v3961, %v3999
      %v4006 = vadd.f32 %v3962, %v3995
      %v4007 = vadd.f32 %v3963, %v3999
      %v4008 = vadd.f32 %v3964, %v3995
      %v4009 = vadd.f32 %v3965, %v3999
      %v4010 = vadd.f32 %v3966, %v3995
      %v4011 = vadd.f32 %v3967, %v3999
      %v4012 = vadd.f32 %v3968, %v3995
      %v4013 = vadd.f32 %v3969, %v3999
      %v4014 = vadd.f32 %v3970, %v3995
      %v4015 = vadd.f32 %v3971, %v3999
      %v4016 = vadd.f32 %v3972, %v3995
      %v4017 = vadd.f32 %v3973, %v3999
      %v4018 = vadd.f32 %v3974, %v3995
      %v4019 = vadd.f32 %v3975, %v3999
      %v4020 = vadd.f32 %v3976, %v3995
      %v4021 = vadd.f32 %v3977, %v3999
      %v4022 = vadd.f32 %v3978, %v3995
      %v4023 = vadd.f32 %v3979, %v3999
      %v4024 = vadd.f32 %v3980, %v3995
      %v4025 = vadd.f32 %v3981, %v3999
      %v4026 = vadd.f32 %v3982, %v3995
      %v4027 = vadd.f32 %v3983, %v3999
      %v4028 = vadd.f32 %v3984, %v3995
      %v4029 = vadd.f32 %v3985, %v3999
      %v4030 = vadd.f32 %v3986, %v3995
      %v4031 = vadd.f32 %v3987, %v3999
      %v4032 = vadd.f32 %v3988, %v3995
      %v4033 = vadd.f32 %v3989, %v3999
      %v4034 = vmax.f32 %v4002, 0.0
      %v4035 = vmax.f32 %v4003, 0.0
      %v4036 = vmax.f32 %v4004, 0.0
      %v4037 = vmax.f32 %v4005, 0.0
      %v4038 = vmax.f32 %v4006, 0.0
      %v4039 = vmax.f32 %v4007, 0.0
      %v4040 = vmax.f32 %v4008, 0.0
      %v4041 = vmax.f32 %v4009, 0.0
      %v4042 = vmax.f32 %v4010, 0.0
      %v4043 = vmax.f32 %v4011, 0.0
      %v4044 = vmax.f32 %v4012, 0.0
      %v4045 = vmax.f32 %v4013, 0.0
      %v4046 = vmax.f32 %v4014, 0.0
      %v4047 = vmax.f32 %v4015, 0.0
      %v4048 = vmax.f32 %v4016, 0.0
      %v4049 = vmax.f32 %v4017, 0.0
      %v4050 = vmax.f32 %v4018, 0.0
      %v4051 = vmax.f32 %v4019, 0.0
      %v4052 = vmax.f32 %v4020, 0.0
      %v4053 = vmax.f32 %v4021, 0.0
      %v4054 = vmax.f32 %v4022, 0.0
      %v4055 = vmax.f32 %v4023, 0.0
      %v4056 = vmax.f32 %v4024, 0.0
      %v4057 = vmax.f32 %v4025, 0.0
      %v4058 = vmax.f32 %v4026, 0.0
      %v4059 = vmax.f32 %v4027, 0.0
      %v4060 = vmax.f32 %v4028, 0.0
      %v4061 = vmax.f32 %v4029, 0.0
      %v4062 = vmax.f32 %v4030, 0.0
      %v4063 = vmax.f32 %v4031, 0.0
      %v4064 = vmax.f32 %v4032, 0.0
      %v4065 = vmax.f32 %v4033, 0.0
      %v4066 = vadd.f32 %v4034, %v4038
      %v4067 = vadd.f32 %v4035, %v4039
      %v4068 = vadd.f32 %v4036, %v4040
      %v4069 = vadd.f32 %v4037, %v4041
      %v4070 = vadd.f32 %v4042, %v4046
      %v4071 = vadd.f32 %v4043, %v4047
      %v4072 = vadd.f32 %v4044, %v4048
      %v4073 = vadd.f32 %v4045, %v4049
      %v4074 = vadd.f32 %v4050, %v4054
      %v4075 = vadd.f32 %v4051, %v4055
      %v4076 = vadd.f32 %v4052, %v4056
      %v4077 = vadd.f32 %v4053, %v4057
      %v4078 = vadd.f32 %v4058, %v4062
      %v4079 = vadd.f32 %v4059, %v4063
      %v4080 = vadd.f32 %v4060, %v4064
      %v4081 = vadd.f32 %v4061, %v4065
      %v4082 = vmul.f32 %v4066, 0.5
      %v4083 = vmul.f32 %v4067, 0.5
      %v4084 = vmul.f32 %v4068, 0.5
      %v4085 = vmul.f32 %v4069, 0.5
      %v4086 = vmul.f32 %v4070, 0.5
      %v4087 = vmul.f32 %v4071, 0.5
      %v4088 = vmul.f32 %v4072, 0.5
      %v4089 = vmul.f32 %v4073, 0.5
      %v4090 = vmul.f32 %v4074, 0.5
      %v4091 = vmul.f32 %v4075, 0.5
      %v4092 = vmul.f32 %v4076, 0.5
      %v4093 = vmul.f32 %v4077, 0.5
      %v4094 = vmul.f32 %v4078, 0.5
      %v4095 = vmul.f32 %v4079, 0.5
      %v4096 = vmul.f32 %v4080, 0.5
      %v4097 = vmul.f32 %v4081, 0.5
      %4098 = vst [vmem:[%s170] sm:$0xff] %v4082
      %4099 = vst [vmem:[%s170 + $0x8] sm:$0xff] %v4083
      %4100 = vst [vmem:[%s170 + $0x10] sm:$0xff] %v4084
      %4101 = vst [vmem:[%s170 + $0x18] sm:$0xff] %v4085
      %4102 = vst [vmem:[%s170 + $0x20] sm:$0xff] %v4086
      %4103 = vst [vmem:[%s170 + $0x28] sm:$0xff] %v4087
      %4104 = vst [vmem:[%s170 + $0x30] sm:$0xff] %v4088
      %4105 = vst [vmem:[%s170 + $0x38] sm:$0xff] %v4089
      %4106 = vst [vmem:[%s170 + $0x40] sm:$0xff] %v4090
      %4107 = vst [vmem:[%s170 + $0x48] sm:$0xff] %v4091
      %4108 = vst [vmem:[%s170 + $0x50] sm:$0xff] %v4092
      %4109 = vst [vmem:[%s170 + $0x58] sm:$0xff] %v4093
      %4110 = vst [vmem:[%s170 + $0x60] sm:$0xff] %v4094
      %4111 = vst [vmem:[%s170 + $0x68] sm:$0xff] %v4095
      %4112 = vst [vmem:[%s170 + $0x70] sm:$0xff] %v4096
      %4113 = vst [vmem:[%s170 + $0x78] sm:$0xff] %v4097
      %p4114 = scmp.lt.s32.totalorder %s14, 1
      %s4115 = scalar_select %p4114, %s14, 1
      %s4116 = smul.addr %s4115, 16
      %s4117 = smul.addr %s4116, 8
      %s4118 = scalar_lea.vmem %s3, %s4117
      // Predicated region
      $region33: #{cnn3d_lstm_lite_forward.4} parent=31 // pred_check
        %p4119 = pneg %p100
      $region34: #{cnn3d_lstm_lite_forward.4} parent=31 // pred_check_branch
        %4121 = sbr.rel (%p4119) target = $region36
      $region35: #{cnn3d_lstm_lite_forward.4} parent=31 // pred_region
        _
      $region36: #{cnn3d_lstm_lite_forward.4} parent=31 // pred_fallthru
        _
    $region32: #{cnn3d_lstm_lite_forward.4} parent=5 // pred_fallthru
      _
    %p4122 = scmp.le.s32.totalorder 2, %s9
    // Predicated region
    $region37: #{cnn3d_lstm_lite_forward.4} parent=5 // pred_check
      %p4123 = pneg %p4122
    $region38: #{cnn3d_lstm_lite_forward.4} parent=5 // pred_check_branch
      %4125 = sbr.rel (%p4123) target = $region40
    $region39: #{cnn3d_lstm_lite_forward.4} parent=5 // pred_region
      %s4126 = ssub.s32 %s9, 2
      // Predicated region
      $region41: #{cnn3d_lstm_lite_forward.4} parent=39 // pred_check
        %p4127 = pneg %p106
      $region42: #{cnn3d_lstm_lite_forward.4} parent=39 // pred_check_branch
        %4129 = sbr.rel (%p4127) target = $region44
      $region43: #{cnn3d_lstm_lite_forward.4} parent=39 // pred_region
        %p4130 = scmp.lt.s32.totalorder %s15, 1
        %s4131 = scalar_select %p4130, %s15, 1
        %s4132 = smul.addr %s4131, 16
        %s4133 = smul.addr %s4132, 8
        %s4134 = scalar_lea.vmem %s3, %s4133
      $region44: #{cnn3d_lstm_lite_forward.4} parent=39 // pred_fallthru
        _
    $region40: #{cnn3d_lstm_lite_forward.4} parent=5 // pred_fallthru
      _
  $region6: #{cnn3d_lstm_lite_forward.4} parent=0 // loop_footer
    %s13 = sadd.s32 1, %s9
  $region7: #{cnn3d_lstm_lite_forward.4} parent=0 // loop_footer_branch
    %8 = sbr.rel target = $region3
  $region8: #{cnn3d_lstm_lite_forward.4} parent=0 // loop_exit
    _

// kernel: cnn3d_lstm_lite_forward.5
$region0: #{cnn3d_lstm_lite_forward.5}
  #allocation0 [shape = 'u32[]', space=smem, size = 0x4, offset = 0x4, fixed_abs, tag = 'smem constant byte address 0x4 - core index']
  #allocation1 [shape = 'u32[144,128]{1,0:T(1,128)}', space=vmem, size = 0x12000, scoped, tag = 'internal scratch']
  %s0 = inlined_call_operand.vmem [shape: f32[65,512], index: 0, kind: input, shape index: {}]
  %s1 = inlined_call_operand.vmem [shape: bf16[512,65], index: 1, kind: input, shape index: {}]
  %s2 = inlined_call_operand.vmem [shape: f32[64,16], index: 2, kind: input, shape index: {}]
  %s3 = inlined_call_operand.vmem [shape: f32[1,33], index: 3, kind: input, shape index: {}]
  %s4 = inlined_call_operand.vmem [shape: f32[1,512], index: 4, kind: output, shape index: {}]
  %s5 = sld [smem:[#allocation0]]
  $region72: #{cnn3d_lstm_lite_forward.5} parent=0
    _
  %s7 = ssub.s32 1, %s5
  %s8 = scalar_select 0, %s7, %s5
  $region1: #{cnn3d_lstm_lite_forward.5} parent=0
    #allocation2 [shape = 'u8[147456]{0}', space=vmem, size = 0x24000, scoped, tag = 'input window, operand 0']
    loop: start=0, step=1, limit=4
    $region2: #{cnn3d_lstm_lite_forward.5} parent=1 // loop_pre_header
      _
    $region3: #{cnn3d_lstm_lite_forward.5} parent=1 // loop_header
      %s10 = sphi 0, %s14
      %p11 = scmp.ge.s32.totalorder %s10, 4
      %s20 = sphi 0, %s22
      %s23 = sphi 0, %s20
      %s24 = sphi 0, %s23
      %s40 = sphi 0, %s24
      %s44 = sphi 0, %s44
      %s46 = sphi 0, %s44
      %s47 = sphi 0, %s46
      %s61 = sphi 0, %s47
      %s65 = sphi 0, %s65
      %s67 = sphi 0, %s65
      %s68 = sphi 0, %s67
      %s82 = sphi 0, %s68
      %s86 = sphi 0, %s86
      %s88 = sphi 0, %s86
      %s89 = sphi 0, %s88
      %s103 = sphi 0, %s89
      %s109 = sphi 0, %s111
      %s112 = sphi 0, %s109
      %s113 = sphi 0, %s112
      %s129 = sphi 0, %s113
    $region4: #{cnn3d_lstm_lite_forward.5} parent=1 // loop_header_branch
      %13 = sbr.rel (%p11) target = $region8
    $region5: #{cnn3d_lstm_lite_forward.5} parent=1 // loop_body
      %s15 = ssub.s32 %s10, 1
      %s16 = ssub.s32 %s10, 2
      %s17 = sadd.s32 %s10, 1
      %s18 = ssub.s32 %s10, %s17
      %p19 = scmp.eq.s32.totalorder %s18, 0
      %s21 = sadd.s32 %s20, 1
      %s22 = scalar_select %p19, %s20, %s21
      %p25 = pneg %p19
      %p26 = scmp.eq.s32.totalorder %s10, 1
      %p27 = por %p25, %p26
      %p28 = scmp.ne.s32.totalorder %s20, %s23
      %p29 = scmp.eq.s32.totalorder %s10, 0
      %p30 = por %p28, %p29
      %p31 = scmp.ne.s32.totalorder %s20, %s23
      %p32 = scmp.eq.s32.totalorder %s15, 1
      %p33 = por %p31, %p32
      %p34 = scmp.ne.s32.totalorder %s23, %s24
      %p35 = scmp.eq.s32.totalorder %s15, 0
      %p36 = por %p34, %p35
      %p37 = scmp.ne.s32.totalorder %s23, %s24
      %p38 = scmp.eq.s32.totalorder %s16, 1
      %p39 = por %p37, %p38
      %p41 = scmp.ne.s32.totalorder %s24, %s40
      %p42 = scmp.eq.s32.totalorder %s16, 0
      %p43 = por %p41, %p42
      %s45 = sadd.s32 %s44, 1
      %p48 = scmp.eq.s32.totalorder %s10, 1
      %p49 = scmp.ne.s32.totalorder %s44, %s46
      %p50 = scmp.eq.s32.totalorder %s10, 0
      %p51 = por %p49, %p50
      %p52 = scmp.ne.s32.totalorder %s44, %s46
      %p53 = scmp.eq.s32.totalorder %s15, 1
      %p54 = por %p52, %p53
      %p55 = scmp.ne.s32.totalorder %s46, %s47
      %p56 = scmp.eq.s32.totalorder %s15, 0
      %p57 = por %p55, %p56
      %p58 = scmp.ne.s32.totalorder %s46, %s47
      %p59 = scmp.eq.s32.totalorder %s16, 1
      %p60 = por %p58, %p59
      %p62 = scmp.ne.s32.totalorder %s47, %s61
      %p63 = scmp.eq.s32.totalorder %s16, 0
      %p64 = por %p62, %p63
      %s66 = sadd.s32 %s65, 1
      %p69 = scmp.eq.s32.totalorder %s10, 1
      %p70 = scmp.ne.s32.totalorder %s65, %s67
      %p71 = scmp.eq.s32.totalorder %s10, 0
      %p72 = por %p70, %p71
      %p73 = scmp.ne.s32.totalorder %s65, %s67
      %p74 = scmp.eq.s32.totalorder %s15, 1
      %p75 = por %p73, %p74
      %p76 = scmp.ne.s32.totalorder %s67, %s68
      %p77 = scmp.eq.s32.totalorder %s15, 0
      %p78 = por %p76, %p77
      %p79 = scmp.ne.s32.totalorder %s67, %s68
      %p80 = scmp.eq.s32.totalorder %s16, 1
      %p81 = por %p79, %p80
      %p83 = scmp.ne.s32.totalorder %s68, %s82
      %p84 = scmp.eq.s32.totalorder %s16, 0
      %p85 = por %p83, %p84
      %s87 = sadd.s32 %s86, 1
      %p90 = scmp.eq.s32.totalorder %s10, 1
      %p91 = scmp.ne.s32.totalorder %s86, %s88
      %p92 = scmp.eq.s32.totalorder %s10, 0
      %p93 = por %p91, %p92
      %p94 = scmp.ne.s32.totalorder %s86, %s88
      %p95 = scmp.eq.s32.totalorder %s15, 1
      %p96 = por %p94, %p95
      %p97 = scmp.ne.s32.totalorder %s88, %s89
      %p98 = scmp.eq.s32.totalorder %s15, 0
      %p99 = por %p97, %p98
      %p100 = scmp.ne.s32.totalorder %s88, %s89
      %p101 = scmp.eq.s32.totalorder %s16, 1
      %p102 = por %p100, %p101
      %p104 = scmp.ne.s32.totalorder %s89, %s103
      %p105 = scmp.eq.s32.totalorder %s16, 0
      %p106 = por %p104, %p105
      %s107 = ssub.s32 %s10, %s17
      %p108 = scmp.eq.s32.totalorder %s107, 0
      %s110 = sadd.s32 %s109, 1
      %s111 = scalar_select %p108, %s109, %s110
      %p114 = pneg %p108
      %p115 = scmp.eq.s32.totalorder %s10, 1
      %p116 = por %p114, %p115
      %p117 = scmp.ne.s32.totalorder %s109, %s112
      %p118 = scmp.eq.s32.totalorder %s10, 0
      %p119 = por %p117, %p118
      %p120 = scmp.ne.s32.totalorder %s109, %s112
      %p121 = scmp.eq.s32.totalorder %s15, 1
      %p122 = por %p120, %p121
      %p123 = scmp.ne.s32.totalorder %s112, %s113
      %p124 = scmp.eq.s32.totalorder %s15, 0
      %p125 = por %p123, %p124
      %p126 = scmp.ne.s32.totalorder %s112, %s113
      %p127 = scmp.eq.s32.totalorder %s16, 1
      %p128 = por %p126, %p127
      %p130 = scmp.ne.s32.totalorder %s113, %s129
      %p131 = scmp.eq.s32.totalorder %s16, 0
      %p132 = por %p130, %p131
      %p133 = scmp.le.s32.totalorder 1, %s10
      %p134 = scmp.lt.s32.totalorder %s10, 3
      %p135 = pnand %p133, %p134
      %p136 = pneg %p135
      // Predicated region
      $region9: #{cnn3d_lstm_lite_forward.5} parent=5 // pred_check
        _
      $region10: #{cnn3d_lstm_lite_forward.5} parent=5 // pred_check_branch
        %138 = sbr.rel (%p135) target = $region12
      $region11: #{cnn3d_lstm_lite_forward.5} parent=5 // pred_region
        %s139 = ssub.s32 %s10, 1
        // Predicated region
        $region13: #{cnn3d_lstm_lite_forward.5} parent=11 // pred_check
          %p140 = pneg %p57
        $region14: #{cnn3d_lstm_lite_forward.5} parent=11 // pred_check_branch
          %142 = sbr.rel (%p140) target = $region16
        $region15: #{cnn3d_lstm_lite_forward.5} parent=11 // pred_region
          _
        $region16: #{cnn3d_lstm_lite_forward.5} parent=11 // pred_fallthru
          _
        // Predicated region
        $region17: #{cnn3d_lstm_lite_forward.5} parent=11 // pred_check
          %p143 = pneg %p78
        $region18: #{cnn3d_lstm_lite_forward.5} parent=11 // pred_check_branch
          %145 = sbr.rel (%p143) target = $region20
        $region19: #{cnn3d_lstm_lite_forward.5} parent=11 // pred_region
          _
        $region20: #{cnn3d_lstm_lite_forward.5} parent=11 // pred_fallthru
          _
        // Predicated region
        $region21: #{cnn3d_lstm_lite_forward.5} parent=11 // pred_check
          %p146 = pneg %p99
        $region22: #{cnn3d_lstm_lite_forward.5} parent=11 // pred_check_branch
          %148 = sbr.rel (%p146) target = $region24
        $region23: #{cnn3d_lstm_lite_forward.5} parent=11 // pred_region
          _
        $region24: #{cnn3d_lstm_lite_forward.5} parent=11 // pred_fallthru
          _
      $region12: #{cnn3d_lstm_lite_forward.5} parent=5 // pred_fallthru
        _
      %p149 = scmp.lt.s32.totalorder %s10, 2
      // Predicated region
      $region25: #{cnn3d_lstm_lite_forward.5} parent=5 // pred_check
        %p150 = pneg %p149
      $region26: #{cnn3d_lstm_lite_forward.5} parent=5 // pred_check_branch
        %152 = sbr.rel (%p150) target = $region28
      $region27: #{cnn3d_lstm_lite_forward.5} parent=5 // pred_region
        // Predicated region
        $region29: #{cnn3d_lstm_lite_forward.5} parent=27 // pred_check
          %p153 = pneg %p30
        $region30: #{cnn3d_lstm_lite_forward.5} parent=27 // pred_check_branch
          %155 = sbr.rel (%p153) target = $region32
        $region31: #{cnn3d_lstm_lite_forward.5} parent=27 // pred_region
          %s156 = sand.u32 %s20, 1
          %s157 = sand.u32 %s20, 1
          %s158 = smul.addr %s157, 144
          %s159 = scalar_lea.vmem [#allocation2], %s158
          %s160 = smul.u32 2, %s10
          %s161 = smul.addr %s160, 8
          %s162 = scalar_lea.vmem %s0, %s161
          // Predicated region
          $region33: #{cnn3d_lstm_lite_forward.5} parent=31 // pred_check
            _
          $region34: #{cnn3d_lstm_lite_forward.5} parent=31 // pred_check_branch
            %164 = sbr.rel (0) target = $region36
          $region35: #{cnn3d_lstm_lite_forward.5} parent=31 // pred_region
            // Predicated region
            $region37: #{cnn3d_lstm_lite_forward.5} parent=35 // pred_check
              _
            $region38: #{cnn3d_lstm_lite_forward.5} parent=35 // pred_check_branch
              %166 = sbr.rel (0) target = $region40
            $region39: #{cnn3d_lstm_lite_forward.5} parent=35 // pred_region
              loop: start=0, step=1, limit=1
              $region41: #{cnn3d_lstm_lite_forward.5} parent=39 // loop_pre_header
                _
              $region42: #{cnn3d_lstm_lite_forward.5} parent=39 // loop_header
                %s168 = sphi 0, %s172
                %p169 = scmp.ge.s32.totalorder %s168, 1
                %s173 = sphi %s162, %s162
                %s174 = sphi %s159, %s159
              $region43: #{cnn3d_lstm_lite_forward.5} parent=39 // loop_header_branch
                %171 = sbr.rel (%p169) target = $region47
              $region44: #{cnn3d_lstm_lite_forward.5} parent=39 // loop_body
                %v175 = vld [vmem:[%s173] sm:$0xff]
                %176 = vst [vmem:[%s174] sm:$0xff] %v175
                %v177 = vld [vmem:[%s173 + $0x8] sm:$0xff]
                %178 = vst [vmem:[%s174 + $0x8] sm:$0xff] %v177
                %v179 = vld [vmem:[%s173 + $0x20] sm:$0xff]
                %180 = vst [vmem:[%s174 + $0x10] sm:$0xff] %v179
                %v181 = vld [vmem:[%s173 + $0x28] sm:$0xff]
                %182 = vst [vmem:[%s174 + $0x18] sm:$0xff] %v181
                %v183 = vld [vmem:[%s173 + $0x40] sm:$0xff]
                %184 = vst [vmem:[%s174 + $0x20] sm:$0xff] %v183
                %v185 = vld [vmem:[%s173 + $0x48] sm:$0xff]
                %186 = vst [vmem:[%s174 + $0x28] sm:$0xff] %v185
                %v187 = vld [vmem:[%s173 + $0x60] sm:$0xff]
                %188 = vst [vmem:[%s174 + $0x30] sm:$0xff] %v187
                %v189 = vld [vmem:[%s173 + $0x68] sm:$0xff]
                %190 = vst [vmem:[%s174 + $0x38] sm:$0xff] %v189
                %v191 = vld [vmem:[%s173 + $0x80] sm:$0xff]
                %192 = vst [vmem:[%s174 + $0x40] sm:$0xff] %v191
                %v193 = vld [vmem:[%s173 + $0x88] sm:$0xff]
                %194 = vst [vmem:[%s174 + $0x48] sm:$0xff] %v193
                %v195 = vld [vmem:[%s173 + $0xa0] sm:$0xff]
                %196 = vst [vmem:[%s174 + $0x50] sm:$0xff] %v195
                %v197 = vld [vmem:[%s173 + $0xa8] sm:$0xff]
                %198 = vst [vmem:[%s174 + $0x58] sm:$0xff] %v197
                %v199 = vld [vmem:[%s173 + $0xc0] sm:$0xff]
                %200 = vst [vmem:[%s174 + $0x60] sm:$0xff] %v199
                %v201 = vld [vmem:[%s173 + $0xc8] sm:$0xff]
                %202 = vst [vmem:[%s174 + $0x68] sm:$0xff] %v201
                %v203 = vld [vmem:[%s173 + $0xe0] sm:$0xff]
                %204 = vst [vmem:[%s174 + $0x70] sm:$0xff] %v203
                %v205 = vld [vmem:[%s173 + $0xe8] sm:$0xff]
                %206 = vst [vmem:[%s174 + $0x78] sm:$0xff] %v205
                %v207 = vld [vmem:[%s173 + $0x100] sm:$0xff]
                %208 = vst [vmem:[%s174 + $0x80] sm:$0xff] %v207
                %v209 = vld [vmem:[%s173 + $0x108] sm:$0xff]
                %210 = vst [vmem:[%s174 + $0x88] sm:$0xff] %v209
              $region45: #{cnn3d_lstm_lite_forward.5} parent=39 // loop_footer
                %s172 = sadd.s32 1, %s168
              $region46: #{cnn3d_lstm_lite_forward.5} parent=39 // loop_footer_branch
                %167 = sbr.rel target = $region42
              $region47: #{cnn3d_lstm_lite_forward.5} parent=39 // loop_exit
                _
            $region40: #{cnn3d_lstm_lite_forward.5} parent=35 // pred_fallthru
              _
            // Predicated region
            $region48: #{cnn3d_lstm_lite_forward.5} parent=35 // pred_check
              _
            $region49: #{cnn3d_lstm_lite_forward.5} parent=35 // pred_check_branch
              %212 = sbr.rel target = $region51
            $region50: #{cnn3d_lstm_lite_forward.5} parent=35 // pred_region
              _
            $region51: #{cnn3d_lstm_lite_forward.5} parent=35 // pred_fallthru
              _
          $region36: #{cnn3d_lstm_lite_forward.5} parent=31 // pred_fallthru
            _
          %213 = vnop
        $region32: #{cnn3d_lstm_lite_forward.5} parent=27 // pred_fallthru
          _
      $region28: #{cnn3d_lstm_lite_forward.5} parent=5 // pred_fallthru
        _
      %p214 = scmp.le.s32.totalorder 1, %s10
      %p215 = scmp.lt.s32.totalorder %s10, 3
      %p216 = pnand %p214, %p215
      %p217 = pneg %p216
      // Predicated region
      $region52: #{cnn3d_lstm_lite_forward.5} parent=5 // pred_check
        _
      $region53: #{cnn3d_lstm_lite_forward.5} parent=5 // pred_check_branch
        %219 = sbr.rel (%p216) target = $region55
      $region54: #{cnn3d_lstm_lite_forward.5} parent=5 // pred_region
        %s220 = ssub.s32 %s10, 1
        %s221 = sand.u32 %s23, 1
        %s222 = sand.u32 %s23, 1
        %s223 = smul.addr %s222, 144
        %s224 = scalar_lea.vmem [#allocation2], %s223
        // Predicated region
        $region56: #{cnn3d_lstm_lite_forward.5} parent=54 // pred_check
          %p225 = pneg %p36
        $region57: #{cnn3d_lstm_lite_forward.5} parent=54 // pred_check_branch
          %227 = sbr.rel (%p225) target = $region59
        $region58: #{cnn3d_lstm_lite_forward.5} parent=54 // pred_region
          _
        $region59: #{cnn3d_lstm_lite_forward.5} parent=54 // pred_fallthru
          _
        %s228 = sand.u32 %s23, 1
        %s229 = sand.u32 %s23, 1
        %s230 = smul.addr %s229, 144
        %s231 = scalar_lea.vmem [#allocation2], %s230
        %p232 = pneg %p36
        %p233 = pneg %p33
        %p234 = pneg %p57
        %p235 = pneg %p54
        %p236 = pneg %p78
        %p237 = pneg %p75
        %p238 = pneg %p99
        %p239 = pneg %p96
        %p240 = pneg %p125
        %p241 = pneg %p122
        %s242 = smul.u32 2, %s15
        %p243 = scmp.lt.s32.totalorder %s242, 3
        %s244 = scalar_select %p243, %s242, 3
        %s245 = scalar_lea.vmem %s4, %s244
        %s246 = smul.u32 2, %s15
        %s247 = smul.u32 2, %s15
        %p248 = scmp.lt.s32.totalorder %s247, 3
        %s249 = scalar_select %p248, %s247, 3
        %s250 = scalar_lea.vmem %s4, %s249
        %s251 = smul.u32 2, %s15
        %v253 = vld [vmem:[%s1] sm:$0xf]
        %v254 = vld [vmem:[%s1 + $0x4] sm:$0xf]
        %v255 = vld [vmem:[%s1 + $0x8] sm:$0xf]
        %v256 = vld [vmem:[%s1 + $0xc] sm:$0xf]
        %v257 = vld [vmem:[%s1 + $0x10] sm:$0xf]
        %v258 = vld [vmem:[%s1 + $0x14] sm:$0xf]
        %v259 = vld [vmem:[%s1 + $0x18] sm:$0xf]
        %v260 = vld [vmem:[%s1 + $0x1c] sm:$0xf]
        %v261 = vld [vmem:[%s1 + $0x20] sm:$0xf]
        %v262 = vld [vmem:[%s1 + $0x24] sm:$0xf]
        %v263 = vld [vmem:[%s1 + $0x28] sm:$0xf]
        %v264 = vld [vmem:[%s1 + $0x2c] sm:$0xf]
        %v265 = vld [vmem:[%s1 + $0x30] sm:$0xf]
        %v266 = vld [vmem:[%s1 + $0x34] sm:$0xf]
        %v267 = vld [vmem:[%s1 + $0x38] sm:$0xf]
        %v268 = vld [vmem:[%s1 + $0x3c] sm:$0xf]
        %v269 = vld [vmem:[%s1 + $0x40] sm:$0xf]
        %v270 = vld [vmem:[%s1 + $0x44] sm:$0xf]
        %v271 = vld [vmem:[%s1 + $0x48] sm:$0xf]
        %v272 = vld [vmem:[%s1 + $0x4c] sm:$0xf]
        %v273 = vld [vmem:[%s1 + $0x50] sm:$0xf]
        %v274 = vld [vmem:[%s1 + $0x54] sm:$0xf]
        %v275 = vld [vmem:[%s1 + $0x58] sm:$0xf]
        %v276 = vld [vmem:[%s1 + $0x5c] sm:$0xf]
        %v277 = vld [vmem:[%s1 + $0x60] sm:$0xf]
        %v278 = vld [vmem:[%s1 + $0x64] sm:$0xf]
        %v279 = vld [vmem:[%s1 + $0x68] sm:$0xf]
        %v280 = vld [vmem:[%s1 + $0x6c] sm:$0xf]
        %v281 = vld [vmem:[%s1 + $0x70] sm:$0xf]
        %v282 = vld [vmem:[%s1 + $0x74] sm:$0xf]
        %v283 = vld [vmem:[%s1 + $0x78] sm:$0xf]
        %v284 = vld [vmem:[%s1 + $0x7c] sm:$0xf]
        %v285 = vld [vmem:[%s1 + $0x80] sm:$0xf]
        %v286 = vld [vmem:[%s1 + $0x84] sm:$0xf]
        %v287 = vld [vmem:[%s1 + $0x88] sm:$0xf]
        %v288 = vld [vmem:[%s1 + $0x8c] sm:$0xf]
        %v289 = vld [vmem:[%s1 + $0x90] sm:$0xf]
        %v290 = vld [vmem:[%s1 + $0x94] sm:$0xf]
        %v291 = vld [vmem:[%s1 + $0x98] sm:$0xf]
        %v292 = vld [vmem:[%s1 + $0x9c] sm:$0xf]
        %v293 = vld [vmem:[%s1 + $0xa0] sm:$0xf]
        %v294 = vld [vmem:[%s1 + $0xa4] sm:$0xf]
        %v295 = vld [vmem:[%s1 + $0xa8] sm:$0xf]
        %v296 = vld [vmem:[%s1 + $0xac] sm:$0xf]
        %v297 = vld [vmem:[%s1 + $0xb0] sm:$0xf]
        %v298 = vld [vmem:[%s1 + $0xb4] sm:$0xf]
        %v299 = vld [vmem:[%s1 + $0xb8] sm:$0xf]
        %v300 = vld [vmem:[%s1 + $0xbc] sm:$0xf]
        %v301 = vld [vmem:[%s1 + $0xc0] sm:$0xf]
        %v302 = vld [vmem:[%s1 + $0xc4] sm:$0xf]
        %v303 = vld [vmem:[%s1 + $0xc8] sm:$0xf]
        %v304 = vld [vmem:[%s1 + $0xcc] sm:$0xf]
        %v305 = vld [vmem:[%s1 + $0xd0] sm:$0xf]
        %v306 = vld [vmem:[%s1 + $0xd4] sm:$0xf]
        %v307 = vld [vmem:[%s1 + $0xd8] sm:$0xf]
        %v308 = vld [vmem:[%s1 + $0xdc] sm:$0xf]
        %v309 = vld [vmem:[%s1 + $0xe0] sm:$0xf]
        %v310 = vld [vmem:[%s1 + $0xe4] sm:$0xf]
        %v311 = vld [vmem:[%s1 + $0xe8] sm:$0xf]
        %v312 = vld [vmem:[%s1 + $0xec] sm:$0xf]
        %v313 = vld [vmem:[%s1 + $0xf0] sm:$0xf]
        %v314 = vld [vmem:[%s1 + $0xf4] sm:$0xf]
        %v315 = vld [vmem:[%s1 + $0xf8] sm:$0xf]
        %v316 = vld [vmem:[%s1 + $0xfc] sm:$0xf]
        %v317 = vld [vmem:[%s224] sm:$0xff]
        %v318 = vld [vmem:[%s224 + $0x8] sm:$0xff]
        %v319 = vld [vmem:[%s224 + $0x10] sm:$0xff]
        %v320 = vld [vmem:[%s224 + $0x18] sm:$0xff]
        %v321 = vld [vmem:[%s224 + $0x20] sm:$0xff]
        %v322 = vld [vmem:[%s224 + $0x28] sm:$0xff]
        %v323 = vld [vmem:[%s224 + $0x30] sm:$0xff]
        %v324 = vld [vmem:[%s224 + $0x38] sm:$0xff]
        %v325 = vld [vmem:[%s224 + $0x40] sm:$0xff]
        %v326 = vld [vmem:[%s224 + $0x48] sm:$0xff]
        %v327 = vld [vmem:[%s224 + $0x50] sm:$0xff]
        %v328 = vld [vmem:[%s224 + $0x58] sm:$0xff]
        %v329 = vld [vmem:[%s224 + $0x60] sm:$0xff]
        %v330 = vld [vmem:[%s224 + $0x68] sm:$0xff]
        %v331 = vld [vmem:[%s224 + $0x70] sm:$0xff]
        %v332 = vld [vmem:[%s224 + $0x78] sm:$0xff]
        %v333 = vld [vmem:[%s224 + $0x80] sm:$0x1]
        %v334 = vld [vmem:[%s224 + $0x88] sm:$0x1]
        %v335 = vpack.c.bf16 %v319, %v317
        %v336 = vpack.c.bf16 %v320, %v318
        %v337 = vpack.c.bf16 %v323, %v321
        %v338 = vpack.c.bf16 %v324, %v322
        %v339 = vpack.c.bf16 %v327, %v325
        %v340 = vpack.c.bf16 %v328, %v326
        %v341 = vpack.c.bf16 %v331, %v329
        %v342 = vpack.c.bf16 %v332, %v330
        %v343 = vpack.c.bf16 %v333, %v333
        %v344 = vpack.c.bf16 %v334, %v334
        %v409 = vunpack.c.l.b16 %v253
        %v410 = vunpack.c.l.b16 %v254
        %v411 = vunpack.c.l.b16 %v255
        %v412 = vunpack.c.l.b16 %v256
        %v413 = vunpack.c.l.b16 %v257
        %v414 = vunpack.c.l.b16 %v258
        %v415 = vunpack.c.l.b16 %v259
        %v416 = vunpack.c.l.b16 %v260
        %v417 = vunpack.c.l.b16 %v261
        %v418 = vunpack.c.l.b16 %v262
        %v419 = vunpack.c.l.b16 %v263
        %v420 = vunpack.c.l.b16 %v264
        %v421 = vunpack.c.l.b16 %v265
        %v422 = vunpack.c.l.b16 %v266
        %v423 = vunpack.c.l.b16 %v267
        %v424 = vunpack.c.l.b16 %v268
        %v425 = vunpack.c.l.b16 %v269
        %v426 = vunpack.c.l.b16 %v270
        %v427 = vunpack.c.l.b16 %v271
        %v428 = vunpack.c.l.b16 %v272
        %v429 = vunpack.c.l.b16 %v273
        %v430 = vunpack.c.l.b16 %v274
        %v431 = vunpack.c.l.b16 %v275
        %v432 = vunpack.c.l.b16 %v276
        %v433 = vunpack.c.l.b16 %v277
        %v434 = vunpack.c.l.b16 %v278
        %v435 = vunpack.c.l.b16 %v279
        %v436 = vunpack.c.l.b16 %v280
        %v437 = vunpack.c.l.b16 %v281
        %v438 = vunpack.c.l.b16 %v282
        %v439 = vunpack.c.l.b16 %v283
        %v440 = vunpack.c.l.b16 %v284
        %v441 = vunpack.c.l.b16 %v285
        %v442 = vunpack.c.l.b16 %v286
        %v443 = vunpack.c.l.b16 %v287
        %v444 = vunpack.c.l.b16 %v288
        %v445 = vunpack.c.l.b16 %v289
        %v446 = vunpack.c.l.b16 %v290
        %v447 = vunpack.c.l.b16 %v291
        %v448 = vunpack.c.l.b16 %v292
        %v449 = vunpack.c.l.b16 %v293
        %v450 = vunpack.c.l.b16 %v294
        %v451 = vunpack.c.l.b16 %v295
        %v452 = vunpack.c.l.b16 %v296
        %v453 = vunpack.c.l.b16 %v297
        %v454 = vunpack.c.l.b16 %v298
        %v455 = vunpack.c.l.b16 %v299
        %v456 = vunpack.c.l.b16 %v300
        %v457 = vunpack.c.l.b16 %v301
        %v458 = vunpack.c.l.b16 %v302
        %v459 = vunpack.c.l.b16 %v303
        %v460 = vunpack.c.l.b16 %v304
        %v461 = vunpack.c.l.b16 %v305
        %v462 = vunpack.c.l.b16 %v306
        %v463 = vunpack.c.l.b16 %v307
        %v464 = vunpack.c.l.b16 %v308
        %v465 = vunpack.c.l.b16 %v309
        %v466 = vunpack.c.l.b16 %v310
        %v467 = vunpack.c.l.b16 %v311
        %v468 = vunpack.c.l.b16 %v312
        %v469 = vunpack.c.l.b16 %v313
        %v470 = vunpack.c.l.b16 %v314
        %v471 = vunpack.c.l.b16 %v315
        %v472 = vunpack.c.l.b16 %v316
        %v473 = vpack.c.b16 %v410, %v409
        %v474 = vpack.c.b16 %v412, %v411
        %v475 = vpack.c.b16 %v414, %v413
        %v476 = vpack.c.b16 %v416, %v415
        %v477 = vpack.c.b16 %v418, %v417
        %v478 = vpack.c.b16 %v420, %v419
        %v479 = vpack.c.b16 %v422, %v421
        %v480 = vpack.c.b16 %v424, %v423
        %v481 = vpack.c.b16 %v426, %v425
        %v482 = vpack.c.b16 %v428, %v427
        %v483 = vpack.c.b16 %v430, %v429
        %v484 = vpack.c.b16 %v432, %v431
        %v485 = vpack.c.b16 %v434, %v433
        %v486 = vpack.c.b16 %v436, %v435
        %v487 = vpack.c.b16 %v438, %v437
        %v488 = vpack.c.b16 %v440, %v439
        %v489 = vpack.c.b16 %v442, %v441
        %v490 = vpack.c.b16 %v444, %v443
        %v491 = vpack.c.b16 %v446, %v445
        %v492 = vpack.c.b16 %v448, %v447
        %v493 = vpack.c.b16 %v450, %v449
        %v494 = vpack.c.b16 %v452, %v451
        %v495 = vpack.c.b16 %v454, %v453
        %v496 = vpack.c.b16 %v456, %v455
        %v497 = vpack.c.b16 %v458, %v457
        %v498 = vpack.c.b16 %v460, %v459
        %v499 = vpack.c.b16 %v462, %v461
        %v500 = vpack.c.b16 %v464, %v463
        %v501 = vpack.c.b16 %v466, %v465
        %v502 = vpack.c.b16 %v468, %v467
        %v503 = vpack.c.b16 %v470, %v469
        %v504 = vpack.c.b16 %v472, %v471
        %vm505 = vcmask 531456
        %v507 = vsel %vm505, %v473, 0
        %v510 = vsel %vm505, %v474, 0
        %v513 = vsel %vm505, %v475, 0
        %v516 = vsel %vm505, %v476, 0
        %v519 = vsel %vm505, %v477, 0
        %v522 = vsel %vm505, %v478, 0
        %v525 = vsel %vm505, %v479, 0
        %v528 = vsel %vm505, %v480, 0
        %v531 = vsel %vm505, %v481, 0
        %v534 = vsel %vm505, %v482, 0
        %v537 = vsel %vm505, %v483, 0
        %v540 = vsel %vm505, %v484, 0
        %v543 = vsel %vm505, %v485, 0
        %v546 = vsel %vm505, %v486, 0
        %v549 = vsel %vm505, %v487, 0
        %v552 = vsel %vm505, %v488, 0
        %v555 = vsel %vm505, %v489, 0
        %v558 = vsel %vm505, %v490, 0
        %v561 = vsel %vm505, %v491, 0
        %v564 = vsel %vm505, %v492, 0
        %v567 = vsel %vm505, %v493, 0
        %v570 = vsel %vm505, %v494, 0
        %v573 = vsel %vm505, %v495, 0
        %v576 = vsel %vm505, %v496, 0
        %v579 = vsel %vm505, %v497, 0
        %v582 = vsel %vm505, %v498, 0
        %v585 = vsel %vm505, %v499, 0
        %v588 = vsel %vm505, %v500, 0
        %v591 = vsel %vm505, %v501, 0
        %v594 = vsel %vm505, %v502, 0
        %v597 = vsel %vm505, %v503, 0
        %v600 = vsel %vm505, %v504, 0
        %vm602 = vcmask 1040384
        %v603 = vsel 0, 4294967295, 65535
        %v604 = vsel %vm602, %v603, 0
        %v606 = vand.u32 %v343, %v604
        %v609 = vand.u32 %v344, %v604
        %611 = vmatprep.subr.bf16.mxu0 0
        %612 = vmatpush1.bf16.msra.mxu0 0
        %613 = vmatprep.subr.bf16.mxu0 0
        %614 = vmatpush1.bf16.msra.mxu0 0
        %615 = vmatprep.subr.bf16.mxu0 0
        %616 = vmatpush1.bf16.msra.mxu0 0
        %617 = vmatprep.subr.bf16.mxu0 %v609
        %618 = vmatpush1.bf16.msra.mxu0 %v606
        %619 = vmatprep.subr.bf16.mxu0 %v342
        %620 = vmatpush1.bf16.msra.mxu0 %v341
        %621 = vmatprep.subr.bf16.mxu0 %v340
        %622 = vmatpush1.bf16.msra.mxu0 %v339
        %623 = vmatprep.subr.bf16.mxu0 %v338
        %624 = vmatpush1.bf16.msra.mxu0 %v337
        %625 = vmatprep.subr.bf16.mxu0 %v336
        %626 = vmatpush1.bf16.msra.mxu0 %v335
        %627 = vmatprep.subr.bf16.mxu0 0
        %628 = vmatpush2.bf16.msra.mxu0 0
        %629 = vmatprep.subr.bf16.mxu0 0
        %630 = vmatpush2.bf16.msra.mxu0 0
        %631 = vmatprep.subr.bf16.mxu0 0
        %632 = vmatpush2.bf16.msra.mxu0 0
        %633 = vmatprep.subr.bf16.mxu0 0
        %634 = vmatpush2.bf16.msra.mxu0 0
        %635 = vmatprep.subr.bf16.mxu0 0
        %636 = vmatpush2.bf16.msra.mxu0 0
        %637 = vmatprep.subr.bf16.mxu0 0
        %638 = vmatpush2.bf16.msra.mxu0 0
        %639 = vmatprep.subr.bf16.mxu0 0
        %640 = vmatpush2.bf16.msra.mxu0 0
        %641 = vmatprep.subr.bf16.mxu0 0
        %642 = vmatpush2.bf16.msra.mxu0 0
        %643 = vmatprep.mubr.bf16.mxu0 0
        %644 = vmatmul.mubr.bf16.gmra.mxu0 %v507
        %v645 = vpop.f32.mrf.mxu0
        %v646 = vadd.f32 0.0, %v645
        %v647 = vpop.f32.mrf.mxu0
        %v648 = vadd.f32 0.0, %v647
        %v649 = vpop.f32.mrf.mxu0
        %v650 = vadd.f32 0.0, %v649
        %v651 = vpop.f32.mrf.mxu0
        %v652 = vadd.f32 0.0, %v651
        %653 = vmatprep.mubr.bf16.mxu0 0
        %654 = vmatmul.mubr.bf16.gmra.mxu0 %v510
        %v655 = vpop.f32.mrf.mxu0
        %v656 = vadd.f32 0.0, %v655
        %v657 = vpop.f32.mrf.mxu0
        %v658 = vadd.f32 0.0, %v657
        %v659 = vpop.f32.mrf.mxu0
        %v660 = vadd.f32 0.0, %v659
        %v661 = vpop.f32.mrf.mxu0
        %v662 = vadd.f32 0.0, %v661
        %663 = vmatprep.mubr.bf16.mxu0 0
        %664 = vmatmul.mubr.bf16.gmra.mxu0 %v513
        %v665 = vpop.f32.mrf.mxu0
        %v666 = vadd.f32 0.0, %v665
        %v667 = vpop.f32.mrf.mxu0
        %v668 = vadd.f32 0.0, %v667
        %v669 = vpop.f32.mrf.mxu0
        %v670 = vadd.f32 0.0, %v669
        %v671 = vpop.f32.mrf.mxu0
        %v672 = vadd.f32 0.0, %v671
        %673 = vmatprep.mubr.bf16.mxu0 0
        %674 = vmatmul.mubr.bf16.gmra.mxu0 %v516
        %v675 = vpop.f32.mrf.mxu0
        %v676 = vadd.f32 0.0, %v675
        %v677 = vpop.f32.mrf.mxu0
        %v678 = vadd.f32 0.0, %v677
        %v679 = vpop.f32.mrf.mxu0
        %v680 = vadd.f32 0.0, %v679
        %v681 = vpop.f32.mrf.mxu0
        %v682 = vadd.f32 0.0, %v681
        %683 = vmatprep.mubr.bf16.mxu0 0
        %684 = vmatmul.mubr.bf16.gmra.mxu0 %v519
        %v685 = vpop.f32.mrf.mxu0
        %v686 = vpop.f32.mrf.mxu0
        %v687 = vpop.f32.mrf.mxu0
        %v688 = vpop.f32.mrf.mxu0
        %689 = vmatprep.mubr.bf16.mxu0 0
        %690 = vmatmul.mubr.bf16.gmra.mxu0 %v522
        %v691 = vpop.f32.mrf.mxu0
        %v692 = vpop.f32.mrf.mxu0
        %v693 = vpop.f32.mrf.mxu0
        %v694 = vpop.f32.mrf.mxu0
        %695 = vmatprep.mubr.bf16.mxu0 0
        %696 = vmatmul.mubr.bf16.gmra.mxu0 %v525
        %v697 = vpop.f32.mrf.mxu0
        %v698 = vpop.f32.mrf.mxu0
        %v699 = vpop.f32.mrf.mxu0
        %v700 = vpop.f32.mrf.mxu0
        %701 = vmatprep.mubr.bf16.mxu0 0
        %702 = vmatmul.mubr.bf16.gmra.mxu0 %v528
        %v703 = vpop.f32.mrf.mxu0
        %v704 = vpop.f32.mrf.mxu0
        %v705 = vpop.f32.mrf.mxu0
        %v706 = vpop.f32.mrf.mxu0
        %707 = vmatprep.mubr.bf16.mxu0 0
        %708 = vmatmul.mubr.bf16.gmra.mxu0 %v531
        %v709 = vpop.f32.mrf.mxu0
        %v710 = vadd.f32 0.0, %v709
        %v711 = vpop.f32.mrf.mxu0
        %v712 = vadd.f32 0.0, %v711
        %v713 = vpop.f32.mrf.mxu0
        %v714 = vadd.f32 0.0, %v713
        %v715 = vpop.f32.mrf.mxu0
        %v716 = vadd.f32 0.0, %v715
        %717 = vmatprep.mubr.bf16.mxu0 0
        %718 = vmatmul.mubr.bf16.gmra.mxu0 %v534
        %v719 = vpop.f32.mrf.mxu0
        %v720 = vadd.f32 0.0, %v719
        %v721 = vpop.f32.mrf.mxu0
        %v722 = vadd.f32 0.0, %v721
        %v723 = vpop.f32.mrf.mxu0
        %v724 = vadd.f32 0.0, %v723
        %v725 = vpop.f32.mrf.mxu0
        %v726 = vadd.f32 0.0, %v725
        %727 = vmatprep.mubr.bf16.mxu0 0
        %728 = vmatmul.mubr.bf16.gmra.mxu0 %v537
        %v729 = vpop.f32.mrf.mxu0
        %v730 = vadd.f32 0.0, %v729
        %v731 = vpop.f32.mrf.mxu0
        %v732 = vadd.f32 0.0, %v731
        %v733 = vpop.f32.mrf.mxu0
        %v734 = vadd.f32 0.0, %v733
        %v735 = vpop.f32.mrf.mxu0
        %v736 = vadd.f32 0.0, %v735
        %737 = vmatprep.mubr.bf16.mxu0 0
        %738 = vmatmul.mubr.bf16.gmra.mxu0 %v540
        %v739 = vpop.f32.mrf.mxu0
        %v740 = vadd.f32 0.0, %v739
        %v741 = vpop.f32.mrf.mxu0
        %v742 = vadd.f32 0.0, %v741
        %v743 = vpop.f32.mrf.mxu0
        %v744 = vadd.f32 0.0, %v743
        %v745 = vpop.f32.mrf.mxu0
        %v746 = vadd.f32 0.0, %v745
        %747 = vmatprep.mubr.bf16.mxu0 0
        %748 = vmatmul.mubr.bf16.gmra.mxu0 %v543
        %v749 = vpop.f32.mrf.mxu0
        %v750 = vpop.f32.mrf.mxu0
        %v751 = vpop.f32.mrf.mxu0
        %v752 = vpop.f32.mrf.mxu0
        %753 = vmatprep.mubr.bf16.mxu0 0
        %754 = vmatmul.mubr.bf16.gmra.mxu0 %v546
        %v755 = vpop.f32.mrf.mxu0
        %v756 = vpop.f32.mrf.mxu0
        %v757 = vpop.f32.mrf.mxu0
        %v758 = vpop.f32.mrf.mxu0
        %759 = vmatprep.mubr.bf16.mxu0 0
        %760 = vmatmul.mubr.bf16.gmra.mxu0 %v549
        %v761 = vpop.f32.mrf.mxu0
        %v762 = vpop.f32.mrf.mxu0
        %v763 = vpop.f32.mrf.mxu0
        %v764 = vpop.f32.mrf.mxu0
        %765 = vmatprep.mubr.bf16.mxu0 0
        %766 = vmatmul.mubr.bf16.gmra.mxu0 %v552
        %v767 = vpop.f32.mrf.mxu0
        %v768 = vpop.f32.mrf.mxu0
        %v769 = vpop.f32.mrf.mxu0
        %v770 = vpop.f32.mrf.mxu0
        %771 = vmatprep.mubr.bf16.mxu0 0
        %772 = vmatmul.mubr.bf16.gmra.mxu0 %v555
        %v773 = vpop.f32.mrf.mxu0
        %v774 = vadd.f32 0.0, %v773
        %v775 = vpop.f32.mrf.mxu0
        %v776 = vadd.f32 0.0, %v775
        %v777 = vpop.f32.mrf.mxu0
        %v778 = vadd.f32 0.0, %v777
        %v779 = vpop.f32.mrf.mxu0
        %v780 = vadd.f32 0.0, %v779
        %781 = vmatprep.mubr.bf16.mxu0 0
        %782 = vmatmul.mubr.bf16.gmra.mxu0 %v558
        %v783 = vpop.f32.mrf.mxu0
        %v784 = vadd.f32 0.0, %v783
        %v785 = vpop.f32.mrf.mxu0
        %v786 = vadd.f32 0.0, %v785
        %v787 = vpop.f32.mrf.mxu0
        %v788 = vadd.f32 0.0, %v787
        %v789 = vpop.f32.mrf.mxu0
        %v790 = vadd.f32 0.0, %v789
        %791 = vmatprep.mubr.bf16.mxu0 0
        %792 = vmatmul.mubr.bf16.gmra.mxu0 %v561
        %v793 = vpop.f32.mrf.mxu0
        %v794 = vadd.f32 0.0, %v793
        %v795 = vpop.f32.mrf.mxu0
        %v796 = vadd.f32 0.0, %v795
        %v797 = vpop.f32.mrf.mxu0
        %v798 = vadd.f32 0.0, %v797
        %v799 = vpop.f32.mrf.mxu0
        %v800 = vadd.f32 0.0, %v799
        %801 = vmatprep.mubr.bf16.mxu0 0
        %802 = vmatmul.mubr.bf16.gmra.mxu0 %v564
        %v803 = vpop.f32.mrf.mxu0
        %v804 = vadd.f32 0.0, %v803
        %v805 = vpop.f32.mrf.mxu0
        %v806 = vadd.f32 0.0, %v805
        %v807 = vpop.f32.mrf.mxu0
        %v808 = vadd.f32 0.0, %v807
        %v809 = vpop.f32.mrf.mxu0
        %v810 = vadd.f32 0.0, %v809
        %811 = vmatprep.mubr.bf16.mxu0 0
        %812 = vmatmul.mubr.bf16.gmra.mxu0 %v567
        %v813 = vpop.f32.mrf.mxu0
        %v814 = vpop.f32.mrf.mxu0
        %v815 = vpop.f32.mrf.mxu0
        %v816 = vpop.f32.mrf.mxu0
        %817 = vmatprep.mubr.bf16.mxu0 0
        %818 = vmatmul.mubr.bf16.gmra.mxu0 %v570
        %v819 = vpop.f32.mrf.mxu0
        %v820 = vpop.f32.mrf.mxu0
        %v821 = vpop.f32.mrf.mxu0
        %v822 = vpop.f32.mrf.mxu0
        %823 = vmatprep.mubr.bf16.mxu0 0
        %824 = vmatmul.mubr.bf16.gmra.mxu0 %v573
        %v825 = vpop.f32.mrf.mxu0
        %v826 = vpop.f32.mrf.mxu0
        %v827 = vpop.f32.mrf.mxu0
        %v828 = vpop.f32.mrf.mxu0
        %829 = vmatprep.mubr.bf16.mxu0 0
        %830 = vmatmul.mubr.bf16.gmra.mxu0 %v576
        %v831 = vpop.f32.mrf.mxu0
        %v832 = vpop.f32.mrf.mxu0
        %v833 = vpop.f32.mrf.mxu0
        %v834 = vpop.f32.mrf.mxu0
        %835 = vmatprep.mubr.bf16.mxu0 0
        %836 = vmatmul.mubr.bf16.gmra.mxu0 %v579
        %v837 = vpop.f32.mrf.mxu0
        %v838 = vadd.f32 0.0, %v837
        %v839 = vpop.f32.mrf.mxu0
        %v840 = vadd.f32 0.0, %v839
        %v841 = vpop.f32.mrf.mxu0
        %v842 = vadd.f32 0.0, %v841
        %v843 = vpop.f32.mrf.mxu0
        %v844 = vadd.f32 0.0, %v843
        %845 = vmatprep.mubr.bf16.mxu0 0
        %846 = vmatmul.mubr.bf16.gmra.mxu0 %v582
        %v847 = vpop.f32.mrf.mxu0
        %v848 = vadd.f32 0.0, %v847
        %v849 = vpop.f32.mrf.mxu0
        %v850 = vadd.f32 0.0, %v849
        %v851 = vpop.f32.mrf.mxu0
        %v852 = vadd.f32 0.0, %v851
        %v853 = vpop.f32.mrf.mxu0
        %v854 = vadd.f32 0.0, %v853
        %855 = vmatprep.mubr.bf16.mxu0 0
        %856 = vmatmul.mubr.bf16.gmra.mxu0 %v585
        %v857 = vpop.f32.mrf.mxu0
        %v858 = vadd.f32 0.0, %v857
        %v859 = vpop.f32.mrf.mxu0
        %v860 = vadd.f32 0.0, %v859
        %v861 = vpop.f32.mrf.mxu0
        %v862 = vadd.f32 0.0, %v861
        %v863 = vpop.f32.mrf.mxu0
        %v864 = vadd.f32 0.0, %v863
        %865 = vmatprep.mubr.bf16.mxu0 0
        %866 = vmatmul.mubr.bf16.gmra.mxu0 %v588
        %v867 = vpop.f32.mrf.mxu0
        %v868 = vadd.f32 0.0, %v867
        %v869 = vpop.f32.mrf.mxu0
        %v870 = vadd.f32 0.0, %v869
        %v871 = vpop.f32.mrf.mxu0
        %v872 = vadd.f32 0.0, %v871
        %v873 = vpop.f32.mrf.mxu0
        %v874 = vadd.f32 0.0, %v873
        %875 = vmatprep.mubr.bf16.mxu0 0
        %876 = vmatmul.mubr.bf16.gmra.mxu0 %v591
        %v877 = vpop.f32.mrf.mxu0
        %v878 = vadd.f32 0.0, %v877
        %v879 = vpop.f32.mrf.mxu0
        %v880 = vadd.f32 0.0, %v879
        %v881 = vpop.f32.mrf.mxu0
        %v882 = vadd.f32 0.0, %v881
        %v883 = vpop.f32.mrf.mxu0
        %v884 = vadd.f32 0.0, %v883
        %885 = vmatprep.mubr.bf16.mxu0 0
        %886 = vmatmul.mubr.bf16.gmra.mxu0 %v594
        %v887 = vpop.f32.mrf.mxu0
        %v888 = vadd.f32 0.0, %v887
        %v889 = vpop.f32.mrf.mxu0
        %v890 = vadd.f32 0.0, %v889
        %v891 = vpop.f32.mrf.mxu0
        %v892 = vadd.f32 0.0, %v891
        %v893 = vpop.f32.mrf.mxu0
        %v894 = vadd.f32 0.0, %v893
        %895 = vmatprep.mubr.bf16.mxu0 0
        %896 = vmatmul.mubr.bf16.gmra.mxu0 %v597
        %v897 = vpop.f32.mrf.mxu0
        %v898 = vadd.f32 0.0, %v897
        %v899 = vpop.f32.mrf.mxu0
        %v900 = vadd.f32 0.0, %v899
        %v901 = vpop.f32.mrf.mxu0
        %v902 = vadd.f32 0.0, %v901
        %v903 = vpop.f32.mrf.mxu0
        %v904 = vadd.f32 0.0, %v903
        %905 = vmatprep.mubr.bf16.mxu0 0
        %906 = vmatmul.mubr.bf16.gmra.mxu0 %v600
        %v907 = vpop.f32.mrf.mxu0
        %v908 = vadd.f32 0.0, %v907
        %v909 = vpop.f32.mrf.mxu0
        %v910 = vadd.f32 0.0, %v909
        %v911 = vpop.f32.mrf.mxu0
        %v912 = vadd.f32 0.0, %v911
        %v913 = vpop.f32.mrf.mxu0
        %v914 = vadd.f32 0.0, %v913
        %915 = vdwg.mxu0
        %v916 = vld [vmem:[%s2] sm:$0xff]
        %v917 = vld [vmem:[%s2 + $0x8] sm:$0xff]
        %v918 = vld [vmem:[%s2 + $0x10] sm:$0xff]
        %v919 = vld [vmem:[%s2 + $0x18] sm:$0xff]
        %v920 = vld [vmem:[%s2 + $0x20] sm:$0xff]
        %v921 = vld [vmem:[%s2 + $0x28] sm:$0xff]
        %v922 = vld [vmem:[%s2 + $0x30] sm:$0xff]
        %v923 = vld [vmem:[%s2 + $0x38] sm:$0xff]
        %vm924 = vcmask 130048
        %v926 = vsel %vm924, %v916, 0
        %v929 = vsel %vm924, %v917, 0
        %v932 = vsel %vm924, %v918, 0
        %v935 = vsel %vm924, %v919, 0
        %v938 = vsel %vm924, %v920, 0
        %v941 = vsel %vm924, %v921, 0
        %v944 = vsel %vm924, %v922, 0
        %v947 = vsel %vm924, %v923, 0
        %949 = vmatprep.subr.mxu0 0.0
        %950 = vmatpush1.msra.mxu0 0.0
        %951 = vmatprep.subr.mxu0 0.0
        %952 = vmatpush1.msra.mxu0 0.0
        %953 = vmatprep.subr.mxu0 0.0
        %954 = vmatpush1.msra.mxu0 0.0
        %955 = vmatprep.subr.mxu0 0.0
        %956 = vmatpush1.msra.mxu0 0.0
        %957 = vmatprep.subr.mxu0 0.0
        %958 = vmatpush1.msra.mxu0 0.0
        %959 = vmatprep.subr.mxu0 0.0
        %960 = vmatpush1.msra.mxu0 0.0
        %961 = vmatprep.subr.mxu0 0.0
        %962 = vmatpush1.msra.mxu0 0.0
        %963 = vmatprep.subr.mxu0 0.0
        %964 = vmatpush1.msra.mxu0 0.0
        %965 = vmatprep.subr.mxu0 0.0
        %966 = vmatpush1.msra.mxu0 0.0
        %967 = vmatprep.subr.mxu0 0.0
        %968 = vmatpush1.msra.mxu0 0.0
        %969 = vmatprep.subr.mxu0 0.0
        %970 = vmatpush1.msra.mxu0 0.0
        %971 = vmatprep.subr.mxu0 0.0
        %972 = vmatpush1.msra.mxu0 0.0
        %973 = vmatprep.subr.mxu0 0.0
        %974 = vmatpush1.msra.mxu0 0.0
        %975 = vmatprep.subr.mxu0 0.0
        %976 = vmatpush1.msra.mxu0 0.0
        %977 = vmatprep.subr.mxu0 0.0
        %978 = vmatpush1.msra.mxu0 0.0
        %979 = vmatprep.subr.mxu0 0.0
        %980 = vmatpush1.msra.mxu0 0.0
        %981 = vmatprep.subr.mxu0 0.0
        %982 = vmatpush2.msra.mxu0 0.0
        %983 = vmatprep.subr.mxu0 0.0
        %984 = vmatpush2.msra.mxu0 0.0
        %985 = vmatprep.subr.mxu0 0.0
        %986 = vmatpush2.msra.mxu0 0.0
        %987 = vmatprep.subr.mxu0 0.0
        %988 = vmatpush2.msra.mxu0 0.0
        %989 = vmatprep.subr.mxu0 0.0
        %990 = vmatpush2.msra.mxu0 0.0
        %991 = vmatprep.subr.mxu0 0.0
        %992 = vmatpush2.msra.mxu0 0.0
        %993 = vmatprep.subr.mxu0 0.0
        %994 = vmatpush2.msra.mxu0 0.0
        %995 = vmatprep.subr.mxu0 0.0
        %996 = vmatpush2.msra.mxu0 0.0
        %997 = vmatprep.subr.mxu0 0.0
        %998 = vmatpush2.msra.mxu0 0.0
        %999 = vmatprep.subr.mxu0 0.0
        %1000 = vmatpush2.msra.mxu0 0.0
        %1001 = vmatprep.subr.mxu0 0.0
        %1002 = vmatpush2.msra.mxu0 0.0
        %1003 = vmatprep.subr.mxu0 0.0
        %1004 = vmatpush2.msra.mxu0 0.0
        %1005 = vmatprep.subr.mxu0 0.0
        %1006 = vmatpush2.msra.mxu0 0.0
        %1007 = vmatprep.subr.mxu0 0.0
        %1008 = vmatpush2.msra.mxu0 0.0
        %1009 = vmatprep.subr.mxu0 0.0
        %1010 = vmatpush2.msra.mxu0 0.0
        %1011 = vmatprep.subr.mxu0 0.0
        %1012 = vmatpush2.msra.mxu0 0.0
        %1013 = vmatprep.mubr.f32.mxu0 0.0
        %1014 = vmatmul.mubr.f32.gmra.mxu0 %v926
        %v1015 = vpop.f32.mrf.mxu0
        %v1016 = vadd.f32 0.0, %v1015
        %v1017 = vpop.f32.mrf.mxu0
        %v1018 = vadd.f32 0.0, %v1017
        %1019 = vmatprep.mubr.f32.mxu0 0.0
        %1020 = vmatmul.mubr.f32.gmra.mxu0 %v929
        %v1021 = vpop.f32.mrf.mxu0
        %v1022 = vadd.f32 0.0, %v1021
        %v1023 = vpop.f32.mrf.mxu0
        %v1024 = vadd.f32 0.0, %v1023
        %1025 = vmatprep.mubr.f32.mxu0 0.0
        %1026 = vmatmul.mubr.f32.gmra.mxu0 %v932
        %v1027 = vpop.f32.mrf.mxu0
        %v1028 = vadd.f32 0.0, %v1027
        %v1029 = vpop.f32.mrf.mxu0
        %v1030 = vadd.f32 0.0, %v1029
        %1031 = vmatprep.mubr.f32.mxu0 0.0
        %1032 = vmatmul.mubr.f32.gmra.mxu0 %v935
        %v1033 = vpop.f32.mrf.mxu0
        %v1034 = vadd.f32 0.0, %v1033
        %v1035 = vpop.f32.mrf.mxu0
        %v1036 = vadd.f32 0.0, %v1035
        %1037 = vmatprep.mubr.f32.mxu0 0.0
        %1038 = vmatmul.mubr.f32.gmra.mxu0 %v938
        %v1039 = vpop.f32.mrf.mxu0
        %v1040 = vadd.f32 0.0, %v1039
        %v1041 = vpop.f32.mrf.mxu0
        %v1042 = vadd.f32 0.0, %v1041
        %1043 = vmatprep.mubr.f32.mxu0 0.0
        %1044 = vmatmul.mubr.f32.gmra.mxu0 %v941
        %v1045 = vpop.f32.mrf.mxu0
        %v1046 = vadd.f32 0.0, %v1045
        %v1047 = vpop.f32.mrf.mxu0
        %v1048 = vadd.f32 0.0, %v1047
        %1049 = vmatprep.mubr.f32.mxu0 0.0
        %1050 = vmatmul.mubr.f32.gmra.mxu0 %v944
        %v1051 = vpop.f32.mrf.mxu0
        %v1052 = vadd.f32 0.0, %v1051
        %v1053 = vpop.f32.mrf.mxu0
        %v1054 = vadd.f32 0.0, %v1053
        %1055 = vmatprep.mubr.f32.mxu0 0.0
        %1056 = vmatmul.mubr.f32.gmra.mxu0 %v947
        %v1057 = vpop.f32.mrf.mxu0
        %v1058 = vadd.f32 0.0, %v1057
        %v1059 = vpop.f32.mrf.mxu0
        %v1060 = vadd.f32 0.0, %v1059
        %1061 = vdwg.mxu0
        %v1062 = vadd.f32 %v646, %v1016
        %v1063 = vadd.f32 %v648, %v1018
        %v1064 = vadd.f32 %v650, %v1022
        %v1065 = vadd.f32 %v652, %v1024
        %v1066 = vadd.f32 %v656, %v1028
        %v1067 = vadd.f32 %v658, %v1030
        %v1068 = vadd.f32 %v660, %v1034
        %v1069 = vadd.f32 %v662, %v1036
        %v1070 = vadd.f32 %v666, %v1040
        %v1071 = vadd.f32 %v668, %v1042
        %v1072 = vadd.f32 %v670, %v1046
        %v1073 = vadd.f32 %v672, %v1048
        %v1074 = vadd.f32 %v676, %v1052
        %v1075 = vadd.f32 %v678, %v1054
        %v1076 = vadd.f32 %v680, %v1058
        %v1077 = vadd.f32 %v682, %v1060
        %v1078 = vxor.u32 %v1062, 2147483648
        %v1079 = vxor.u32 %v1063, 2147483648
        %v1080 = vxor.u32 %v1064, 2147483648
        %v1081 = vxor.u32 %v1065, 2147483648
        %v1082 = vmul.f32 %v1078, 1.442695
        %v1083 = vpow.pop %v1082
        %v1084 = vmul.f32 %v1079, 1.442695
        %v1085 = vpow.pop %v1084
        %v1086 = vmul.f32 %v1080, 1.442695
        %v1087 = vpow.pop %v1086
        %v1088 = vmul.f32 %v1081, 1.442695
        %v1089 = vpow.pop %v1088
        %v1090 = vadd.f32 %v1083, 1.0
        %v1091 = vadd.f32 %v1085, 1.0
        %v1092 = vadd.f32 %v1087, 1.0
        %v1093 = vadd.f32 %v1089, 1.0
        %v1094 = vrcp.pop %v1090
        %v1095 = vmul.f32 1.0, %v1094
        %v1096 = vrcp.pop %v1091
        %v1097 = vmul.f32 1.0, %v1096
        %v1098 = vrcp.pop %v1092
        %v1099 = vmul.f32 1.0, %v1098
        %v1100 = vrcp.pop %v1093
        %v1101 = vmul.f32 1.0, %v1100
        %v1102 = vxor.u32 %v1066, 2147483648
        %v1103 = vxor.u32 %v1067, 2147483648
        %v1104 = vxor.u32 %v1068, 2147483648
        %v1105 = vxor.u32 %v1069, 2147483648
        %v1106 = vmul.f32 %v1102, 1.442695
        %v1107 = vpow.pop %v1106
        %v1108 = vmul.f32 %v1103, 1.442695
        %v1109 = vpow.pop %v1108
        %v1110 = vmul.f32 %v1104, 1.442695
        %v1111 = vpow.pop %v1110
        %v1112 = vmul.f32 %v1105, 1.442695
        %v1113 = vpow.pop %v1112
        %v1114 = vadd.f32 %v1107, 1.0
        %v1115 = vadd.f32 %v1109, 1.0
        %v1116 = vadd.f32 %v1111, 1.0
        %v1117 = vadd.f32 %v1113, 1.0
        %v1118 = vrcp.pop %v1114
        %v1119 = vmul.f32 1.0, %v1118
        %v1120 = vrcp.pop %v1115
        %v1121 = vmul.f32 1.0, %v1120
        %v1122 = vrcp.pop %v1116
        %v1123 = vmul.f32 1.0, %v1122
        %v1124 = vrcp.pop %v1117
        %v1125 = vmul.f32 1.0, %v1124
        %v1126 = vtanh.pop %v1070
        %v1127 = vtanh.pop %v1071
        %v1128 = vtanh.pop %v1072
        %v1129 = vtanh.pop %v1073
        %v1130 = vxor.u32 %v1074, 2147483648
        %v1131 = vxor.u32 %v1075, 2147483648
        %v1132 = vxor.u32 %v1076, 2147483648
        %v1133 = vxor.u32 %v1077, 2147483648
        %v1134 = vmul.f32 %v1130, 1.442695
        %v1135 = vpow.pop %v1134
        %v1136 = vmul.f32 %v1131, 1.442695
        %v1137 = vpow.pop %v1136
        %v1138 = vmul.f32 %v1132, 1.442695
        %v1139 = vpow.pop %v1138
        %v1140 = vmul.f32 %v1133, 1.442695
        %v1141 = vpow.pop %v1140
        %v1142 = vadd.f32 %v1135, 1.0
        %v1143 = vadd.f32 %v1137, 1.0
        %v1144 = vadd.f32 %v1139, 1.0
        %v1145 = vadd.f32 %v1141, 1.0
        %v1146 = vrcp.pop %v1142
        %v1147 = vmul.f32 1.0, %v1146
        %v1148 = vrcp.pop %v1143
        %v1149 = vmul.f32 1.0, %v1148
        %v1150 = vrcp.pop %v1144
        %v1151 = vmul.f32 1.0, %v1150
        %v1152 = vrcp.pop %v1145
        %v1153 = vmul.f32 1.0, %v1152
        %v1154 = vmul.f32 %v1119, 0.0
        %v1155 = vmul.f32 %v1121, 0.0
        %v1156 = vmul.f32 %v1123, 0.0
        %v1157 = vmul.f32 %v1125, 0.0
        %v1158 = vmul.f32 %v1095, %v1126
        %v1159 = vmul.f32 %v1097, %v1127
        %v1160 = vmul.f32 %v1099, %v1128
        %v1161 = vmul.f32 %v1101, %v1129
        %v1162 = vadd.f32 %v1154, %v1158
        %v1163 = vadd.f32 %v1155, %v1159
        %v1164 = vadd.f32 %v1156, %v1160
        %v1165 = vadd.f32 %v1157, %v1161
        %v1166 = vtanh.pop %v1162
        %v1167 = vtanh.pop %v1163
        %v1168 = vtanh.pop %v1164
        %v1169 = vtanh.pop %v1165
        %v1170 = vmul.f32 %v1147, %v1166
        %v1171 = vmul.f32 %v1149, %v1167
        %v1172 = vmul.f32 %v1151, %v1168
        %v1173 = vmul.f32 %v1153, %v1169
        %1174 = vmatprep.subr.mxu0 0.0
        %1175 = vmatpush1.msra.mxu0 0.0
        %1176 = vmatprep.subr.mxu0 0.0
        %1177 = vmatpush1.msra.mxu0 0.0
        %1178 = vmatprep.subr.mxu0 0.0
        %1179 = vmatpush1.msra.mxu0 0.0
        %1180 = vmatprep.subr.mxu0 0.0
        %1181 = vmatpush1.msra.mxu0 0.0
        %1182 = vmatprep.subr.mxu0 0.0
        %1183 = vmatpush1.msra.mxu0 0.0
        %1184 = vmatprep.subr.mxu0 0.0
        %1185 = vmatpush1.msra.mxu0 0.0
        %1186 = vmatprep.subr.mxu0 0.0
        %1187 = vmatpush1.msra.mxu0 0.0
        %1188 = vmatprep.subr.mxu0 0.0
        %1189 = vmatpush1.msra.mxu0 0.0
        %1190 = vmatprep.subr.mxu0 0.0
        %1191 = vmatpush1.msra.mxu0 0.0
        %1192 = vmatprep.subr.mxu0 0.0
        %1193 = vmatpush1.msra.mxu0 0.0
        %1194 = vmatprep.subr.mxu0 0.0
        %1195 = vmatpush1.msra.mxu0 0.0
        %1196 = vmatprep.subr.mxu0 0.0
        %1197 = vmatpush1.msra.mxu0 0.0
        %1198 = vmatprep.subr.mxu0 0.0
        %1199 = vmatpush1.msra.mxu0 0.0
        %1200 = vmatprep.subr.mxu0 0.0
        %1201 = vmatpush1.msra.mxu0 0.0
        %1202 = vmatprep.subr.mxu0 %v1173
        %1203 = vmatpush1.msra.mxu0 %v1172
        %1204 = vmatprep.subr.mxu0 %v1171
        %1205 = vmatpush1.msra.mxu0 %v1170
        %1206 = vmatprep.subr.mxu0 0.0
        %1207 = vmatpush2.msra.mxu0 0.0
        %1208 = vmatprep.subr.mxu0 0.0
        %1209 = vmatpush2.msra.mxu0 0.0
        %1210 = vmatprep.subr.mxu0 0.0
        %1211 = vmatpush2.msra.mxu0 0.0
        %1212 = vmatprep.subr.mxu0 0.0
        %1213 = vmatpush2.msra.mxu0 0.0
        %1214 = vmatprep.subr.mxu0 0.0
        %1215 = vmatpush2.msra.mxu0 0.0
        %1216 = vmatprep.subr.mxu0 0.0
        %1217 = vmatpush2.msra.mxu0 0.0
        %1218 = vmatprep.subr.mxu0 0.0
        %1219 = vmatpush2.msra.mxu0 0.0
        %1220 = vmatprep.subr.mxu0 0.0
        %1221 = vmatpush2.msra.mxu0 0.0
        %1222 = vmatprep.subr.mxu0 0.0
        %1223 = vmatpush2.msra.mxu0 0.0
        %1224 = vmatprep.subr.mxu0 0.0
        %1225 = vmatpush2.msra.mxu0 0.0
        %1226 = vmatprep.subr.mxu0 0.0
        %1227 = vmatpush2.msra.mxu0 0.0
        %1228 = vmatprep.subr.mxu0 0.0
        %1229 = vmatpush2.msra.mxu0 0.0
        %1230 = vmatprep.subr.mxu0 0.0
        %1231 = vmatpush2.msra.mxu0 0.0
        %1232 = vmatprep.subr.mxu0 0.0
        %1233 = vmatpush2.msra.mxu0 0.0
        %1234 = vmatprep.subr.mxu0 0.0
        %1235 = vmatpush2.msra.mxu0 0.0
        %1236 = vmatprep.subr.mxu0 0.0
        %1237 = vmatpush2.msra.mxu0 0.0
        %1238 = vmatprep.mubr.f32.mxu0 0.0
        %1239 = vmatmul.mubr.f32.gmra.mxu0 %v926
        %v1240 = vpop.f32.mrf.mxu0
        %v1241 = vadd.f32 0.0, %v1240
        %v1242 = vpop.f32.mrf.mxu0
        %v1243 = vadd.f32 0.0, %v1242
        %1244 = vmatprep.mubr.f32.mxu0 0.0
        %1245 = vmatmul.mubr.f32.gmra.mxu0 %v929
        %v1246 = vpop.f32.mrf.mxu0
        %v1247 = vadd.f32 0.0, %v1246
        %v1248 = vpop.f32.mrf.mxu0
        %v1249 = vadd.f32 0.0, %v1248
        %1250 = vmatprep.mubr.f32.mxu0 0.0
        %1251 = vmatmul.mubr.f32.gmra.mxu0 %v932
        %v1252 = vpop.f32.mrf.mxu0
        %v1253 = vadd.f32 0.0, %v1252
        %v1254 = vpop.f32.mrf.mxu0
        %v1255 = vadd.f32 0.0, %v1254
        %1256 = vmatprep.mubr.f32.mxu0 0.0
        %1257 = vmatmul.mubr.f32.gmra.mxu0 %v935
        %v1258 = vpop.f32.mrf.mxu0
        %v1259 = vadd.f32 0.0, %v1258
        %v1260 = vpop.f32.mrf.mxu0
        %v1261 = vadd.f32 0.0, %v1260
        %1262 = vmatprep.mubr.f32.mxu0 0.0
        %1263 = vmatmul.mubr.f32.gmra.mxu0 %v938
        %v1264 = vpop.f32.mrf.mxu0
        %v1265 = vadd.f32 0.0, %v1264
        %v1266 = vpop.f32.mrf.mxu0
        %v1267 = vadd.f32 0.0, %v1266
        %1268 = vmatprep.mubr.f32.mxu0 0.0
        %1269 = vmatmul.mubr.f32.gmra.mxu0 %v941
        %v1270 = vpop.f32.mrf.mxu0
        %v1271 = vadd.f32 0.0, %v1270
        %v1272 = vpop.f32.mrf.mxu0
        %v1273 = vadd.f32 0.0, %v1272
        %1274 = vmatprep.mubr.f32.mxu0 0.0
        %1275 = vmatmul.mubr.f32.gmra.mxu0 %v944
        %v1276 = vpop.f32.mrf.mxu0
        %v1277 = vadd.f32 0.0, %v1276
        %v1278 = vpop.f32.mrf.mxu0
        %v1279 = vadd.f32 0.0, %v1278
        %1280 = vmatprep.mubr.f32.mxu0 0.0
        %1281 = vmatmul.mubr.f32.gmra.mxu0 %v947
        %v1282 = vpop.f32.mrf.mxu0
        %v1283 = vadd.f32 0.0, %v1282
        %v1284 = vpop.f32.mrf.mxu0
        %v1285 = vadd.f32 0.0, %v1284
        %1286 = vdwg.mxu0
        %v1287 = vadd.f32 %v710, %v1241
        %v1288 = vadd.f32 %v712, %v1243
        %v1289 = vadd.f32 %v714, %v1247
        %v1290 = vadd.f32 %v716, %v1249
        %v1291 = vadd.f32 %v720, %v1253
        %v1292 = vadd.f32 %v722, %v1255
        %v1293 = vadd.f32 %v724, %v1259
        %v1294 = vadd.f32 %v726, %v1261
        %v1295 = vadd.f32 %v730, %v1265
        %v1296 = vadd.f32 %v732, %v1267
        %v1297 = vadd.f32 %v734, %v1271
        %v1298 = vadd.f32 %v736, %v1273
        %v1299 = vadd.f32 %v740, %v1277
        %v1300 = vadd.f32 %v742, %v1279
        %v1301 = vadd.f32 %v744, %v1283
        %v1302 = vadd.f32 %v746, %v1285
        %v1303 = vxor.u32 %v1287, 2147483648
        %v1304 = vxor.u32 %v1288, 2147483648
        %v1305 = vxor.u32 %v1289, 2147483648
        %v1306 = vxor.u32 %v1290, 2147483648
        %v1307 = vmul.f32 %v1303, 1.442695
        %v1308 = vpow.pop %v1307
        %v1309 = vmul.f32 %v1304, 1.442695
        %v1310 = vpow.pop %v1309
        %v1311 = vmul.f32 %v1305, 1.442695
        %v1312 = vpow.pop %v1311
        %v1313 = vmul.f32 %v1306, 1.442695
        %v1314 = vpow.pop %v1313
        %v1315 = vadd.f32 %v1308, 1.0
        %v1316 = vadd.f32 %v1310, 1.0
        %v1317 = vadd.f32 %v1312, 1.0
        %v1318 = vadd.f32 %v1314, 1.0
        %v1319 = vrcp.pop %v1315
        %v1320 = vmul.f32 1.0, %v1319
        %v1321 = vrcp.pop %v1316
        %v1322 = vmul.f32 1.0, %v1321
        %v1323 = vrcp.pop %v1317
        %v1324 = vmul.f32 1.0, %v1323
        %v1325 = vrcp.pop %v1318
        %v1326 = vmul.f32 1.0, %v1325
        %v1327 = vxor.u32 %v1291, 2147483648
        %v1328 = vxor.u32 %v1292, 2147483648
        %v1329 = vxor.u32 %v1293, 2147483648
        %v1330 = vxor.u32 %v1294, 2147483648
        %v1331 = vmul.f32 %v1327, 1.442695
        %v1332 = vpow.pop %v1331
        %v1333 = vmul.f32 %v1328, 1.442695
        %v1334 = vpow.pop %v1333
        %v1335 = vmul.f32 %v1329, 1.442695
        %v1336 = vpow.pop %v1335
        %v1337 = vmul.f32 %v1330, 1.442695
        %v1338 = vpow.pop %v1337
        %v1339 = vadd.f32 %v1332, 1.0
        %v1340 = vadd.f32 %v1334, 1.0
        %v1341 = vadd.f32 %v1336, 1.0
        %v1342 = vadd.f32 %v1338, 1.0
        %v1343 = vrcp.pop %v1339
        %v1344 = vmul.f32 1.0, %v1343
        %v1345 = vrcp.pop %v1340
        %v1346 = vmul.f32 1.0, %v1345
        %v1347 = vrcp.pop %v1341
        %v1348 = vmul.f32 1.0, %v1347
        %v1349 = vrcp.pop %v1342
        %v1350 = vmul.f32 1.0, %v1349
        %v1351 = vtanh.pop %v1295
        %v1352 = vtanh.pop %v1296
        %v1353 = vtanh.pop %v1297
        %v1354 = vtanh.pop %v1298
        %v1355 = vxor.u32 %v1299, 2147483648
        %v1356 = vxor.u32 %v1300, 2147483648
        %v1357 = vxor.u32 %v1301, 2147483648
        %v1358 = vxor.u32 %v1302, 2147483648
        %v1359 = vmul.f32 %v1355, 1.442695
        %v1360 = vpow.pop %v1359
        %v1361 = vmul.f32 %v1356, 1.442695
        %v1362 = vpow.pop %v1361
        %v1363 = vmul.f32 %v1357, 1.442695
        %v1364 = vpow.pop %v1363
        %v1365 = vmul.f32 %v1358, 1.442695
        %v1366 = vpow.pop %v1365
        %v1367 = vadd.f32 %v1360, 1.0
        %v1368 = vadd.f32 %v1362, 1.0
        %v1369 = vadd.f32 %v1364, 1.0
        %v1370 = vadd.f32 %v1366, 1.0
        %v1371 = vrcp.pop %v1367
        %v1372 = vmul.f32 1.0, %v1371
        %v1373 = vrcp.pop %v1368
        %v1374 = vmul.f32 1.0, %v1373
        %v1375 = vrcp.pop %v1369
        %v1376 = vmul.f32 1.0, %v1375
        %v1377 = vrcp.pop %v1370
        %v1378 = vmul.f32 1.0, %v1377
        %v1379 = vmul.f32 %v1344, %v1162
        %v1380 = vmul.f32 %v1346, %v1163
        %v1381 = vmul.f32 %v1348, %v1164
        %v1382 = vmul.f32 %v1350, %v1165
        %v1383 = vmul.f32 %v1320, %v1351
        %v1384 = vmul.f32 %v1322, %v1352
        %v1385 = vmul.f32 %v1324, %v1353
        %v1386 = vmul.f32 %v1326, %v1354
        %v1387 = vadd.f32 %v1379, %v1383
        %v1388 = vadd.f32 %v1380, %v1384
        %v1389 = vadd.f32 %v1381, %v1385
        %v1390 = vadd.f32 %v1382, %v1386
        %v1391 = vtanh.pop %v1387
        %v1392 = vtanh.pop %v1388
        %v1393 = vtanh.pop %v1389
        %v1394 = vtanh.pop %v1390
        %v1395 = vmul.f32 %v1372, %v1391
        %v1396 = vmul.f32 %v1374, %v1392
        %v1397 = vmul.f32 %v1376, %v1393
        %v1398 = vmul.f32 %v1378, %v1394
        %1399 = vmatprep.subr.mxu0 0.0
        %1400 = vmatpush1.msra.mxu0 0.0
        %1401 = vmatprep.subr.mxu0 0.0
        %1402 = vmatpush1.msra.mxu0 0.0
        %1403 = vmatprep.subr.mxu0 0.0
        %1404 = vmatpush1.msra.mxu0 0.0
        %1405 = vmatprep.subr.mxu0 0.0
        %1406 = vmatpush1.msra.mxu0 0.0
        %1407 = vmatprep.subr.mxu0 0.0
        %1408 = vmatpush1.msra.mxu0 0.0
        %1409 = vmatprep.subr.mxu0 0.0
        %1410 = vmatpush1.msra.mxu0 0.0
        %1411 = vmatprep.subr.mxu0 0.0
        %1412 = vmatpush1.msra.mxu0 0.0
        %1413 = vmatprep.subr.mxu0 0.0
        %1414 = vmatpush1.msra.mxu0 0.0
        %1415 = vmatprep.subr.mxu0 0.0
        %1416 = vmatpush1.msra.mxu0 0.0
        %1417 = vmatprep.subr.mxu0 0.0
        %1418 = vmatpush1.msra.mxu0 0.0
        %1419 = vmatprep.subr.mxu0 0.0
        %1420 = vmatpush1.msra.mxu0 0.0
        %1421 = vmatprep.subr.mxu0 0.0
        %1422 = vmatpush1.msra.mxu0 0.0
        %1423 = vmatprep.subr.mxu0 0.0
        %1424 = vmatpush1.msra.mxu0 0.0
        %1425 = vmatprep.subr.mxu0 0.0
        %1426 = vmatpush1.msra.mxu0 0.0
        %1427 = vmatprep.subr.mxu0 %v1398
        %1428 = vmatpush1.msra.mxu0 %v1397
        %1429 = vmatprep.subr.mxu0 %v1396
        %1430 = vmatpush1.msra.mxu0 %v1395
        %1431 = vmatprep.subr.mxu0 0.0
        %1432 = vmatpush2.msra.mxu0 0.0
        %1433 = vmatprep.subr.mxu0 0.0
        %1434 = vmatpush2.msra.mxu0 0.0
        %1435 = vmatprep.subr.mxu0 0.0
        %1436 = vmatpush2.msra.mxu0 0.0
        %1437 = vmatprep.subr.mxu0 0.0
        %1438 = vmatpush2.msra.mxu0 0.0
        %1439 = vmatprep.subr.mxu0 0.0
        %1440 = vmatpush2.msra.mxu0 0.0
        %1441 = vmatprep.subr.mxu0 0.0
        %1442 = vmatpush2.msra.mxu0 0.0
        %1443 = vmatprep.subr.mxu0 0.0
        %1444 = vmatpush2.msra.mxu0 0.0
        %1445 = vmatprep.subr.mxu0 0.0
        %1446 = vmatpush2.msra.mxu0 0.0
        %1447 = vmatprep.subr.mxu0 0.0
        %1448 = vmatpush2.msra.mxu0 0.0
        %1449 = vmatprep.subr.mxu0 0.0
        %1450 = vmatpush2.msra.mxu0 0.0
        %1451 = vmatprep.subr.mxu0 0.0
        %1452 = vmatpush2.msra.mxu0 0.0
        %1453 = vmatprep.subr.mxu0 0.0
        %1454 = vmatpush2.msra.mxu0 0.0
        %1455 = vmatprep.subr.mxu0 0.0
        %1456 = vmatpush2.msra.mxu0 0.0
        %1457 = vmatprep.subr.mxu0 0.0
        %1458 = vmatpush2.msra.mxu0 0.0
        %1459 = vmatprep.subr.mxu0 0.0
        %1460 = vmatpush2.msra.mxu0 0.0
        %1461 = vmatprep.subr.mxu0 0.0
        %1462 = vmatpush2.msra.mxu0 0.0
        %1463 = vmatprep.mubr.f32.mxu0 0.0
        %1464 = vmatmul.mubr.f32.gmra.mxu0 %v926
        %v1465 = vpop.f32.mrf.mxu0
        %v1466 = vadd.f32 0.0, %v1465
        %v1467 = vpop.f32.mrf.mxu0
        %v1468 = vadd.f32 0.0, %v1467
        %1469 = vmatprep.mubr.f32.mxu0 0.0
        %1470 = vmatmul.mubr.f32.gmra.mxu0 %v929
        %v1471 = vpop.f32.mrf.mxu0
        %v1472 = vadd.f32 0.0, %v1471
        %v1473 = vpop.f32.mrf.mxu0
        %v1474 = vadd.f32 0.0, %v1473
        %1475 = vmatprep.mubr.f32.mxu0 0.0
        %1476 = vmatmul.mubr.f32.gmra.mxu0 %v932
        %v1477 = vpop.f32.mrf.mxu0
        %v1478 = vadd.f32 0.0, %v1477
        %v1479 = vpop.f32.mrf.mxu0
        %v1480 = vadd.f32 0.0, %v1479
        %1481 = vmatprep.mubr.f32.mxu0 0.0
        %1482 = vmatmul.mubr.f32.gmra.mxu0 %v935
        %v1483 = vpop.f32.mrf.mxu0
        %v1484 = vadd.f32 0.0, %v1483
        %v1485 = vpop.f32.mrf.mxu0
        %v1486 = vadd.f32 0.0, %v1485
        %1487 = vmatprep.mubr.f32.mxu0 0.0
        %1488 = vmatmul.mubr.f32.gmra.mxu0 %v938
        %v1489 = vpop.f32.mrf.mxu0
        %v1490 = vadd.f32 0.0, %v1489
        %v1491 = vpop.f32.mrf.mxu0
        %v1492 = vadd.f32 0.0, %v1491
        %1493 = vmatprep.mubr.f32.mxu0 0.0
        %1494 = vmatmul.mubr.f32.gmra.mxu0 %v941
        %v1495 = vpop.f32.mrf.mxu0
        %v1496 = vadd.f32 0.0, %v1495
        %v1497 = vpop.f32.mrf.mxu0
        %v1498 = vadd.f32 0.0, %v1497
        %1499 = vmatprep.mubr.f32.mxu0 0.0
        %1500 = vmatmul.mubr.f32.gmra.mxu0 %v944
        %v1501 = vpop.f32.mrf.mxu0
        %v1502 = vadd.f32 0.0, %v1501
        %v1503 = vpop.f32.mrf.mxu0
        %v1504 = vadd.f32 0.0, %v1503
        %1505 = vmatprep.mubr.f32.mxu0 0.0
        %1506 = vmatmul.mubr.f32.gmra.mxu0 %v947
        %v1507 = vpop.f32.mrf.mxu0
        %v1508 = vadd.f32 0.0, %v1507
        %v1509 = vpop.f32.mrf.mxu0
        %v1510 = vadd.f32 0.0, %v1509
        %1511 = vdwg.mxu0
        %v1512 = vadd.f32 %v774, %v1466
        %v1513 = vadd.f32 %v776, %v1468
        %v1514 = vadd.f32 %v778, %v1472
        %v1515 = vadd.f32 %v780, %v1474
        %v1516 = vadd.f32 %v784, %v1478
        %v1517 = vadd.f32 %v786, %v1480
        %v1518 = vadd.f32 %v788, %v1484
        %v1519 = vadd.f32 %v790, %v1486
        %v1520 = vadd.f32 %v794, %v1490
        %v1521 = vadd.f32 %v796, %v1492
        %v1522 = vadd.f32 %v798, %v1496
        %v1523 = vadd.f32 %v800, %v1498
        %v1524 = vadd.f32 %v804, %v1502
        %v1525 = vadd.f32 %v806, %v1504
        %v1526 = vadd.f32 %v808, %v1508
        %v1527 = vadd.f32 %v810, %v1510
        %v1528 = vxor.u32 %v1512, 2147483648
        %v1529 = vxor.u32 %v1513, 2147483648
        %v1530 = vxor.u32 %v1514, 2147483648
        %v1531 = vxor.u32 %v1515, 2147483648
        %v1532 = vmul.f32 %v1528, 1.442695
        %v1533 = vpow.pop %v1532
        %v1534 = vmul.f32 %v1529, 1.442695
        %v1535 = vpow.pop %v1534
        %v1536 = vmul.f32 %v1530, 1.442695
        %v1537 = vpow.pop %v1536
        %v1538 = vmul.f32 %v1531, 1.442695
        %v1539 = vpow.pop %v1538
        %v1540 = vadd.f32 %v1533, 1.0
        %v1541 = vadd.f32 %v1535, 1.0
        %v1542 = vadd.f32 %v1537, 1.0
        %v1543 = vadd.f32 %v1539, 1.0
        %v1544 = vrcp.pop %v1540
        %v1545 = vmul.f32 1.0, %v1544
        %v1546 = vrcp.pop %v1541
        %v1547 = vmul.f32 1.0, %v1546
        %v1548 = vrcp.pop %v1542
        %v1549 = vmul.f32 1.0, %v1548
        %v1550 = vrcp.pop %v1543
        %v1551 = vmul.f32 1.0, %v1550
        %v1552 = vxor.u32 %v1516, 2147483648
        %v1553 = vxor.u32 %v1517, 2147483648
        %v1554 = vxor.u32 %v1518, 2147483648
        %v1555 = vxor.u32 %v1519, 2147483648
        %v1556 = vmul.f32 %v1552, 1.442695
        %v1557 = vpow.pop %v1556
        %v1558 = vmul.f32 %v1553, 1.442695
        %v1559 = vpow.pop %v1558
        %v1560 = vmul.f32 %v1554, 1.442695
        %v1561 = vpow.pop %v1560
        %v1562 = vmul.f32 %v1555, 1.442695
        %v1563 = vpow.pop %v1562
        %v1564 = vadd.f32 %v1557, 1.0
        %v1565 = vadd.f32 %v1559, 1.0
        %v1566 = vadd.f32 %v1561, 1.0
        %v1567 = vadd.f32 %v1563, 1.0
        %v1568 = vrcp.pop %v1564
        %v1569 = vmul.f32 1.0, %v1568
        %v1570 = vrcp.pop %v1565
        %v1571 = vmul.f32 1.0, %v1570
        %v1572 = vrcp.pop %v1566
        %v1573 = vmul.f32 1.0, %v1572
        %v1574 = vrcp.pop %v1567
        %v1575 = vmul.f32 1.0, %v1574
        %v1576 = vtanh.pop %v1520
        %v1577 = vtanh.pop %v1521
        %v1578 = vtanh.pop %v1522
        %v1579 = vtanh.pop %v1523
        %v1580 = vxor.u32 %v1524, 2147483648
        %v1581 = vxor.u32 %v1525, 2147483648
        %v1582 = vxor.u32 %v1526, 2147483648
        %v1583 = vxor.u32 %v1527, 2147483648
        %v1584 = vmul.f32 %v1580, 1.442695
        %v1585 = vpow.pop %v1584
        %v1586 = vmul.f32 %v1581, 1.442695
        %v1587 = vpow.pop %v1586
        %v1588 = vmul.f32 %v1582, 1.442695
        %v1589 = vpow.pop %v1588
        %v1590 = vmul.f32 %v1583, 1.442695
        %v1591 = vpow.pop %v1590
        %v1592 = vadd.f32 %v1585, 1.0
        %v1593 = vadd.f32 %v1587, 1.0
        %v1594 = vadd.f32 %v1589, 1.0
        %v1595 = vadd.f32 %v1591, 1.0
        %v1596 = vrcp.pop %v1592
        %v1597 = vmul.f32 1.0, %v1596
        %v1598 = vrcp.pop %v1593
        %v1599 = vmul.f32 1.0, %v1598
        %v1600 = vrcp.pop %v1594
        %v1601 = vmul.f32 1.0, %v1600
        %v1602 = vrcp.pop %v1595
        %v1603 = vmul.f32 1.0, %v1602
        %v1604 = vmul.f32 %v1569, %v1387
        %v1605 = vmul.f32 %v1571, %v1388
        %v1606 = vmul.f32 %v1573, %v1389
        %v1607 = vmul.f32 %v1575, %v1390
        %v1608 = vmul.f32 %v1545, %v1576
        %v1609 = vmul.f32 %v1547, %v1577
        %v1610 = vmul.f32 %v1549, %v1578
        %v1611 = vmul.f32 %v1551, %v1579
        %v1612 = vadd.f32 %v1604, %v1608
        %v1613 = vadd.f32 %v1605, %v1609
        %v1614 = vadd.f32 %v1606, %v1610
        %v1615 = vadd.f32 %v1607, %v1611
        %v1616 = vtanh.pop %v1612
        %v1617 = vtanh.pop %v1613
        %v1618 = vtanh.pop %v1614
        %v1619 = vtanh.pop %v1615
        %v1620 = vmul.f32 %v1597, %v1616
        %v1621 = vmul.f32 %v1599, %v1617
        %v1622 = vmul.f32 %v1601, %v1618
        %v1623 = vmul.f32 %v1603, %v1619
        %1624 = vmatprep.subr.mxu0 0.0
        %1625 = vmatpush1.msra.mxu0 0.0
        %1626 = vmatprep.subr.mxu0 0.0
        %1627 = vmatpush1.msra.mxu0 0.0
        %1628 = vmatprep.subr.mxu0 0.0
        %1629 = vmatpush1.msra.mxu0 0.0
        %1630 = vmatprep.subr.mxu0 0.0
        %1631 = vmatpush1.msra.mxu0 0.0
        %1632 = vmatprep.subr.mxu0 0.0
        %1633 = vmatpush1.msra.mxu0 0.0
        %1634 = vmatprep.subr.mxu0 0.0
        %1635 = vmatpush1.msra.mxu0 0.0
        %1636 = vmatprep.subr.mxu0 0.0
        %1637 = vmatpush1.msra.mxu0 0.0
        %1638 = vmatprep.subr.mxu0 0.0
        %1639 = vmatpush1.msra.mxu0 0.0
        %1640 = vmatprep.subr.mxu0 0.0
        %1641 = vmatpush1.msra.mxu0 0.0
        %1642 = vmatprep.subr.mxu0 0.0
        %1643 = vmatpush1.msra.mxu0 0.0
        %1644 = vmatprep.subr.mxu0 0.0
        %1645 = vmatpush1.msra.mxu0 0.0
        %1646 = vmatprep.subr.mxu0 0.0
        %1647 = vmatpush1.msra.mxu0 0.0
        %1648 = vmatprep.subr.mxu0 0.0
        %1649 = vmatpush1.msra.mxu0 0.0
        %1650 = vmatprep.subr.mxu0 0.0
        %1651 = vmatpush1.msra.mxu0 0.0
        %1652 = vmatprep.subr.mxu0 %v1623
        %1653 = vmatpush1.msra.mxu0 %v1622
        %1654 = vmatprep.subr.mxu0 %v1621
        %1655 = vmatpush1.msra.mxu0 %v1620
        %1656 = vmatprep.subr.mxu0 0.0
        %1657 = vmatpush2.msra.mxu0 0.0
        %1658 = vmatprep.subr.mxu0 0.0
        %1659 = vmatpush2.msra.mxu0 0.0
        %1660 = vmatprep.subr.mxu0 0.0
        %1661 = vmatpush2.msra.mxu0 0.0
        %1662 = vmatprep.subr.mxu0 0.0
        %1663 = vmatpush2.msra.mxu0 0.0
        %1664 = vmatprep.subr.mxu0 0.0
        %1665 = vmatpush2.msra.mxu0 0.0
        %1666 = vmatprep.subr.mxu0 0.0
        %1667 = vmatpush2.msra.mxu0 0.0
        %1668 = vmatprep.subr.mxu0 0.0
        %1669 = vmatpush2.msra.mxu0 0.0
        %1670 = vmatprep.subr.mxu0 0.0
        %1671 = vmatpush2.msra.mxu0 0.0
        %1672 = vmatprep.subr.mxu0 0.0
        %1673 = vmatpush2.msra.mxu0 0.0
        %1674 = vmatprep.subr.mxu0 0.0
        %1675 = vmatpush2.msra.mxu0 0.0
        %1676 = vmatprep.subr.mxu0 0.0
        %1677 = vmatpush2.msra.mxu0 0.0
        %1678 = vmatprep.subr.mxu0 0.0
        %1679 = vmatpush2.msra.mxu0 0.0
        %1680 = vmatprep.subr.mxu0 0.0
        %1681 = vmatpush2.msra.mxu0 0.0
        %1682 = vmatprep.subr.mxu0 0.0
        %1683 = vmatpush2.msra.mxu0 0.0
        %1684 = vmatprep.subr.mxu0 0.0
        %1685 = vmatpush2.msra.mxu0 0.0
        %1686 = vmatprep.subr.mxu0 0.0
        %1687 = vmatpush2.msra.mxu0 0.0
        %1688 = vmatprep.mubr.f32.mxu0 0.0
        %1689 = vmatmul.mubr.f32.gmra.mxu0 %v926
        %v1690 = vpop.f32.mrf.mxu0
        %v1691 = vadd.f32 0.0, %v1690
        %v1692 = vpop.f32.mrf.mxu0
        %v1693 = vadd.f32 0.0, %v1692
        %1694 = vmatprep.mubr.f32.mxu0 0.0
        %1695 = vmatmul.mubr.f32.gmra.mxu0 %v929
        %v1696 = vpop.f32.mrf.mxu0
        %v1697 = vadd.f32 0.0, %v1696
        %v1698 = vpop.f32.mrf.mxu0
        %v1699 = vadd.f32 0.0, %v1698
        %1700 = vmatprep.mubr.f32.mxu0 0.0
        %1701 = vmatmul.mubr.f32.gmra.mxu0 %v932
        %v1702 = vpop.f32.mrf.mxu0
        %v1703 = vadd.f32 0.0, %v1702
        %v1704 = vpop.f32.mrf.mxu0
        %v1705 = vadd.f32 0.0, %v1704
        %1706 = vmatprep.mubr.f32.mxu0 0.0
        %1707 = vmatmul.mubr.f32.gmra.mxu0 %v935
        %v1708 = vpop.f32.mrf.mxu0
        %v1709 = vadd.f32 0.0, %v1708
        %v1710 = vpop.f32.mrf.mxu0
        %v1711 = vadd.f32 0.0, %v1710
        %1712 = vmatprep.mubr.f32.mxu0 0.0
        %1713 = vmatmul.mubr.f32.gmra.mxu0 %v938
        %v1714 = vpop.f32.mrf.mxu0
        %v1715 = vadd.f32 0.0, %v1714
        %v1716 = vpop.f32.mrf.mxu0
        %v1717 = vadd.f32 0.0, %v1716
        %1718 = vmatprep.mubr.f32.mxu0 0.0
        %1719 = vmatmul.mubr.f32.gmra.mxu0 %v941
        %v1720 = vpop.f32.mrf.mxu0
        %v1721 = vadd.f32 0.0, %v1720
        %v1722 = vpop.f32.mrf.mxu0
        %v1723 = vadd.f32 0.0, %v1722
        %1724 = vmatprep.mubr.f32.mxu0 0.0
        %1725 = vmatmul.mubr.f32.gmra.mxu0 %v944
        %v1726 = vpop.f32.mrf.mxu0
        %v1727 = vadd.f32 0.0, %v1726
        %v1728 = vpop.f32.mrf.mxu0
        %v1729 = vadd.f32 0.0, %v1728
        %1730 = vmatprep.mubr.f32.mxu0 0.0
        %1731 = vmatmul.mubr.f32.gmra.mxu0 %v947
        %v1732 = vpop.f32.mrf.mxu0
        %v1733 = vadd.f32 0.0, %v1732
        %v1734 = vpop.f32.mrf.mxu0
        %v1735 = vadd.f32 0.0, %v1734
        %1736 = vdwg.mxu0
        %v1737 = vadd.f32 %v838, %v1691
        %v1738 = vadd.f32 %v840, %v1693
        %v1739 = vadd.f32 %v842, %v1697
        %v1740 = vadd.f32 %v844, %v1699
        %v1741 = vadd.f32 %v848, %v1703
        %v1742 = vadd.f32 %v850, %v1705
        %v1743 = vadd.f32 %v852, %v1709
        %v1744 = vadd.f32 %v854, %v1711
        %v1745 = vadd.f32 %v858, %v1715
        %v1746 = vadd.f32 %v860, %v1717
        %v1747 = vadd.f32 %v862, %v1721
        %v1748 = vadd.f32 %v864, %v1723
        %v1749 = vadd.f32 %v868, %v1727
        %v1750 = vadd.f32 %v870, %v1729
        %v1751 = vadd.f32 %v872, %v1733
        %v1752 = vadd.f32 %v874, %v1735
        %v1753 = vxor.u32 %v1737, 2147483648
        %v1754 = vxor.u32 %v1738, 2147483648
        %v1755 = vxor.u32 %v1739, 2147483648
        %v1756 = vxor.u32 %v1740, 2147483648
        %v1757 = vmul.f32 %v1753, 1.442695
        %v1758 = vpow.pop %v1757
        %v1759 = vmul.f32 %v1754, 1.442695
        %v1760 = vpow.pop %v1759
        %v1761 = vmul.f32 %v1755, 1.442695
        %v1762 = vpow.pop %v1761
        %v1763 = vmul.f32 %v1756, 1.442695
        %v1764 = vpow.pop %v1763
        %v1765 = vadd.f32 %v1758, 1.0
        %v1766 = vadd.f32 %v1760, 1.0
        %v1767 = vadd.f32 %v1762, 1.0
        %v1768 = vadd.f32 %v1764, 1.0
        %v1769 = vrcp.pop %v1765
        %v1770 = vmul.f32 1.0, %v1769
        %v1771 = vrcp.pop %v1766
        %v1772 = vmul.f32 1.0, %v1771
        %v1773 = vrcp.pop %v1767
        %v1774 = vmul.f32 1.0, %v1773
        %v1775 = vrcp.pop %v1768
        %v1776 = vmul.f32 1.0, %v1775
        %v1777 = vxor.u32 %v1741, 2147483648
        %v1778 = vxor.u32 %v1742, 2147483648
        %v1779 = vxor.u32 %v1743, 2147483648
        %v1780 = vxor.u32 %v1744, 2147483648
        %v1781 = vmul.f32 %v1777, 1.442695
        %v1782 = vpow.pop %v1781
        %v1783 = vmul.f32 %v1778, 1.442695
        %v1784 = vpow.pop %v1783
        %v1785 = vmul.f32 %v1779, 1.442695
        %v1786 = vpow.pop %v1785
        %v1787 = vmul.f32 %v1780, 1.442695
        %v1788 = vpow.pop %v1787
        %v1789 = vadd.f32 %v1782, 1.0
        %v1790 = vadd.f32 %v1784, 1.0
        %v1791 = vadd.f32 %v1786, 1.0
        %v1792 = vadd.f32 %v1788, 1.0
        %v1793 = vrcp.pop %v1789
        %v1794 = vmul.f32 1.0, %v1793
        %v1795 = vrcp.pop %v1790
        %v1796 = vmul.f32 1.0, %v1795
        %v1797 = vrcp.pop %v1791
        %v1798 = vmul.f32 1.0, %v1797
        %v1799 = vrcp.pop %v1792
        %v1800 = vmul.f32 1.0, %v1799
        %v1801 = vtanh.pop %v1745
        %v1802 = vtanh.pop %v1746
        %v1803 = vtanh.pop %v1747
        %v1804 = vtanh.pop %v1748
        %v1805 = vxor.u32 %v1749, 2147483648
        %v1806 = vxor.u32 %v1750, 2147483648
        %v1807 = vxor.u32 %v1751, 2147483648
        %v1808 = vxor.u32 %v1752, 2147483648
        %v1809 = vmul.f32 %v1805, 1.442695
        %v1810 = vpow.pop %v1809
        %v1811 = vmul.f32 %v1806, 1.442695
        %v1812 = vpow.pop %v1811
        %v1813 = vmul.f32 %v1807, 1.442695
        %v1814 = vpow.pop %v1813
        %v1815 = vmul.f32 %v1808, 1.442695
        %v1816 = vpow.pop %v1815
        %v1817 = vadd.f32 %v1810, 1.0
        %v1818 = vadd.f32 %v1812, 1.0
        %v1819 = vadd.f32 %v1814, 1.0
        %v1820 = vadd.f32 %v1816, 1.0
        %v1821 = vrcp.pop %v1817
        %v1822 = vmul.f32 1.0, %v1821
        %v1823 = vrcp.pop %v1818
        %v1824 = vmul.f32 1.0, %v1823
        %v1825 = vrcp.pop %v1819
        %v1826 = vmul.f32 1.0, %v1825
        %v1827 = vrcp.pop %v1820
        %v1828 = vmul.f32 1.0, %v1827
        %v1829 = vmul.f32 %v1794, %v1612
        %v1830 = vmul.f32 %v1796, %v1613
        %v1831 = vmul.f32 %v1798, %v1614
        %v1832 = vmul.f32 %v1800, %v1615
        %v1833 = vmul.f32 %v1770, %v1801
        %v1834 = vmul.f32 %v1772, %v1802
        %v1835 = vmul.f32 %v1774, %v1803
        %v1836 = vmul.f32 %v1776, %v1804
        %v1837 = vadd.f32 %v1829, %v1833
        %v1838 = vadd.f32 %v1830, %v1834
        %v1839 = vadd.f32 %v1831, %v1835
        %v1840 = vadd.f32 %v1832, %v1836
        %v1841 = vtanh.pop %v1837
        %v1842 = vtanh.pop %v1838
        %v1843 = vtanh.pop %v1839
        %v1844 = vtanh.pop %v1840
        %v1845 = vmul.f32 %v1822, %v1841
        %v1846 = vmul.f32 %v1824, %v1842
        %v1847 = vmul.f32 %v1826, %v1843
        %v1848 = vmul.f32 %v1828, %v1844
        %v1849 = vxor.u32 %v878, 2147483648
        %v1850 = vxor.u32 %v880, 2147483648
        %v1851 = vxor.u32 %v882, 2147483648
        %v1852 = vxor.u32 %v884, 2147483648
        %v1853 = vmul.f32 %v1849, 1.442695
        %v1854 = vpow.pop %v1853
        %v1855 = vmul.f32 %v1850, 1.442695
        %v1856 = vpow.pop %v1855
        %v1857 = vmul.f32 %v1851, 1.442695
        %v1858 = vpow.pop %v1857
        %v1859 = vmul.f32 %v1852, 1.442695
        %v1860 = vpow.pop %v1859
        %v1861 = vadd.f32 %v1854, 1.0
        %v1862 = vadd.f32 %v1856, 1.0
        %v1863 = vadd.f32 %v1858, 1.0
        %v1864 = vadd.f32 %v1860, 1.0
        %v1865 = vrcp.pop %v1861
        %v1866 = vmul.f32 1.0, %v1865
        %v1867 = vrcp.pop %v1862
        %v1868 = vmul.f32 1.0, %v1867
        %v1869 = vrcp.pop %v1863
        %v1870 = vmul.f32 1.0, %v1869
        %v1871 = vrcp.pop %v1864
        %v1872 = vmul.f32 1.0, %v1871
        %v1873 = vxor.u32 %v888, 2147483648
        %v1874 = vxor.u32 %v890, 2147483648
        %v1875 = vxor.u32 %v892, 2147483648
        %v1876 = vxor.u32 %v894, 2147483648
        %v1877 = vmul.f32 %v1873, 1.442695
        %v1878 = vpow.pop %v1877
        %v1879 = vmul.f32 %v1874, 1.442695
        %v1880 = vpow.pop %v1879
        %v1881 = vmul.f32 %v1875, 1.442695
        %v1882 = vpow.pop %v1881
        %v1883 = vmul.f32 %v1876, 1.442695
        %v1884 = vpow.pop %v1883
        %v1885 = vadd.f32 %v1878, 1.0
        %v1886 = vadd.f32 %v1880, 1.0
        %v1887 = vadd.f32 %v1882, 1.0
        %v1888 = vadd.f32 %v1884, 1.0
        %v1889 = vrcp.pop %v1885
        %v1890 = vmul.f32 1.0, %v1889
        %v1891 = vrcp.pop %v1886
        %v1892 = vmul.f32 1.0, %v1891
        %v1893 = vrcp.pop %v1887
        %v1894 = vmul.f32 1.0, %v1893
        %v1895 = vrcp.pop %v1888
        %v1896 = vmul.f32 1.0, %v1895
        %v1897 = vtanh.pop %v898
        %v1898 = vtanh.pop %v900
        %v1899 = vtanh.pop %v902
        %v1900 = vtanh.pop %v904
        %v1901 = vxor.u32 %v908, 2147483648
        %v1902 = vxor.u32 %v910, 2147483648
        %v1903 = vxor.u32 %v912, 2147483648
        %v1904 = vxor.u32 %v914, 2147483648
        %v1905 = vmul.f32 %v1901, 1.442695
        %v1906 = vpow.pop %v1905
        %v1907 = vmul.f32 %v1902, 1.442695
        %v1908 = vpow.pop %v1907
        %v1909 = vmul.f32 %v1903, 1.442695
        %v1910 = vpow.pop %v1909
        %v1911 = vmul.f32 %v1904, 1.442695
        %v1912 = vpow.pop %v1911
        %v1913 = vadd.f32 %v1906, 1.0
        %v1914 = vadd.f32 %v1908, 1.0
        %v1915 = vadd.f32 %v1910, 1.0
        %v1916 = vadd.f32 %v1912, 1.0
        %v1917 = vrcp.pop %v1913
        %v1918 = vmul.f32 1.0, %v1917
        %v1919 = vrcp.pop %v1914
        %v1920 = vmul.f32 1.0, %v1919
        %v1921 = vrcp.pop %v1915
        %v1922 = vmul.f32 1.0, %v1921
        %v1923 = vrcp.pop %v1916
        %v1924 = vmul.f32 1.0, %v1923
        %v1925 = vmul.f32 %v1890, 0.0
        %v1926 = vmul.f32 %v1892, 0.0
        %v1927 = vmul.f32 %v1894, 0.0
        %v1928 = vmul.f32 %v1896, 0.0
        %v1929 = vmul.f32 %v1866, %v1897
        %v1930 = vmul.f32 %v1868, %v1898
        %v1931 = vmul.f32 %v1870, %v1899
        %v1932 = vmul.f32 %v1872, %v1900
        %v1933 = vadd.f32 %v1925, %v1929
        %v1934 = vadd.f32 %v1926, %v1930
        %v1935 = vadd.f32 %v1927, %v1931
        %v1936 = vadd.f32 %v1928, %v1932
        %v1937 = vtanh.pop %v1933
        %v1938 = vtanh.pop %v1934
        %v1939 = vtanh.pop %v1935
        %v1940 = vtanh.pop %v1936
        %v1941 = vmul.f32 %v1918, %v1937
        %v1942 = vmul.f32 %v1920, %v1938
        %v1943 = vmul.f32 %v1922, %v1939
        %v1944 = vmul.f32 %v1924, %v1940
        %v1945 = vld [vmem:[%s3] sm:$0x1]
        %vm1946 = vcmask 269312
        %v1948 = vsel %vm1946, %v1945, 0
        %v1951 = vsel %vm602, 1.0, 0
        %1953 = vmatprep.subr.mxu0 0.0
        %1954 = vmatpush1.msra.mxu0 0.0
        %1955 = vmatprep.subr.mxu0 0.0
        %1956 = vmatpush1.msra.mxu0 0.0
        %1957 = vmatprep.subr.mxu0 0.0
        %1958 = vmatpush1.msra.mxu0 0.0
        %1959 = vmatprep.subr.mxu0 0.0
        %1960 = vmatpush1.msra.mxu0 0.0
        %1961 = vmatprep.subr.mxu0 0.0
        %1962 = vmatpush1.msra.mxu0 0.0
        %1963 = vmatprep.subr.mxu0 0.0
        %1964 = vmatpush1.msra.mxu0 0.0
        %1965 = vmatprep.subr.mxu0 0.0
        %1966 = vmatpush1.msra.mxu0 0.0
        %1967 = vmatprep.subr.mxu0 0.0
        %1968 = vmatpush1.msra.mxu0 0.0
        %1969 = vmatprep.subr.mxu0 0.0
        %1970 = vmatpush1.msra.mxu0 0.0
        %1971 = vmatprep.subr.mxu0 0.0
        %1972 = vmatpush1.msra.mxu0 0.0
        %1973 = vmatprep.subr.mxu0 0.0
        %1974 = vmatpush1.msra.mxu0 0.0
        %1975 = vmatprep.subr.mxu0 %v1951
        %1976 = vmatpush1.msra.mxu0 %v1951
        %1977 = vmatprep.subr.mxu0 %v1944
        %1978 = vmatpush1.msra.mxu0 %v1943
        %1979 = vmatprep.subr.mxu0 %v1942
        %1980 = vmatpush1.msra.mxu0 %v1941
        %1981 = vmatprep.subr.mxu0 %v1848
        %1982 = vmatpush1.msra.mxu0 %v1847
        %1983 = vmatprep.subr.mxu0 %v1846
        %1984 = vmatpush1.msra.mxu0 %v1845
        %1985 = vmatprep.subr.mxu0 0.0
        %1986 = vmatpush2.msra.mxu0 0.0
        %1987 = vmatprep.subr.mxu0 0.0
        %1988 = vmatpush2.msra.mxu0 0.0
        %1989 = vmatprep.subr.mxu0 0.0
        %1990 = vmatpush2.msra.mxu0 0.0
        %1991 = vmatprep.subr.mxu0 0.0
        %1992 = vmatpush2.msra.mxu0 0.0
        %1993 = vmatprep.subr.mxu0 0.0
        %1994 = vmatpush2.msra.mxu0 0.0
        %1995 = vmatprep.subr.mxu0 0.0
        %1996 = vmatpush2.msra.mxu0 0.0
        %1997 = vmatprep.subr.mxu0 0.0
        %1998 = vmatpush2.msra.mxu0 0.0
        %1999 = vmatprep.subr.mxu0 0.0
        %2000 = vmatpush2.msra.mxu0 0.0
        %2001 = vmatprep.subr.mxu0 0.0
        %2002 = vmatpush2.msra.mxu0 0.0
        %2003 = vmatprep.subr.mxu0 0.0
        %2004 = vmatpush2.msra.mxu0 0.0
        %2005 = vmatprep.subr.mxu0 0.0
        %2006 = vmatpush2.msra.mxu0 0.0
        %2007 = vmatprep.subr.mxu0 0.0
        %2008 = vmatpush2.msra.mxu0 0.0
        %2009 = vmatprep.subr.mxu0 0.0
        %2010 = vmatpush2.msra.mxu0 0.0
        %2011 = vmatprep.subr.mxu0 0.0
        %2012 = vmatpush2.msra.mxu0 0.0
        %2013 = vmatprep.subr.mxu0 0.0
        %2014 = vmatpush2.msra.mxu0 0.0
        %2015 = vmatprep.subr.mxu0 0.0
        %2016 = vmatpush2.msra.mxu0 0.0
        %2017 = vmatprep.mubr.f32.mxu0 0.0
        %2018 = vmatmul.mubr.f32.gmra.mxu0 %v1948
        %v2019 = vpop.f32.mrf.mxu0
        %v2020 = vadd.f32 0.0, %v2019
        %v2021 = vpop.f32.mrf.mxu0
        %v2022 = vadd.f32 0.0, %v2021
        %2023 = vdwg.mxu0
        %v2026 = vcombine.low %v2020, %v2022
        %v2028 = vunpack.c.l.s4 1966171168
        %v2029 = vunpack.c.0.s8 %v2028
        %v2030 = vlaneseq
        %v2031 = vshrl.u32 %v2030, 7
        %v2032 = vsub.s32 %v2029, %v2031
        %v2033 = vrot.slane %v2026, %v2032
        %v2035 = vunpack.c.l.s4 1966171168
        %v2036 = vunpack.c.0.s8 %v2035
        %v2037 = vlaneseq
        %v2038 = vshrl.u32 %v2037, 7
        %v2039 = vsub.s32 %v2036, %v2038
        %v2040 = vrot.slane %v2033, %v2039
        %v2042 = vlaneseq
        %vm2043 = vcmp.ge.s32.totalorder %v2042, 0
        %vm2044 = vcmp.lt.s32.totalorder %v2042, 256
        %vm2045 = vmand %vm2043, %vm2044
        %2046 = vst.msk [vmem:[%s250] sm:$0x3] %vm2045, %v2040
        %s2047 = smul.u32 2, %s15
        %p2048 = scmp.lt.s32.totalorder %s2047, 3
        %s2049 = scalar_select %p2048, %s2047, 3
        %s2050 = scalar_lea.vmem %s4, %s2049
        // Predicated region
        $region60: #{cnn3d_lstm_lite_forward.5} parent=54 // pred_check
          %p2051 = pneg %p122
        $region61: #{cnn3d_lstm_lite_forward.5} parent=54 // pred_check_branch
          %2053 = sbr.rel (%p2051) target = $region63
        $region62: #{cnn3d_lstm_lite_forward.5} parent=54 // pred_region
          %s2054 = smul.u32 2, %s15
        $region63: #{cnn3d_lstm_lite_forward.5} parent=54 // pred_fallthru
          _
      $region55: #{cnn3d_lstm_lite_forward.5} parent=5 // pred_fallthru
        _
      %p2055 = scmp.le.s32.totalorder 2, %s10
      // Predicated region
      $region64: #{cnn3d_lstm_lite_forward.5} parent=5 // pred_check
        %p2056 = pneg %p2055
      $region65: #{cnn3d_lstm_lite_forward.5} parent=5 // pred_check_branch
        %2058 = sbr.rel (%p2056) target = $region67
      $region66: #{cnn3d_lstm_lite_forward.5} parent=5 // pred_region
        %s2059 = ssub.s32 %s10, 2
        // Predicated region
        $region68: #{cnn3d_lstm_lite_forward.5} parent=66 // pred_check
          %p2060 = pneg %p128
        $region69: #{cnn3d_lstm_lite_forward.5} parent=66 // pred_check_branch
          %2062 = sbr.rel (%p2060) target = $region71
        $region70: #{cnn3d_lstm_lite_forward.5} parent=66 // pred_region
          %s2063 = smul.u32 2, %s16
          %p2064 = scmp.lt.s32.totalorder %s2063, 3
          %s2065 = scalar_select %p2064, %s2063, 3
          %s2066 = scalar_lea.vmem %s4, %s2065
        $region71: #{cnn3d_lstm_lite_forward.5} parent=66 // pred_fallthru
          _
      $region67: #{cnn3d_lstm_lite_forward.5} parent=5 // pred_fallthru
        _
    $region6: #{cnn3d_lstm_lite_forward.5} parent=1 // loop_footer
      %s14 = sadd.s32 1, %s10
    $region7: #{cnn3d_lstm_lite_forward.5} parent=1 // loop_footer_branch
      %9 = sbr.rel target = $region3
    $region8: #{cnn3d_lstm_lite_forward.5} parent=1 // loop_exit
      _

</llo_original>
